<compile_context>
chip_gen: v6e
topology: v6e:2x2x1
jax: 0.10.0
libtpu: 0.0.40
codegen_flags: <defaults>
</compile_context>

<pallas_src>
import jax
import jax.numpy as jnp
from jax import lax
from jax.experimental import pallas as pl
from jax.experimental.pallas import tpu as pltpu

EPS = 1e-5
LANE = 128


def _round_up(x, m):
    return (x + m - 1) // m * m


def _pick_block_b(n, max_b=8, min_steps=4):
    """Largest divisor of n (<= max_b) keeping >= min_steps grid steps (falls back
    to >=2, then 1).  >=4 steps keeps both v7x TensorCores pipelined; on v6e
    (single TC, 128 MiB VMEM) callers may pass a larger block_b explicitly."""
    for req in (min_steps, 2, 1):
        cands = [b for b in range(1, min(n, max_b) + 1)
                 if n % b == 0 and n // b >= req]
        if cands:
            return max(cands)
    return 1


# ----------------------------- Pallas kernel ------------------------------ #
def _se_preact_kernel(x_ref,       # (B, H, W, Cp)  f32
                      aff_ref,     # (8, Cp)  f32  rows: in_g, in_b, bn1_s, bn1_b,
                                   #                      bn2_s, bn2_b, 0, 0
                      w1_ref,      # (9*Cp, Cp) bf16  im2col-flattened HWIO conv1
                      w2_ref,      # (9*Cp, Cp) bf16  conv2
                      fc1_ref,     # (Cp, Mp) bf16  (= fc1.weight.T, zero-padded)
                      fc2_ref,     # (Mp, Cp) bf16  (= fc2.weight.T, zero-padded)
                      out_ref,     # (B, H, W, Cp)  f32
                      pad_ref,     # scratch (B, H+2, W+2, Cp) bf16
                      patch_ref):  # scratch (B, H, W, 3*Cp)  bf16
    B, H, W, Cp = x_ref.shape
    C3 = 3 * Cp
    x = x_ref[...]

    aff = aff_ref[...]
    in_g = aff[0].reshape(1, 1, 1, Cp)
    in_b = aff[1].reshape(1, 1, 1, Cp)
    bn1_s = aff[2].reshape(1, 1, 1, Cp)
    bn1_b = aff[3].reshape(1, 1, 1, Cp)
    bn2_s = aff[4].reshape(1, 1, 1, Cp)
    bn2_b = aff[5].reshape(1, 1, 1, Cp)

    # ---- bn1 = IBN (fused): t = IN(x)*g_in + b_in + x*s_bn + b_bn ------------
    # One-pass IN statistics (E[x^2] - mean^2).  The affine vectors are zero on
    # each other's channel ranges (and on the lane-padding channels), so no mask
    # is needed; stats on the BN/padding channels are wasted-but-masked work.
    mean = jnp.mean(x, axis=(1, 2), keepdims=True)
    ex2 = jnp.mean(x * x, axis=(1, 2), keepdims=True)
    var = jnp.maximum(ex2 - mean * mean, 0.0)
    inst = (x - mean) * lax.rsqrt(var + EPS)
    t = jnp.maximum(inst * in_g + in_b + x * bn1_s + bn1_b, 0.0)

    # ---- zero only the halo border strips of the bf16 padded scratch --------
    # (done every step, NOT gated on program_id==0: megacore-safe; it's cheap.)
    zrow = jnp.zeros((B, 1, W + 2, Cp), jnp.bfloat16)
    zcol = jnp.zeros((B, H, 1, Cp), jnp.bfloat16)
    pad_ref[:, 0:1, :, :] = zrow
    pad_ref[:, H + 1:H + 2, :, :] = zrow
    pad_ref[:, 1:H + 1, 0:1, :] = zcol
    pad_ref[:, 1:H + 1, W + 1:W + 2, :] = zcol

    def conv3x3(interior_bf16, w_ref):
        # `interior_bf16` already has the preceding norm/ReLU applied and is cast
        # to bf16 ONCE here (fused into the pad write).  im2col split over ky:
        # three accumulating (B*H*W, 3*Cp) x (3*Cp, Cp) bf16 MXU matmuls with f32
        # accumulation -> patch scratch is 3x smaller than a full 9-tap im2col.
        pad_ref[:, 1:H + 1, 1:W + 1, :] = interior_bf16
        acc = None
        for ky in range(3):
            for kx in range(3):
                patch_ref[:, :, :, kx * Cp:(kx + 1) * Cp] = \
                    pad_ref[:, ky:ky + H, kx:kx + W, :]
            lhs = patch_ref[...].reshape(B * H * W, C3)
            part = jnp.dot(lhs, w_ref[ky * C3:(ky + 1) * C3, :],
                           preferred_element_type=jnp.float32)
            acc = part if acc is None else acc + part
        return acc.reshape(B, H, W, Cp)

    c1 = conv3x3(t.astype(jnp.bfloat16), w1_ref)

    # ---- bn2 (eval) + relu fused into the conv2 pad-interior write ----------
    c2 = conv3x3(jnp.maximum(c1 * bn2_s + bn2_b, 0.0).astype(jnp.bfloat16), w2_ref)

    # ---- SE block (per sample): GAP -> fc1 -> relu -> fc2 -> sigmoid --------
    gap = jnp.mean(c2, axis=(1, 2)).astype(jnp.bfloat16)                 # (B, Cp)
    y = jnp.maximum(jnp.dot(gap, fc1_ref[...],
                            preferred_element_type=jnp.float32), 0.0)    # (B, Mp)
    z = jnp.dot(y.astype(jnp.bfloat16), fc2_ref[...],
                preferred_element_type=jnp.float32)                      # (B, Cp)
    scale = (1.0 / (1.0 + jnp.exp(-z))).reshape(B, 1, 1, Cp)

    # ---- residual add (branch = x, no downsample/block_post) + relu ---------
    out_ref[...] = jnp.maximum(scale * c2 + x, 0.0)


# ------------------------------ JAX wrapper -------------------------------- #
def _vmem_budget_bytes(B, H, W, Cp, Mp):
    act_f32 = B * H * W * Cp * 4
    io = 2 * 2 * act_f32                                   # x + out blocks, 2-buffered
    consts = 8 * Cp * 4 + 2 * 9 * Cp * Cp * 2 + 2 * Cp * Mp * 2   # single-buffered
    pad = B * (H + 2) * (W + 2) * Cp * 2                   # bf16 halo scratch
    patch = B * H * W * 3 * Cp * 2                         # bf16 K-split patch
    temps = 6 * act_f32                                    # t, c1, c2, acc, slack
    return io + consts + pad + patch + temps


def se_preact_basic_block(x_nchw, kp, block_b=None):
    """x_nchw: (N, C, H, W) float32 -> (N, C, H, W) float32."""
    x = jnp.transpose(x_nchw, (0, 2, 3, 1))                  # NCHW -> NHWC
    N, H, W, C = x.shape
    Cp, Mp = kp["Cp"], kp["Mp"]
    # lane-pad channels so every vector op / store is 128-lane dense
    x = jnp.pad(x, ((0, 0), (0, 0), (0, 0), (0, Cp - C)))

    if block_b is None:
        block_b = _pick_block_b(N)
    B = block_b
    assert N % B == 0
    grid = (N // B,)

    def _const(shape):
        # grid-invariant operand: constant block index + single-buffered
        r = len(shape)
        return pl.BlockSpec(shape, lambda n, _r=r: (0,) * _r,
                            pipeline_mode=pl.Buffered(1))

    in_specs = [
        pl.BlockSpec((B, H, W, Cp), lambda n: (n, 0, 0, 0)),  # x: B images / step
        _const((8, Cp)),                                      # packed affine table
        _const((9 * Cp, Cp)),                                 # conv1 weight (im2col, bf16)
        _const((9 * Cp, Cp)),                                 # conv2 weight (im2col, bf16)
        _const((Cp, Mp)),                                     # fc1^T (bf16)
        _const((Mp, Cp)),                                     # fc2^T (bf16)
    ]
    out_specs = pl.BlockSpec((B, H, W, Cp), lambda n: (n, 0, 0, 0))

    # Explicit scoped-VMEM limit from the real per-step working set (v5e's 16 MiB
    # default is too small at real ResNet shapes); capped at 64 MiB (v7x physical).
    vmem_limit = min(max(int(1.5 * _vmem_budget_bytes(B, H, W, Cp, Mp)),
                         32 * 1024 * 1024), 64 * 1024 * 1024)

    conv_flops = 2 * (2 * N * H * W * (9 * Cp) * Cp)
    se_flops = 2 * (2 * N * Cp * Mp)
    elem_flops = 14 * N * H * W * Cp
    scratch_bytes = 2 * 28 * N * H * W * Cp * 2              # pad/patch im2col traffic
    cost = pl.CostEstimate(
        flops=int(conv_flops + se_flops + elem_flops),
        transcendentals=int(2 * N * Cp),
        bytes_accessed=int(2 * N * H * W * Cp * 4             # x in + out
                           + 2 * 9 * Cp * Cp * 2              # bf16 conv weights
                           + 2 * Cp * Mp * 2 + 8 * Cp * 4     # SE weights + affine
                           + scratch_bytes),
    )

    out = pl.pallas_call(
        _se_preact_kernel,
        out_shape=jax.ShapeDtypeStruct((N, H, W, Cp), jnp.float32),
        grid_spec=pltpu.PrefetchScalarGridSpec(
            num_scalar_prefetch=0,
            grid=grid,
            in_specs=in_specs,
            out_specs=out_specs,
            scratch_shapes=[
                pltpu.VMEM((B, H + 2, W + 2, Cp), jnp.bfloat16),   # padded activations
                pltpu.VMEM((B, H, W, 3 * Cp), jnp.bfloat16),       # K-split im2col patch
            ],
        ),
        compiler_params=pltpu.CompilerParams(
            dimension_semantics=("parallel",),
            vmem_limit_bytes=vmem_limit),
        cost_estimate=cost,
    )(x, kp["affine"], kp["w1_flat"], kp["w2_flat"], kp["fc1_t"], kp["fc2_t"])

    out = out[..., :C]                                       # drop lane padding
    return jnp.transpose(out, (0, 3, 1, 2))                  # NHWC -> NCHW


# ------------------------- deterministic parameters ------------------------ #
def init_params(key, C):
    Ch = int(C * 0.5)
    Cb = C - Ch
    mip = max(8, C // 16)
    Cp = _round_up(C, LANE)
    Mp = _round_up(mip, LANE)
    ks = jax.random.split(key, 6)

    def bn_affine(k, n):
        k1, k2, k3, k4 = jax.random.split(k, 4)
        gamma = jax.random.uniform(k1, (n,), jnp.float32, 0.5, 1.5)
        beta = 0.1 * jax.random.normal(k2, (n,), jnp.float32)
        rmean = 0.1 * jax.random.normal(k3, (n,), jnp.float32)
        rvar = jax.random.uniform(k4, (n,), jnp.float32, 0.5, 1.5)
        scale = gamma / jnp.sqrt(rvar + EPS)
        shift = beta - rmean * scale
        return scale, shift

    bn1_scale, bn1_shift = bn_affine(ks[0], Cb)      # bn1.BN  (eval BatchNorm2d)
    bn2_scale, bn2_shift = bn_affine(ks[1], C)       # bn2     (eval BatchNorm2d)
    in_gamma = jnp.ones((Ch,), jnp.float32)          # IBN.IN affine init
    in_beta = jnp.zeros((Ch,), jnp.float32)

    # conv weights, PyTorch (O, I, 3, 3) -> HWIO
    w1 = jnp.transpose(0.2 * jax.random.normal(ks[2], (C, C, 3, 3), jnp.float32), (2, 3, 1, 0))
    w2 = jnp.transpose(0.2 * jax.random.normal(ks[3], (C, C, 3, 3), jnp.float32), (2, 3, 1, 0))

    # SE: fc1 Conv2d(C, mip, 1, bias=False) ; fc2 Linear(mip, C, bias=False)
    fc1_w = 0.5 * jax.random.normal(ks[4], (mip, C), jnp.float32)
    fc2_w = 0.5 * jax.random.normal(ks[5], (C, mip), jnp.float32)

    # Packed (8, Cp) affine table:
    # row 0/1: IN gamma/beta (nonzero only on [0, Ch))
    # row 2/3: BN1 scale/shift (nonzero only on [Ch, C))
    # row 4/5: BN2 scale/shift (nonzero on [0, C)); rows 6/7: sublane padding.
    aff = jnp.zeros((8, Cp), jnp.float32)
    aff = aff.at[0, :Ch].set(in_gamma)
    aff = aff.at[1, :Ch].set(in_beta)
    aff = aff.at[2, Ch:C].set(bn1_scale)
    aff = aff.at[3, Ch:C].set(bn1_shift)
    aff = aff.at[4, :C].set(bn2_scale)
    aff = aff.at[5, :C].set(bn2_shift)

    def pad_w_flat(w):              # (3,3,C,C) HWIO -> (9*Cp, Cp) bf16 im2col weight
        wp = jnp.pad(w, ((0, 0), (0, 0), (0, Cp - C), (0, Cp - C)))
        return wp.reshape(9 * Cp, Cp).astype(jnp.bfloat16)

    kernel_params = {
        "Cp": Cp, "Mp": Mp,
        "affine": aff,
        "w1_flat": pad_w_flat(w1),
        "w2_flat": pad_w_flat(w2),
        "fc1_t": jnp.pad(fc1_w.T, ((0, Cp - C), (0, Mp - mip))).astype(jnp.bfloat16),
        "fc2_t": jnp.pad(fc2_w.T, ((0, Mp - mip), (0, Cp - C))).astype(jnp.bfloat16),
    }
    raw = {
        "Ch": Ch,
        "in_gamma": in_gamma, "in_beta": in_beta,
        "bn1_scale": bn1_scale, "bn1_shift": bn1_shift,
        "bn2_scale": bn2_scale, "bn2_shift": bn2_shift,
        "w1": w1, "w2": w2,
        "fc1_t": fc1_w.T, "fc2_t": fc2_w.T,
    }
    return kernel_params, raw


# ----------------------------- pure-JAX reference --------------------------- #
def reference_forward(x_nchw, raw):
    x = jnp.transpose(x_nchw, (0, 2, 3, 1))   # NHWC
    Ch = raw["Ch"]
    x_in = x[..., :Ch]
    m = jnp.mean(x_in, axis=(1, 2), keepdims=True)
    v = jnp.var(x_in, axis=(1, 2), keepdims=True)
    o1 = (x_in - m) / jnp.sqrt(v + EPS) * raw["in_gamma"] + raw["in_beta"]
    o2 = x[..., Ch:] * raw["bn1_scale"] + raw["bn1_shift"]
    t = jax.nn.relu(jnp.concatenate([o1, o2], axis=-1))

    dn = ("NHWC", "HWIO", "NHWC")

    def conv(a, w):   # bf16 inputs, f32 accumulation (matches the kernel's MXU path)
        return lax.conv_general_dilated(a.astype(jnp.bfloat16), w.astype(jnp.bfloat16),
                                        (1, 1), "SAME", dimension_numbers=dn,
                                        preferred_element_type=jnp.float32)

    c1 = conv(t, raw["w1"])
    u = jax.nn.relu(c1 * raw["bn2_scale"] + raw["bn2_shift"])
    c2 = conv(u, raw["w2"])

    # SE path mirrors the kernel's bf16-in / f32-acc MXU numerics.
    gap = jnp.mean(c2, axis=(1, 2)).astype(jnp.bfloat16)               # (N, C)
    y = jax.nn.relu(jnp.dot(gap, raw["fc1_t"].astype(jnp.bfloat16),
                            preferred_element_type=jnp.float32))       # (N, mip)
    z = jnp.dot(y.astype(jnp.bfloat16), raw["fc2_t"].astype(jnp.bfloat16),
                preferred_element_type=jnp.float32)                    # (N, C)
    s = jax.nn.sigmoid(z)
    out = jax.nn.relu(s[:, None, None, :] * c2 + x)
    return jnp.transpose(out, (0, 3, 1, 2))


if __name__ == "__main__":
    key = jax.random.PRNGKey(0)
    kx, kpk = jax.random.split(key)
    N, C, H, W = 4, 4, 16, 16                 # NCHW like PyTorch; 4 grid steps of B=1
    x = jax.random.normal(kx, (N, C, H, W), jnp.float32)
    kernel_params, raw_params = init_params(kpk, C)

    out = se_preact_basic_block(x, kernel_params)
    out = jax.block_until_ready(out)

    ref = reference_forward(x, raw_params)
    assert out.shape == (N, C, H, W)
    err = float(jnp.max(jnp.abs(out - ref)))
    # bf16 MXU inputs (f32 accumulation) in both kernel and reference; tolerance
    # covers accumulation-order / bf16 rounding differences only.
    assert err < 1e-2, err
    print("KERNEL_OK")
</pallas_src>

<mosaic_0001>
module attributes {stable_mosaic.version = 11 : i64} {
  func.func @_se_preact_kernel(%arg0: i32, %arg1: memref<1x16x16x128xf32, #tpu.memory_space<vmem>>, %arg2: memref<8x128xf32, #tpu.memory_space<vmem>>, %arg3: memref<1152x128xbf16, #tpu.memory_space<vmem>>, %arg4: memref<1152x128xbf16, #tpu.memory_space<vmem>>, %arg5: memref<128x128xbf16, #tpu.memory_space<vmem>>, %arg6: memref<128x128xbf16, #tpu.memory_space<vmem>>, %arg7: memref<1x16x16x128xf32, #tpu.memory_space<vmem>>, %arg8: memref<1x18x18x128xbf16, #tpu.memory_space<vmem>>, %arg9: memref<1x16x16x384xbf16, #tpu.memory_space<vmem>>) attributes {dimension_semantics = [#tpu.dimension_semantics<parallel>], iteration_bounds = array<i64: 4>, scalar_prefetch = 0 : i64, scratch_operands = 2 : i64, tpu.core_type = #tpu.core_type<tc>, window_params = [{transform_indices = @transform_0, window_bounds = array<i64: 1, 16, 16, 128>}, {pipeline_mode = #tpu.pipeline_mode<synchronous>, transform_indices = @transform_1, window_bounds = array<i64: 8, 128>}, {pipeline_mode = #tpu.pipeline_mode<synchronous>, transform_indices = @transform_2, window_bounds = array<i64: 1152, 128>}, {pipeline_mode = #tpu.pipeline_mode<synchronous>, transform_indices = @transform_3, window_bounds = array<i64: 1152, 128>}, {pipeline_mode = #tpu.pipeline_mode<synchronous>, transform_indices = @transform_4, window_bounds = array<i64: 128, 128>}, {pipeline_mode = #tpu.pipeline_mode<synchronous>, transform_indices = @transform_5, window_bounds = array<i64: 128, 128>}, {transform_indices = @transform_6, window_bounds = array<i64: 1, 16, 16, 128>}]} {
    %c0 = arith.constant 0 : index
    %c0_0 = arith.constant 0 : index
    %c0_1 = arith.constant 0 : index
    %c0_2 = arith.constant 0 : index
    %0 = vector.load %arg1[%c0, %c0_0, %c0_1, %c0_2] : memref<1x16x16x128xf32, #tpu.memory_space<vmem>>, vector<1x16x16x128xf32>
    %c0_3 = arith.constant 0 : index
    %c0_4 = arith.constant 0 : index
    %1 = vector.load %arg2[%c0_3, %c0_4] : memref<8x128xf32, #tpu.memory_space<vmem>>, vector<8x128xf32>
    %2 = vector.extract_strided_slice %1 {offsets = [0, 0], sizes = [1, 128], strides = [1, 1]} : vector<8x128xf32> to vector<1x128xf32>
    %3 = vector.shape_cast %2 : vector<1x128xf32> to vector<128xf32>
    %4 = vector.shape_cast %3 : vector<128xf32> to vector<1x1x1x128xf32>
    %5 = vector.extract_strided_slice %1 {offsets = [1, 0], sizes = [1, 128], strides = [1, 1]} : vector<8x128xf32> to vector<1x128xf32>
    %6 = vector.shape_cast %5 : vector<1x128xf32> to vector<128xf32>
    %7 = vector.shape_cast %6 : vector<128xf32> to vector<1x1x1x128xf32>
    %8 = vector.extract_strided_slice %1 {offsets = [2, 0], sizes = [1, 128], strides = [1, 1]} : vector<8x128xf32> to vector<1x128xf32>
    %9 = vector.shape_cast %8 : vector<1x128xf32> to vector<128xf32>
    %10 = vector.shape_cast %9 : vector<128xf32> to vector<1x1x1x128xf32>
    %11 = vector.extract_strided_slice %1 {offsets = [3, 0], sizes = [1, 128], strides = [1, 1]} : vector<8x128xf32> to vector<1x128xf32>
    %12 = vector.shape_cast %11 : vector<1x128xf32> to vector<128xf32>
    %13 = vector.shape_cast %12 : vector<128xf32> to vector<1x1x1x128xf32>
    %14 = vector.extract_strided_slice %1 {offsets = [4, 0], sizes = [1, 128], strides = [1, 1]} : vector<8x128xf32> to vector<1x128xf32>
    %15 = vector.shape_cast %14 : vector<1x128xf32> to vector<128xf32>
    %16 = vector.shape_cast %15 : vector<128xf32> to vector<1x1x1x128xf32>
    %17 = vector.extract_strided_slice %1 {offsets = [5, 0], sizes = [1, 128], strides = [1, 1]} : vector<8x128xf32> to vector<1x128xf32>
    %18 = vector.shape_cast %17 : vector<1x128xf32> to vector<128xf32>
    %19 = vector.shape_cast %18 : vector<128xf32> to vector<1x1x1x128xf32>
    %cst = arith.constant dense<0.000000e+00> : vector<1x128xf32>
    %20 = vector.multi_reduction <add>, %0, %cst [1, 2] : vector<1x16x16x128xf32> to vector<1x128xf32>
    %21 = vector.shape_cast %20 : vector<1x128xf32> to vector<1x1x1x128xf32>
    %cst_5 = arith.constant 2.560000e+02 : f32
    %22 = vector.broadcast %cst_5 : f32 to vector<1x1x1x128xf32>
    %23 = arith.divf %21, %22 : vector<1x1x1x128xf32>
    %24 = arith.mulf %0, %0 : vector<1x16x16x128xf32>
    %cst_6 = arith.constant dense<0.000000e+00> : vector<1x128xf32>
    %25 = vector.multi_reduction <add>, %24, %cst_6 [1, 2] : vector<1x16x16x128xf32> to vector<1x128xf32>
    %26 = vector.shape_cast %25 : vector<1x128xf32> to vector<1x1x1x128xf32>
    %cst_7 = arith.constant 2.560000e+02 : f32
    %27 = vector.broadcast %cst_7 : f32 to vector<1x1x1x128xf32>
    %28 = arith.divf %26, %27 : vector<1x1x1x128xf32>
    %29 = arith.mulf %23, %23 : vector<1x1x1x128xf32>
    %30 = arith.subf %28, %29 : vector<1x1x1x128xf32>
    %cst_8 = arith.constant 0.000000e+00 : f32
    %31 = vector.broadcast %cst_8 : f32 to vector<1x1x1x128xf32>
    %32 = arith.maximumf %30, %31 : vector<1x1x1x128xf32>
    %33 = vector.broadcast %23 : vector<1x1x1x128xf32> to vector<1x16x16x128xf32>
    %34 = arith.subf %0, %33 : vector<1x16x16x128xf32>
    %cst_9 = arith.constant 9.99999974E-6 : f32
    %35 = vector.broadcast %cst_9 : f32 to vector<1x1x1x128xf32>
    %36 = arith.addf %32, %35 : vector<1x1x1x128xf32>
    %37 = math.rsqrt %36 : vector<1x1x1x128xf32>
    %38 = vector.broadcast %37 : vector<1x1x1x128xf32> to vector<1x16x16x128xf32>
    %39 = arith.mulf %34, %38 : vector<1x16x16x128xf32>
    %40 = vector.broadcast %4 : vector<1x1x1x128xf32> to vector<1x16x16x128xf32>
    %41 = arith.mulf %39, %40 : vector<1x16x16x128xf32>
    %42 = vector.broadcast %7 : vector<1x1x1x128xf32> to vector<1x16x16x128xf32>
    %43 = arith.addf %41, %42 : vector<1x16x16x128xf32>
    %44 = vector.broadcast %10 : vector<1x1x1x128xf32> to vector<1x16x16x128xf32>
    %45 = arith.mulf %0, %44 : vector<1x16x16x128xf32>
    %46 = arith.addf %43, %45 : vector<1x16x16x128xf32>
    %47 = vector.broadcast %13 : vector<1x1x1x128xf32> to vector<1x16x16x128xf32>
    %48 = arith.addf %46, %47 : vector<1x16x16x128xf32>
    %cst_10 = arith.constant 0.000000e+00 : f32
    %49 = vector.broadcast %cst_10 : f32 to vector<1x16x16x128xf32>
    %50 = arith.maximumf %48, %49 : vector<1x16x16x128xf32>
    %cst_11 = arith.constant 0.000000e+00 : bf16
    %51 = vector.broadcast %cst_11 : bf16 to vector<1x1x18x128xbf16>
    %cst_12 = arith.constant 0.000000e+00 : bf16
    %52 = vector.broadcast %cst_12 : bf16 to vector<1x16x1x128xbf16>
    %c0_13 = arith.constant 0 : index
    %c0_14 = arith.constant 0 : index
    %c0_15 = arith.constant 0 : index
    %c0_16 = arith.constant 0 : index
    %53 = vector.load %arg8[%c0_13, %c0_14, %c0_15, %c0_16] : memref<1x18x18x128xbf16, #tpu.memory_space<vmem>>, vector<1x1x18x128xbf16>
    tpu.vector_store %arg8[%c0_13, %c0_14, %c0_15, %c0_16], %51 {strides = array<i32>} : memref<1x18x18x128xbf16, #tpu.memory_space<vmem>>, vector<1x1x18x128xbf16>,
    %c0_17 = arith.constant 0 : index
    %c17 = arith.constant 17 : index
    %c0_18 = arith.constant 0 : index
    %c0_19 = arith.constant 0 : index
    %54 = vector.load %arg8[%c0_17, %c17, %c0_18, %c0_19] : memref<1x18x18x128xbf16, #tpu.memory_space<vmem>>, vector<1x1x18x128xbf16>
    tpu.vector_store %arg8[%c0_17, %c17, %c0_18, %c0_19], %51 {strides = array<i32>} : memref<1x18x18x128xbf16, #tpu.memory_space<vmem>>, vector<1x1x18x128xbf16>,
    %c0_20 = arith.constant 0 : index
    %c1 = arith.constant 1 : index
    %c0_21 = arith.constant 0 : index
    %c0_22 = arith.constant 0 : index
    %55 = vector.load %arg8[%c0_20, %c1, %c0_21, %c0_22] : memref<1x18x18x128xbf16, #tpu.memory_space<vmem>>, vector<1x16x1x128xbf16>
    tpu.vector_store %arg8[%c0_20, %c1, %c0_21, %c0_22], %52 {strides = array<i32>} : memref<1x18x18x128xbf16, #tpu.memory_space<vmem>>, vector<1x16x1x128xbf16>,
    %c0_23 = arith.constant 0 : index
    %c1_24 = arith.constant 1 : index
    %c17_25 = arith.constant 17 : index
    %c0_26 = arith.constant 0 : index
    %56 = vector.load %arg8[%c0_23, %c1_24, %c17_25, %c0_26] : memref<1x18x18x128xbf16, #tpu.memory_space<vmem>>, vector<1x16x1x128xbf16>
    tpu.vector_store %arg8[%c0_23, %c1_24, %c17_25, %c0_26], %52 {strides = array<i32>} : memref<1x18x18x128xbf16, #tpu.memory_space<vmem>>, vector<1x16x1x128xbf16>,
    %57 = arith.truncf %50 : vector<1x16x16x128xf32> to vector<1x16x16x128xbf16>
    %c0_27 = arith.constant 0 : index
    %c1_28 = arith.constant 1 : index
    %c1_29 = arith.constant 1 : index
    %c0_30 = arith.constant 0 : index
    %58 = vector.load %arg8[%c0_27, %c1_28, %c1_29, %c0_30] : memref<1x18x18x128xbf16, #tpu.memory_space<vmem>>, vector<1x16x16x128xbf16>
    tpu.vector_store %arg8[%c0_27, %c1_28, %c1_29, %c0_30], %57 {strides = array<i32>} : memref<1x18x18x128xbf16, #tpu.memory_space<vmem>>, vector<1x16x16x128xbf16>,
    %c0_31 = arith.constant 0 : index
    %c0_32 = arith.constant 0 : index
    %c0_33 = arith.constant 0 : index
    %c0_34 = arith.constant 0 : index
    %59 = vector.load %arg8[%c0_31, %c0_32, %c0_33, %c0_34] : memref<1x18x18x128xbf16, #tpu.memory_space<vmem>>, vector<1x16x16x128xbf16>
    %c0_35 = arith.constant 0 : index
    %c0_36 = arith.constant 0 : index
    %c0_37 = arith.constant 0 : index
    %c0_38 = arith.constant 0 : index
    %60 = vector.load %arg9[%c0_35, %c0_36, %c0_37, %c0_38] : memref<1x16x16x384xbf16, #tpu.memory_space<vmem>>, vector<1x16x16x128xbf16>
    tpu.vector_store %arg9[%c0_35, %c0_36, %c0_37, %c0_38], %59 {strides = array<i32>} : memref<1x16x16x384xbf16, #tpu.memory_space<vmem>>, vector<1x16x16x128xbf16>,
    %c0_39 = arith.constant 0 : index
    %c0_40 = arith.constant 0 : index
    %c1_41 = arith.constant 1 : index
    %c0_42 = arith.constant 0 : index
    %61 = vector.load %arg8[%c0_39, %c0_40, %c1_41, %c0_42] : memref<1x18x18x128xbf16, #tpu.memory_space<vmem>>, vector<1x16x16x128xbf16>
    %c0_43 = arith.constant 0 : index
    %c0_44 = arith.constant 0 : index
    %c0_45 = arith.constant 0 : index
    %c128 = arith.constant 128 : index
    %62 = vector.load %arg9[%c0_43, %c0_44, %c0_45, %c128] : memref<1x16x16x384xbf16, #tpu.memory_space<vmem>>, vector<1x16x16x128xbf16>
    tpu.vector_store %arg9[%c0_43, %c0_44, %c0_45, %c128], %61 {strides = array<i32>} : memref<1x16x16x384xbf16, #tpu.memory_space<vmem>>, vector<1x16x16x128xbf16>,
    %c0_46 = arith.constant 0 : index
    %c0_47 = arith.constant 0 : index
    %c2 = arith.constant 2 : index
    %c0_48 = arith.constant 0 : index
    %63 = vector.load %arg8[%c0_46, %c0_47, %c2, %c0_48] : memref<1x18x18x128xbf16, #tpu.memory_space<vmem>>, vector<1x16x16x128xbf16>
    %c0_49 = arith.constant 0 : index
    %c0_50 = arith.constant 0 : index
    %c0_51 = arith.constant 0 : index
    %c256 = arith.constant 256 : index
    %64 = vector.load %arg9[%c0_49, %c0_50, %c0_51, %c256] : memref<1x16x16x384xbf16, #tpu.memory_space<vmem>>, vector<1x16x16x128xbf16>
    tpu.vector_store %arg9[%c0_49, %c0_50, %c0_51, %c256], %63 {strides = array<i32>} : memref<1x16x16x384xbf16, #tpu.memory_space<vmem>>, vector<1x16x16x128xbf16>,
    %c0_52 = arith.constant 0 : index
    %c0_53 = arith.constant 0 : index
    %c0_54 = arith.constant 0 : index
    %c0_55 = arith.constant 0 : index
    %65 = vector.load %arg9[%c0_52, %c0_53, %c0_54, %c0_55] : memref<1x16x16x384xbf16, #tpu.memory_space<vmem>>, vector<1x16x16x384xbf16>
    %66 = vector.shape_cast %65 : vector<1x16x16x384xbf16> to vector<256x384xbf16>
    %c0_56 = arith.constant 0 : index
    %c0_57 = arith.constant 0 : index
    %67 = vector.load %arg3[%c0_56, %c0_57] : memref<1152x128xbf16, #tpu.memory_space<vmem>>, vector<384x128xbf16>
    %cst_58 = arith.constant dense<0.000000e+00> : vector<256x128xf32>
    %68 = tpu.matmul %66, %67, %cst_58 {dimension_numbers = #tpu.dot_dimension_numbers<[1], [0], [0], [1], [0, 0, 1, 1], [], []>} : vector<256x384xbf16>, vector<384x128xbf16>, vector<256x128xf32> -> vector<256x128xf32>
    %c0_59 = arith.constant 0 : index
    %c1_60 = arith.constant 1 : index
    %c0_61 = arith.constant 0 : index
    %c0_62 = arith.constant 0 : index
    %69 = vector.load %arg8[%c0_59, %c1_60, %c0_61, %c0_62] : memref<1x18x18x128xbf16, #tpu.memory_space<vmem>>, vector<1x16x16x128xbf16>
    %c0_63 = arith.constant 0 : index
    %c0_64 = arith.constant 0 : index
    %c0_65 = arith.constant 0 : index
    %c0_66 = arith.constant 0 : index
    %70 = vector.load %arg9[%c0_63, %c0_64, %c0_65, %c0_66] : memref<1x16x16x384xbf16, #tpu.memory_space<vmem>>, vector<1x16x16x128xbf16>
    tpu.vector_store %arg9[%c0_63, %c0_64, %c0_65, %c0_66], %69 {strides = array<i32>} : memref<1x16x16x384xbf16, #tpu.memory_space<vmem>>, vector<1x16x16x128xbf16>,
    %c0_67 = arith.constant 0 : index
    %c1_68 = arith.constant 1 : index
    %c1_69 = arith.constant 1 : index
    %c0_70 = arith.constant 0 : index
    %71 = vector.load %arg8[%c0_67, %c1_68, %c1_69, %c0_70] : memref<1x18x18x128xbf16, #tpu.memory_space<vmem>>, vector<1x16x16x128xbf16>
    %c0_71 = arith.constant 0 : index
    %c0_72 = arith.constant 0 : index
    %c0_73 = arith.constant 0 : index
    %c128_74 = arith.constant 128 : index
    %72 = vector.load %arg9[%c0_71, %c0_72, %c0_73, %c128_74] : memref<1x16x16x384xbf16, #tpu.memory_space<vmem>>, vector<1x16x16x128xbf16>
    tpu.vector_store %arg9[%c0_71, %c0_72, %c0_73, %c128_74], %71 {strides = array<i32>} : memref<1x16x16x384xbf16, #tpu.memory_space<vmem>>, vector<1x16x16x128xbf16>,
    %c0_75 = arith.constant 0 : index
    %c1_76 = arith.constant 1 : index
    %c2_77 = arith.constant 2 : index
    %c0_78 = arith.constant 0 : index
    %73 = vector.load %arg8[%c0_75, %c1_76, %c2_77, %c0_78] : memref<1x18x18x128xbf16, #tpu.memory_space<vmem>>, vector<1x16x16x128xbf16>
    %c0_79 = arith.constant 0 : index
    %c0_80 = arith.constant 0 : index
    %c0_81 = arith.constant 0 : index
    %c256_82 = arith.constant 256 : index
    %74 = vector.load %arg9[%c0_79, %c0_80, %c0_81, %c256_82] : memref<1x16x16x384xbf16, #tpu.memory_space<vmem>>, vector<1x16x16x128xbf16>
    tpu.vector_store %arg9[%c0_79, %c0_80, %c0_81, %c256_82], %73 {strides = array<i32>} : memref<1x16x16x384xbf16, #tpu.memory_space<vmem>>, vector<1x16x16x128xbf16>,
    %c0_83 = arith.constant 0 : index
    %c0_84 = arith.constant 0 : index
    %c0_85 = arith.constant 0 : index
    %c0_86 = arith.constant 0 : index
    %75 = vector.load %arg9[%c0_83, %c0_84, %c0_85, %c0_86] : memref<1x16x16x384xbf16, #tpu.memory_space<vmem>>, vector<1x16x16x384xbf16>
    %76 = vector.shape_cast %75 : vector<1x16x16x384xbf16> to vector<256x384xbf16>
    %c384 = arith.constant 384 : index
    %c0_87 = arith.constant 0 : index
    %77 = vector.load %arg3[%c384, %c0_87] : memref<1152x128xbf16, #tpu.memory_space<vmem>>, vector<384x128xbf16>
    %cst_88 = arith.constant dense<0.000000e+00> : vector<256x128xf32>
    %78 = tpu.matmul %76, %77, %cst_88 {dimension_numbers = #tpu.dot_dimension_numbers<[1], [0], [0], [1], [0, 0, 1, 1], [], []>} : vector<256x384xbf16>, vector<384x128xbf16>, vector<256x128xf32> -> vector<256x128xf32>
    %79 = arith.addf %68, %78 : vector<256x128xf32>
    %c0_89 = arith.constant 0 : index
    %c2_90 = arith.constant 2 : index
    %c0_91 = arith.constant 0 : index
    %c0_92 = arith.constant 0 : index
    %80 = vector.load %arg8[%c0_89, %c2_90, %c0_91, %c0_92] : memref<1x18x18x128xbf16, #tpu.memory_space<vmem>>, vector<1x16x16x128xbf16>
    %c0_93 = arith.constant 0 : index
    %c0_94 = arith.constant 0 : index
    %c0_95 = arith.constant 0 : index
    %c0_96 = arith.constant 0 : index
    %81 = vector.load %arg9[%c0_93, %c0_94, %c0_95, %c0_96] : memref<1x16x16x384xbf16, #tpu.memory_space<vmem>>, vector<1x16x16x128xbf16>
    tpu.vector_store %arg9[%c0_93, %c0_94, %c0_95, %c0_96], %80 {strides = array<i32>} : memref<1x16x16x384xbf16, #tpu.memory_space<vmem>>, vector<1x16x16x128xbf16>,
    %c0_97 = arith.constant 0 : index
    %c2_98 = arith.constant 2 : index
    %c1_99 = arith.constant 1 : index
    %c0_100 = arith.constant 0 : index
    %82 = vector.load %arg8[%c0_97, %c2_98, %c1_99, %c0_100] : memref<1x18x18x128xbf16, #tpu.memory_space<vmem>>, vector<1x16x16x128xbf16>
    %c0_101 = arith.constant 0 : index
    %c0_102 = arith.constant 0 : index
    %c0_103 = arith.constant 0 : index
    %c128_104 = arith.constant 128 : index
    %83 = vector.load %arg9[%c0_101, %c0_102, %c0_103, %c128_104] : memref<1x16x16x384xbf16, #tpu.memory_space<vmem>>, vector<1x16x16x128xbf16>
    tpu.vector_store %arg9[%c0_101, %c0_102, %c0_103, %c128_104], %82 {strides = array<i32>} : memref<1x16x16x384xbf16, #tpu.memory_space<vmem>>, vector<1x16x16x128xbf16>,
    %c0_105 = arith.constant 0 : index
    %c2_106 = arith.constant 2 : index
    %c2_107 = arith.constant 2 : index
    %c0_108 = arith.constant 0 : index
    %84 = vector.load %arg8[%c0_105, %c2_106, %c2_107, %c0_108] : memref<1x18x18x128xbf16, #tpu.memory_space<vmem>>, vector<1x16x16x128xbf16>
    %c0_109 = arith.constant 0 : index
    %c0_110 = arith.constant 0 : index
    %c0_111 = arith.constant 0 : index
    %c256_112 = arith.constant 256 : index
    %85 = vector.load %arg9[%c0_109, %c0_110, %c0_111, %c256_112] : memref<1x16x16x384xbf16, #tpu.memory_space<vmem>>, vector<1x16x16x128xbf16>
    tpu.vector_store %arg9[%c0_109, %c0_110, %c0_111, %c256_112], %84 {strides = array<i32>} : memref<1x16x16x384xbf16, #tpu.memory_space<vmem>>, vector<1x16x16x128xbf16>,
    %c0_113 = arith.constant 0 : index
    %c0_114 = arith.constant 0 : index
    %c0_115 = arith.constant 0 : index
    %c0_116 = arith.constant 0 : index
    %86 = vector.load %arg9[%c0_113, %c0_114, %c0_115, %c0_116] : memref<1x16x16x384xbf16, #tpu.memory_space<vmem>>, vector<1x16x16x384xbf16>
    %87 = vector.shape_cast %86 : vector<1x16x16x384xbf16> to vector<256x384xbf16>
    %c768 = arith.constant 768 : index
    %c0_117 = arith.constant 0 : index
    %88 = vector.load %arg3[%c768, %c0_117] : memref<1152x128xbf16, #tpu.memory_space<vmem>>, vector<384x128xbf16>
    %cst_118 = arith.constant dense<0.000000e+00> : vector<256x128xf32>
    %89 = tpu.matmul %87, %88, %cst_118 {dimension_numbers = #tpu.dot_dimension_numbers<[1], [0], [0], [1], [0, 0, 1, 1], [], []>} : vector<256x384xbf16>, vector<384x128xbf16>, vector<256x128xf32> -> vector<256x128xf32>
    %90 = arith.addf %79, %89 : vector<256x128xf32>
    %91 = vector.shape_cast %90 : vector<256x128xf32> to vector<1x16x16x128xf32>
    %92 = vector.broadcast %16 : vector<1x1x1x128xf32> to vector<1x16x16x128xf32>
    %93 = arith.mulf %91, %92 : vector<1x16x16x128xf32>
    %94 = vector.broadcast %19 : vector<1x1x1x128xf32> to vector<1x16x16x128xf32>
    %95 = arith.addf %93, %94 : vector<1x16x16x128xf32>
    %cst_119 = arith.constant 0.000000e+00 : f32
    %96 = vector.broadcast %cst_119 : f32 to vector<1x16x16x128xf32>
    %97 = arith.maximumf %95, %96 : vector<1x16x16x128xf32>
    %98 = arith.truncf %97 : vector<1x16x16x128xf32> to vector<1x16x16x128xbf16>
    %c0_120 = arith.constant 0 : index
    %c1_121 = arith.constant 1 : index
    %c1_122 = arith.constant 1 : index
    %c0_123 = arith.constant 0 : index
    %99 = vector.load %arg8[%c0_120, %c1_121, %c1_122, %c0_123] : memref<1x18x18x128xbf16, #tpu.memory_space<vmem>>, vector<1x16x16x128xbf16>
    tpu.vector_store %arg8[%c0_120, %c1_121, %c1_122, %c0_123], %98 {strides = array<i32>} : memref<1x18x18x128xbf16, #tpu.memory_space<vmem>>, vector<1x16x16x128xbf16>,
    %c0_124 = arith.constant 0 : index
    %c0_125 = arith.constant 0 : index
    %c0_126 = arith.constant 0 : index
    %c0_127 = arith.constant 0 : index
    %100 = vector.load %arg8[%c0_124, %c0_125, %c0_126, %c0_127] : memref<1x18x18x128xbf16, #tpu.memory_space<vmem>>, vector<1x16x16x128xbf16>
    %c0_128 = arith.constant 0 : index
    %c0_129 = arith.constant 0 : index
    %c0_130 = arith.constant 0 : index
    %c0_131 = arith.constant 0 : index
    %101 = vector.load %arg9[%c0_128, %c0_129, %c0_130, %c0_131] : memref<1x16x16x384xbf16, #tpu.memory_space<vmem>>, vector<1x16x16x128xbf16>
    tpu.vector_store %arg9[%c0_128, %c0_129, %c0_130, %c0_131], %100 {strides = array<i32>} : memref<1x16x16x384xbf16, #tpu.memory_space<vmem>>, vector<1x16x16x128xbf16>,
    %c0_132 = arith.constant 0 : index
    %c0_133 = arith.constant 0 : index
    %c1_134 = arith.constant 1 : index
    %c0_135 = arith.constant 0 : index
    %102 = vector.load %arg8[%c0_132, %c0_133, %c1_134, %c0_135] : memref<1x18x18x128xbf16, #tpu.memory_space<vmem>>, vector<1x16x16x128xbf16>
    %c0_136 = arith.constant 0 : index
    %c0_137 = arith.constant 0 : index
    %c0_138 = arith.constant 0 : index
    %c128_139 = arith.constant 128 : index
    %103 = vector.load %arg9[%c0_136, %c0_137, %c0_138, %c128_139] : memref<1x16x16x384xbf16, #tpu.memory_space<vmem>>, vector<1x16x16x128xbf16>
    tpu.vector_store %arg9[%c0_136, %c0_137, %c0_138, %c128_139], %102 {strides = array<i32>} : memref<1x16x16x384xbf16, #tpu.memory_space<vmem>>, vector<1x16x16x128xbf16>,
    %c0_140 = arith.constant 0 : index
    %c0_141 = arith.constant 0 : index
    %c2_142 = arith.constant 2 : index
    %c0_143 = arith.constant 0 : index
    %104 = vector.load %arg8[%c0_140, %c0_141, %c2_142, %c0_143] : memref<1x18x18x128xbf16, #tpu.memory_space<vmem>>, vector<1x16x16x128xbf16>
    %c0_144 = arith.constant 0 : index
    %c0_145 = arith.constant 0 : index
    %c0_146 = arith.constant 0 : index
    %c256_147 = arith.constant 256 : index
    %105 = vector.load %arg9[%c0_144, %c0_145, %c0_146, %c256_147] : memref<1x16x16x384xbf16, #tpu.memory_space<vmem>>, vector<1x16x16x128xbf16>
    tpu.vector_store %arg9[%c0_144, %c0_145, %c0_146, %c256_147], %104 {strides = array<i32>} : memref<1x16x16x384xbf16, #tpu.memory_space<vmem>>, vector<1x16x16x128xbf16>,
    %c0_148 = arith.constant 0 : index
    %c0_149 = arith.constant 0 : index
    %c0_150 = arith.constant 0 : index
    %c0_151 = arith.constant 0 : index
    %106 = vector.load %arg9[%c0_148, %c0_149, %c0_150, %c0_151] : memref<1x16x16x384xbf16, #tpu.memory_space<vmem>>, vector<1x16x16x384xbf16>
    %107 = vector.shape_cast %106 : vector<1x16x16x384xbf16> to vector<256x384xbf16>
    %c0_152 = arith.constant 0 : index
    %c0_153 = arith.constant 0 : index
    %108 = vector.load %arg4[%c0_152, %c0_153] : memref<1152x128xbf16, #tpu.memory_space<vmem>>, vector<384x128xbf16>
    %cst_154 = arith.constant dense<0.000000e+00> : vector<256x128xf32>
    %109 = tpu.matmul %107, %108, %cst_154 {dimension_numbers = #tpu.dot_dimension_numbers<[1], [0], [0], [1], [0, 0, 1, 1], [], []>} : vector<256x384xbf16>, vector<384x128xbf16>, vector<256x128xf32> -> vector<256x128xf32>
    %c0_155 = arith.constant 0 : index
    %c1_156 = arith.constant 1 : index
    %c0_157 = arith.constant 0 : index
    %c0_158 = arith.constant 0 : index
    %110 = vector.load %arg8[%c0_155, %c1_156, %c0_157, %c0_158] : memref<1x18x18x128xbf16, #tpu.memory_space<vmem>>, vector<1x16x16x128xbf16>
    %c0_159 = arith.constant 0 : index
    %c0_160 = arith.constant 0 : index
    %c0_161 = arith.constant 0 : index
    %c0_162 = arith.constant 0 : index
    %111 = vector.load %arg9[%c0_159, %c0_160, %c0_161, %c0_162] : memref<1x16x16x384xbf16, #tpu.memory_space<vmem>>, vector<1x16x16x128xbf16>
    tpu.vector_store %arg9[%c0_159, %c0_160, %c0_161, %c0_162], %110 {strides = array<i32>} : memref<1x16x16x384xbf16, #tpu.memory_space<vmem>>, vector<1x16x16x128xbf16>,
    %c0_163 = arith.constant 0 : index
    %c1_164 = arith.constant 1 : index
    %c1_165 = arith.constant 1 : index
    %c0_166 = arith.constant 0 : index
    %112 = vector.load %arg8[%c0_163, %c1_164, %c1_165, %c0_166] : memref<1x18x18x128xbf16, #tpu.memory_space<vmem>>, vector<1x16x16x128xbf16>
    %c0_167 = arith.constant 0 : index
    %c0_168 = arith.constant 0 : index
    %c0_169 = arith.constant 0 : index
    %c128_170 = arith.constant 128 : index
    %113 = vector.load %arg9[%c0_167, %c0_168, %c0_169, %c128_170] : memref<1x16x16x384xbf16, #tpu.memory_space<vmem>>, vector<1x16x16x128xbf16>
    tpu.vector_store %arg9[%c0_167, %c0_168, %c0_169, %c128_170], %112 {strides = array<i32>} : memref<1x16x16x384xbf16, #tpu.memory_space<vmem>>, vector<1x16x16x128xbf16>,
    %c0_171 = arith.constant 0 : index
    %c1_172 = arith.constant 1 : index
    %c2_173 = arith.constant 2 : index
    %c0_174 = arith.constant 0 : index
    %114 = vector.load %arg8[%c0_171, %c1_172, %c2_173, %c0_174] : memref<1x18x18x128xbf16, #tpu.memory_space<vmem>>, vector<1x16x16x128xbf16>
    %c0_175 = arith.constant 0 : index
    %c0_176 = arith.constant 0 : index
    %c0_177 = arith.constant 0 : index
    %c256_178 = arith.constant 256 : index
    %115 = vector.load %arg9[%c0_175, %c0_176, %c0_177, %c256_178] : memref<1x16x16x384xbf16, #tpu.memory_space<vmem>>, vector<1x16x16x128xbf16>
    tpu.vector_store %arg9[%c0_175, %c0_176, %c0_177, %c256_178], %114 {strides = array<i32>} : memref<1x16x16x384xbf16, #tpu.memory_space<vmem>>, vector<1x16x16x128xbf16>,
    %c0_179 = arith.constant 0 : index
    %c0_180 = arith.constant 0 : index
    %c0_181 = arith.constant 0 : index
    %c0_182 = arith.constant 0 : index
    %116 = vector.load %arg9[%c0_179, %c0_180, %c0_181, %c0_182] : memref<1x16x16x384xbf16, #tpu.memory_space<vmem>>, vector<1x16x16x384xbf16>
    %117 = vector.shape_cast %116 : vector<1x16x16x384xbf16> to vector<256x384xbf16>
    %c384_183 = arith.constant 384 : index
    %c0_184 = arith.constant 0 : index
    %118 = vector.load %arg4[%c384_183, %c0_184] : memref<1152x128xbf16, #tpu.memory_space<vmem>>, vector<384x128xbf16>
    %cst_185 = arith.constant dense<0.000000e+00> : vector<256x128xf32>
    %119 = tpu.matmul %117, %118, %cst_185 {dimension_numbers = #tpu.dot_dimension_numbers<[1], [0], [0], [1], [0, 0, 1, 1], [], []>} : vector<256x384xbf16>, vector<384x128xbf16>, vector<256x128xf32> -> vector<256x128xf32>
    %120 = arith.addf %109, %119 : vector<256x128xf32>
    %c0_186 = arith.constant 0 : index
    %c2_187 = arith.constant 2 : index
    %c0_188 = arith.constant 0 : index
    %c0_189 = arith.constant 0 : index
    %121 = vector.load %arg8[%c0_186, %c2_187, %c0_188, %c0_189] : memref<1x18x18x128xbf16, #tpu.memory_space<vmem>>, vector<1x16x16x128xbf16>
    %c0_190 = arith.constant 0 : index
    %c0_191 = arith.constant 0 : index
    %c0_192 = arith.constant 0 : index
    %c0_193 = arith.constant 0 : index
    %122 = vector.load %arg9[%c0_190, %c0_191, %c0_192, %c0_193] : memref<1x16x16x384xbf16, #tpu.memory_space<vmem>>, vector<1x16x16x128xbf16>
    tpu.vector_store %arg9[%c0_190, %c0_191, %c0_192, %c0_193], %121 {strides = array<i32>} : memref<1x16x16x384xbf16, #tpu.memory_space<vmem>>, vector<1x16x16x128xbf16>,
    %c0_194 = arith.constant 0 : index
    %c2_195 = arith.constant 2 : index
    %c1_196 = arith.constant 1 : index
    %c0_197 = arith.constant 0 : index
    %123 = vector.load %arg8[%c0_194, %c2_195, %c1_196, %c0_197] : memref<1x18x18x128xbf16, #tpu.memory_space<vmem>>, vector<1x16x16x128xbf16>
    %c0_198 = arith.constant 0 : index
    %c0_199 = arith.constant 0 : index
    %c0_200 = arith.constant 0 : index
    %c128_201 = arith.constant 128 : index
    %124 = vector.load %arg9[%c0_198, %c0_199, %c0_200, %c128_201] : memref<1x16x16x384xbf16, #tpu.memory_space<vmem>>, vector<1x16x16x128xbf16>
    tpu.vector_store %arg9[%c0_198, %c0_199, %c0_200, %c128_201], %123 {strides = array<i32>} : memref<1x16x16x384xbf16, #tpu.memory_space<vmem>>, vector<1x16x16x128xbf16>,
    %c0_202 = arith.constant 0 : index
    %c2_203 = arith.constant 2 : index
    %c2_204 = arith.constant 2 : index
    %c0_205 = arith.constant 0 : index
    %125 = vector.load %arg8[%c0_202, %c2_203, %c2_204, %c0_205] : memref<1x18x18x128xbf16, #tpu.memory_space<vmem>>, vector<1x16x16x128xbf16>
    %c0_206 = arith.constant 0 : index
    %c0_207 = arith.constant 0 : index
    %c0_208 = arith.constant 0 : index
    %c256_209 = arith.constant 256 : index
    %126 = vector.load %arg9[%c0_206, %c0_207, %c0_208, %c256_209] : memref<1x16x16x384xbf16, #tpu.memory_space<vmem>>, vector<1x16x16x128xbf16>
    tpu.vector_store %arg9[%c0_206, %c0_207, %c0_208, %c256_209], %125 {strides = array<i32>} : memref<1x16x16x384xbf16, #tpu.memory_space<vmem>>, vector<1x16x16x128xbf16>,
    %c0_210 = arith.constant 0 : index
    %c0_211 = arith.constant 0 : index
    %c0_212 = arith.constant 0 : index
    %c0_213 = arith.constant 0 : index
    %127 = vector.load %arg9[%c0_210, %c0_211, %c0_212, %c0_213] : memref<1x16x16x384xbf16, #tpu.memory_space<vmem>>, vector<1x16x16x384xbf16>
    %128 = vector.shape_cast %127 : vector<1x16x16x384xbf16> to vector<256x384xbf16>
    %c768_214 = arith.constant 768 : index
    %c0_215 = arith.constant 0 : index
    %129 = vector.load %arg4[%c768_214, %c0_215] : memref<1152x128xbf16, #tpu.memory_space<vmem>>, vector<384x128xbf16>
    %cst_216 = arith.constant dense<0.000000e+00> : vector<256x128xf32>
    %130 = tpu.matmul %128, %129, %cst_216 {dimension_numbers = #tpu.dot_dimension_numbers<[1], [0], [0], [1], [0, 0, 1, 1], [], []>} : vector<256x384xbf16>, vector<384x128xbf16>, vector<256x128xf32> -> vector<256x128xf32>
    %131 = arith.addf %120, %130 : vector<256x128xf32>
    %132 = vector.shape_cast %131 : vector<256x128xf32> to vector<1x16x16x128xf32>
    %cst_217 = arith.constant dense<0.000000e+00> : vector<1x128xf32>
    %133 = vector.multi_reduction <add>, %132, %cst_217 [1, 2] : vector<1x16x16x128xf32> to vector<1x128xf32>
    %cst_218 = arith.constant 2.560000e+02 : f32
    %134 = vector.broadcast %cst_218 : f32 to vector<1x128xf32>
    %135 = arith.divf %133, %134 : vector<1x128xf32>
    %136 = arith.truncf %135 : vector<1x128xf32> to vector<1x128xbf16>
    %c0_219 = arith.constant 0 : index
    %c0_220 = arith.constant 0 : index
    %137 = vector.load %arg5[%c0_219, %c0_220] : memref<128x128xbf16, #tpu.memory_space<vmem>>, vector<128x128xbf16>
    %cst_221 = arith.constant dense<0.000000e+00> : vector<1x128xf32>
    %138 = tpu.matmul %136, %137, %cst_221 {dimension_numbers = #tpu.dot_dimension_numbers<[1], [0], [0], [1], [0, 0, 1, 1], [], []>} : vector<1x128xbf16>, vector<128x128xbf16>, vector<1x128xf32> -> vector<1x128xf32>
    %cst_222 = arith.constant 0.000000e+00 : f32
    %139 = vector.broadcast %cst_222 : f32 to vector<1x128xf32>
    %140 = arith.maximumf %138, %139 : vector<1x128xf32>
    %141 = arith.truncf %140 : vector<1x128xf32> to vector<1x128xbf16>
    %c0_223 = arith.constant 0 : index
    %c0_224 = arith.constant 0 : index
    %142 = vector.load %arg6[%c0_223, %c0_224] : memref<128x128xbf16, #tpu.memory_space<vmem>>, vector<128x128xbf16>
    %cst_225 = arith.constant dense<0.000000e+00> : vector<1x128xf32>
    %143 = tpu.matmul %141, %142, %cst_225 {dimension_numbers = #tpu.dot_dimension_numbers<[1], [0], [0], [1], [0, 0, 1, 1], [], []>} : vector<1x128xbf16>, vector<128x128xbf16>, vector<1x128xf32> -> vector<1x128xf32>
    %cst_226 = arith.constant 0.000000e+00 : f32
    %144 = vector.broadcast %cst_226 : f32 to vector<1x128xf32>
    %145 = arith.subf %144, %143 : vector<1x128xf32>
    %146 = math.exp %145 : vector<1x128xf32>
    %cst_227 = arith.constant 1.000000e+00 : f32
    %147 = vector.broadcast %cst_227 : f32 to vector<1x128xf32>
    %148 = arith.addf %147, %146 : vector<1x128xf32>
    %cst_228 = arith.constant 1.000000e+00 : f32
    %149 = vector.broadcast %cst_228 : f32 to vector<1x128xf32>
    %150 = arith.divf %149, %148 : vector<1x128xf32>
    %151 = vector.shape_cast %150 : vector<1x128xf32> to vector<1x1x1x128xf32>
    %152 = vector.broadcast %151 : vector<1x1x1x128xf32> to vector<1x16x16x128xf32>
    %153 = arith.mulf %152, %132 : vector<1x16x16x128xf32>
    %154 = arith.addf %153, %0 : vector<1x16x16x128xf32>
    %cst_229 = arith.constant 0.000000e+00 : f32
    %155 = vector.broadcast %cst_229 : f32 to vector<1x16x16x128xf32>
    %156 = arith.maximumf %154, %155 : vector<1x16x16x128xf32>
    %c0_230 = arith.constant 0 : index
    %c0_231 = arith.constant 0 : index
    %c0_232 = arith.constant 0 : index
    %c0_233 = arith.constant 0 : index
    %157 = vector.load %arg7[%c0_230, %c0_231, %c0_232, %c0_233] : memref<1x16x16x128xf32, #tpu.memory_space<vmem>>, vector<1x16x16x128xf32>
    tpu.vector_store %arg7[%c0_230, %c0_231, %c0_232, %c0_233], %156 {strides = array<i32>} : memref<1x16x16x128xf32, #tpu.memory_space<vmem>>, vector<1x16x16x128xf32>,
    return
  }
  func.func @transform_0(%arg0: i32) -> (i32, i32, i32, i32) {
    %c0_i32 = arith.constant 0 : i32
    %c0_i32_0 = arith.constant 0 : i32
    %c0_i32_1 = arith.constant 0 : i32
    %c0_i32_2 = arith.constant 0 : i32
    return %arg0, %c0_i32, %c0_i32_0, %c0_i32_1 : i32, i32, i32, i32
  }
  func.func @transform_1(%arg0: i32) -> (i32, i32) {
    %c0_i32 = arith.constant 0 : i32
    %c0_i32_0 = arith.constant 0 : i32
    %c0_i32_1 = arith.constant 0 : i32
    return %c0_i32, %c0_i32_0 : i32, i32
  }
  func.func @transform_2(%arg0: i32) -> (i32, i32) {
    %c0_i32 = arith.constant 0 : i32
    %c0_i32_0 = arith.constant 0 : i32
    %c0_i32_1 = arith.constant 0 : i32
    return %c0_i32, %c0_i32_0 : i32, i32
  }
  func.func @transform_3(%arg0: i32) -> (i32, i32) {
    %c0_i32 = arith.constant 0 : i32
    %c0_i32_0 = arith.constant 0 : i32
    %c0_i32_1 = arith.constant 0 : i32
    return %c0_i32, %c0_i32_0 : i32, i32
  }
  func.func @transform_4(%arg0: i32) -> (i32, i32) {
    %c0_i32 = arith.constant 0 : i32
    %c0_i32_0 = arith.constant 0 : i32
    %c0_i32_1 = arith.constant 0 : i32
    return %c0_i32, %c0_i32_0 : i32, i32
  }
  func.func @transform_5(%arg0: i32) -> (i32, i32) {
    %c0_i32 = arith.constant 0 : i32
    %c0_i32_0 = arith.constant 0 : i32
    %c0_i32_1 = arith.constant 0 : i32
    return %c0_i32, %c0_i32_0 : i32, i32
  }
  func.func @transform_6(%arg0: i32) -> (i32, i32, i32, i32) {
    %c0_i32 = arith.constant 0 : i32
    %c0_i32_0 = arith.constant 0 : i32
    %c0_i32_1 = arith.constant 0 : i32
    %c0_i32_2 = arith.constant 0 : i32
    return %arg0, %c0_i32, %c0_i32_0, %c0_i32_1 : i32, i32, i32, i32
  }
}

</mosaic_0001>

<llo_original>
// kernel: tpu_custom_call.1
$region0: #{tpu_custom_call.1}
  #allocation0 [shape = 'u32[]', space=smem, size = 0x4, offset = 0x4, fixed_abs, tag = 'smem constant byte address 0x4 - core index']
  #allocation1 [shape = 'u32[144,128]{1,0:T(1,128)}', space=vmem, size = 0x12000, scoped, tag = 'internal scratch']
  #allocation2 [shape = 'bf16[1,18,18,128]{3,2,1,0:T(8,128)(2,1)}', space=vmem, size = 0x1b000, scoped, tag = 'scratch operand']
  #allocation3 [shape = 'bf16[1,16,16,384]{3,2,1,0:T(8,128)(2,1)}', space=vmem, size = 0x30000, scoped, tag = 'scratch operand']
  %s0 = inlined_call_operand.hbm [shape: f32[4,16,16,128], index: 0, kind: input, shape index: {}]
  %s1 = inlined_call_operand.hbm [shape: f32[8,128], index: 1, kind: input, shape index: {}]
  %s2 = inlined_call_operand.hbm [shape: bf16[1152,128], index: 2, kind: input, shape index: {}]
  %s3 = inlined_call_operand.hbm [shape: bf16[1152,128], index: 3, kind: input, shape index: {}]
  %s4 = inlined_call_operand.hbm [shape: bf16[128,128], index: 4, kind: input, shape index: {}]
  %s5 = inlined_call_operand.hbm [shape: bf16[128,128], index: 5, kind: input, shape index: {}]
  %s6 = inlined_call_operand.hbm [shape: f32[4,16,16,128], index: 6, kind: output, shape index: {}]
  %s7 = sld [smem:[#allocation0]]
  $region81: #{tpu_custom_call.1} parent=0
    _
  %s9 = ssub.s32 1, %s7
  %s10 = scalar_select 0, %s9, %s7
  $region1: #{tpu_custom_call.1} parent=0
    #allocation4 [shape = 'u8[262144]{0}', space=vmem, size = 0x40000, scoped, tag = 'input window, operand 0']
    #allocation5 [shape = 's32[2]{0}', space=sflag, size = 0x8, scoped, tag = 'scoped memory for tpu_custom_call.1']
    #allocation6 [shape = 's32[2]{0}', space=sflag, size = 0x8, scoped, tag = 'scoped memory for tpu_custom_call.1']
    #allocation7 [shape = 'u8[4096]{0}', space=vmem, size = 0x1000, scoped, tag = 'input window, operand 1, single buffered']
    #allocation8 [shape = 's32[1]{0}', space=sflag, size = 0x4, scoped, tag = 'scoped memory for tpu_custom_call.1']
    #allocation9 [shape = 'u8[294912]{0}', space=vmem, size = 0x48000, scoped, tag = 'input window, operand 2, single buffered']
    #allocation10 [shape = 'u8[294912]{0}', space=vmem, size = 0x48000, scoped, tag = 'input window, operand 3, single buffered']
    #allocation11 [shape = 's32[1]{0}', space=sflag, size = 0x4, scoped, tag = 'scoped memory for tpu_custom_call.1']
    #allocation12 [shape = 'u8[32768]{0}', space=vmem, size = 0x8000, scoped, tag = 'input window, operand 4, single buffered']
    #allocation13 [shape = 'u8[32768]{0}', space=vmem, size = 0x8000, scoped, tag = 'input window, operand 5, single buffered']
    #allocation14 [shape = 's32[1]{0}', space=sflag, size = 0x4, scoped, tag = 'scoped memory for tpu_custom_call.1']
    #allocation15 [shape = 'u8[262144]{0}', space=vmem, size = 0x40000, scoped, tag = 'output window, operand 0']
    %11 = vsyncpa [#allocation5], 0
    %s12 = scalar_lea.sflag [#allocation5], 1
    %13 = vsyncpa %s12, 0
    %14 = vsyncpa [#allocation8], 0
    %15 = vsyncpa [#allocation11], 0
    %16 = vsyncpa [#allocation14], 0
    %17 = vsyncpa [#allocation6], 0
    %s18 = scalar_lea.sflag [#allocation6], 1
    %19 = vsyncpa %s18, 0
    loop: start=0, step=1, limit=6
    $region2: #{tpu_custom_call.1} parent=1 // loop_pre_header
      _
    $region3: #{tpu_custom_call.1} parent=1 // loop_header
      %s21 = sphi 0, %s25
      %p22 = scmp.ge.s32.totalorder %s21, 6
      %s31 = sphi 0, %s33
      %s34 = sphi 0, %s31
      %s35 = sphi 0, %s34
      %s51 = sphi 0, %s35
      %s55 = sphi 0, %s55
      %s57 = sphi 0, %s55
      %s58 = sphi 0, %s57
      %s72 = sphi 0, %s58
      %s76 = sphi 0, %s76
      %s78 = sphi 0, %s76
      %s79 = sphi 0, %s78
      %s93 = sphi 0, %s79
      %s97 = sphi 0, %s97
      %s99 = sphi 0, %s97
      %s100 = sphi 0, %s99
      %s114 = sphi 0, %s100
      %s118 = sphi 0, %s118
      %s120 = sphi 0, %s118
      %s121 = sphi 0, %s120
      %s135 = sphi 0, %s121
      %s139 = sphi 0, %s139
      %s141 = sphi 0, %s139
      %s142 = sphi 0, %s141
      %s156 = sphi 0, %s142
      %s162 = sphi 0, %s164
      %s165 = sphi 0, %s162
      %s166 = sphi 0, %s165
      %s182 = sphi 0, %s166
    $region4: #{tpu_custom_call.1} parent=1 // loop_header_branch
      %24 = sbr.rel (%p22) target = $region8
    $region5: #{tpu_custom_call.1} parent=1 // loop_body
      %s26 = ssub.s32 %s21, 1
      %s27 = ssub.s32 %s21, 2
      %s28 = sadd.s32 %s21, 1
      %s29 = ssub.s32 %s21, %s28
      %p30 = scmp.eq.s32.totalorder %s29, 0
      %s32 = sadd.s32 %s31, 1
      %s33 = scalar_select %p30, %s31, %s32
      %p36 = pneg %p30
      %p37 = scmp.eq.s32.totalorder %s21, 3
      %p38 = por %p36, %p37
      %p39 = scmp.ne.s32.totalorder %s31, %s34
      %p40 = scmp.eq.s32.totalorder %s21, 0
      %p41 = por %p39, %p40
      %p42 = scmp.ne.s32.totalorder %s31, %s34
      %p43 = scmp.eq.s32.totalorder %s26, 3
      %p44 = por %p42, %p43
      %p45 = scmp.ne.s32.totalorder %s34, %s35
      %p46 = scmp.eq.s32.totalorder %s26, 0
      %p47 = por %p45, %p46
      %p48 = scmp.ne.s32.totalorder %s34, %s35
      %p49 = scmp.eq.s32.totalorder %s27, 3
      %p50 = por %p48, %p49
      %p52 = scmp.ne.s32.totalorder %s35, %s51
      %p53 = scmp.eq.s32.totalorder %s27, 0
      %p54 = por %p52, %p53
      %s56 = sadd.s32 %s55, 1
      %p59 = scmp.eq.s32.totalorder %s21, 3
      %p60 = scmp.ne.s32.totalorder %s55, %s57
      %p61 = scmp.eq.s32.totalorder %s21, 0
      %p62 = por %p60, %p61
      %p63 = scmp.ne.s32.totalorder %s55, %s57
      %p64 = scmp.eq.s32.totalorder %s26, 3
      %p65 = por %p63, %p64
      %p66 = scmp.ne.s32.totalorder %s57, %s58
      %p67 = scmp.eq.s32.totalorder %s26, 0
      %p68 = por %p66, %p67
      %p69 = scmp.ne.s32.totalorder %s57, %s58
      %p70 = scmp.eq.s32.totalorder %s27, 3
      %p71 = por %p69, %p70
      %p73 = scmp.ne.s32.totalorder %s58, %s72
      %p74 = scmp.eq.s32.totalorder %s27, 0
      %p75 = por %p73, %p74
      %s77 = sadd.s32 %s76, 1
      %p80 = scmp.eq.s32.totalorder %s21, 3
      %p81 = scmp.ne.s32.totalorder %s76, %s78
      %p82 = scmp.eq.s32.totalorder %s21, 0
      %p83 = por %p81, %p82
      %p84 = scmp.ne.s32.totalorder %s76, %s78
      %p85 = scmp.eq.s32.totalorder %s26, 3
      %p86 = por %p84, %p85
      %p87 = scmp.ne.s32.totalorder %s78, %s79
      %p88 = scmp.eq.s32.totalorder %s26, 0
      %p89 = por %p87, %p88
      %p90 = scmp.ne.s32.totalorder %s78, %s79
      %p91 = scmp.eq.s32.totalorder %s27, 3
      %p92 = por %p90, %p91
      %p94 = scmp.ne.s32.totalorder %s79, %s93
      %p95 = scmp.eq.s32.totalorder %s27, 0
      %p96 = por %p94, %p95
      %s98 = sadd.s32 %s97, 1
      %p101 = scmp.eq.s32.totalorder %s21, 3
      %p102 = scmp.ne.s32.totalorder %s97, %s99
      %p103 = scmp.eq.s32.totalorder %s21, 0
      %p104 = por %p102, %p103
      %p105 = scmp.ne.s32.totalorder %s97, %s99
      %p106 = scmp.eq.s32.totalorder %s26, 3
      %p107 = por %p105, %p106
      %p108 = scmp.ne.s32.totalorder %s99, %s100
      %p109 = scmp.eq.s32.totalorder %s26, 0
      %p110 = por %p108, %p109
      %p111 = scmp.ne.s32.totalorder %s99, %s100
      %p112 = scmp.eq.s32.totalorder %s27, 3
      %p113 = por %p111, %p112
      %p115 = scmp.ne.s32.totalorder %s100, %s114
      %p116 = scmp.eq.s32.totalorder %s27, 0
      %p117 = por %p115, %p116
      %s119 = sadd.s32 %s118, 1
      %p122 = scmp.eq.s32.totalorder %s21, 3
      %p123 = scmp.ne.s32.totalorder %s118, %s120
      %p124 = scmp.eq.s32.totalorder %s21, 0
      %p125 = por %p123, %p124
      %p126 = scmp.ne.s32.totalorder %s118, %s120
      %p127 = scmp.eq.s32.totalorder %s26, 3
      %p128 = por %p126, %p127
      %p129 = scmp.ne.s32.totalorder %s120, %s121
      %p130 = scmp.eq.s32.totalorder %s26, 0
      %p131 = por %p129, %p130
      %p132 = scmp.ne.s32.totalorder %s120, %s121
      %p133 = scmp.eq.s32.totalorder %s27, 3
      %p134 = por %p132, %p133
      %p136 = scmp.ne.s32.totalorder %s121, %s135
      %p137 = scmp.eq.s32.totalorder %s27, 0
      %p138 = por %p136, %p137
      %s140 = sadd.s32 %s139, 1
      %p143 = scmp.eq.s32.totalorder %s21, 3
      %p144 = scmp.ne.s32.totalorder %s139, %s141
      %p145 = scmp.eq.s32.totalorder %s21, 0
      %p146 = por %p144, %p145
      %p147 = scmp.ne.s32.totalorder %s139, %s141
      %p148 = scmp.eq.s32.totalorder %s26, 3
      %p149 = por %p147, %p148
      %p150 = scmp.ne.s32.totalorder %s141, %s142
      %p151 = scmp.eq.s32.totalorder %s26, 0
      %p152 = por %p150, %p151
      %p153 = scmp.ne.s32.totalorder %s141, %s142
      %p154 = scmp.eq.s32.totalorder %s27, 3
      %p155 = por %p153, %p154
      %p157 = scmp.ne.s32.totalorder %s142, %s156
      %p158 = scmp.eq.s32.totalorder %s27, 0
      %p159 = por %p157, %p158
      %s160 = ssub.s32 %s21, %s28
      %p161 = scmp.eq.s32.totalorder %s160, 0
      %s163 = sadd.s32 %s162, 1
      %s164 = scalar_select %p161, %s162, %s163
      %p167 = pneg %p161
      %p168 = scmp.eq.s32.totalorder %s21, 3
      %p169 = por %p167, %p168
      %p170 = scmp.ne.s32.totalorder %s162, %s165
      %p171 = scmp.eq.s32.totalorder %s21, 0
      %p172 = por %p170, %p171
      %p173 = scmp.ne.s32.totalorder %s162, %s165
      %p174 = scmp.eq.s32.totalorder %s26, 3
      %p175 = por %p173, %p174
      %p176 = scmp.ne.s32.totalorder %s165, %s166
      %p177 = scmp.eq.s32.totalorder %s26, 0
      %p178 = por %p176, %p177
      %p179 = scmp.ne.s32.totalorder %s165, %s166
      %p180 = scmp.eq.s32.totalorder %s27, 3
      %p181 = por %p179, %p180
      %p183 = scmp.ne.s32.totalorder %s166, %s182
      %p184 = scmp.eq.s32.totalorder %s27, 0
      %p185 = por %p183, %p184
      %p186 = scmp.le.s32.totalorder 1, %s21
      %p187 = scmp.lt.s32.totalorder %s21, 5
      %p188 = pnand %p186, %p187
      %p189 = pneg %p188
      // Predicated region
      $region9: #{tpu_custom_call.1} parent=5 // pred_check
        _
      $region10: #{tpu_custom_call.1} parent=5 // pred_check_branch
        %191 = sbr.rel (%p188) target = $region12
      $region11: #{tpu_custom_call.1} parent=5 // pred_region
        %s192 = ssub.s32 %s21, 1
        // Predicated region
        $region13: #{tpu_custom_call.1} parent=11 // pred_check
          %p193 = pneg %p68
        $region14: #{tpu_custom_call.1} parent=11 // pred_check_branch
          %195 = sbr.rel (%p193) target = $region16
        $region15: #{tpu_custom_call.1} parent=11 // pred_region
          %s197 = ssub.s32 128, 128
          %198 = vsyncadd [#allocation8], %s197
          %s200 = sshll.u32 [#allocation7], 4
          %s201 = int_to_ptr.vmem [resolvable:$true] %s200
          %203 = dma.hbm_to_vmem [thread:$0]  %s1, 128, %s201, [#allocation8]
        $region16: #{tpu_custom_call.1} parent=11 // pred_fallthru
          _
        // Predicated region
        $region17: #{tpu_custom_call.1} parent=11 // pred_check
          %p204 = pneg %p89
        $region18: #{tpu_custom_call.1} parent=11 // pred_check_branch
          %206 = sbr.rel (%p204) target = $region20
        $region19: #{tpu_custom_call.1} parent=11 // pred_region
          %s208 = ssub.s32 9216, 9216
          %209 = vsyncadd [#allocation8], %s208
          %s210 = sshll.u32 [#allocation9], 4
          %s211 = int_to_ptr.vmem [resolvable:$true] %s210
          %216 = dma.hbm_to_vmem [thread:$0]  %s2, 9216, %s211, [#allocation8], 64, 64, 4
        $region20: #{tpu_custom_call.1} parent=11 // pred_fallthru
          _
        // Predicated region
        $region21: #{tpu_custom_call.1} parent=11 // pred_check
          %p217 = pneg %p110
        $region22: #{tpu_custom_call.1} parent=11 // pred_check_branch
          %219 = sbr.rel (%p217) target = $region24
        $region23: #{tpu_custom_call.1} parent=11 // pred_region
          %s221 = ssub.s32 9216, 9216
          %222 = vsyncadd [#allocation11], %s221
          %s223 = sshll.u32 [#allocation10], 4
          %s224 = int_to_ptr.vmem [resolvable:$true] %s223
          %229 = dma.hbm_to_vmem [thread:$0]  %s3, 9216, %s224, [#allocation11], 64, 64, 4
        $region24: #{tpu_custom_call.1} parent=11 // pred_fallthru
          _
        // Predicated region
        $region25: #{tpu_custom_call.1} parent=11 // pred_check
          %p230 = pneg %p131
        $region26: #{tpu_custom_call.1} parent=11 // pred_check_branch
          %232 = sbr.rel (%p230) target = $region28
        $region27: #{tpu_custom_call.1} parent=11 // pred_region
          %s234 = ssub.s32 1024, 1024
          %235 = vsyncadd [#allocation11], %s234
          %s236 = sshll.u32 [#allocation12], 4
          %s237 = int_to_ptr.vmem [resolvable:$true] %s236
          %242 = dma.hbm_to_vmem [thread:$0]  %s4, 1024, %s237, [#allocation11], 64, 64, 4
        $region28: #{tpu_custom_call.1} parent=11 // pred_fallthru
          _
        // Predicated region
        $region29: #{tpu_custom_call.1} parent=11 // pred_check
          %p243 = pneg %p152
        $region30: #{tpu_custom_call.1} parent=11 // pred_check_branch
          %245 = sbr.rel (%p243) target = $region32
        $region31: #{tpu_custom_call.1} parent=11 // pred_region
          %s247 = ssub.s32 1024, 1024
          %248 = vsyncadd [#allocation14], %s247
          %s249 = sshll.u32 [#allocation13], 4
          %s250 = int_to_ptr.vmem [resolvable:$true] %s249
          %255 = dma.hbm_to_vmem [thread:$0]  %s5, 1024, %s250, [#allocation14], 64, 64, 4
        $region32: #{tpu_custom_call.1} parent=11 // pred_fallthru
          _
      $region12: #{tpu_custom_call.1} parent=5 // pred_fallthru
        _
      %p256 = scmp.lt.s32.totalorder %s21, 4
      // Predicated region
      $region33: #{tpu_custom_call.1} parent=5 // pred_check
        %p257 = pneg %p256
      $region34: #{tpu_custom_call.1} parent=5 // pred_check_branch
        %259 = sbr.rel (%p257) target = $region36
      $region35: #{tpu_custom_call.1} parent=5 // pred_region
        // Predicated region
        $region37: #{tpu_custom_call.1} parent=35 // pred_check
          %p260 = pneg %p41
        $region38: #{tpu_custom_call.1} parent=35 // pred_check_branch
          %262 = sbr.rel (%p260) target = $region40
        $region39: #{tpu_custom_call.1} parent=35 // pred_region
          %s263 = sand.u32 %s31, 1
          %s264 = scalar_lea.sflag [#allocation5], %s263
          %s265 = sand.u32 %s31, 1
          %s266 = smul.addr %s265, 256
          %s267 = scalar_lea.vmem [#allocation4], %s266
          %s269 = ssub.s32 4096, 4096
          %270 = vsyncadd %s264, %s269
          %s271 = smul.addr %s21, 32
          %s272 = smul.addr %s271, 128
          %s273 = scalar_lea.hbm %s0, %s272
          %s274 = sshll.u32 %s267, 4
          %s275 = int_to_ptr.vmem [resolvable:$true] %s274
          %280 = dma.hbm_to_vmem [thread:$0]  %s273, 4096, %s275, %s264, 128, 128, 8
        $region40: #{tpu_custom_call.1} parent=35 // pred_fallthru
          _
      $region36: #{tpu_custom_call.1} parent=5 // pred_fallthru
        _
      %p281 = scmp.le.s32.totalorder 1, %s21
      %p282 = scmp.lt.s32.totalorder %s21, 5
      %p283 = pnand %p281, %p282
      %p284 = pneg %p283
      // Predicated region
      $region41: #{tpu_custom_call.1} parent=5 // pred_check
        _
      $region42: #{tpu_custom_call.1} parent=5 // pred_check_branch
        %286 = sbr.rel (%p283) target = $region44
      $region43: #{tpu_custom_call.1} parent=5 // pred_region
        %s287 = ssub.s32 %s21, 1
        %s288 = sand.u32 %s34, 1
        %s289 = scalar_lea.sflag [#allocation5], %s288
        %s290 = sand.u32 %s34, 1
        %s291 = smul.addr %s290, 256
        %s292 = scalar_lea.vmem [#allocation4], %s291
        // Predicated region
        $region45: #{tpu_custom_call.1} parent=43 // pred_check
          %p293 = pneg %p47
        $region46: #{tpu_custom_call.1} parent=43 // pred_check_branch
          %295 = sbr.rel (%p293) target = $region48
        $region47: #{tpu_custom_call.1} parent=43 // pred_region
          %296 = dma.done %s289, 4096
        $region48: #{tpu_custom_call.1} parent=43 // pred_fallthru
          _
        // Predicated region
        $region49: #{tpu_custom_call.1} parent=43 // pred_check
          %p297 = pneg %p68
        $region50: #{tpu_custom_call.1} parent=43 // pred_check_branch
          %299 = sbr.rel (%p297) target = $region52
        $region51: #{tpu_custom_call.1} parent=43 // pred_region
          %300 = dma.done [#allocation8], 128
        $region52: #{tpu_custom_call.1} parent=43 // pred_fallthru
          _
        // Predicated region
        $region53: #{tpu_custom_call.1} parent=43 // pred_check
          %p301 = pneg %p89
        $region54: #{tpu_custom_call.1} parent=43 // pred_check_branch
          %303 = sbr.rel (%p301) target = $region56
        $region55: #{tpu_custom_call.1} parent=43 // pred_region
          %304 = dma.done [#allocation8], 9216
        $region56: #{tpu_custom_call.1} parent=43 // pred_fallthru
          _
        // Predicated region
        $region57: #{tpu_custom_call.1} parent=43 // pred_check
          %p305 = pneg %p110
        $region58: #{tpu_custom_call.1} parent=43 // pred_check_branch
          %307 = sbr.rel (%p305) target = $region60
        $region59: #{tpu_custom_call.1} parent=43 // pred_region
          %308 = dma.done [#allocation11], 9216
        $region60: #{tpu_custom_call.1} parent=43 // pred_fallthru
          _
        // Predicated region
        $region61: #{tpu_custom_call.1} parent=43 // pred_check
          %p309 = pneg %p131
        $region62: #{tpu_custom_call.1} parent=43 // pred_check_branch
          %311 = sbr.rel (%p309) target = $region64
        $region63: #{tpu_custom_call.1} parent=43 // pred_region
          %312 = dma.done [#allocation11], 1024
        $region64: #{tpu_custom_call.1} parent=43 // pred_fallthru
          _
        // Predicated region
        $region65: #{tpu_custom_call.1} parent=43 // pred_check
          %p313 = pneg %p152
        $region66: #{tpu_custom_call.1} parent=43 // pred_check_branch
          %315 = sbr.rel (%p313) target = $region68
        $region67: #{tpu_custom_call.1} parent=43 // pred_region
          %316 = dma.done [#allocation14], 1024
        $region68: #{tpu_custom_call.1} parent=43 // pred_fallthru
          _
        %s317 = sand.u32 %s34, 1
        %s318 = scalar_lea.sflag [#allocation5], %s317
        %s319 = sand.u32 %s34, 1
        %s320 = smul.addr %s319, 256
        %s321 = scalar_lea.vmem [#allocation4], %s320
        %p322 = pneg %p47
        %p323 = pneg %p44
        %p324 = pneg %p68
        %p325 = pneg %p65
        %p326 = pneg %p89
        %p327 = pneg %p86
        %p328 = pneg %p110
        %p329 = pneg %p107
        %p330 = pneg %p131
        %p331 = pneg %p128
        %p332 = pneg %p152
        %p333 = pneg %p149
        %p334 = pneg %p178
        %p335 = pneg %p175
        %s336 = sand.u32 %s165, 1
        %s337 = scalar_lea.sflag [#allocation6], %s336
        %s338 = sand.u32 %s165, 1
        %s339 = smul.addr %s338, 256
        %s340 = scalar_lea.vmem [#allocation15], %s339
        %v342 = vld [vmem:[%s292] sm:$0xff]
        %v343 = vld [vmem:[%s292 + $0x8] sm:$0xff]
        %v344 = vld [vmem:[%s292 + $0x10] sm:$0xff]
        %v345 = vld [vmem:[%s292 + $0x18] sm:$0xff]
        %v346 = vld [vmem:[%s292 + $0x20] sm:$0xff]
        %v347 = vld [vmem:[%s292 + $0x28] sm:$0xff]
        %v348 = vld [vmem:[%s292 + $0x30] sm:$0xff]
        %v349 = vld [vmem:[%s292 + $0x38] sm:$0xff]
        %v350 = vld [vmem:[%s292 + $0x40] sm:$0xff]
        %v351 = vld [vmem:[%s292 + $0x48] sm:$0xff]
        %v352 = vld [vmem:[%s292 + $0x50] sm:$0xff]
        %v353 = vld [vmem:[%s292 + $0x58] sm:$0xff]
        %v354 = vld [vmem:[%s292 + $0x60] sm:$0xff]
        %v355 = vld [vmem:[%s292 + $0x68] sm:$0xff]
        %v356 = vld [vmem:[%s292 + $0x70] sm:$0xff]
        %v357 = vld [vmem:[%s292 + $0x78] sm:$0xff]
        %v358 = vld [vmem:[%s292 + $0x80] sm:$0xff]
        %v359 = vld [vmem:[%s292 + $0x88] sm:$0xff]
        %v360 = vld [vmem:[%s292 + $0x90] sm:$0xff]
        %v361 = vld [vmem:[%s292 + $0x98] sm:$0xff]
        %v362 = vld [vmem:[%s292 + $0xa0] sm:$0xff]
        %v363 = vld [vmem:[%s292 + $0xa8] sm:$0xff]
        %v364 = vld [vmem:[%s292 + $0xb0] sm:$0xff]
        %v365 = vld [vmem:[%s292 + $0xb8] sm:$0xff]
        %v366 = vld [vmem:[%s292 + $0xc0] sm:$0xff]
        %v367 = vld [vmem:[%s292 + $0xc8] sm:$0xff]
        %v368 = vld [vmem:[%s292 + $0xd0] sm:$0xff]
        %v369 = vld [vmem:[%s292 + $0xd8] sm:$0xff]
        %v370 = vld [vmem:[%s292 + $0xe0] sm:$0xff]
        %v371 = vld [vmem:[%s292 + $0xe8] sm:$0xff]
        %v372 = vld [vmem:[%s292 + $0xf0] sm:$0xff]
        %v373 = vld [vmem:[%s292 + $0xf8] sm:$0xff]
        %v374 = vld [vmem:[#allocation7] sm:$0xff]
        %v375 = vadd.f32 %v342, %v343
        %v376 = vadd.f32 %v375, %v344
        %v377 = vadd.f32 %v376, %v345
        %v378 = vadd.f32 %v377, %v346
        %v379 = vadd.f32 %v378, %v347
        %v380 = vadd.f32 %v379, %v348
        %v381 = vadd.f32 %v380, %v349
        %v382 = vadd.f32 %v381, %v350
        %v383 = vadd.f32 %v382, %v351
        %v384 = vadd.f32 %v383, %v352
        %v385 = vadd.f32 %v384, %v353
        %v386 = vadd.f32 %v385, %v354
        %v387 = vadd.f32 %v386, %v355
        %v388 = vadd.f32 %v387, %v356
        %v389 = vadd.f32 %v388, %v357
        %v390 = vadd.f32 %v389, %v358
        %v391 = vadd.f32 %v390, %v359
        %v392 = vadd.f32 %v391, %v360
        %v393 = vadd.f32 %v392, %v361
        %v394 = vadd.f32 %v393, %v362
        %v395 = vadd.f32 %v394, %v363
        %v396 = vadd.f32 %v395, %v364
        %v397 = vadd.f32 %v396, %v365
        %v398 = vadd.f32 %v397, %v366
        %v399 = vadd.f32 %v398, %v367
        %v400 = vadd.f32 %v399, %v368
        %v401 = vadd.f32 %v400, %v369
        %v402 = vadd.f32 %v401, %v370
        %v403 = vadd.f32 %v402, %v371
        %v404 = vadd.f32 %v403, %v372
        %v405 = vadd.f32 %v404, %v373
        %v406 = vrot.slane %v405, 4
        %v407 = vadd.f32 %v405, %v406
        %v408 = vrot.slane %v407, 2
        %v409 = vadd.f32 %v407, %v408
        %v410 = vrot.slane %v409, 1
        %v411 = vadd.f32 %v409, %v410
        %v412 = vrcp.pop 256.0
        %v413 = vmul.f32 %v411, %v412
        %v414 = vmul.f32 %v342, %v342
        %v415 = vmul.f32 %v343, %v343
        %v416 = vmul.f32 %v344, %v344
        %v417 = vmul.f32 %v345, %v345
        %v418 = vmul.f32 %v346, %v346
        %v419 = vmul.f32 %v347, %v347
        %v420 = vmul.f32 %v348, %v348
        %v421 = vmul.f32 %v349, %v349
        %v422 = vmul.f32 %v350, %v350
        %v423 = vmul.f32 %v351, %v351
        %v424 = vmul.f32 %v352, %v352
        %v425 = vmul.f32 %v353, %v353
        %v426 = vmul.f32 %v354, %v354
        %v427 = vmul.f32 %v355, %v355
        %v428 = vmul.f32 %v356, %v356
        %v429 = vmul.f32 %v357, %v357
        %v430 = vmul.f32 %v358, %v358
        %v431 = vmul.f32 %v359, %v359
        %v432 = vmul.f32 %v360, %v360
        %v433 = vmul.f32 %v361, %v361
        %v434 = vmul.f32 %v362, %v362
        %v435 = vmul.f32 %v363, %v363
        %v436 = vmul.f32 %v364, %v364
        %v437 = vmul.f32 %v365, %v365
        %v438 = vmul.f32 %v366, %v366
        %v439 = vmul.f32 %v367, %v367
        %v440 = vmul.f32 %v368, %v368
        %v441 = vmul.f32 %v369, %v369
        %v442 = vmul.f32 %v370, %v370
        %v443 = vmul.f32 %v371, %v371
        %v444 = vmul.f32 %v372, %v372
        %v445 = vmul.f32 %v373, %v373
        %v446 = vadd.f32 %v414, %v415
        %v447 = vadd.f32 %v446, %v416
        %v448 = vadd.f32 %v447, %v417
        %v449 = vadd.f32 %v448, %v418
        %v450 = vadd.f32 %v449, %v419
        %v451 = vadd.f32 %v450, %v420
        %v452 = vadd.f32 %v451, %v421
        %v453 = vadd.f32 %v452, %v422
        %v454 = vadd.f32 %v453, %v423
        %v455 = vadd.f32 %v454, %v424
        %v456 = vadd.f32 %v455, %v425
        %v457 = vadd.f32 %v456, %v426
        %v458 = vadd.f32 %v457, %v427
        %v459 = vadd.f32 %v458, %v428
        %v460 = vadd.f32 %v459, %v429
        %v461 = vadd.f32 %v460, %v430
        %v462 = vadd.f32 %v461, %v431
        %v463 = vadd.f32 %v462, %v432
        %v464 = vadd.f32 %v463, %v433
        %v465 = vadd.f32 %v464, %v434
        %v466 = vadd.f32 %v465, %v435
        %v467 = vadd.f32 %v466, %v436
        %v468 = vadd.f32 %v467, %v437
        %v469 = vadd.f32 %v468, %v438
        %v470 = vadd.f32 %v469, %v439
        %v471 = vadd.f32 %v470, %v440
        %v472 = vadd.f32 %v471, %v441
        %v473 = vadd.f32 %v472, %v442
        %v474 = vadd.f32 %v473, %v443
        %v475 = vadd.f32 %v474, %v444
        %v476 = vadd.f32 %v475, %v445
        %v477 = vrot.slane %v476, 4
        %v478 = vadd.f32 %v476, %v477
        %v479 = vrot.slane %v478, 2
        %v480 = vadd.f32 %v478, %v479
        %v481 = vrot.slane %v480, 1
        %v482 = vadd.f32 %v480, %v481
        %v483 = vmul.f32 %v482, %v412
        %v484 = vmul.f32 %v413, %v413
        %v485 = vsub.f32 %v483, %v484
        %v486 = vmax.f32 %v485, 0.0
        %v487 = vsub.f32 %v342, %v413
        %v488 = vsub.f32 %v343, %v413
        %v489 = vsub.f32 %v344, %v413
        %v490 = vsub.f32 %v345, %v413
        %v491 = vsub.f32 %v346, %v413
        %v492 = vsub.f32 %v347, %v413
        %v493 = vsub.f32 %v348, %v413
        %v494 = vsub.f32 %v349, %v413
        %v495 = vsub.f32 %v350, %v413
        %v496 = vsub.f32 %v351, %v413
        %v497 = vsub.f32 %v352, %v413
        %v498 = vsub.f32 %v353, %v413
        %v499 = vsub.f32 %v354, %v413
        %v500 = vsub.f32 %v355, %v413
        %v501 = vsub.f32 %v356, %v413
        %v502 = vsub.f32 %v357, %v413
        %v503 = vsub.f32 %v358, %v413
        %v504 = vsub.f32 %v359, %v413
        %v505 = vsub.f32 %v360, %v413
        %v506 = vsub.f32 %v361, %v413
        %v507 = vsub.f32 %v362, %v413
        %v508 = vsub.f32 %v363, %v413
        %v509 = vsub.f32 %v364, %v413
        %v510 = vsub.f32 %v365, %v413
        %v511 = vsub.f32 %v366, %v413
        %v512 = vsub.f32 %v367, %v413
        %v513 = vsub.f32 %v368, %v413
        %v514 = vsub.f32 %v369, %v413
        %v515 = vsub.f32 %v370, %v413
        %v516 = vsub.f32 %v371, %v413
        %v517 = vsub.f32 %v372, %v413
        %v518 = vsub.f32 %v373, %v413
        %v519 = vadd.f32 %v486, 1e-05
        %v520 = vrsqrt.pop %v519
        %v521 = vmul.f32 %v487, %v520
        %v522 = vmul.f32 %v488, %v520
        %v523 = vmul.f32 %v489, %v520
        %v524 = vmul.f32 %v490, %v520
        %v525 = vmul.f32 %v491, %v520
        %v526 = vmul.f32 %v492, %v520
        %v527 = vmul.f32 %v493, %v520
        %v528 = vmul.f32 %v494, %v520
        %v529 = vmul.f32 %v495, %v520
        %v530 = vmul.f32 %v496, %v520
        %v531 = vmul.f32 %v497, %v520
        %v532 = vmul.f32 %v498, %v520
        %v533 = vmul.f32 %v499, %v520
        %v534 = vmul.f32 %v500, %v520
        %v535 = vmul.f32 %v501, %v520
        %v536 = vmul.f32 %v502, %v520
        %v537 = vmul.f32 %v503, %v520
        %v538 = vmul.f32 %v504, %v520
        %v539 = vmul.f32 %v505, %v520
        %v540 = vmul.f32 %v506, %v520
        %v541 = vmul.f32 %v507, %v520
        %v542 = vmul.f32 %v508, %v520
        %v543 = vmul.f32 %v509, %v520
        %v544 = vmul.f32 %v510, %v520
        %v545 = vmul.f32 %v511, %v520
        %v546 = vmul.f32 %v512, %v520
        %v547 = vmul.f32 %v513, %v520
        %v548 = vmul.f32 %v514, %v520
        %v549 = vmul.f32 %v515, %v520
        %v550 = vmul.f32 %v516, %v520
        %v551 = vmul.f32 %v517, %v520
        %v552 = vmul.f32 %v518, %v520
        %v553 = vlaneseq
        %v554 = vshrl.u32 %v553, 7
        %v555 = vsub.s32 0, %v554
        %v556 = vrot.slane %v374, %v555
        %v557 = vmul.f32 %v521, %v556
        %v558 = vmul.f32 %v522, %v556
        %v559 = vmul.f32 %v523, %v556
        %v560 = vmul.f32 %v524, %v556
        %v561 = vmul.f32 %v525, %v556
        %v562 = vmul.f32 %v526, %v556
        %v563 = vmul.f32 %v527, %v556
        %v564 = vmul.f32 %v528, %v556
        %v565 = vmul.f32 %v529, %v556
        %v566 = vmul.f32 %v530, %v556
        %v567 = vmul.f32 %v531, %v556
        %v568 = vmul.f32 %v532, %v556
        %v569 = vmul.f32 %v533, %v556
        %v570 = vmul.f32 %v534, %v556
        %v571 = vmul.f32 %v535, %v556
        %v572 = vmul.f32 %v536, %v556
        %v573 = vmul.f32 %v537, %v556
        %v574 = vmul.f32 %v538, %v556
        %v575 = vmul.f32 %v539, %v556
        %v576 = vmul.f32 %v540, %v556
        %v577 = vmul.f32 %v541, %v556
        %v578 = vmul.f32 %v542, %v556
        %v579 = vmul.f32 %v543, %v556
        %v580 = vmul.f32 %v544, %v556
        %v581 = vmul.f32 %v545, %v556
        %v582 = vmul.f32 %v546, %v556
        %v583 = vmul.f32 %v547, %v556
        %v584 = vmul.f32 %v548, %v556
        %v585 = vmul.f32 %v549, %v556
        %v586 = vmul.f32 %v550, %v556
        %v587 = vmul.f32 %v551, %v556
        %v588 = vmul.f32 %v552, %v556
        %v589 = vlaneseq
        %v590 = vshrl.u32 %v589, 7
        %v591 = vsub.s32 1, %v590
        %v592 = vrot.slane %v374, %v591
        %v593 = vadd.f32 %v557, %v592
        %v594 = vadd.f32 %v558, %v592
        %v595 = vadd.f32 %v559, %v592
        %v596 = vadd.f32 %v560, %v592
        %v597 = vadd.f32 %v561, %v592
        %v598 = vadd.f32 %v562, %v592
        %v599 = vadd.f32 %v563, %v592
        %v600 = vadd.f32 %v564, %v592
        %v601 = vadd.f32 %v565, %v592
        %v602 = vadd.f32 %v566, %v592
        %v603 = vadd.f32 %v567, %v592
        %v604 = vadd.f32 %v568, %v592
        %v605 = vadd.f32 %v569, %v592
        %v606 = vadd.f32 %v570, %v592
        %v607 = vadd.f32 %v571, %v592
        %v608 = vadd.f32 %v572, %v592
        %v609 = vadd.f32 %v573, %v592
        %v610 = vadd.f32 %v574, %v592
        %v611 = vadd.f32 %v575, %v592
        %v612 = vadd.f32 %v576, %v592
        %v613 = vadd.f32 %v577, %v592
        %v614 = vadd.f32 %v578, %v592
        %v615 = vadd.f32 %v579, %v592
        %v616 = vadd.f32 %v580, %v592
        %v617 = vadd.f32 %v581, %v592
        %v618 = vadd.f32 %v582, %v592
        %v619 = vadd.f32 %v583, %v592
        %v620 = vadd.f32 %v584, %v592
        %v621 = vadd.f32 %v585, %v592
        %v622 = vadd.f32 %v586, %v592
        %v623 = vadd.f32 %v587, %v592
        %v624 = vadd.f32 %v588, %v592
        %v625 = vlaneseq
        %v626 = vshrl.u32 %v625, 7
        %v627 = vsub.s32 2, %v626
        %v628 = vrot.slane %v374, %v627
        %v629 = vmul.f32 %v342, %v628
        %v630 = vmul.f32 %v343, %v628
        %v631 = vmul.f32 %v344, %v628
        %v632 = vmul.f32 %v345, %v628
        %v633 = vmul.f32 %v346, %v628
        %v634 = vmul.f32 %v347, %v628
        %v635 = vmul.f32 %v348, %v628
        %v636 = vmul.f32 %v349, %v628
        %v637 = vmul.f32 %v350, %v628
        %v638 = vmul.f32 %v351, %v628
        %v639 = vmul.f32 %v352, %v628
        %v640 = vmul.f32 %v353, %v628
        %v641 = vmul.f32 %v354, %v628
        %v642 = vmul.f32 %v355, %v628
        %v643 = vmul.f32 %v356, %v628
        %v644 = vmul.f32 %v357, %v628
        %v645 = vmul.f32 %v358, %v628
        %v646 = vmul.f32 %v359, %v628
        %v647 = vmul.f32 %v360, %v628
        %v648 = vmul.f32 %v361, %v628
        %v649 = vmul.f32 %v362, %v628
        %v650 = vmul.f32 %v363, %v628
        %v651 = vmul.f32 %v364, %v628
        %v652 = vmul.f32 %v365, %v628
        %v653 = vmul.f32 %v366, %v628
        %v654 = vmul.f32 %v367, %v628
        %v655 = vmul.f32 %v368, %v628
        %v656 = vmul.f32 %v369, %v628
        %v657 = vmul.f32 %v370, %v628
        %v658 = vmul.f32 %v371, %v628
        %v659 = vmul.f32 %v372, %v628
        %v660 = vmul.f32 %v373, %v628
        %v661 = vadd.f32 %v593, %v629
        %v662 = vadd.f32 %v594, %v630
        %v663 = vadd.f32 %v595, %v631
        %v664 = vadd.f32 %v596, %v632
        %v665 = vadd.f32 %v597, %v633
        %v666 = vadd.f32 %v598, %v634
        %v667 = vadd.f32 %v599, %v635
        %v668 = vadd.f32 %v600, %v636
        %v669 = vadd.f32 %v601, %v637
        %v670 = vadd.f32 %v602, %v638
        %v671 = vadd.f32 %v603, %v639
        %v672 = vadd.f32 %v604, %v640
        %v673 = vadd.f32 %v605, %v641
        %v674 = vadd.f32 %v606, %v642
        %v675 = vadd.f32 %v607, %v643
        %v676 = vadd.f32 %v608, %v644
        %v677 = vadd.f32 %v609, %v645
        %v678 = vadd.f32 %v610, %v646
        %v679 = vadd.f32 %v611, %v647
        %v680 = vadd.f32 %v612, %v648
        %v681 = vadd.f32 %v613, %v649
        %v682 = vadd.f32 %v614, %v650
        %v683 = vadd.f32 %v615, %v651
        %v684 = vadd.f32 %v616, %v652
        %v685 = vadd.f32 %v617, %v653
        %v686 = vadd.f32 %v618, %v654
        %v687 = vadd.f32 %v619, %v655
        %v688 = vadd.f32 %v620, %v656
        %v689 = vadd.f32 %v621, %v657
        %v690 = vadd.f32 %v622, %v658
        %v691 = vadd.f32 %v623, %v659
        %v692 = vadd.f32 %v624, %v660
        %v693 = vlaneseq
        %v694 = vshrl.u32 %v693, 7
        %v695 = vsub.s32 3, %v694
        %v696 = vrot.slane %v374, %v695
        %v697 = vadd.f32 %v661, %v696
        %v698 = vadd.f32 %v662, %v696
        %v699 = vadd.f32 %v663, %v696
        %v700 = vadd.f32 %v664, %v696
        %v701 = vadd.f32 %v665, %v696
        %v702 = vadd.f32 %v666, %v696
        %v703 = vadd.f32 %v667, %v696
        %v704 = vadd.f32 %v668, %v696
        %v705 = vadd.f32 %v669, %v696
        %v706 = vadd.f32 %v670, %v696
        %v707 = vadd.f32 %v671, %v696
        %v708 = vadd.f32 %v672, %v696
        %v709 = vadd.f32 %v673, %v696
        %v710 = vadd.f32 %v674, %v696
        %v711 = vadd.f32 %v675, %v696
        %v712 = vadd.f32 %v676, %v696
        %v713 = vadd.f32 %v677, %v696
        %v714 = vadd.f32 %v678, %v696
        %v715 = vadd.f32 %v679, %v696
        %v716 = vadd.f32 %v680, %v696
        %v717 = vadd.f32 %v681, %v696
        %v718 = vadd.f32 %v682, %v696
        %v719 = vadd.f32 %v683, %v696
        %v720 = vadd.f32 %v684, %v696
        %v721 = vadd.f32 %v685, %v696
        %v722 = vadd.f32 %v686, %v696
        %v723 = vadd.f32 %v687, %v696
        %v724 = vadd.f32 %v688, %v696
        %v725 = vadd.f32 %v689, %v696
        %v726 = vadd.f32 %v690, %v696
        %v727 = vadd.f32 %v691, %v696
        %v728 = vadd.f32 %v692, %v696
        %v729 = vmax.f32 %v697, 0.0
        %v730 = vmax.f32 %v698, 0.0
        %v731 = vmax.f32 %v699, 0.0
        %v732 = vmax.f32 %v700, 0.0
        %v733 = vmax.f32 %v701, 0.0
        %v734 = vmax.f32 %v702, 0.0
        %v735 = vmax.f32 %v703, 0.0
        %v736 = vmax.f32 %v704, 0.0
        %v737 = vmax.f32 %v705, 0.0
        %v738 = vmax.f32 %v706, 0.0
        %v739 = vmax.f32 %v707, 0.0
        %v740 = vmax.f32 %v708, 0.0
        %v741 = vmax.f32 %v709, 0.0
        %v742 = vmax.f32 %v710, 0.0
        %v743 = vmax.f32 %v711, 0.0
        %v744 = vmax.f32 %v712, 0.0
        %v745 = vmax.f32 %v713, 0.0
        %v746 = vmax.f32 %v714, 0.0
        %v747 = vmax.f32 %v715, 0.0
        %v748 = vmax.f32 %v716, 0.0
        %v749 = vmax.f32 %v717, 0.0
        %v750 = vmax.f32 %v718, 0.0
        %v751 = vmax.f32 %v719, 0.0
        %v752 = vmax.f32 %v720, 0.0
        %v753 = vmax.f32 %v721, 0.0
        %v754 = vmax.f32 %v722, 0.0
        %v755 = vmax.f32 %v723, 0.0
        %v756 = vmax.f32 %v724, 0.0
        %v757 = vmax.f32 %v725, 0.0
        %v758 = vmax.f32 %v726, 0.0
        %v759 = vmax.f32 %v727, 0.0
        %v760 = vmax.f32 %v728, 0.0
        %761 = vst [vmem:[#allocation2] sm:$0xf] 0
        %762 = vst [vmem:[#allocation2 + $0x4] sm:$0xf] 0
        %763 = vst [vmem:[#allocation2 + $0x8] sm:$0x1] 0
        %s764 = scalar_lea.vmem [#allocation2], 204
        %765 = vst [vmem:[%s764] sm:$0xf] 0
        %766 = vst [vmem:[%s764 + $0x4] sm:$0xf] 0
        %767 = vst [vmem:[%s764 + $0x8] sm:$0x1] 0
        %s768 = scalar_lea.vmem [#allocation2], 12
        %vm769 = vcmask 1040384
        %vm770 = vsmask.f32 256
        %vm771 = vmand %vm769, %vm770
        %v772 = vld [vmem:[%s768] sm:$0x1]
        %v773 = vsel %vm771, 0, %v772
        %774 = vst [vmem:[%s768] sm:$0x1] %v773
        %v775 = vld [vmem:[%s768 + $0xc] sm:$0x1]
        %v776 = vsel %vm771, 0, %v775
        %777 = vst [vmem:[%s768 + $0xc] sm:$0x1] %v776
        %v778 = vld [vmem:[%s768 + $0x18] sm:$0x1]
        %v779 = vsel %vm771, 0, %v778
        %780 = vst [vmem:[%s768 + $0x18] sm:$0x1] %v779
        %v781 = vld [vmem:[%s768 + $0x24] sm:$0x1]
        %v782 = vsel %vm771, 0, %v781
        %783 = vst [vmem:[%s768 + $0x24] sm:$0x1] %v782
        %v784 = vld [vmem:[%s768 + $0x30] sm:$0x1]
        %v785 = vsel %vm771, 0, %v784
        %786 = vst [vmem:[%s768 + $0x30] sm:$0x1] %v785
        %v787 = vld [vmem:[%s768 + $0x3c] sm:$0x1]
        %v788 = vsel %vm771, 0, %v787
        %789 = vst [vmem:[%s768 + $0x3c] sm:$0x1] %v788
        %v790 = vld [vmem:[%s768 + $0x48] sm:$0x1]
        %v791 = vsel %vm771, 0, %v790
        %792 = vst [vmem:[%s768 + $0x48] sm:$0x1] %v791
        %v793 = vld [vmem:[%s768 + $0x54] sm:$0x1]
        %v794 = vsel %vm771, 0, %v793
        %795 = vst [vmem:[%s768 + $0x54] sm:$0x1] %v794
        %v796 = vld [vmem:[%s768 + $0x60] sm:$0x1]
        %v797 = vsel %vm771, 0, %v796
        %798 = vst [vmem:[%s768 + $0x60] sm:$0x1] %v797
        %v799 = vld [vmem:[%s768 + $0x6c] sm:$0x1]
        %v800 = vsel %vm771, 0, %v799
        %801 = vst [vmem:[%s768 + $0x6c] sm:$0x1] %v800
        %v802 = vld [vmem:[%s768 + $0x78] sm:$0x1]
        %v803 = vsel %vm771, 0, %v802
        %804 = vst [vmem:[%s768 + $0x78] sm:$0x1] %v803
        %v805 = vld [vmem:[%s768 + $0x84] sm:$0x1]
        %v806 = vsel %vm771, 0, %v805
        %807 = vst [vmem:[%s768 + $0x84] sm:$0x1] %v806
        %v808 = vld [vmem:[%s768 + $0x90] sm:$0x1]
        %v809 = vsel %vm771, 0, %v808
        %810 = vst [vmem:[%s768 + $0x90] sm:$0x1] %v809
        %v811 = vld [vmem:[%s768 + $0x9c] sm:$0x1]
        %v812 = vsel %vm771, 0, %v811
        %813 = vst [vmem:[%s768 + $0x9c] sm:$0x1] %v812
        %v814 = vld [vmem:[%s768 + $0xa8] sm:$0x1]
        %v815 = vsel %vm771, 0, %v814
        %816 = vst [vmem:[%s768 + $0xa8] sm:$0x1] %v815
        %v817 = vld [vmem:[%s768 + $0xb4] sm:$0x1]
        %v818 = vsel %vm771, 0, %v817
        %819 = vst [vmem:[%s768 + $0xb4] sm:$0x1] %v818
        %vm820 = vsmask.f32 7938
        %vm821 = vmand %vm769, %vm820
        %v822 = vld [vmem:[%s768 + $0x8] sm:$0x1]
        %v823 = vsel %vm821, 0, %v822
        %824 = vst [vmem:[%s768 + $0x8] sm:$0x1] %v823
        %v825 = vld [vmem:[%s768 + $0x14] sm:$0x1]
        %v826 = vsel %vm821, 0, %v825
        %827 = vst [vmem:[%s768 + $0x14] sm:$0x1] %v826
        %v828 = vld [vmem:[%s768 + $0x20] sm:$0x1]
        %v829 = vsel %vm821, 0, %v828
        %830 = vst [vmem:[%s768 + $0x20] sm:$0x1] %v829
        %v831 = vld [vmem:[%s768 + $0x2c] sm:$0x1]
        %v832 = vsel %vm821, 0, %v831
        %833 = vst [vmem:[%s768 + $0x2c] sm:$0x1] %v832
        %v834 = vld [vmem:[%s768 + $0x38] sm:$0x1]
        %v835 = vsel %vm821, 0, %v834
        %836 = vst [vmem:[%s768 + $0x38] sm:$0x1] %v835
        %v837 = vld [vmem:[%s768 + $0x44] sm:$0x1]
        %v838 = vsel %vm821, 0, %v837
        %839 = vst [vmem:[%s768 + $0x44] sm:$0x1] %v838
        %v840 = vld [vmem:[%s768 + $0x50] sm:$0x1]
        %v841 = vsel %vm821, 0, %v840
        %842 = vst [vmem:[%s768 + $0x50] sm:$0x1] %v841
        %v843 = vld [vmem:[%s768 + $0x5c] sm:$0x1]
        %v844 = vsel %vm821, 0, %v843
        %845 = vst [vmem:[%s768 + $0x5c] sm:$0x1] %v844
        %v846 = vld [vmem:[%s768 + $0x68] sm:$0x1]
        %v847 = vsel %vm821, 0, %v846
        %848 = vst [vmem:[%s768 + $0x68] sm:$0x1] %v847
        %v849 = vld [vmem:[%s768 + $0x74] sm:$0x1]
        %v850 = vsel %vm821, 0, %v849
        %851 = vst [vmem:[%s768 + $0x74] sm:$0x1] %v850
        %v852 = vld [vmem:[%s768 + $0x80] sm:$0x1]
        %v853 = vsel %vm821, 0, %v852
        %854 = vst [vmem:[%s768 + $0x80] sm:$0x1] %v853
        %v855 = vld [vmem:[%s768 + $0x8c] sm:$0x1]
        %v856 = vsel %vm821, 0, %v855
        %857 = vst [vmem:[%s768 + $0x8c] sm:$0x1] %v856
        %v858 = vld [vmem:[%s768 + $0x98] sm:$0x1]
        %v859 = vsel %vm821, 0, %v858
        %860 = vst [vmem:[%s768 + $0x98] sm:$0x1] %v859
        %v861 = vld [vmem:[%s768 + $0xa4] sm:$0x1]
        %v862 = vsel %vm821, 0, %v861
        %863 = vst [vmem:[%s768 + $0xa4] sm:$0x1] %v862
        %v864 = vld [vmem:[%s768 + $0xb0] sm:$0x1]
        %v865 = vsel %vm821, 0, %v864
        %866 = vst [vmem:[%s768 + $0xb0] sm:$0x1] %v865
        %v867 = vld [vmem:[%s768 + $0xbc] sm:$0x1]
        %v868 = vsel %vm821, 0, %v867
        %869 = vst [vmem:[%s768 + $0xbc] sm:$0x1] %v868
        %v870 = vpack.c.bf16 %v730, %v729
        %v871 = vpack.c.bf16 %v732, %v731
        %v872 = vpack.c.bf16 %v734, %v733
        %v873 = vpack.c.bf16 %v736, %v735
        %v874 = vpack.c.bf16 %v738, %v737
        %v875 = vpack.c.bf16 %v740, %v739
        %v876 = vpack.c.bf16 %v742, %v741
        %v877 = vpack.c.bf16 %v744, %v743
        %v878 = vpack.c.bf16 %v746, %v745
        %v879 = vpack.c.bf16 %v748, %v747
        %v880 = vpack.c.bf16 %v750, %v749
        %v881 = vpack.c.bf16 %v752, %v751
        %v882 = vpack.c.bf16 %v754, %v753
        %v883 = vpack.c.bf16 %v756, %v755
        %v884 = vpack.c.bf16 %v758, %v757
        %v885 = vpack.c.bf16 %v760, %v759
        %v902 = vunpack.c.l.b16 %v870
        %v903 = vunpack.c.h.b16 %v870
        %v904 = vunpack.c.l.b16 %v871
        %v905 = vunpack.c.h.b16 %v871
        %v906 = vunpack.c.l.b16 %v872
        %v907 = vunpack.c.h.b16 %v872
        %v908 = vunpack.c.l.b16 %v873
        %v909 = vunpack.c.h.b16 %v873
        %v910 = vunpack.c.l.b16 %v874
        %v911 = vunpack.c.h.b16 %v874
        %v912 = vunpack.c.l.b16 %v875
        %v913 = vunpack.c.h.b16 %v875
        %v914 = vunpack.c.l.b16 %v876
        %v915 = vunpack.c.h.b16 %v876
        %v916 = vunpack.c.l.b16 %v877
        %v917 = vunpack.c.h.b16 %v877
        %v918 = vunpack.c.l.b16 %v878
        %v919 = vunpack.c.h.b16 %v878
        %v920 = vunpack.c.l.b16 %v879
        %v921 = vunpack.c.h.b16 %v879
        %v922 = vunpack.c.l.b16 %v880
        %v923 = vunpack.c.h.b16 %v880
        %v924 = vunpack.c.l.b16 %v881
        %v925 = vunpack.c.h.b16 %v881
        %v926 = vunpack.c.l.b16 %v882
        %v927 = vunpack.c.h.b16 %v882
        %v928 = vunpack.c.l.b16 %v883
        %v929 = vunpack.c.h.b16 %v883
        %v930 = vunpack.c.l.b16 %v884
        %v931 = vunpack.c.h.b16 %v884
        %v932 = vunpack.c.l.b16 %v885
        %v933 = vunpack.c.h.b16 %v885
        %v934 = vpack.c.b16 %v902, %v902
        %v935 = vpack.c.b16 %v903, %v903
        %v936 = vpack.c.b16 %v904, %v904
        %v937 = vpack.c.b16 %v905, %v905
        %v938 = vpack.c.b16 %v906, %v906
        %v939 = vpack.c.b16 %v907, %v907
        %v940 = vpack.c.b16 %v908, %v908
        %v941 = vpack.c.b16 %v909, %v909
        %v942 = vpack.c.b16 %v910, %v910
        %v943 = vpack.c.b16 %v911, %v911
        %v944 = vpack.c.b16 %v912, %v912
        %v945 = vpack.c.b16 %v913, %v913
        %v946 = vpack.c.b16 %v914, %v914
        %v947 = vpack.c.b16 %v915, %v915
        %v948 = vpack.c.b16 %v916, %v916
        %v949 = vpack.c.b16 %v917, %v917
        %v950 = vpack.c.b16 %v918, %v918
        %v951 = vpack.c.b16 %v919, %v919
        %v952 = vpack.c.b16 %v920, %v920
        %v953 = vpack.c.b16 %v921, %v921
        %v954 = vpack.c.b16 %v922, %v922
        %v955 = vpack.c.b16 %v923, %v923
        %v956 = vpack.c.b16 %v924, %v924
        %v957 = vpack.c.b16 %v925, %v925
        %v958 = vpack.c.b16 %v926, %v926
        %v959 = vpack.c.b16 %v927, %v927
        %v960 = vpack.c.b16 %v928, %v928
        %v961 = vpack.c.b16 %v929, %v929
        %v962 = vpack.c.b16 %v930, %v930
        %v963 = vpack.c.b16 %v931, %v931
        %v964 = vpack.c.b16 %v932, %v932
        %v965 = vpack.c.b16 %v933, %v933
        %vm966 = vsmask.f32 4368
        %vm967 = vmor %vm770, %vm966
        %v969 = vshrl.u32 %v934, 16
        %v971 = vrot.slane %v969, 7
        %v972 = vshll.u32 %v934, 16
        %v974 = vor.u32 %v971, %v972
        %v975 = vrot.slane %v971, 4
        %v977 = vshrl.u32 %v935, 16
        %v979 = vrot.slane %v977, 7
        %v980 = vshll.u32 %v935, 16
        %v982 = vor.u32 %v979, %v980
        %v983 = vsel %vm967, %v975, %v982
        %v984 = vrot.slane %v979, 4
        %v986 = vshrl.u32 %v936, 16
        %v988 = vrot.slane %v986, 7
        %v989 = vshll.u32 %v936, 16
        %v991 = vor.u32 %v988, %v989
        %v992 = vrot.slane %v988, 4
        %v994 = vshrl.u32 %v937, 16
        %v996 = vrot.slane %v994, 7
        %v997 = vshll.u32 %v937, 16
        %v999 = vor.u32 %v996, %v997
        %v1000 = vsel %vm967, %v992, %v999
        %v1001 = vrot.slane %v996, 4
        %v1003 = vshrl.u32 %v938, 16
        %v1005 = vrot.slane %v1003, 7
        %v1006 = vshll.u32 %v938, 16
        %v1008 = vor.u32 %v1005, %v1006
        %v1009 = vrot.slane %v1005, 4
        %v1011 = vshrl.u32 %v939, 16
        %v1013 = vrot.slane %v1011, 7
        %v1014 = vshll.u32 %v939, 16
        %v1016 = vor.u32 %v1013, %v1014
        %v1017 = vsel %vm967, %v1009, %v1016
        %v1018 = vrot.slane %v1013, 4
        %v1020 = vshrl.u32 %v940, 16
        %v1022 = vrot.slane %v1020, 7
        %v1023 = vshll.u32 %v940, 16
        %v1025 = vor.u32 %v1022, %v1023
        %v1026 = vrot.slane %v1022, 4
        %v1028 = vshrl.u32 %v941, 16
        %v1030 = vrot.slane %v1028, 7
        %v1031 = vshll.u32 %v941, 16
        %v1033 = vor.u32 %v1030, %v1031
        %v1034 = vsel %vm967, %v1026, %v1033
        %v1035 = vrot.slane %v1030, 4
        %v1037 = vshrl.u32 %v942, 16
        %v1039 = vrot.slane %v1037, 7
        %v1040 = vshll.u32 %v942, 16
        %v1042 = vor.u32 %v1039, %v1040
        %v1043 = vrot.slane %v1039, 4
        %v1045 = vshrl.u32 %v943, 16
        %v1047 = vrot.slane %v1045, 7
        %v1048 = vshll.u32 %v943, 16
        %v1050 = vor.u32 %v1047, %v1048
        %v1051 = vsel %vm967, %v1043, %v1050
        %v1052 = vrot.slane %v1047, 4
        %v1054 = vshrl.u32 %v944, 16
        %v1056 = vrot.slane %v1054, 7
        %v1057 = vshll.u32 %v944, 16
        %v1059 = vor.u32 %v1056, %v1057
        %v1060 = vrot.slane %v1056, 4
        %v1062 = vshrl.u32 %v945, 16
        %v1064 = vrot.slane %v1062, 7
        %v1065 = vshll.u32 %v945, 16
        %v1067 = vor.u32 %v1064, %v1065
        %v1068 = vsel %vm967, %v1060, %v1067
        %v1069 = vrot.slane %v1064, 4
        %v1071 = vshrl.u32 %v946, 16
        %v1073 = vrot.slane %v1071, 7
        %v1074 = vshll.u32 %v946, 16
        %v1076 = vor.u32 %v1073, %v1074
        %v1077 = vrot.slane %v1073, 4
        %v1079 = vshrl.u32 %v947, 16
        %v1081 = vrot.slane %v1079, 7
        %v1082 = vshll.u32 %v947, 16
        %v1084 = vor.u32 %v1081, %v1082
        %v1085 = vsel %vm967, %v1077, %v1084
        %v1086 = vrot.slane %v1081, 4
        %v1088 = vshrl.u32 %v948, 16
        %v1090 = vrot.slane %v1088, 7
        %v1091 = vshll.u32 %v948, 16
        %v1093 = vor.u32 %v1090, %v1091
        %v1094 = vrot.slane %v1090, 4
        %v1096 = vshrl.u32 %v949, 16
        %v1098 = vrot.slane %v1096, 7
        %v1099 = vshll.u32 %v949, 16
        %v1101 = vor.u32 %v1098, %v1099
        %v1102 = vsel %vm967, %v1094, %v1101
        %v1103 = vrot.slane %v1098, 4
        %v1105 = vshrl.u32 %v950, 16
        %v1107 = vrot.slane %v1105, 7
        %v1108 = vshll.u32 %v950, 16
        %v1110 = vor.u32 %v1107, %v1108
        %v1111 = vrot.slane %v1107, 4
        %v1113 = vshrl.u32 %v951, 16
        %v1115 = vrot.slane %v1113, 7
        %v1116 = vshll.u32 %v951, 16
        %v1118 = vor.u32 %v1115, %v1116
        %v1119 = vsel %vm967, %v1111, %v1118
        %v1120 = vrot.slane %v1115, 4
        %v1122 = vshrl.u32 %v952, 16
        %v1124 = vrot.slane %v1122, 7
        %v1125 = vshll.u32 %v952, 16
        %v1127 = vor.u32 %v1124, %v1125
        %v1128 = vrot.slane %v1124, 4
        %v1130 = vshrl.u32 %v953, 16
        %v1132 = vrot.slane %v1130, 7
        %v1133 = vshll.u32 %v953, 16
        %v1135 = vor.u32 %v1132, %v1133
        %v1136 = vsel %vm967, %v1128, %v1135
        %v1137 = vrot.slane %v1132, 4
        %v1139 = vshrl.u32 %v954, 16
        %v1141 = vrot.slane %v1139, 7
        %v1142 = vshll.u32 %v954, 16
        %v1144 = vor.u32 %v1141, %v1142
        %v1145 = vrot.slane %v1141, 4
        %v1147 = vshrl.u32 %v955, 16
        %v1149 = vrot.slane %v1147, 7
        %v1150 = vshll.u32 %v955, 16
        %v1152 = vor.u32 %v1149, %v1150
        %v1153 = vsel %vm967, %v1145, %v1152
        %v1154 = vrot.slane %v1149, 4
        %v1156 = vshrl.u32 %v956, 16
        %v1158 = vrot.slane %v1156, 7
        %v1159 = vshll.u32 %v956, 16
        %v1161 = vor.u32 %v1158, %v1159
        %v1162 = vrot.slane %v1158, 4
        %v1164 = vshrl.u32 %v957, 16
        %v1166 = vrot.slane %v1164, 7
        %v1167 = vshll.u32 %v957, 16
        %v1169 = vor.u32 %v1166, %v1167
        %v1170 = vsel %vm967, %v1162, %v1169
        %v1171 = vrot.slane %v1166, 4
        %v1173 = vshrl.u32 %v958, 16
        %v1175 = vrot.slane %v1173, 7
        %v1176 = vshll.u32 %v958, 16
        %v1178 = vor.u32 %v1175, %v1176
        %v1179 = vrot.slane %v1175, 4
        %v1181 = vshrl.u32 %v959, 16
        %v1183 = vrot.slane %v1181, 7
        %v1184 = vshll.u32 %v959, 16
        %v1186 = vor.u32 %v1183, %v1184
        %v1187 = vsel %vm967, %v1179, %v1186
        %v1188 = vrot.slane %v1183, 4
        %v1190 = vshrl.u32 %v960, 16
        %v1192 = vrot.slane %v1190, 7
        %v1193 = vshll.u32 %v960, 16
        %v1195 = vor.u32 %v1192, %v1193
        %v1196 = vrot.slane %v1192, 4
        %v1198 = vshrl.u32 %v961, 16
        %v1200 = vrot.slane %v1198, 7
        %v1201 = vshll.u32 %v961, 16
        %v1203 = vor.u32 %v1200, %v1201
        %v1204 = vsel %vm967, %v1196, %v1203
        %v1205 = vrot.slane %v1200, 4
        %v1207 = vshrl.u32 %v962, 16
        %v1209 = vrot.slane %v1207, 7
        %v1210 = vshll.u32 %v962, 16
        %v1212 = vor.u32 %v1209, %v1210
        %v1213 = vrot.slane %v1209, 4
        %v1215 = vshrl.u32 %v963, 16
        %v1217 = vrot.slane %v1215, 7
        %v1218 = vshll.u32 %v963, 16
        %v1220 = vor.u32 %v1217, %v1218
        %v1221 = vsel %vm967, %v1213, %v1220
        %v1222 = vrot.slane %v1217, 4
        %v1224 = vshrl.u32 %v964, 16
        %v1226 = vrot.slane %v1224, 7
        %v1227 = vshll.u32 %v964, 16
        %v1229 = vor.u32 %v1226, %v1227
        %v1230 = vrot.slane %v1226, 4
        %v1232 = vshrl.u32 %v965, 16
        %v1234 = vrot.slane %v1232, 7
        %v1235 = vshll.u32 %v965, 16
        %v1237 = vor.u32 %v1234, %v1235
        %v1238 = vsel %vm967, %v1230, %v1237
        %v1239 = vrot.slane %v1234, 4
        %vm1288 = vcmask 1043456
        %vm1289 = vmand %vm1288, %vm820
        %v1290 = vld [vmem:[%s768] sm:$0xf]
        %v1291 = vsel %vm1289, %v974, %v1290
        %1292 = vst [vmem:[%s768] sm:$0xf] %v1291
        %1293 = vst [vmem:[%s768 + $0x4] sm:$0xf] %v983
        %v1294 = vld [vmem:[%s768 + $0x8] sm:$0x1]
        %v1295 = vsel %vm771, %v984, %v1294
        %1296 = vst [vmem:[%s768 + $0x8] sm:$0x1] %v1295
        %v1297 = vld [vmem:[%s768 + $0xc] sm:$0xf]
        %v1298 = vsel %vm1289, %v991, %v1297
        %1299 = vst [vmem:[%s768 + $0xc] sm:$0xf] %v1298
        %1300 = vst [vmem:[%s768 + $0x10] sm:$0xf] %v1000
        %v1301 = vld [vmem:[%s768 + $0x14] sm:$0x1]
        %v1302 = vsel %vm771, %v1001, %v1301
        %1303 = vst [vmem:[%s768 + $0x14] sm:$0x1] %v1302
        %v1304 = vld [vmem:[%s768 + $0x18] sm:$0xf]
        %v1305 = vsel %vm1289, %v1008, %v1304
        %1306 = vst [vmem:[%s768 + $0x18] sm:$0xf] %v1305
        %1307 = vst [vmem:[%s768 + $0x1c] sm:$0xf] %v1017
        %v1308 = vld [vmem:[%s768 + $0x20] sm:$0x1]
        %v1309 = vsel %vm771, %v1018, %v1308
        %1310 = vst [vmem:[%s768 + $0x20] sm:$0x1] %v1309
        %v1311 = vld [vmem:[%s768 + $0x24] sm:$0xf]
        %v1312 = vsel %vm1289, %v1025, %v1311
        %1313 = vst [vmem:[%s768 + $0x24] sm:$0xf] %v1312
        %1314 = vst [vmem:[%s768 + $0x28] sm:$0xf] %v1034
        %v1315 = vld [vmem:[%s768 + $0x2c] sm:$0x1]
        %v1316 = vsel %vm771, %v1035, %v1315
        %1317 = vst [vmem:[%s768 + $0x2c] sm:$0x1] %v1316
        %v1318 = vld [vmem:[%s768 + $0x30] sm:$0xf]
        %v1319 = vsel %vm1289, %v1042, %v1318
        %1320 = vst [vmem:[%s768 + $0x30] sm:$0xf] %v1319
        %1321 = vst [vmem:[%s768 + $0x34] sm:$0xf] %v1051
        %v1322 = vld [vmem:[%s768 + $0x38] sm:$0x1]
        %v1323 = vsel %vm771, %v1052, %v1322
        %1324 = vst [vmem:[%s768 + $0x38] sm:$0x1] %v1323
        %v1325 = vld [vmem:[%s768 + $0x3c] sm:$0xf]
        %v1326 = vsel %vm1289, %v1059, %v1325
        %1327 = vst [vmem:[%s768 + $0x3c] sm:$0xf] %v1326
        %1328 = vst [vmem:[%s768 + $0x40] sm:$0xf] %v1068
        %v1329 = vld [vmem:[%s768 + $0x44] sm:$0x1]
        %v1330 = vsel %vm771, %v1069, %v1329
        %1331 = vst [vmem:[%s768 + $0x44] sm:$0x1] %v1330
        %v1332 = vld [vmem:[%s768 + $0x48] sm:$0xf]
        %v1333 = vsel %vm1289, %v1076, %v1332
        %1334 = vst [vmem:[%s768 + $0x48] sm:$0xf] %v1333
        %1335 = vst [vmem:[%s768 + $0x4c] sm:$0xf] %v1085
        %v1336 = vld [vmem:[%s768 + $0x50] sm:$0x1]
        %v1337 = vsel %vm771, %v1086, %v1336
        %1338 = vst [vmem:[%s768 + $0x50] sm:$0x1] %v1337
        %v1339 = vld [vmem:[%s768 + $0x54] sm:$0xf]
        %v1340 = vsel %vm1289, %v1093, %v1339
        %1341 = vst [vmem:[%s768 + $0x54] sm:$0xf] %v1340
        %1342 = vst [vmem:[%s768 + $0x58] sm:$0xf] %v1102
        %v1343 = vld [vmem:[%s768 + $0x5c] sm:$0x1]
        %v1344 = vsel %vm771, %v1103, %v1343
        %1345 = vst [vmem:[%s768 + $0x5c] sm:$0x1] %v1344
        %v1346 = vld [vmem:[%s768 + $0x60] sm:$0xf]
        %v1347 = vsel %vm1289, %v1110, %v1346
        %1348 = vst [vmem:[%s768 + $0x60] sm:$0xf] %v1347
        %1349 = vst [vmem:[%s768 + $0x64] sm:$0xf] %v1119
        %v1350 = vld [vmem:[%s768 + $0x68] sm:$0x1]
        %v1351 = vsel %vm771, %v1120, %v1350
        %1352 = vst [vmem:[%s768 + $0x68] sm:$0x1] %v1351
        %v1353 = vld [vmem:[%s768 + $0x6c] sm:$0xf]
        %v1354 = vsel %vm1289, %v1127, %v1353
        %1355 = vst [vmem:[%s768 + $0x6c] sm:$0xf] %v1354
        %1356 = vst [vmem:[%s768 + $0x70] sm:$0xf] %v1136
        %v1357 = vld [vmem:[%s768 + $0x74] sm:$0x1]
        %v1358 = vsel %vm771, %v1137, %v1357
        %1359 = vst [vmem:[%s768 + $0x74] sm:$0x1] %v1358
        %v1360 = vld [vmem:[%s768 + $0x78] sm:$0xf]
        %v1361 = vsel %vm1289, %v1144, %v1360
        %1362 = vst [vmem:[%s768 + $0x78] sm:$0xf] %v1361
        %1363 = vst [vmem:[%s768 + $0x7c] sm:$0xf] %v1153
        %v1364 = vld [vmem:[%s768 + $0x80] sm:$0x1]
        %v1365 = vsel %vm771, %v1154, %v1364
        %1366 = vst [vmem:[%s768 + $0x80] sm:$0x1] %v1365
        %v1367 = vld [vmem:[%s768 + $0x84] sm:$0xf]
        %v1368 = vsel %vm1289, %v1161, %v1367
        %1369 = vst [vmem:[%s768 + $0x84] sm:$0xf] %v1368
        %1370 = vst [vmem:[%s768 + $0x88] sm:$0xf] %v1170
        %v1371 = vld [vmem:[%s768 + $0x8c] sm:$0x1]
        %v1372 = vsel %vm771, %v1171, %v1371
        %1373 = vst [vmem:[%s768 + $0x8c] sm:$0x1] %v1372
        %v1374 = vld [vmem:[%s768 + $0x90] sm:$0xf]
        %v1375 = vsel %vm1289, %v1178, %v1374
        %1376 = vst [vmem:[%s768 + $0x90] sm:$0xf] %v1375
        %1377 = vst [vmem:[%s768 + $0x94] sm:$0xf] %v1187
        %v1378 = vld [vmem:[%s768 + $0x98] sm:$0x1]
        %v1379 = vsel %vm771, %v1188, %v1378
        %1380 = vst [vmem:[%s768 + $0x98] sm:$0x1] %v1379
        %v1381 = vld [vmem:[%s768 + $0x9c] sm:$0xf]
        %v1382 = vsel %vm1289, %v1195, %v1381
        %1383 = vst [vmem:[%s768 + $0x9c] sm:$0xf] %v1382
        %1384 = vst [vmem:[%s768 + $0xa0] sm:$0xf] %v1204
        %v1385 = vld [vmem:[%s768 + $0xa4] sm:$0x1]
        %v1386 = vsel %vm771, %v1205, %v1385
        %1387 = vst [vmem:[%s768 + $0xa4] sm:$0x1] %v1386
        %v1388 = vld [vmem:[%s768 + $0xa8] sm:$0xf]
        %v1389 = vsel %vm1289, %v1212, %v1388
        %1390 = vst [vmem:[%s768 + $0xa8] sm:$0xf] %v1389
        %1391 = vst [vmem:[%s768 + $0xac] sm:$0xf] %v1221
        %v1392 = vld [vmem:[%s768 + $0xb0] sm:$0x1]
        %v1393 = vsel %vm771, %v1222, %v1392
        %1394 = vst [vmem:[%s768 + $0xb0] sm:$0x1] %v1393
        %v1395 = vld [vmem:[%s768 + $0xb4] sm:$0xf]
        %v1396 = vsel %vm1289, %v1229, %v1395
        %1397 = vst [vmem:[%s768 + $0xb4] sm:$0xf] %v1396
        %1398 = vst [vmem:[%s768 + $0xb8] sm:$0xf] %v1238
        %v1399 = vld [vmem:[%s768 + $0xbc] sm:$0x1]
        %v1400 = vsel %vm771, %v1239, %v1399
        %1401 = vst [vmem:[%s768 + $0xbc] sm:$0x1] %v1400
        %v1402 = vld [vmem:[#allocation2] sm:$0xf]
        %v1403 = vld [vmem:[#allocation2 + $0x4] sm:$0xf]
        %v1404 = vld [vmem:[#allocation2 + $0xc] sm:$0xf]
        %v1405 = vld [vmem:[#allocation2 + $0x10] sm:$0xf]
        %v1406 = vld [vmem:[#allocation2 + $0x18] sm:$0xf]
        %v1407 = vld [vmem:[#allocation2 + $0x1c] sm:$0xf]
        %v1408 = vld [vmem:[#allocation2 + $0x24] sm:$0xf]
        %v1409 = vld [vmem:[#allocation2 + $0x28] sm:$0xf]
        %v1410 = vld [vmem:[#allocation2 + $0x30] sm:$0xf]
        %v1411 = vld [vmem:[#allocation2 + $0x34] sm:$0xf]
        %v1412 = vld [vmem:[#allocation2 + $0x3c] sm:$0xf]
        %v1413 = vld [vmem:[#allocation2 + $0x40] sm:$0xf]
        %v1414 = vld [vmem:[#allocation2 + $0x48] sm:$0xf]
        %v1415 = vld [vmem:[#allocation2 + $0x4c] sm:$0xf]
        %v1416 = vld [vmem:[#allocation2 + $0x54] sm:$0xf]
        %v1417 = vld [vmem:[#allocation2 + $0x58] sm:$0xf]
        %v1418 = vld [vmem:[#allocation2 + $0x60] sm:$0xf]
        %v1419 = vld [vmem:[#allocation2 + $0x64] sm:$0xf]
        %v1420 = vld [vmem:[#allocation2 + $0x6c] sm:$0xf]
        %v1421 = vld [vmem:[#allocation2 + $0x70] sm:$0xf]
        %v1422 = vld [vmem:[#allocation2 + $0x78] sm:$0xf]
        %v1423 = vld [vmem:[#allocation2 + $0x7c] sm:$0xf]
        %v1424 = vld [vmem:[#allocation2 + $0x84] sm:$0xf]
        %v1425 = vld [vmem:[#allocation2 + $0x88] sm:$0xf]
        %v1426 = vld [vmem:[#allocation2 + $0x90] sm:$0xf]
        %v1427 = vld [vmem:[#allocation2 + $0x94] sm:$0xf]
        %v1428 = vld [vmem:[#allocation2 + $0x9c] sm:$0xf]
        %v1429 = vld [vmem:[#allocation2 + $0xa0] sm:$0xf]
        %v1430 = vld [vmem:[#allocation2 + $0xa8] sm:$0xf]
        %v1431 = vld [vmem:[#allocation2 + $0xac] sm:$0xf]
        %v1432 = vld [vmem:[#allocation2 + $0xb4] sm:$0xf]
        %v1433 = vld [vmem:[#allocation2 + $0xb8] sm:$0xf]
        %1434 = vst [vmem:[#allocation3] sm:$0xf] %v1402
        %1435 = vst [vmem:[#allocation3 + $0xc] sm:$0xf] %v1403
        %1436 = vst [vmem:[#allocation3 + $0x18] sm:$0xf] %v1404
        %1437 = vst [vmem:[#allocation3 + $0x24] sm:$0xf] %v1405
        %1438 = vst [vmem:[#allocation3 + $0x30] sm:$0xf] %v1406
        %1439 = vst [vmem:[#allocation3 + $0x3c] sm:$0xf] %v1407
        %1440 = vst [vmem:[#allocation3 + $0x48] sm:$0xf] %v1408
        %1441 = vst [vmem:[#allocation3 + $0x54] sm:$0xf] %v1409
        %1442 = vst [vmem:[#allocation3 + $0x60] sm:$0xf] %v1410
        %1443 = vst [vmem:[#allocation3 + $0x6c] sm:$0xf] %v1411
        %1444 = vst [vmem:[#allocation3 + $0x78] sm:$0xf] %v1412
        %1445 = vst [vmem:[#allocation3 + $0x84] sm:$0xf] %v1413
        %1446 = vst [vmem:[#allocation3 + $0x90] sm:$0xf] %v1414
        %1447 = vst [vmem:[#allocation3 + $0x9c] sm:$0xf] %v1415
        %1448 = vst [vmem:[#allocation3 + $0xa8] sm:$0xf] %v1416
        %1449 = vst [vmem:[#allocation3 + $0xb4] sm:$0xf] %v1417
        %1450 = vst [vmem:[#allocation3 + $0xc0] sm:$0xf] %v1418
        %1451 = vst [vmem:[#allocation3 + $0xcc] sm:$0xf] %v1419
        %1452 = vst [vmem:[#allocation3 + $0xd8] sm:$0xf] %v1420
        %1453 = vst [vmem:[#allocation3 + $0xe4] sm:$0xf] %v1421
        %1454 = vst [vmem:[#allocation3 + $0xf0] sm:$0xf] %v1422
        %1455 = vst [vmem:[#allocation3 + $0xfc] sm:$0xf] %v1423
        %1456 = vst [vmem:[#allocation3 + $0x108] sm:$0xf] %v1424
        %1457 = vst [vmem:[#allocation3 + $0x114] sm:$0xf] %v1425
        %1458 = vst [vmem:[#allocation3 + $0x120] sm:$0xf] %v1426
        %1459 = vst [vmem:[#allocation3 + $0x12c] sm:$0xf] %v1427
        %1460 = vst [vmem:[#allocation3 + $0x138] sm:$0xf] %v1428
        %1461 = vst [vmem:[#allocation3 + $0x144] sm:$0xf] %v1429
        %1462 = vst [vmem:[#allocation3 + $0x150] sm:$0xf] %v1430
        %1463 = vst [vmem:[#allocation3 + $0x15c] sm:$0xf] %v1431
        %1464 = vst [vmem:[#allocation3 + $0x168] sm:$0xf] %v1432
        %1465 = vst [vmem:[#allocation3 + $0x174] sm:$0xf] %v1433
        %v1466 = vld [vmem:[#allocation2] sm:$0xf]
        %v1467 = vld [vmem:[#allocation2 + $0x4] sm:$0xf]
        %v1468 = vld [vmem:[#allocation2 + $0x8] sm:$0x1]
        %v1469 = vld [vmem:[#allocation2 + $0xc] sm:$0xf]
        %v1470 = vld [vmem:[#allocation2 + $0x10] sm:$0xf]
        %v1471 = vld [vmem:[#allocation2 + $0x14] sm:$0x1]
        %v1472 = vld [vmem:[#allocation2 + $0x18] sm:$0xf]
        %v1473 = vld [vmem:[#allocation2 + $0x1c] sm:$0xf]
        %v1474 = vld [vmem:[#allocation2 + $0x20] sm:$0x1]
        %v1475 = vld [vmem:[#allocation2 + $0x24] sm:$0xf]
        %v1476 = vld [vmem:[#allocation2 + $0x28] sm:$0xf]
        %v1477 = vld [vmem:[#allocation2 + $0x2c] sm:$0x1]
        %v1478 = vld [vmem:[#allocation2 + $0x30] sm:$0xf]
        %v1479 = vld [vmem:[#allocation2 + $0x34] sm:$0xf]
        %v1480 = vld [vmem:[#allocation2 + $0x38] sm:$0x1]
        %v1481 = vld [vmem:[#allocation2 + $0x3c] sm:$0xf]
        %v1482 = vld [vmem:[#allocation2 + $0x40] sm:$0xf]
        %v1483 = vld [vmem:[#allocation2 + $0x44] sm:$0x1]
        %v1484 = vld [vmem:[#allocation2 + $0x48] sm:$0xf]
        %v1485 = vld [vmem:[#allocation2 + $0x4c] sm:$0xf]
        %v1486 = vld [vmem:[#allocation2 + $0x50] sm:$0x1]
        %v1487 = vld [vmem:[#allocation2 + $0x54] sm:$0xf]
        %v1488 = vld [vmem:[#allocation2 + $0x58] sm:$0xf]
        %v1489 = vld [vmem:[#allocation2 + $0x5c] sm:$0x1]
        %v1490 = vld [vmem:[#allocation2 + $0x60] sm:$0xf]
        %v1491 = vld [vmem:[#allocation2 + $0x64] sm:$0xf]
        %v1492 = vld [vmem:[#allocation2 + $0x68] sm:$0x1]
        %v1493 = vld [vmem:[#allocation2 + $0x6c] sm:$0xf]
        %v1494 = vld [vmem:[#allocation2 + $0x70] sm:$0xf]
        %v1495 = vld [vmem:[#allocation2 + $0x74] sm:$0x1]
        %v1496 = vld [vmem:[#allocation2 + $0x78] sm:$0xf]
        %v1497 = vld [vmem:[#allocation2 + $0x7c] sm:$0xf]
        %v1498 = vld [vmem:[#allocation2 + $0x80] sm:$0x1]
        %v1499 = vld [vmem:[#allocation2 + $0x84] sm:$0xf]
        %v1500 = vld [vmem:[#allocation2 + $0x88] sm:$0xf]
        %v1501 = vld [vmem:[#allocation2 + $0x8c] sm:$0x1]
        %v1502 = vld [vmem:[#allocation2 + $0x90] sm:$0xf]
        %v1503 = vld [vmem:[#allocation2 + $0x94] sm:$0xf]
        %v1504 = vld [vmem:[#allocation2 + $0x98] sm:$0x1]
        %v1505 = vld [vmem:[#allocation2 + $0x9c] sm:$0xf]
        %v1506 = vld [vmem:[#allocation2 + $0xa0] sm:$0xf]
        %v1507 = vld [vmem:[#allocation2 + $0xa4] sm:$0x1]
        %v1508 = vld [vmem:[#allocation2 + $0xa8] sm:$0xf]
        %v1509 = vld [vmem:[#allocation2 + $0xac] sm:$0xf]
        %v1510 = vld [vmem:[#allocation2 + $0xb0] sm:$0x1]
        %v1511 = vld [vmem:[#allocation2 + $0xb4] sm:$0xf]
        %v1512 = vld [vmem:[#allocation2 + $0xb8] sm:$0xf]
        %v1513 = vld [vmem:[#allocation2 + $0xbc] sm:$0x1]
        %vm1514 = vsmask.f32 3328
        %vm1515 = vsmask.f32 7440
        %vm1516 = vmor %vm1514, %vm1515
        %v1518 = vshrl.u32 %v1466, 16
        %v1520 = vrot.slane %v1518, 4
        %v1521 = vshll.u32 %v1466, 16
        %v1523 = vrot.slane %v1521, 5
        %v1524 = vor.u32 %v1520, %v1523
        %v1525 = vrot.slane %v1524, 4
        %v1527 = vshll.u32 %v1467, 16
        %v1529 = vrot.slane %v1527, 5
        %v1530 = vsel %vm1516, %v1525, %v1529
        %v1531 = vshrl.u32 %v1467, 16
        %v1533 = vrot.slane %v1531, 4
        %v1534 = vor.u32 %v1533, %v1529
        %v1535 = vrot.slane %v1534, 4
        %v1537 = vshll.u32 %v1468, 16
        %v1539 = vrot.slane %v1537, 5
        %v1540 = vsel %vm1516, %v1535, %v1539
        %v1542 = vshrl.u32 %v1469, 16
        %v1544 = vrot.slane %v1542, 4
        %v1545 = vshll.u32 %v1469, 16
        %v1547 = vrot.slane %v1545, 5
        %v1548 = vor.u32 %v1544, %v1547
        %v1549 = vrot.slane %v1548, 4
        %v1551 = vshll.u32 %v1470, 16
        %v1553 = vrot.slane %v1551, 5
        %v1554 = vsel %vm1516, %v1549, %v1553
        %v1555 = vshrl.u32 %v1470, 16
        %v1557 = vrot.slane %v1555, 4
        %v1558 = vor.u32 %v1557, %v1553
        %v1559 = vrot.slane %v1558, 4
        %v1561 = vshll.u32 %v1471, 16
        %v1563 = vrot.slane %v1561, 5
        %v1564 = vsel %vm1516, %v1559, %v1563
        %v1566 = vshrl.u32 %v1472, 16
        %v1568 = vrot.slane %v1566, 4
        %v1569 = vshll.u32 %v1472, 16
        %v1571 = vrot.slane %v1569, 5
        %v1572 = vor.u32 %v1568, %v1571
        %v1573 = vrot.slane %v1572, 4
        %v1575 = vshll.u32 %v1473, 16
        %v1577 = vrot.slane %v1575, 5
        %v1578 = vsel %vm1516, %v1573, %v1577
        %v1579 = vshrl.u32 %v1473, 16
        %v1581 = vrot.slane %v1579, 4
        %v1582 = vor.u32 %v1581, %v1577
        %v1583 = vrot.slane %v1582, 4
        %v1585 = vshll.u32 %v1474, 16
        %v1587 = vrot.slane %v1585, 5
        %v1588 = vsel %vm1516, %v1583, %v1587
        %v1590 = vshrl.u32 %v1475, 16
        %v1592 = vrot.slane %v1590, 4
        %v1593 = vshll.u32 %v1475, 16
        %v1595 = vrot.slane %v1593, 5
        %v1596 = vor.u32 %v1592, %v1595
        %v1597 = vrot.slane %v1596, 4
        %v1599 = vshll.u32 %v1476, 16
        %v1601 = vrot.slane %v1599, 5
        %v1602 = vsel %vm1516, %v1597, %v1601
        %v1603 = vshrl.u32 %v1476, 16
        %v1605 = vrot.slane %v1603, 4
        %v1606 = vor.u32 %v1605, %v1601
        %v1607 = vrot.slane %v1606, 4
        %v1609 = vshll.u32 %v1477, 16
        %v1611 = vrot.slane %v1609, 5
        %v1612 = vsel %vm1516, %v1607, %v1611
        %v1614 = vshrl.u32 %v1478, 16
        %v1616 = vrot.slane %v1614, 4
        %v1617 = vshll.u32 %v1478, 16
        %v1619 = vrot.slane %v1617, 5
        %v1620 = vor.u32 %v1616, %v1619
        %v1621 = vrot.slane %v1620, 4
        %v1623 = vshll.u32 %v1479, 16
        %v1625 = vrot.slane %v1623, 5
        %v1626 = vsel %vm1516, %v1621, %v1625
        %v1627 = vshrl.u32 %v1479, 16
        %v1629 = vrot.slane %v1627, 4
        %v1630 = vor.u32 %v1629, %v1625
        %v1631 = vrot.slane %v1630, 4
        %v1633 = vshll.u32 %v1480, 16
        %v1635 = vrot.slane %v1633, 5
        %v1636 = vsel %vm1516, %v1631, %v1635
        %v1638 = vshrl.u32 %v1481, 16
        %v1640 = vrot.slane %v1638, 4
        %v1641 = vshll.u32 %v1481, 16
        %v1643 = vrot.slane %v1641, 5
        %v1644 = vor.u32 %v1640, %v1643
        %v1645 = vrot.slane %v1644, 4
        %v1647 = vshll.u32 %v1482, 16
        %v1649 = vrot.slane %v1647, 5
        %v1650 = vsel %vm1516, %v1645, %v1649
        %v1651 = vshrl.u32 %v1482, 16
        %v1653 = vrot.slane %v1651, 4
        %v1654 = vor.u32 %v1653, %v1649
        %v1655 = vrot.slane %v1654, 4
        %v1657 = vshll.u32 %v1483, 16
        %v1659 = vrot.slane %v1657, 5
        %v1660 = vsel %vm1516, %v1655, %v1659
        %v1662 = vshrl.u32 %v1484, 16
        %v1664 = vrot.slane %v1662, 4
        %v1665 = vshll.u32 %v1484, 16
        %v1667 = vrot.slane %v1665, 5
        %v1668 = vor.u32 %v1664, %v1667
        %v1669 = vrot.slane %v1668, 4
        %v1671 = vshll.u32 %v1485, 16
        %v1673 = vrot.slane %v1671, 5
        %v1674 = vsel %vm1516, %v1669, %v1673
        %v1675 = vshrl.u32 %v1485, 16
        %v1677 = vrot.slane %v1675, 4
        %v1678 = vor.u32 %v1677, %v1673
        %v1679 = vrot.slane %v1678, 4
        %v1681 = vshll.u32 %v1486, 16
        %v1683 = vrot.slane %v1681, 5
        %v1684 = vsel %vm1516, %v1679, %v1683
        %v1686 = vshrl.u32 %v1487, 16
        %v1688 = vrot.slane %v1686, 4
        %v1689 = vshll.u32 %v1487, 16
        %v1691 = vrot.slane %v1689, 5
        %v1692 = vor.u32 %v1688, %v1691
        %v1693 = vrot.slane %v1692, 4
        %v1695 = vshll.u32 %v1488, 16
        %v1697 = vrot.slane %v1695, 5
        %v1698 = vsel %vm1516, %v1693, %v1697
        %v1699 = vshrl.u32 %v1488, 16
        %v1701 = vrot.slane %v1699, 4
        %v1702 = vor.u32 %v1701, %v1697
        %v1703 = vrot.slane %v1702, 4
        %v1705 = vshll.u32 %v1489, 16
        %v1707 = vrot.slane %v1705, 5
        %v1708 = vsel %vm1516, %v1703, %v1707
        %v1710 = vshrl.u32 %v1490, 16
        %v1712 = vrot.slane %v1710, 4
        %v1713 = vshll.u32 %v1490, 16
        %v1715 = vrot.slane %v1713, 5
        %v1716 = vor.u32 %v1712, %v1715
        %v1717 = vrot.slane %v1716, 4
        %v1719 = vshll.u32 %v1491, 16
        %v1721 = vrot.slane %v1719, 5
        %v1722 = vsel %vm1516, %v1717, %v1721
        %v1723 = vshrl.u32 %v1491, 16
        %v1725 = vrot.slane %v1723, 4
        %v1726 = vor.u32 %v1725, %v1721
        %v1727 = vrot.slane %v1726, 4
        %v1729 = vshll.u32 %v1492, 16
        %v1731 = vrot.slane %v1729, 5
        %v1732 = vsel %vm1516, %v1727, %v1731
        %v1734 = vshrl.u32 %v1493, 16
        %v1736 = vrot.slane %v1734, 4
        %v1737 = vshll.u32 %v1493, 16
        %v1739 = vrot.slane %v1737, 5
        %v1740 = vor.u32 %v1736, %v1739
        %v1741 = vrot.slane %v1740, 4
        %v1743 = vshll.u32 %v1494, 16
        %v1745 = vrot.slane %v1743, 5
        %v1746 = vsel %vm1516, %v1741, %v1745
        %v1747 = vshrl.u32 %v1494, 16
        %v1749 = vrot.slane %v1747, 4
        %v1750 = vor.u32 %v1749, %v1745
        %v1751 = vrot.slane %v1750, 4
        %v1753 = vshll.u32 %v1495, 16
        %v1755 = vrot.slane %v1753, 5
        %v1756 = vsel %vm1516, %v1751, %v1755
        %v1758 = vshrl.u32 %v1496, 16
        %v1760 = vrot.slane %v1758, 4
        %v1761 = vshll.u32 %v1496, 16
        %v1763 = vrot.slane %v1761, 5
        %v1764 = vor.u32 %v1760, %v1763
        %v1765 = vrot.slane %v1764, 4
        %v1767 = vshll.u32 %v1497, 16
        %v1769 = vrot.slane %v1767, 5
        %v1770 = vsel %vm1516, %v1765, %v1769
        %v1771 = vshrl.u32 %v1497, 16
        %v1773 = vrot.slane %v1771, 4
        %v1774 = vor.u32 %v1773, %v1769
        %v1775 = vrot.slane %v1774, 4
        %v1777 = vshll.u32 %v1498, 16
        %v1779 = vrot.slane %v1777, 5
        %v1780 = vsel %vm1516, %v1775, %v1779
        %v1782 = vshrl.u32 %v1499, 16
        %v1784 = vrot.slane %v1782, 4
        %v1785 = vshll.u32 %v1499, 16
        %v1787 = vrot.slane %v1785, 5
        %v1788 = vor.u32 %v1784, %v1787
        %v1789 = vrot.slane %v1788, 4
        %v1791 = vshll.u32 %v1500, 16
        %v1793 = vrot.slane %v1791, 5
        %v1794 = vsel %vm1516, %v1789, %v1793
        %v1795 = vshrl.u32 %v1500, 16
        %v1797 = vrot.slane %v1795, 4
        %v1798 = vor.u32 %v1797, %v1793
        %v1799 = vrot.slane %v1798, 4
        %v1801 = vshll.u32 %v1501, 16
        %v1803 = vrot.slane %v1801, 5
        %v1804 = vsel %vm1516, %v1799, %v1803
        %v1806 = vshrl.u32 %v1502, 16
        %v1808 = vrot.slane %v1806, 4
        %v1809 = vshll.u32 %v1502, 16
        %v1811 = vrot.slane %v1809, 5
        %v1812 = vor.u32 %v1808, %v1811
        %v1813 = vrot.slane %v1812, 4
        %v1815 = vshll.u32 %v1503, 16
        %v1817 = vrot.slane %v1815, 5
        %v1818 = vsel %vm1516, %v1813, %v1817
        %v1819 = vshrl.u32 %v1503, 16
        %v1821 = vrot.slane %v1819, 4
        %v1822 = vor.u32 %v1821, %v1817
        %v1823 = vrot.slane %v1822, 4
        %v1825 = vshll.u32 %v1504, 16
        %v1827 = vrot.slane %v1825, 5
        %v1828 = vsel %vm1516, %v1823, %v1827
        %v1830 = vshrl.u32 %v1505, 16
        %v1832 = vrot.slane %v1830, 4
        %v1833 = vshll.u32 %v1505, 16
        %v1835 = vrot.slane %v1833, 5
        %v1836 = vor.u32 %v1832, %v1835
        %v1837 = vrot.slane %v1836, 4
        %v1839 = vshll.u32 %v1506, 16
        %v1841 = vrot.slane %v1839, 5
        %v1842 = vsel %vm1516, %v1837, %v1841
        %v1843 = vshrl.u32 %v1506, 16
        %v1845 = vrot.slane %v1843, 4
        %v1846 = vor.u32 %v1845, %v1841
        %v1847 = vrot.slane %v1846, 4
        %v1849 = vshll.u32 %v1507, 16
        %v1851 = vrot.slane %v1849, 5
        %v1852 = vsel %vm1516, %v1847, %v1851
        %v1854 = vshrl.u32 %v1508, 16
        %v1856 = vrot.slane %v1854, 4
        %v1857 = vshll.u32 %v1508, 16
        %v1859 = vrot.slane %v1857, 5
        %v1860 = vor.u32 %v1856, %v1859
        %v1861 = vrot.slane %v1860, 4
        %v1863 = vshll.u32 %v1509, 16
        %v1865 = vrot.slane %v1863, 5
        %v1866 = vsel %vm1516, %v1861, %v1865
        %v1867 = vshrl.u32 %v1509, 16
        %v1869 = vrot.slane %v1867, 4
        %v1870 = vor.u32 %v1869, %v1865
        %v1871 = vrot.slane %v1870, 4
        %v1873 = vshll.u32 %v1510, 16
        %v1875 = vrot.slane %v1873, 5
        %v1876 = vsel %vm1516, %v1871, %v1875
        %v1878 = vshrl.u32 %v1511, 16
        %v1880 = vrot.slane %v1878, 4
        %v1881 = vshll.u32 %v1511, 16
        %v1883 = vrot.slane %v1881, 5
        %v1884 = vor.u32 %v1880, %v1883
        %v1885 = vrot.slane %v1884, 4
        %v1887 = vshll.u32 %v1512, 16
        %v1889 = vrot.slane %v1887, 5
        %v1890 = vsel %vm1516, %v1885, %v1889
        %v1891 = vshrl.u32 %v1512, 16
        %v1893 = vrot.slane %v1891, 4
        %v1894 = vor.u32 %v1893, %v1889
        %v1895 = vrot.slane %v1894, 4
        %v1897 = vshll.u32 %v1513, 16
        %v1899 = vrot.slane %v1897, 5
        %v1900 = vsel %vm1516, %v1895, %v1899
        %1933 = vst [vmem:[#allocation3 + $0x4] sm:$0xf] %v1530
        %1934 = vst [vmem:[#allocation3 + $0x10] sm:$0xf] %v1540
        %1935 = vst [vmem:[#allocation3 + $0x1c] sm:$0xf] %v1554
        %1936 = vst [vmem:[#allocation3 + $0x28] sm:$0xf] %v1564
        %1937 = vst [vmem:[#allocation3 + $0x34] sm:$0xf] %v1578
        %1938 = vst [vmem:[#allocation3 + $0x40] sm:$0xf] %v1588
        %1939 = vst [vmem:[#allocation3 + $0x4c] sm:$0xf] %v1602
        %1940 = vst [vmem:[#allocation3 + $0x58] sm:$0xf] %v1612
        %1941 = vst [vmem:[#allocation3 + $0x64] sm:$0xf] %v1626
        %1942 = vst [vmem:[#allocation3 + $0x70] sm:$0xf] %v1636
        %1943 = vst [vmem:[#allocation3 + $0x7c] sm:$0xf] %v1650
        %1944 = vst [vmem:[#allocation3 + $0x88] sm:$0xf] %v1660
        %1945 = vst [vmem:[#allocation3 + $0x94] sm:$0xf] %v1674
        %1946 = vst [vmem:[#allocation3 + $0xa0] sm:$0xf] %v1684
        %1947 = vst [vmem:[#allocation3 + $0xac] sm:$0xf] %v1698
        %1948 = vst [vmem:[#allocation3 + $0xb8] sm:$0xf] %v1708
        %1949 = vst [vmem:[#allocation3 + $0xc4] sm:$0xf] %v1722
        %1950 = vst [vmem:[#allocation3 + $0xd0] sm:$0xf] %v1732
        %1951 = vst [vmem:[#allocation3 + $0xdc] sm:$0xf] %v1746
        %1952 = vst [vmem:[#allocation3 + $0xe8] sm:$0xf] %v1756
        %1953 = vst [vmem:[#allocation3 + $0xf4] sm:$0xf] %v1770
        %1954 = vst [vmem:[#allocation3 + $0x100] sm:$0xf] %v1780
        %1955 = vst [vmem:[#allocation3 + $0x10c] sm:$0xf] %v1794
        %1956 = vst [vmem:[#allocation3 + $0x118] sm:$0xf] %v1804
        %1957 = vst [vmem:[#allocation3 + $0x124] sm:$0xf] %v1818
        %1958 = vst [vmem:[#allocation3 + $0x130] sm:$0xf] %v1828
        %1959 = vst [vmem:[#allocation3 + $0x13c] sm:$0xf] %v1842
        %1960 = vst [vmem:[#allocation3 + $0x148] sm:$0xf] %v1852
        %1961 = vst [vmem:[#allocation3 + $0x154] sm:$0xf] %v1866
        %1962 = vst [vmem:[#allocation3 + $0x160] sm:$0xf] %v1876
        %1963 = vst [vmem:[#allocation3 + $0x16c] sm:$0xf] %v1890
        %1964 = vst [vmem:[#allocation3 + $0x178] sm:$0xf] %v1900
        %v1965 = vld [vmem:[#allocation2] sm:$0xe]
        %v1966 = vld [vmem:[#allocation2 + $0x4] sm:$0xf]
        %v1967 = vld [vmem:[#allocation2 + $0x8] sm:$0x1]
        %v1968 = vld [vmem:[#allocation2 + $0xc] sm:$0xe]
        %v1969 = vld [vmem:[#allocation2 + $0x10] sm:$0xf]
        %v1970 = vld [vmem:[#allocation2 + $0x14] sm:$0x1]
        %v1971 = vld [vmem:[#allocation2 + $0x18] sm:$0xe]
        %v1972 = vld [vmem:[#allocation2 + $0x1c] sm:$0xf]
        %v1973 = vld [vmem:[#allocation2 + $0x20] sm:$0x1]
        %v1974 = vld [vmem:[#allocation2 + $0x24] sm:$0xe]
        %v1975 = vld [vmem:[#allocation2 + $0x28] sm:$0xf]
        %v1976 = vld [vmem:[#allocation2 + $0x2c] sm:$0x1]
        %v1977 = vld [vmem:[#allocation2 + $0x30] sm:$0xe]
        %v1978 = vld [vmem:[#allocation2 + $0x34] sm:$0xf]
        %v1979 = vld [vmem:[#allocation2 + $0x38] sm:$0x1]
        %v1980 = vld [vmem:[#allocation2 + $0x3c] sm:$0xe]
        %v1981 = vld [vmem:[#allocation2 + $0x40] sm:$0xf]
        %v1982 = vld [vmem:[#allocation2 + $0x44] sm:$0x1]
        %v1983 = vld [vmem:[#allocation2 + $0x48] sm:$0xe]
        %v1984 = vld [vmem:[#allocation2 + $0x4c] sm:$0xf]
        %v1985 = vld [vmem:[#allocation2 + $0x50] sm:$0x1]
        %v1986 = vld [vmem:[#allocation2 + $0x54] sm:$0xe]
        %v1987 = vld [vmem:[#allocation2 + $0x58] sm:$0xf]
        %v1988 = vld [vmem:[#allocation2 + $0x5c] sm:$0x1]
        %v1989 = vld [vmem:[#allocation2 + $0x60] sm:$0xe]
        %v1990 = vld [vmem:[#allocation2 + $0x64] sm:$0xf]
        %v1991 = vld [vmem:[#allocation2 + $0x68] sm:$0x1]
        %v1992 = vld [vmem:[#allocation2 + $0x6c] sm:$0xe]
        %v1993 = vld [vmem:[#allocation2 + $0x70] sm:$0xf]
        %v1994 = vld [vmem:[#allocation2 + $0x74] sm:$0x1]
        %v1995 = vld [vmem:[#allocation2 + $0x78] sm:$0xe]
        %v1996 = vld [vmem:[#allocation2 + $0x7c] sm:$0xf]
        %v1997 = vld [vmem:[#allocation2 + $0x80] sm:$0x1]
        %v1998 = vld [vmem:[#allocation2 + $0x84] sm:$0xe]
        %v1999 = vld [vmem:[#allocation2 + $0x88] sm:$0xf]
        %v2000 = vld [vmem:[#allocation2 + $0x8c] sm:$0x1]
        %v2001 = vld [vmem:[#allocation2 + $0x90] sm:$0xe]
        %v2002 = vld [vmem:[#allocation2 + $0x94] sm:$0xf]
        %v2003 = vld [vmem:[#allocation2 + $0x98] sm:$0x1]
        %v2004 = vld [vmem:[#allocation2 + $0x9c] sm:$0xe]
        %v2005 = vld [vmem:[#allocation2 + $0xa0] sm:$0xf]
        %v2006 = vld [vmem:[#allocation2 + $0xa4] sm:$0x1]
        %v2007 = vld [vmem:[#allocation2 + $0xa8] sm:$0xe]
        %v2008 = vld [vmem:[#allocation2 + $0xac] sm:$0xf]
        %v2009 = vld [vmem:[#allocation2 + $0xb0] sm:$0x1]
        %v2010 = vld [vmem:[#allocation2 + $0xb4] sm:$0xe]
        %v2011 = vld [vmem:[#allocation2 + $0xb8] sm:$0xf]
        %v2012 = vld [vmem:[#allocation2 + $0xbc] sm:$0x1]
        %vm2061 = vcmask 1042432
        %vm2062 = vcmask 1046532
        %vm2063 = vmor %vm2061, %vm2062
        %v2064 = vrot.slane %v1965, 5
        %v2065 = vrot.slane %v2064, 4
        %v2066 = vrot.slane %v1966, 5
        %v2067 = vsel %vm2063, %v2065, %v2066
        %v2068 = vrot.slane %v2066, 4
        %v2069 = vrot.slane %v1967, 5
        %v2070 = vsel %vm2063, %v2068, %v2069
        %v2071 = vrot.slane %v1968, 5
        %v2072 = vrot.slane %v2071, 4
        %v2073 = vrot.slane %v1969, 5
        %v2074 = vsel %vm2063, %v2072, %v2073
        %v2075 = vrot.slane %v2073, 4
        %v2076 = vrot.slane %v1970, 5
        %v2077 = vsel %vm2063, %v2075, %v2076
        %v2078 = vrot.slane %v1971, 5
        %v2079 = vrot.slane %v2078, 4
        %v2080 = vrot.slane %v1972, 5
        %v2081 = vsel %vm2063, %v2079, %v2080
        %v2082 = vrot.slane %v2080, 4
        %v2083 = vrot.slane %v1973, 5
        %v2084 = vsel %vm2063, %v2082, %v2083
        %v2085 = vrot.slane %v1974, 5
        %v2086 = vrot.slane %v2085, 4
        %v2087 = vrot.slane %v1975, 5
        %v2088 = vsel %vm2063, %v2086, %v2087
        %v2089 = vrot.slane %v2087, 4
        %v2090 = vrot.slane %v1976, 5
        %v2091 = vsel %vm2063, %v2089, %v2090
        %v2092 = vrot.slane %v1977, 5
        %v2093 = vrot.slane %v2092, 4
        %v2094 = vrot.slane %v1978, 5
        %v2095 = vsel %vm2063, %v2093, %v2094
        %v2096 = vrot.slane %v2094, 4
        %v2097 = vrot.slane %v1979, 5
        %v2098 = vsel %vm2063, %v2096, %v2097
        %v2099 = vrot.slane %v1980, 5
        %v2100 = vrot.slane %v2099, 4
        %v2101 = vrot.slane %v1981, 5
        %v2102 = vsel %vm2063, %v2100, %v2101
        %v2103 = vrot.slane %v2101, 4
        %v2104 = vrot.slane %v1982, 5
        %v2105 = vsel %vm2063, %v2103, %v2104
        %v2106 = vrot.slane %v1983, 5
        %v2107 = vrot.slane %v2106, 4
        %v2108 = vrot.slane %v1984, 5
        %v2109 = vsel %vm2063, %v2107, %v2108
        %v2110 = vrot.slane %v2108, 4
        %v2111 = vrot.slane %v1985, 5
        %v2112 = vsel %vm2063, %v2110, %v2111
        %v2113 = vrot.slane %v1986, 5
        %v2114 = vrot.slane %v2113, 4
        %v2115 = vrot.slane %v1987, 5
        %v2116 = vsel %vm2063, %v2114, %v2115
        %v2117 = vrot.slane %v2115, 4
        %v2118 = vrot.slane %v1988, 5
        %v2119 = vsel %vm2063, %v2117, %v2118
        %v2120 = vrot.slane %v1989, 5
        %v2121 = vrot.slane %v2120, 4
        %v2122 = vrot.slane %v1990, 5
        %v2123 = vsel %vm2063, %v2121, %v2122
        %v2124 = vrot.slane %v2122, 4
        %v2125 = vrot.slane %v1991, 5
        %v2126 = vsel %vm2063, %v2124, %v2125
        %v2127 = vrot.slane %v1992, 5
        %v2128 = vrot.slane %v2127, 4
        %v2129 = vrot.slane %v1993, 5
        %v2130 = vsel %vm2063, %v2128, %v2129
        %v2131 = vrot.slane %v2129, 4
        %v2132 = vrot.slane %v1994, 5
        %v2133 = vsel %vm2063, %v2131, %v2132
        %v2134 = vrot.slane %v1995, 5
        %v2135 = vrot.slane %v2134, 4
        %v2136 = vrot.slane %v1996, 5
        %v2137 = vsel %vm2063, %v2135, %v2136
        %v2138 = vrot.slane %v2136, 4
        %v2139 = vrot.slane %v1997, 5
        %v2140 = vsel %vm2063, %v2138, %v2139
        %v2141 = vrot.slane %v1998, 5
        %v2142 = vrot.slane %v2141, 4
        %v2143 = vrot.slane %v1999, 5
        %v2144 = vsel %vm2063, %v2142, %v2143
        %v2145 = vrot.slane %v2143, 4
        %v2146 = vrot.slane %v2000, 5
        %v2147 = vsel %vm2063, %v2145, %v2146
        %v2148 = vrot.slane %v2001, 5
        %v2149 = vrot.slane %v2148, 4
        %v2150 = vrot.slane %v2002, 5
        %v2151 = vsel %vm2063, %v2149, %v2150
        %v2152 = vrot.slane %v2150, 4
        %v2153 = vrot.slane %v2003, 5
        %v2154 = vsel %vm2063, %v2152, %v2153
        %v2155 = vrot.slane %v2004, 5
        %v2156 = vrot.slane %v2155, 4
        %v2157 = vrot.slane %v2005, 5
        %v2158 = vsel %vm2063, %v2156, %v2157
        %v2159 = vrot.slane %v2157, 4
        %v2160 = vrot.slane %v2006, 5
        %v2161 = vsel %vm2063, %v2159, %v2160
        %v2162 = vrot.slane %v2007, 5
        %v2163 = vrot.slane %v2162, 4
        %v2164 = vrot.slane %v2008, 5
        %v2165 = vsel %vm2063, %v2163, %v2164
        %v2166 = vrot.slane %v2164, 4
        %v2167 = vrot.slane %v2009, 5
        %v2168 = vsel %vm2063, %v2166, %v2167
        %v2169 = vrot.slane %v2010, 5
        %v2170 = vrot.slane %v2169, 4
        %v2171 = vrot.slane %v2011, 5
        %v2172 = vsel %vm2063, %v2170, %v2171
        %v2173 = vrot.slane %v2171, 4
        %v2174 = vrot.slane %v2012, 5
        %v2175 = vsel %vm2063, %v2173, %v2174
        %2208 = vst [vmem:[#allocation3 + $0x8] sm:$0xf] %v2067
        %2209 = vst [vmem:[#allocation3 + $0x14] sm:$0xf] %v2070
        %2210 = vst [vmem:[#allocation3 + $0x20] sm:$0xf] %v2074
        %2211 = vst [vmem:[#allocation3 + $0x2c] sm:$0xf] %v2077
        %2212 = vst [vmem:[#allocation3 + $0x38] sm:$0xf] %v2081
        %2213 = vst [vmem:[#allocation3 + $0x44] sm:$0xf] %v2084
        %2214 = vst [vmem:[#allocation3 + $0x50] sm:$0xf] %v2088
        %2215 = vst [vmem:[#allocation3 + $0x5c] sm:$0xf] %v2091
        %2216 = vst [vmem:[#allocation3 + $0x68] sm:$0xf] %v2095
        %2217 = vst [vmem:[#allocation3 + $0x74] sm:$0xf] %v2098
        %2218 = vst [vmem:[#allocation3 + $0x80] sm:$0xf] %v2102
        %2219 = vst [vmem:[#allocation3 + $0x8c] sm:$0xf] %v2105
        %2220 = vst [vmem:[#allocation3 + $0x98] sm:$0xf] %v2109
        %2221 = vst [vmem:[#allocation3 + $0xa4] sm:$0xf] %v2112
        %2222 = vst [vmem:[#allocation3 + $0xb0] sm:$0xf] %v2116
        %2223 = vst [vmem:[#allocation3 + $0xbc] sm:$0xf] %v2119
        %2224 = vst [vmem:[#allocation3 + $0xc8] sm:$0xf] %v2123
        %2225 = vst [vmem:[#allocation3 + $0xd4] sm:$0xf] %v2126
        %2226 = vst [vmem:[#allocation3 + $0xe0] sm:$0xf] %v2130
        %2227 = vst [vmem:[#allocation3 + $0xec] sm:$0xf] %v2133
        %2228 = vst [vmem:[#allocation3 + $0xf8] sm:$0xf] %v2137
        %2229 = vst [vmem:[#allocation3 + $0x104] sm:$0xf] %v2140
        %2230 = vst [vmem:[#allocation3 + $0x110] sm:$0xf] %v2144
        %2231 = vst [vmem:[#allocation3 + $0x11c] sm:$0xf] %v2147
        %2232 = vst [vmem:[#allocation3 + $0x128] sm:$0xf] %v2151
        %2233 = vst [vmem:[#allocation3 + $0x134] sm:$0xf] %v2154
        %2234 = vst [vmem:[#allocation3 + $0x140] sm:$0xf] %v2158
        %2235 = vst [vmem:[#allocation3 + $0x14c] sm:$0xf] %v2161
        %2236 = vst [vmem:[#allocation3 + $0x158] sm:$0xf] %v2165
        %2237 = vst [vmem:[#allocation3 + $0x164] sm:$0xf] %v2168
        %2238 = vst [vmem:[#allocation3 + $0x170] sm:$0xf] %v2172
        %2239 = vst [vmem:[#allocation3 + $0x17c] sm:$0xf] %v2175
        %v2240 = vld [vmem:[#allocation3] sm:$0xff]
        %v2241 = vld [vmem:[#allocation3 + $0x8] sm:$0xf]
        %v2242 = vld [vmem:[#allocation3 + $0xc] sm:$0xff]
        %v2243 = vld [vmem:[#allocation3 + $0x14] sm:$0xf]
        %v2244 = vld [vmem:[#allocation3 + $0x18] sm:$0xff]
        %v2245 = vld [vmem:[#allocation3 + $0x20] sm:$0xf]
        %v2246 = vld [vmem:[#allocation3 + $0x24] sm:$0xff]
        %v2247 = vld [vmem:[#allocation3 + $0x2c] sm:$0xf]
        %v2248 = vld [vmem:[#allocation3 + $0x30] sm:$0xff]
        %v2249 = vld [vmem:[#allocation3 + $0x38] sm:$0xf]
        %v2250 = vld [vmem:[#allocation3 + $0x3c] sm:$0xff]
        %v2251 = vld [vmem:[#allocation3 + $0x44] sm:$0xf]
        %v2252 = vld [vmem:[#allocation3 + $0x48] sm:$0xff]
        %v2253 = vld [vmem:[#allocation3 + $0x50] sm:$0xf]
        %v2254 = vld [vmem:[#allocation3 + $0x54] sm:$0xff]
        %v2255 = vld [vmem:[#allocation3 + $0x5c] sm:$0xf]
        %v2256 = vld [vmem:[#allocation3 + $0x60] sm:$0xff]
        %v2257 = vld [vmem:[#allocation3 + $0x68] sm:$0xf]
        %v2258 = vld [vmem:[#allocation3 + $0x6c] sm:$0xff]
        %v2259 = vld [vmem:[#allocation3 + $0x74] sm:$0xf]
        %v2260 = vld [vmem:[#allocation3 + $0x78] sm:$0xff]
        %v2261 = vld [vmem:[#allocation3 + $0x80] sm:$0xf]
        %v2262 = vld [vmem:[#allocation3 + $0x84] sm:$0xff]
        %v2263 = vld [vmem:[#allocation3 + $0x8c] sm:$0xf]
        %v2264 = vld [vmem:[#allocation3 + $0x90] sm:$0xff]
        %v2265 = vld [vmem:[#allocation3 + $0x98] sm:$0xf]
        %v2266 = vld [vmem:[#allocation3 + $0x9c] sm:$0xff]
        %v2267 = vld [vmem:[#allocation3 + $0xa4] sm:$0xf]
        %v2268 = vld [vmem:[#allocation3 + $0xa8] sm:$0xff]
        %v2269 = vld [vmem:[#allocation3 + $0xb0] sm:$0xf]
        %v2270 = vld [vmem:[#allocation3 + $0xb4] sm:$0xff]
        %v2271 = vld [vmem:[#allocation3 + $0xbc] sm:$0xf]
        %v2272 = vld [vmem:[#allocation3 + $0xc0] sm:$0xff]
        %v2273 = vld [vmem:[#allocation3 + $0xc8] sm:$0xf]
        %v2274 = vld [vmem:[#allocation3 + $0xcc] sm:$0xff]
        %v2275 = vld [vmem:[#allocation3 + $0xd4] sm:$0xf]
        %v2276 = vld [vmem:[#allocation3 + $0xd8] sm:$0xff]
        %v2277 = vld [vmem:[#allocation3 + $0xe0] sm:$0xf]
        %v2278 = vld [vmem:[#allocation3 + $0xe4] sm:$0xff]
        %v2279 = vld [vmem:[#allocation3 + $0xec] sm:$0xf]
        %v2280 = vld [vmem:[#allocation3 + $0xf0] sm:$0xff]
        %v2281 = vld [vmem:[#allocation3 + $0xf8] sm:$0xf]
        %v2282 = vld [vmem:[#allocation3 + $0xfc] sm:$0xff]
        %v2283 = vld [vmem:[#allocation3 + $0x104] sm:$0xf]
        %v2284 = vld [vmem:[#allocation3 + $0x108] sm:$0xff]
        %v2285 = vld [vmem:[#allocation3 + $0x110] sm:$0xf]
        %v2286 = vld [vmem:[#allocation3 + $0x114] sm:$0xff]
        %v2287 = vld [vmem:[#allocation3 + $0x11c] sm:$0xf]
        %v2288 = vld [vmem:[#allocation3 + $0x120] sm:$0xff]
        %v2289 = vld [vmem:[#allocation3 + $0x128] sm:$0xf]
        %v2290 = vld [vmem:[#allocation3 + $0x12c] sm:$0xff]
        %v2291 = vld [vmem:[#allocation3 + $0x134] sm:$0xf]
        %v2292 = vld [vmem:[#allocation3 + $0x138] sm:$0xff]
        %v2293 = vld [vmem:[#allocation3 + $0x140] sm:$0xf]
        %v2294 = vld [vmem:[#allocation3 + $0x144] sm:$0xff]
        %v2295 = vld [vmem:[#allocation3 + $0x14c] sm:$0xf]
        %v2296 = vld [vmem:[#allocation3 + $0x150] sm:$0xff]
        %v2297 = vld [vmem:[#allocation3 + $0x158] sm:$0xf]
        %v2298 = vld [vmem:[#allocation3 + $0x15c] sm:$0xff]
        %v2299 = vld [vmem:[#allocation3 + $0x164] sm:$0xf]
        %v2300 = vld [vmem:[#allocation3 + $0x168] sm:$0xff]
        %v2301 = vld [vmem:[#allocation3 + $0x170] sm:$0xf]
        %v2302 = vld [vmem:[#allocation3 + $0x174] sm:$0xff]
        %v2303 = vld [vmem:[#allocation3 + $0x17c] sm:$0xf]
        %v2304 = vld [vmem:[#allocation9] sm:$0xf]
        %v2305 = vld [vmem:[#allocation9 + $0x4] sm:$0xf]
        %v2306 = vld [vmem:[#allocation9 + $0x8] sm:$0xf]
        %v2307 = vld [vmem:[#allocation9 + $0xc] sm:$0xf]
        %v2308 = vld [vmem:[#allocation9 + $0x10] sm:$0xf]
        %v2309 = vld [vmem:[#allocation9 + $0x14] sm:$0xf]
        %v2310 = vld [vmem:[#allocation9 + $0x18] sm:$0xf]
        %v2311 = vld [vmem:[#allocation9 + $0x1c] sm:$0xf]
        %v2312 = vld [vmem:[#allocation9 + $0x20] sm:$0xf]
        %v2313 = vld [vmem:[#allocation9 + $0x24] sm:$0xf]
        %v2314 = vld [vmem:[#allocation9 + $0x28] sm:$0xf]
        %v2315 = vld [vmem:[#allocation9 + $0x2c] sm:$0xf]
        %v2316 = vld [vmem:[#allocation9 + $0x30] sm:$0xf]
        %v2317 = vld [vmem:[#allocation9 + $0x34] sm:$0xf]
        %v2318 = vld [vmem:[#allocation9 + $0x38] sm:$0xf]
        %v2319 = vld [vmem:[#allocation9 + $0x3c] sm:$0xf]
        %v2320 = vld [vmem:[#allocation9 + $0x40] sm:$0xf]
        %v2321 = vld [vmem:[#allocation9 + $0x44] sm:$0xf]
        %v2322 = vld [vmem:[#allocation9 + $0x48] sm:$0xf]
        %v2323 = vld [vmem:[#allocation9 + $0x4c] sm:$0xf]
        %v2324 = vld [vmem:[#allocation9 + $0x50] sm:$0xf]
        %v2325 = vld [vmem:[#allocation9 + $0x54] sm:$0xf]
        %v2326 = vld [vmem:[#allocation9 + $0x58] sm:$0xf]
        %v2327 = vld [vmem:[#allocation9 + $0x5c] sm:$0xf]
        %v2328 = vld [vmem:[#allocation9 + $0x60] sm:$0xf]
        %v2329 = vld [vmem:[#allocation9 + $0x64] sm:$0xf]
        %v2330 = vld [vmem:[#allocation9 + $0x68] sm:$0xf]
        %v2331 = vld [vmem:[#allocation9 + $0x6c] sm:$0xf]
        %v2332 = vld [vmem:[#allocation9 + $0x70] sm:$0xf]
        %v2333 = vld [vmem:[#allocation9 + $0x74] sm:$0xf]
        %v2334 = vld [vmem:[#allocation9 + $0x78] sm:$0xf]
        %v2335 = vld [vmem:[#allocation9 + $0x7c] sm:$0xf]
        %v2336 = vld [vmem:[#allocation9 + $0x80] sm:$0xf]
        %v2337 = vld [vmem:[#allocation9 + $0x84] sm:$0xf]
        %v2338 = vld [vmem:[#allocation9 + $0x88] sm:$0xf]
        %v2339 = vld [vmem:[#allocation9 + $0x8c] sm:$0xf]
        %v2340 = vld [vmem:[#allocation9 + $0x90] sm:$0xf]
        %v2341 = vld [vmem:[#allocation9 + $0x94] sm:$0xf]
        %v2342 = vld [vmem:[#allocation9 + $0x98] sm:$0xf]
        %v2343 = vld [vmem:[#allocation9 + $0x9c] sm:$0xf]
        %v2344 = vld [vmem:[#allocation9 + $0xa0] sm:$0xf]
        %v2345 = vld [vmem:[#allocation9 + $0xa4] sm:$0xf]
        %v2346 = vld [vmem:[#allocation9 + $0xa8] sm:$0xf]
        %v2347 = vld [vmem:[#allocation9 + $0xac] sm:$0xf]
        %v2348 = vld [vmem:[#allocation9 + $0xb0] sm:$0xf]
        %v2349 = vld [vmem:[#allocation9 + $0xb4] sm:$0xf]
        %v2350 = vld [vmem:[#allocation9 + $0xb8] sm:$0xf]
        %v2351 = vld [vmem:[#allocation9 + $0xbc] sm:$0xf]
        %v2352 = vld [vmem:[%s768] sm:$0xf]
        %v2353 = vld [vmem:[%s768 + $0x4] sm:$0xf]
        %v2354 = vld [vmem:[%s768 + $0xc] sm:$0xf]
        %v2355 = vld [vmem:[%s768 + $0x10] sm:$0xf]
        %v2356 = vld [vmem:[%s768 + $0x18] sm:$0xf]
        %v2357 = vld [vmem:[%s768 + $0x1c] sm:$0xf]
        %v2358 = vld [vmem:[%s768 + $0x24] sm:$0xf]
        %v2359 = vld [vmem:[%s768 + $0x28] sm:$0xf]
        %v2360 = vld [vmem:[%s768 + $0x30] sm:$0xf]
        %v2361 = vld [vmem:[%s768 + $0x34] sm:$0xf]
        %v2362 = vld [vmem:[%s768 + $0x3c] sm:$0xf]
        %v2363 = vld [vmem:[%s768 + $0x40] sm:$0xf]
        %v2364 = vld [vmem:[%s768 + $0x48] sm:$0xf]
        %v2365 = vld [vmem:[%s768 + $0x4c] sm:$0xf]
        %v2366 = vld [vmem:[%s768 + $0x54] sm:$0xf]
        %v2367 = vld [vmem:[%s768 + $0x58] sm:$0xf]
        %v2368 = vld [vmem:[%s768 + $0x60] sm:$0xf]
        %v2369 = vld [vmem:[%s768 + $0x64] sm:$0xf]
        %v2370 = vld [vmem:[%s768 + $0x6c] sm:$0xf]
        %v2371 = vld [vmem:[%s768 + $0x70] sm:$0xf]
        %v2372 = vld [vmem:[%s768 + $0x78] sm:$0xf]
        %v2373 = vld [vmem:[%s768 + $0x7c] sm:$0xf]
        %v2374 = vld [vmem:[%s768 + $0x84] sm:$0xf]
        %v2375 = vld [vmem:[%s768 + $0x88] sm:$0xf]
        %v2376 = vld [vmem:[%s768 + $0x90] sm:$0xf]
        %v2377 = vld [vmem:[%s768 + $0x94] sm:$0xf]
        %v2378 = vld [vmem:[%s768 + $0x9c] sm:$0xf]
        %v2379 = vld [vmem:[%s768 + $0xa0] sm:$0xf]
        %v2380 = vld [vmem:[%s768 + $0xa8] sm:$0xf]
        %v2381 = vld [vmem:[%s768 + $0xac] sm:$0xf]
        %v2382 = vld [vmem:[%s768 + $0xb4] sm:$0xf]
        %v2383 = vld [vmem:[%s768 + $0xb8] sm:$0xf]
        %2384 = vst [vmem:[#allocation3] sm:$0xf] %v2352
        %2385 = vst [vmem:[#allocation3 + $0xc] sm:$0xf] %v2353
        %2386 = vst [vmem:[#allocation3 + $0x18] sm:$0xf] %v2354
        %2387 = vst [vmem:[#allocation3 + $0x24] sm:$0xf] %v2355
        %2388 = vst [vmem:[#allocation3 + $0x30] sm:$0xf] %v2356
        %2389 = vst [vmem:[#allocation3 + $0x3c] sm:$0xf] %v2357
        %2390 = vst [vmem:[#allocation3 + $0x48] sm:$0xf] %v2358
        %2391 = vst [vmem:[#allocation3 + $0x54] sm:$0xf] %v2359
        %2392 = vst [vmem:[#allocation3 + $0x60] sm:$0xf] %v2360
        %2393 = vst [vmem:[#allocation3 + $0x6c] sm:$0xf] %v2361
        %2394 = vst [vmem:[#allocation3 + $0x78] sm:$0xf] %v2362
        %2395 = vst [vmem:[#allocation3 + $0x84] sm:$0xf] %v2363
        %2396 = vst [vmem:[#allocation3 + $0x90] sm:$0xf] %v2364
        %2397 = vst [vmem:[#allocation3 + $0x9c] sm:$0xf] %v2365
        %2398 = vst [vmem:[#allocation3 + $0xa8] sm:$0xf] %v2366
        %2399 = vst [vmem:[#allocation3 + $0xb4] sm:$0xf] %v2367
        %2400 = vst [vmem:[#allocation3 + $0xc0] sm:$0xf] %v2368
        %2401 = vst [vmem:[#allocation3 + $0xcc] sm:$0xf] %v2369
        %2402 = vst [vmem:[#allocation3 + $0xd8] sm:$0xf] %v2370
        %2403 = vst [vmem:[#allocation3 + $0xe4] sm:$0xf] %v2371
        %2404 = vst [vmem:[#allocation3 + $0xf0] sm:$0xf] %v2372
        %2405 = vst [vmem:[#allocation3 + $0xfc] sm:$0xf] %v2373
        %2406 = vst [vmem:[#allocation3 + $0x108] sm:$0xf] %v2374
        %2407 = vst [vmem:[#allocation3 + $0x114] sm:$0xf] %v2375
        %2408 = vst [vmem:[#allocation3 + $0x120] sm:$0xf] %v2376
        %2409 = vst [vmem:[#allocation3 + $0x12c] sm:$0xf] %v2377
        %2410 = vst [vmem:[#allocation3 + $0x138] sm:$0xf] %v2378
        %2411 = vst [vmem:[#allocation3 + $0x144] sm:$0xf] %v2379
        %2412 = vst [vmem:[#allocation3 + $0x150] sm:$0xf] %v2380
        %2413 = vst [vmem:[#allocation3 + $0x15c] sm:$0xf] %v2381
        %2414 = vst [vmem:[#allocation3 + $0x168] sm:$0xf] %v2382
        %2415 = vst [vmem:[#allocation3 + $0x174] sm:$0xf] %v2383
        %v2416 = vld [vmem:[%s768] sm:$0xf]
        %v2417 = vld [vmem:[%s768 + $0x4] sm:$0xf]
        %v2418 = vld [vmem:[%s768 + $0x8] sm:$0x1]
        %v2419 = vld [vmem:[%s768 + $0xc] sm:$0xf]
        %v2420 = vld [vmem:[%s768 + $0x10] sm:$0xf]
        %v2421 = vld [vmem:[%s768 + $0x14] sm:$0x1]
        %v2422 = vld [vmem:[%s768 + $0x18] sm:$0xf]
        %v2423 = vld [vmem:[%s768 + $0x1c] sm:$0xf]
        %v2424 = vld [vmem:[%s768 + $0x20] sm:$0x1]
        %v2425 = vld [vmem:[%s768 + $0x24] sm:$0xf]
        %v2426 = vld [vmem:[%s768 + $0x28] sm:$0xf]
        %v2427 = vld [vmem:[%s768 + $0x2c] sm:$0x1]
        %v2428 = vld [vmem:[%s768 + $0x30] sm:$0xf]
        %v2429 = vld [vmem:[%s768 + $0x34] sm:$0xf]
        %v2430 = vld [vmem:[%s768 + $0x38] sm:$0x1]
        %v2431 = vld [vmem:[%s768 + $0x3c] sm:$0xf]
        %v2432 = vld [vmem:[%s768 + $0x40] sm:$0xf]
        %v2433 = vld [vmem:[%s768 + $0x44] sm:$0x1]
        %v2434 = vld [vmem:[%s768 + $0x48] sm:$0xf]
        %v2435 = vld [vmem:[%s768 + $0x4c] sm:$0xf]
        %v2436 = vld [vmem:[%s768 + $0x50] sm:$0x1]
        %v2437 = vld [vmem:[%s768 + $0x54] sm:$0xf]
        %v2438 = vld [vmem:[%s768 + $0x58] sm:$0xf]
        %v2439 = vld [vmem:[%s768 + $0x5c] sm:$0x1]
        %v2440 = vld [vmem:[%s768 + $0x60] sm:$0xf]
        %v2441 = vld [vmem:[%s768 + $0x64] sm:$0xf]
        %v2442 = vld [vmem:[%s768 + $0x68] sm:$0x1]
        %v2443 = vld [vmem:[%s768 + $0x6c] sm:$0xf]
        %v2444 = vld [vmem:[%s768 + $0x70] sm:$0xf]
        %v2445 = vld [vmem:[%s768 + $0x74] sm:$0x1]
        %v2446 = vld [vmem:[%s768 + $0x78] sm:$0xf]
        %v2447 = vld [vmem:[%s768 + $0x7c] sm:$0xf]
        %v2448 = vld [vmem:[%s768 + $0x80] sm:$0x1]
        %v2449 = vld [vmem:[%s768 + $0x84] sm:$0xf]
        %v2450 = vld [vmem:[%s768 + $0x88] sm:$0xf]
        %v2451 = vld [vmem:[%s768 + $0x8c] sm:$0x1]
        %v2452 = vld [vmem:[%s768 + $0x90] sm:$0xf]
        %v2453 = vld [vmem:[%s768 + $0x94] sm:$0xf]
        %v2454 = vld [vmem:[%s768 + $0x98] sm:$0x1]
        %v2455 = vld [vmem:[%s768 + $0x9c] sm:$0xf]
        %v2456 = vld [vmem:[%s768 + $0xa0] sm:$0xf]
        %v2457 = vld [vmem:[%s768 + $0xa4] sm:$0x1]
        %v2458 = vld [vmem:[%s768 + $0xa8] sm:$0xf]
        %v2459 = vld [vmem:[%s768 + $0xac] sm:$0xf]
        %v2460 = vld [vmem:[%s768 + $0xb0] sm:$0x1]
        %v2461 = vld [vmem:[%s768 + $0xb4] sm:$0xf]
        %v2462 = vld [vmem:[%s768 + $0xb8] sm:$0xf]
        %v2463 = vld [vmem:[%s768 + $0xbc] sm:$0x1]
        %v2465 = vshrl.u32 %v2416, 16
        %v2467 = vrot.slane %v2465, 4
        %v2468 = vshll.u32 %v2416, 16
        %v2470 = vrot.slane %v2468, 5
        %v2471 = vor.u32 %v2467, %v2470
        %v2472 = vrot.slane %v2471, 4
        %v2474 = vshll.u32 %v2417, 16
        %v2476 = vrot.slane %v2474, 5
        %v2477 = vsel %vm1516, %v2472, %v2476
        %v2478 = vshrl.u32 %v2417, 16
        %v2480 = vrot.slane %v2478, 4
        %v2481 = vor.u32 %v2480, %v2476
        %v2482 = vrot.slane %v2481, 4
        %v2484 = vshll.u32 %v2418, 16
        %v2486 = vrot.slane %v2484, 5
        %v2487 = vsel %vm1516, %v2482, %v2486
        %v2489 = vshrl.u32 %v2419, 16
        %v2491 = vrot.slane %v2489, 4
        %v2492 = vshll.u32 %v2419, 16
        %v2494 = vrot.slane %v2492, 5
        %v2495 = vor.u32 %v2491, %v2494
        %v2496 = vrot.slane %v2495, 4
        %v2498 = vshll.u32 %v2420, 16
        %v2500 = vrot.slane %v2498, 5
        %v2501 = vsel %vm1516, %v2496, %v2500
        %v2502 = vshrl.u32 %v2420, 16
        %v2504 = vrot.slane %v2502, 4
        %v2505 = vor.u32 %v2504, %v2500
        %v2506 = vrot.slane %v2505, 4
        %v2508 = vshll.u32 %v2421, 16
        %v2510 = vrot.slane %v2508, 5
        %v2511 = vsel %vm1516, %v2506, %v2510
        %v2513 = vshrl.u32 %v2422, 16
        %v2515 = vrot.slane %v2513, 4
        %v2516 = vshll.u32 %v2422, 16
        %v2518 = vrot.slane %v2516, 5
        %v2519 = vor.u32 %v2515, %v2518
        %v2520 = vrot.slane %v2519, 4
        %v2522 = vshll.u32 %v2423, 16
        %v2524 = vrot.slane %v2522, 5
        %v2525 = vsel %vm1516, %v2520, %v2524
        %v2526 = vshrl.u32 %v2423, 16
        %v2528 = vrot.slane %v2526, 4
        %v2529 = vor.u32 %v2528, %v2524
        %v2530 = vrot.slane %v2529, 4
        %v2532 = vshll.u32 %v2424, 16
        %v2534 = vrot.slane %v2532, 5
        %v2535 = vsel %vm1516, %v2530, %v2534
        %v2537 = vshrl.u32 %v2425, 16
        %v2539 = vrot.slane %v2537, 4
        %v2540 = vshll.u32 %v2425, 16
        %v2542 = vrot.slane %v2540, 5
        %v2543 = vor.u32 %v2539, %v2542
        %v2544 = vrot.slane %v2543, 4
        %v2546 = vshll.u32 %v2426, 16
        %v2548 = vrot.slane %v2546, 5
        %v2549 = vsel %vm1516, %v2544, %v2548
        %v2550 = vshrl.u32 %v2426, 16
        %v2552 = vrot.slane %v2550, 4
        %v2553 = vor.u32 %v2552, %v2548
        %v2554 = vrot.slane %v2553, 4
        %v2556 = vshll.u32 %v2427, 16
        %v2558 = vrot.slane %v2556, 5
        %v2559 = vsel %vm1516, %v2554, %v2558
        %v2561 = vshrl.u32 %v2428, 16
        %v2563 = vrot.slane %v2561, 4
        %v2564 = vshll.u32 %v2428, 16
        %v2566 = vrot.slane %v2564, 5
        %v2567 = vor.u32 %v2563, %v2566
        %v2568 = vrot.slane %v2567, 4
        %v2570 = vshll.u32 %v2429, 16
        %v2572 = vrot.slane %v2570, 5
        %v2573 = vsel %vm1516, %v2568, %v2572
        %v2574 = vshrl.u32 %v2429, 16
        %v2576 = vrot.slane %v2574, 4
        %v2577 = vor.u32 %v2576, %v2572
        %v2578 = vrot.slane %v2577, 4
        %v2580 = vshll.u32 %v2430, 16
        %v2582 = vrot.slane %v2580, 5
        %v2583 = vsel %vm1516, %v2578, %v2582
        %v2585 = vshrl.u32 %v2431, 16
        %v2587 = vrot.slane %v2585, 4
        %v2588 = vshll.u32 %v2431, 16
        %v2590 = vrot.slane %v2588, 5
        %v2591 = vor.u32 %v2587, %v2590
        %v2592 = vrot.slane %v2591, 4
        %v2594 = vshll.u32 %v2432, 16
        %v2596 = vrot.slane %v2594, 5
        %v2597 = vsel %vm1516, %v2592, %v2596
        %v2598 = vshrl.u32 %v2432, 16
        %v2600 = vrot.slane %v2598, 4
        %v2601 = vor.u32 %v2600, %v2596
        %v2602 = vrot.slane %v2601, 4
        %v2604 = vshll.u32 %v2433, 16
        %v2606 = vrot.slane %v2604, 5
        %v2607 = vsel %vm1516, %v2602, %v2606
        %v2609 = vshrl.u32 %v2434, 16
        %v2611 = vrot.slane %v2609, 4
        %v2612 = vshll.u32 %v2434, 16
        %v2614 = vrot.slane %v2612, 5
        %v2615 = vor.u32 %v2611, %v2614
        %v2616 = vrot.slane %v2615, 4
        %v2618 = vshll.u32 %v2435, 16
        %v2620 = vrot.slane %v2618, 5
        %v2621 = vsel %vm1516, %v2616, %v2620
        %v2622 = vshrl.u32 %v2435, 16
        %v2624 = vrot.slane %v2622, 4
        %v2625 = vor.u32 %v2624, %v2620
        %v2626 = vrot.slane %v2625, 4
        %v2628 = vshll.u32 %v2436, 16
        %v2630 = vrot.slane %v2628, 5
        %v2631 = vsel %vm1516, %v2626, %v2630
        %v2633 = vshrl.u32 %v2437, 16
        %v2635 = vrot.slane %v2633, 4
        %v2636 = vshll.u32 %v2437, 16
        %v2638 = vrot.slane %v2636, 5
        %v2639 = vor.u32 %v2635, %v2638
        %v2640 = vrot.slane %v2639, 4
        %v2642 = vshll.u32 %v2438, 16
        %v2644 = vrot.slane %v2642, 5
        %v2645 = vsel %vm1516, %v2640, %v2644
        %v2646 = vshrl.u32 %v2438, 16
        %v2648 = vrot.slane %v2646, 4
        %v2649 = vor.u32 %v2648, %v2644
        %v2650 = vrot.slane %v2649, 4
        %v2652 = vshll.u32 %v2439, 16
        %v2654 = vrot.slane %v2652, 5
        %v2655 = vsel %vm1516, %v2650, %v2654
        %v2657 = vshrl.u32 %v2440, 16
        %v2659 = vrot.slane %v2657, 4
        %v2660 = vshll.u32 %v2440, 16
        %v2662 = vrot.slane %v2660, 5
        %v2663 = vor.u32 %v2659, %v2662
        %v2664 = vrot.slane %v2663, 4
        %v2666 = vshll.u32 %v2441, 16
        %v2668 = vrot.slane %v2666, 5
        %v2669 = vsel %vm1516, %v2664, %v2668
        %v2670 = vshrl.u32 %v2441, 16
        %v2672 = vrot.slane %v2670, 4
        %v2673 = vor.u32 %v2672, %v2668
        %v2674 = vrot.slane %v2673, 4
        %v2676 = vshll.u32 %v2442, 16
        %v2678 = vrot.slane %v2676, 5
        %v2679 = vsel %vm1516, %v2674, %v2678
        %v2681 = vshrl.u32 %v2443, 16
        %v2683 = vrot.slane %v2681, 4
        %v2684 = vshll.u32 %v2443, 16
        %v2686 = vrot.slane %v2684, 5
        %v2687 = vor.u32 %v2683, %v2686
        %v2688 = vrot.slane %v2687, 4
        %v2690 = vshll.u32 %v2444, 16
        %v2692 = vrot.slane %v2690, 5
        %v2693 = vsel %vm1516, %v2688, %v2692
        %v2694 = vshrl.u32 %v2444, 16
        %v2696 = vrot.slane %v2694, 4
        %v2697 = vor.u32 %v2696, %v2692
        %v2698 = vrot.slane %v2697, 4
        %v2700 = vshll.u32 %v2445, 16
        %v2702 = vrot.slane %v2700, 5
        %v2703 = vsel %vm1516, %v2698, %v2702
        %v2705 = vshrl.u32 %v2446, 16
        %v2707 = vrot.slane %v2705, 4
        %v2708 = vshll.u32 %v2446, 16
        %v2710 = vrot.slane %v2708, 5
        %v2711 = vor.u32 %v2707, %v2710
        %v2712 = vrot.slane %v2711, 4
        %v2714 = vshll.u32 %v2447, 16
        %v2716 = vrot.slane %v2714, 5
        %v2717 = vsel %vm1516, %v2712, %v2716
        %v2718 = vshrl.u32 %v2447, 16
        %v2720 = vrot.slane %v2718, 4
        %v2721 = vor.u32 %v2720, %v2716
        %v2722 = vrot.slane %v2721, 4
        %v2724 = vshll.u32 %v2448, 16
        %v2726 = vrot.slane %v2724, 5
        %v2727 = vsel %vm1516, %v2722, %v2726
        %v2729 = vshrl.u32 %v2449, 16
        %v2731 = vrot.slane %v2729, 4
        %v2732 = vshll.u32 %v2449, 16
        %v2734 = vrot.slane %v2732, 5
        %v2735 = vor.u32 %v2731, %v2734
        %v2736 = vrot.slane %v2735, 4
        %v2738 = vshll.u32 %v2450, 16
        %v2740 = vrot.slane %v2738, 5
        %v2741 = vsel %vm1516, %v2736, %v2740
        %v2742 = vshrl.u32 %v2450, 16
        %v2744 = vrot.slane %v2742, 4
        %v2745 = vor.u32 %v2744, %v2740
        %v2746 = vrot.slane %v2745, 4
        %v2748 = vshll.u32 %v2451, 16
        %v2750 = vrot.slane %v2748, 5
        %v2751 = vsel %vm1516, %v2746, %v2750
        %v2753 = vshrl.u32 %v2452, 16
        %v2755 = vrot.slane %v2753, 4
        %v2756 = vshll.u32 %v2452, 16
        %v2758 = vrot.slane %v2756, 5
        %v2759 = vor.u32 %v2755, %v2758
        %v2760 = vrot.slane %v2759, 4
        %v2762 = vshll.u32 %v2453, 16
        %v2764 = vrot.slane %v2762, 5
        %v2765 = vsel %vm1516, %v2760, %v2764
        %v2766 = vshrl.u32 %v2453, 16
        %v2768 = vrot.slane %v2766, 4
        %v2769 = vor.u32 %v2768, %v2764
        %v2770 = vrot.slane %v2769, 4
        %v2772 = vshll.u32 %v2454, 16
        %v2774 = vrot.slane %v2772, 5
        %v2775 = vsel %vm1516, %v2770, %v2774
        %v2777 = vshrl.u32 %v2455, 16
        %v2779 = vrot.slane %v2777, 4
        %v2780 = vshll.u32 %v2455, 16
        %v2782 = vrot.slane %v2780, 5
        %v2783 = vor.u32 %v2779, %v2782
        %v2784 = vrot.slane %v2783, 4
        %v2786 = vshll.u32 %v2456, 16
        %v2788 = vrot.slane %v2786, 5
        %v2789 = vsel %vm1516, %v2784, %v2788
        %v2790 = vshrl.u32 %v2456, 16
        %v2792 = vrot.slane %v2790, 4
        %v2793 = vor.u32 %v2792, %v2788
        %v2794 = vrot.slane %v2793, 4
        %v2796 = vshll.u32 %v2457, 16
        %v2798 = vrot.slane %v2796, 5
        %v2799 = vsel %vm1516, %v2794, %v2798
        %v2801 = vshrl.u32 %v2458, 16
        %v2803 = vrot.slane %v2801, 4
        %v2804 = vshll.u32 %v2458, 16
        %v2806 = vrot.slane %v2804, 5
        %v2807 = vor.u32 %v2803, %v2806
        %v2808 = vrot.slane %v2807, 4
        %v2810 = vshll.u32 %v2459, 16
        %v2812 = vrot.slane %v2810, 5
        %v2813 = vsel %vm1516, %v2808, %v2812
        %v2814 = vshrl.u32 %v2459, 16
        %v2816 = vrot.slane %v2814, 4
        %v2817 = vor.u32 %v2816, %v2812
        %v2818 = vrot.slane %v2817, 4
        %v2820 = vshll.u32 %v2460, 16
        %v2822 = vrot.slane %v2820, 5
        %v2823 = vsel %vm1516, %v2818, %v2822
        %v2825 = vshrl.u32 %v2461, 16
        %v2827 = vrot.slane %v2825, 4
        %v2828 = vshll.u32 %v2461, 16
        %v2830 = vrot.slane %v2828, 5
        %v2831 = vor.u32 %v2827, %v2830
        %v2832 = vrot.slane %v2831, 4
        %v2834 = vshll.u32 %v2462, 16
        %v2836 = vrot.slane %v2834, 5
        %v2837 = vsel %vm1516, %v2832, %v2836
        %v2838 = vshrl.u32 %v2462, 16
        %v2840 = vrot.slane %v2838, 4
        %v2841 = vor.u32 %v2840, %v2836
        %v2842 = vrot.slane %v2841, 4
        %v2844 = vshll.u32 %v2463, 16
        %v2846 = vrot.slane %v2844, 5
        %v2847 = vsel %vm1516, %v2842, %v2846
        %2880 = vst [vmem:[#allocation3 + $0x4] sm:$0xf] %v2477
        %2881 = vst [vmem:[#allocation3 + $0x10] sm:$0xf] %v2487
        %2882 = vst [vmem:[#allocation3 + $0x1c] sm:$0xf] %v2501
        %2883 = vst [vmem:[#allocation3 + $0x28] sm:$0xf] %v2511
        %2884 = vst [vmem:[#allocation3 + $0x34] sm:$0xf] %v2525
        %2885 = vst [vmem:[#allocation3 + $0x40] sm:$0xf] %v2535
        %2886 = vst [vmem:[#allocation3 + $0x4c] sm:$0xf] %v2549
        %2887 = vst [vmem:[#allocation3 + $0x58] sm:$0xf] %v2559
        %2888 = vst [vmem:[#allocation3 + $0x64] sm:$0xf] %v2573
        %2889 = vst [vmem:[#allocation3 + $0x70] sm:$0xf] %v2583
        %2890 = vst [vmem:[#allocation3 + $0x7c] sm:$0xf] %v2597
        %2891 = vst [vmem:[#allocation3 + $0x88] sm:$0xf] %v2607
        %2892 = vst [vmem:[#allocation3 + $0x94] sm:$0xf] %v2621
        %2893 = vst [vmem:[#allocation3 + $0xa0] sm:$0xf] %v2631
        %2894 = vst [vmem:[#allocation3 + $0xac] sm:$0xf] %v2645
        %2895 = vst [vmem:[#allocation3 + $0xb8] sm:$0xf] %v2655
        %2896 = vst [vmem:[#allocation3 + $0xc4] sm:$0xf] %v2669
        %2897 = vst [vmem:[#allocation3 + $0xd0] sm:$0xf] %v2679
        %2898 = vst [vmem:[#allocation3 + $0xdc] sm:$0xf] %v2693
        %2899 = vst [vmem:[#allocation3 + $0xe8] sm:$0xf] %v2703
        %2900 = vst [vmem:[#allocation3 + $0xf4] sm:$0xf] %v2717
        %2901 = vst [vmem:[#allocation3 + $0x100] sm:$0xf] %v2727
        %2902 = vst [vmem:[#allocation3 + $0x10c] sm:$0xf] %v2741
        %2903 = vst [vmem:[#allocation3 + $0x118] sm:$0xf] %v2751
        %2904 = vst [vmem:[#allocation3 + $0x124] sm:$0xf] %v2765
        %2905 = vst [vmem:[#allocation3 + $0x130] sm:$0xf] %v2775
        %2906 = vst [vmem:[#allocation3 + $0x13c] sm:$0xf] %v2789
        %2907 = vst [vmem:[#allocation3 + $0x148] sm:$0xf] %v2799
        %2908 = vst [vmem:[#allocation3 + $0x154] sm:$0xf] %v2813
        %2909 = vst [vmem:[#allocation3 + $0x160] sm:$0xf] %v2823
        %2910 = vst [vmem:[#allocation3 + $0x16c] sm:$0xf] %v2837
        %2911 = vst [vmem:[#allocation3 + $0x178] sm:$0xf] %v2847
        %v2912 = vld [vmem:[%s768] sm:$0xe]
        %v2913 = vld [vmem:[%s768 + $0x4] sm:$0xf]
        %v2914 = vld [vmem:[%s768 + $0x8] sm:$0x1]
        %v2915 = vld [vmem:[%s768 + $0xc] sm:$0xe]
        %v2916 = vld [vmem:[%s768 + $0x10] sm:$0xf]
        %v2917 = vld [vmem:[%s768 + $0x14] sm:$0x1]
        %v2918 = vld [vmem:[%s768 + $0x18] sm:$0xe]
        %v2919 = vld [vmem:[%s768 + $0x1c] sm:$0xf]
        %v2920 = vld [vmem:[%s768 + $0x20] sm:$0x1]
        %v2921 = vld [vmem:[%s768 + $0x24] sm:$0xe]
        %v2922 = vld [vmem:[%s768 + $0x28] sm:$0xf]
        %v2923 = vld [vmem:[%s768 + $0x2c] sm:$0x1]
        %v2924 = vld [vmem:[%s768 + $0x30] sm:$0xe]
        %v2925 = vld [vmem:[%s768 + $0x34] sm:$0xf]
        %v2926 = vld [vmem:[%s768 + $0x38] sm:$0x1]
        %v2927 = vld [vmem:[%s768 + $0x3c] sm:$0xe]
        %v2928 = vld [vmem:[%s768 + $0x40] sm:$0xf]
        %v2929 = vld [vmem:[%s768 + $0x44] sm:$0x1]
        %v2930 = vld [vmem:[%s768 + $0x48] sm:$0xe]
        %v2931 = vld [vmem:[%s768 + $0x4c] sm:$0xf]
        %v2932 = vld [vmem:[%s768 + $0x50] sm:$0x1]
        %v2933 = vld [vmem:[%s768 + $0x54] sm:$0xe]
        %v2934 = vld [vmem:[%s768 + $0x58] sm:$0xf]
        %v2935 = vld [vmem:[%s768 + $0x5c] sm:$0x1]
        %v2936 = vld [vmem:[%s768 + $0x60] sm:$0xe]
        %v2937 = vld [vmem:[%s768 + $0x64] sm:$0xf]
        %v2938 = vld [vmem:[%s768 + $0x68] sm:$0x1]
        %v2939 = vld [vmem:[%s768 + $0x6c] sm:$0xe]
        %v2940 = vld [vmem:[%s768 + $0x70] sm:$0xf]
        %v2941 = vld [vmem:[%s768 + $0x74] sm:$0x1]
        %v2942 = vld [vmem:[%s768 + $0x78] sm:$0xe]
        %v2943 = vld [vmem:[%s768 + $0x7c] sm:$0xf]
        %v2944 = vld [vmem:[%s768 + $0x80] sm:$0x1]
        %v2945 = vld [vmem:[%s768 + $0x84] sm:$0xe]
        %v2946 = vld [vmem:[%s768 + $0x88] sm:$0xf]
        %v2947 = vld [vmem:[%s768 + $0x8c] sm:$0x1]
        %v2948 = vld [vmem:[%s768 + $0x90] sm:$0xe]
        %v2949 = vld [vmem:[%s768 + $0x94] sm:$0xf]
        %v2950 = vld [vmem:[%s768 + $0x98] sm:$0x1]
        %v2951 = vld [vmem:[%s768 + $0x9c] sm:$0xe]
        %v2952 = vld [vmem:[%s768 + $0xa0] sm:$0xf]
        %v2953 = vld [vmem:[%s768 + $0xa4] sm:$0x1]
        %v2954 = vld [vmem:[%s768 + $0xa8] sm:$0xe]
        %v2955 = vld [vmem:[%s768 + $0xac] sm:$0xf]
        %v2956 = vld [vmem:[%s768 + $0xb0] sm:$0x1]
        %v2957 = vld [vmem:[%s768 + $0xb4] sm:$0xe]
        %v2958 = vld [vmem:[%s768 + $0xb8] sm:$0xf]
        %v2959 = vld [vmem:[%s768 + $0xbc] sm:$0x1]
        %v3008 = vrot.slane %v2912, 5
        %v3009 = vrot.slane %v3008, 4
        %v3010 = vrot.slane %v2913, 5
        %v3011 = vsel %vm2063, %v3009, %v3010
        %v3012 = vrot.slane %v3010, 4
        %v3013 = vrot.slane %v2914, 5
        %v3014 = vsel %vm2063, %v3012, %v3013
        %v3015 = vrot.slane %v2915, 5
        %v3016 = vrot.slane %v3015, 4
        %v3017 = vrot.slane %v2916, 5
        %v3018 = vsel %vm2063, %v3016, %v3017
        %v3019 = vrot.slane %v3017, 4
        %v3020 = vrot.slane %v2917, 5
        %v3021 = vsel %vm2063, %v3019, %v3020
        %v3022 = vrot.slane %v2918, 5
        %v3023 = vrot.slane %v3022, 4
        %v3024 = vrot.slane %v2919, 5
        %v3025 = vsel %vm2063, %v3023, %v3024
        %v3026 = vrot.slane %v3024, 4
        %v3027 = vrot.slane %v2920, 5
        %v3028 = vsel %vm2063, %v3026, %v3027
        %v3029 = vrot.slane %v2921, 5
        %v3030 = vrot.slane %v3029, 4
        %v3031 = vrot.slane %v2922, 5
        %v3032 = vsel %vm2063, %v3030, %v3031
        %v3033 = vrot.slane %v3031, 4
        %v3034 = vrot.slane %v2923, 5
        %v3035 = vsel %vm2063, %v3033, %v3034
        %v3036 = vrot.slane %v2924, 5
        %v3037 = vrot.slane %v3036, 4
        %v3038 = vrot.slane %v2925, 5
        %v3039 = vsel %vm2063, %v3037, %v3038
        %v3040 = vrot.slane %v3038, 4
        %v3041 = vrot.slane %v2926, 5
        %v3042 = vsel %vm2063, %v3040, %v3041
        %v3043 = vrot.slane %v2927, 5
        %v3044 = vrot.slane %v3043, 4
        %v3045 = vrot.slane %v2928, 5
        %v3046 = vsel %vm2063, %v3044, %v3045
        %v3047 = vrot.slane %v3045, 4
        %v3048 = vrot.slane %v2929, 5
        %v3049 = vsel %vm2063, %v3047, %v3048
        %v3050 = vrot.slane %v2930, 5
        %v3051 = vrot.slane %v3050, 4
        %v3052 = vrot.slane %v2931, 5
        %v3053 = vsel %vm2063, %v3051, %v3052
        %v3054 = vrot.slane %v3052, 4
        %v3055 = vrot.slane %v2932, 5
        %v3056 = vsel %vm2063, %v3054, %v3055
        %v3057 = vrot.slane %v2933, 5
        %v3058 = vrot.slane %v3057, 4
        %v3059 = vrot.slane %v2934, 5
        %v3060 = vsel %vm2063, %v3058, %v3059
        %v3061 = vrot.slane %v3059, 4
        %v3062 = vrot.slane %v2935, 5
        %v3063 = vsel %vm2063, %v3061, %v3062
        %v3064 = vrot.slane %v2936, 5
        %v3065 = vrot.slane %v3064, 4
        %v3066 = vrot.slane %v2937, 5
        %v3067 = vsel %vm2063, %v3065, %v3066
        %v3068 = vrot.slane %v3066, 4
        %v3069 = vrot.slane %v2938, 5
        %v3070 = vsel %vm2063, %v3068, %v3069
        %v3071 = vrot.slane %v2939, 5
        %v3072 = vrot.slane %v3071, 4
        %v3073 = vrot.slane %v2940, 5
        %v3074 = vsel %vm2063, %v3072, %v3073
        %v3075 = vrot.slane %v3073, 4
        %v3076 = vrot.slane %v2941, 5
        %v3077 = vsel %vm2063, %v3075, %v3076
        %v3078 = vrot.slane %v2942, 5
        %v3079 = vrot.slane %v3078, 4
        %v3080 = vrot.slane %v2943, 5
        %v3081 = vsel %vm2063, %v3079, %v3080
        %v3082 = vrot.slane %v3080, 4
        %v3083 = vrot.slane %v2944, 5
        %v3084 = vsel %vm2063, %v3082, %v3083
        %v3085 = vrot.slane %v2945, 5
        %v3086 = vrot.slane %v3085, 4
        %v3087 = vrot.slane %v2946, 5
        %v3088 = vsel %vm2063, %v3086, %v3087
        %v3089 = vrot.slane %v3087, 4
        %v3090 = vrot.slane %v2947, 5
        %v3091 = vsel %vm2063, %v3089, %v3090
        %v3092 = vrot.slane %v2948, 5
        %v3093 = vrot.slane %v3092, 4
        %v3094 = vrot.slane %v2949, 5
        %v3095 = vsel %vm2063, %v3093, %v3094
        %v3096 = vrot.slane %v3094, 4
        %v3097 = vrot.slane %v2950, 5
        %v3098 = vsel %vm2063, %v3096, %v3097
        %v3099 = vrot.slane %v2951, 5
        %v3100 = vrot.slane %v3099, 4
        %v3101 = vrot.slane %v2952, 5
        %v3102 = vsel %vm2063, %v3100, %v3101
        %v3103 = vrot.slane %v3101, 4
        %v3104 = vrot.slane %v2953, 5
        %v3105 = vsel %vm2063, %v3103, %v3104
        %v3106 = vrot.slane %v2954, 5
        %v3107 = vrot.slane %v3106, 4
        %v3108 = vrot.slane %v2955, 5
        %v3109 = vsel %vm2063, %v3107, %v3108
        %v3110 = vrot.slane %v3108, 4
        %v3111 = vrot.slane %v2956, 5
        %v3112 = vsel %vm2063, %v3110, %v3111
        %v3113 = vrot.slane %v2957, 5
        %v3114 = vrot.slane %v3113, 4
        %v3115 = vrot.slane %v2958, 5
        %v3116 = vsel %vm2063, %v3114, %v3115
        %v3117 = vrot.slane %v3115, 4
        %v3118 = vrot.slane %v2959, 5
        %v3119 = vsel %vm2063, %v3117, %v3118
        %3152 = vst [vmem:[#allocation3 + $0x8] sm:$0xf] %v3011
        %3153 = vst [vmem:[#allocation3 + $0x14] sm:$0xf] %v3014
        %3154 = vst [vmem:[#allocation3 + $0x20] sm:$0xf] %v3018
        %3155 = vst [vmem:[#allocation3 + $0x2c] sm:$0xf] %v3021
        %3156 = vst [vmem:[#allocation3 + $0x38] sm:$0xf] %v3025
        %3157 = vst [vmem:[#allocation3 + $0x44] sm:$0xf] %v3028
        %3158 = vst [vmem:[#allocation3 + $0x50] sm:$0xf] %v3032
        %3159 = vst [vmem:[#allocation3 + $0x5c] sm:$0xf] %v3035
        %3160 = vst [vmem:[#allocation3 + $0x68] sm:$0xf] %v3039
        %3161 = vst [vmem:[#allocation3 + $0x74] sm:$0xf] %v3042
        %3162 = vst [vmem:[#allocation3 + $0x80] sm:$0xf] %v3046
        %3163 = vst [vmem:[#allocation3 + $0x8c] sm:$0xf] %v3049
        %3164 = vst [vmem:[#allocation3 + $0x98] sm:$0xf] %v3053
        %3165 = vst [vmem:[#allocation3 + $0xa4] sm:$0xf] %v3056
        %3166 = vst [vmem:[#allocation3 + $0xb0] sm:$0xf] %v3060
        %3167 = vst [vmem:[#allocation3 + $0xbc] sm:$0xf] %v3063
        %3168 = vst [vmem:[#allocation3 + $0xc8] sm:$0xf] %v3067
        %3169 = vst [vmem:[#allocation3 + $0xd4] sm:$0xf] %v3070
        %3170 = vst [vmem:[#allocation3 + $0xe0] sm:$0xf] %v3074
        %3171 = vst [vmem:[#allocation3 + $0xec] sm:$0xf] %v3077
        %3172 = vst [vmem:[#allocation3 + $0xf8] sm:$0xf] %v3081
        %3173 = vst [vmem:[#allocation3 + $0x104] sm:$0xf] %v3084
        %3174 = vst [vmem:[#allocation3 + $0x110] sm:$0xf] %v3088
        %3175 = vst [vmem:[#allocation3 + $0x11c] sm:$0xf] %v3091
        %3176 = vst [vmem:[#allocation3 + $0x128] sm:$0xf] %v3095
        %3177 = vst [vmem:[#allocation3 + $0x134] sm:$0xf] %v3098
        %3178 = vst [vmem:[#allocation3 + $0x140] sm:$0xf] %v3102
        %3179 = vst [vmem:[#allocation3 + $0x14c] sm:$0xf] %v3105
        %3180 = vst [vmem:[#allocation3 + $0x158] sm:$0xf] %v3109
        %3181 = vst [vmem:[#allocation3 + $0x164] sm:$0xf] %v3112
        %3182 = vst [vmem:[#allocation3 + $0x170] sm:$0xf] %v3116
        %3183 = vst [vmem:[#allocation3 + $0x17c] sm:$0xf] %v3119
        %v3184 = vld [vmem:[#allocation3] sm:$0xff]
        %v3185 = vld [vmem:[#allocation3 + $0x8] sm:$0xf]
        %v3186 = vld [vmem:[#allocation3 + $0xc] sm:$0xff]
        %v3187 = vld [vmem:[#allocation3 + $0x14] sm:$0xf]
        %v3188 = vld [vmem:[#allocation3 + $0x18] sm:$0xff]
        %v3189 = vld [vmem:[#allocation3 + $0x20] sm:$0xf]
        %v3190 = vld [vmem:[#allocation3 + $0x24] sm:$0xff]
        %v3191 = vld [vmem:[#allocation3 + $0x2c] sm:$0xf]
        %v3192 = vld [vmem:[#allocation3 + $0x30] sm:$0xff]
        %v3193 = vld [vmem:[#allocation3 + $0x38] sm:$0xf]
        %v3194 = vld [vmem:[#allocation3 + $0x3c] sm:$0xff]
        %v3195 = vld [vmem:[#allocation3 + $0x44] sm:$0xf]
        %v3196 = vld [vmem:[#allocation3 + $0x48] sm:$0xff]
        %v3197 = vld [vmem:[#allocation3 + $0x50] sm:$0xf]
        %v3198 = vld [vmem:[#allocation3 + $0x54] sm:$0xff]
        %v3199 = vld [vmem:[#allocation3 + $0x5c] sm:$0xf]
        %v3200 = vld [vmem:[#allocation3 + $0x60] sm:$0xff]
        %v3201 = vld [vmem:[#allocation3 + $0x68] sm:$0xf]
        %v3202 = vld [vmem:[#allocation3 + $0x6c] sm:$0xff]
        %v3203 = vld [vmem:[#allocation3 + $0x74] sm:$0xf]
        %v3204 = vld [vmem:[#allocation3 + $0x78] sm:$0xff]
        %v3205 = vld [vmem:[#allocation3 + $0x80] sm:$0xf]
        %v3206 = vld [vmem:[#allocation3 + $0x84] sm:$0xff]
        %v3207 = vld [vmem:[#allocation3 + $0x8c] sm:$0xf]
        %v3208 = vld [vmem:[#allocation3 + $0x90] sm:$0xff]
        %v3209 = vld [vmem:[#allocation3 + $0x98] sm:$0xf]
        %v3210 = vld [vmem:[#allocation3 + $0x9c] sm:$0xff]
        %v3211 = vld [vmem:[#allocation3 + $0xa4] sm:$0xf]
        %v3212 = vld [vmem:[#allocation3 + $0xa8] sm:$0xff]
        %v3213 = vld [vmem:[#allocation3 + $0xb0] sm:$0xf]
        %v3214 = vld [vmem:[#allocation3 + $0xb4] sm:$0xff]
        %v3215 = vld [vmem:[#allocation3 + $0xbc] sm:$0xf]
        %v3216 = vld [vmem:[#allocation3 + $0xc0] sm:$0xff]
        %v3217 = vld [vmem:[#allocation3 + $0xc8] sm:$0xf]
        %v3218 = vld [vmem:[#allocation3 + $0xcc] sm:$0xff]
        %v3219 = vld [vmem:[#allocation3 + $0xd4] sm:$0xf]
        %v3220 = vld [vmem:[#allocation3 + $0xd8] sm:$0xff]
        %v3221 = vld [vmem:[#allocation3 + $0xe0] sm:$0xf]
        %v3222 = vld [vmem:[#allocation3 + $0xe4] sm:$0xff]
        %v3223 = vld [vmem:[#allocation3 + $0xec] sm:$0xf]
        %v3224 = vld [vmem:[#allocation3 + $0xf0] sm:$0xff]
        %v3225 = vld [vmem:[#allocation3 + $0xf8] sm:$0xf]
        %v3226 = vld [vmem:[#allocation3 + $0xfc] sm:$0xff]
        %v3227 = vld [vmem:[#allocation3 + $0x104] sm:$0xf]
        %v3228 = vld [vmem:[#allocation3 + $0x108] sm:$0xff]
        %v3229 = vld [vmem:[#allocation3 + $0x110] sm:$0xf]
        %v3230 = vld [vmem:[#allocation3 + $0x114] sm:$0xff]
        %v3231 = vld [vmem:[#allocation3 + $0x11c] sm:$0xf]
        %v3232 = vld [vmem:[#allocation3 + $0x120] sm:$0xff]
        %v3233 = vld [vmem:[#allocation3 + $0x128] sm:$0xf]
        %v3234 = vld [vmem:[#allocation3 + $0x12c] sm:$0xff]
        %v3235 = vld [vmem:[#allocation3 + $0x134] sm:$0xf]
        %v3236 = vld [vmem:[#allocation3 + $0x138] sm:$0xff]
        %v3237 = vld [vmem:[#allocation3 + $0x140] sm:$0xf]
        %v3238 = vld [vmem:[#allocation3 + $0x144] sm:$0xff]
        %v3239 = vld [vmem:[#allocation3 + $0x14c] sm:$0xf]
        %v3240 = vld [vmem:[#allocation3 + $0x150] sm:$0xff]
        %v3241 = vld [vmem:[#allocation3 + $0x158] sm:$0xf]
        %v3242 = vld [vmem:[#allocation3 + $0x15c] sm:$0xff]
        %v3243 = vld [vmem:[#allocation3 + $0x164] sm:$0xf]
        %v3244 = vld [vmem:[#allocation3 + $0x168] sm:$0xff]
        %v3245 = vld [vmem:[#allocation3 + $0x170] sm:$0xf]
        %v3246 = vld [vmem:[#allocation3 + $0x174] sm:$0xff]
        %v3247 = vld [vmem:[#allocation3 + $0x17c] sm:$0xf]
        %v3248 = vld [vmem:[#allocation9 + $0xc0] sm:$0xf]
        %v3249 = vld [vmem:[#allocation9 + $0xc4] sm:$0xf]
        %v3250 = vld [vmem:[#allocation9 + $0xc8] sm:$0xf]
        %v3251 = vld [vmem:[#allocation9 + $0xcc] sm:$0xf]
        %v3252 = vld [vmem:[#allocation9 + $0xd0] sm:$0xf]
        %v3253 = vld [vmem:[#allocation9 + $0xd4] sm:$0xf]
        %v3254 = vld [vmem:[#allocation9 + $0xd8] sm:$0xf]
        %v3255 = vld [vmem:[#allocation9 + $0xdc] sm:$0xf]
        %v3256 = vld [vmem:[#allocation9 + $0xe0] sm:$0xf]
        %v3257 = vld [vmem:[#allocation9 + $0xe4] sm:$0xf]
        %v3258 = vld [vmem:[#allocation9 + $0xe8] sm:$0xf]
        %v3259 = vld [vmem:[#allocation9 + $0xec] sm:$0xf]
        %v3260 = vld [vmem:[#allocation9 + $0xf0] sm:$0xf]
        %v3261 = vld [vmem:[#allocation9 + $0xf4] sm:$0xf]
        %v3262 = vld [vmem:[#allocation9 + $0xf8] sm:$0xf]
        %v3263 = vld [vmem:[#allocation9 + $0xfc] sm:$0xf]
        %v3264 = vld [vmem:[#allocation9 + $0x100] sm:$0xf]
        %v3265 = vld [vmem:[#allocation9 + $0x104] sm:$0xf]
        %v3266 = vld [vmem:[#allocation9 + $0x108] sm:$0xf]
        %v3267 = vld [vmem:[#allocation9 + $0x10c] sm:$0xf]
        %v3268 = vld [vmem:[#allocation9 + $0x110] sm:$0xf]
        %v3269 = vld [vmem:[#allocation9 + $0x114] sm:$0xf]
        %v3270 = vld [vmem:[#allocation9 + $0x118] sm:$0xf]
        %v3271 = vld [vmem:[#allocation9 + $0x11c] sm:$0xf]
        %v3272 = vld [vmem:[#allocation9 + $0x120] sm:$0xf]
        %v3273 = vld [vmem:[#allocation9 + $0x124] sm:$0xf]
        %v3274 = vld [vmem:[#allocation9 + $0x128] sm:$0xf]
        %v3275 = vld [vmem:[#allocation9 + $0x12c] sm:$0xf]
        %v3276 = vld [vmem:[#allocation9 + $0x130] sm:$0xf]
        %v3277 = vld [vmem:[#allocation9 + $0x134] sm:$0xf]
        %v3278 = vld [vmem:[#allocation9 + $0x138] sm:$0xf]
        %v3279 = vld [vmem:[#allocation9 + $0x13c] sm:$0xf]
        %v3280 = vld [vmem:[#allocation9 + $0x140] sm:$0xf]
        %v3281 = vld [vmem:[#allocation9 + $0x144] sm:$0xf]
        %v3282 = vld [vmem:[#allocation9 + $0x148] sm:$0xf]
        %v3283 = vld [vmem:[#allocation9 + $0x14c] sm:$0xf]
        %v3284 = vld [vmem:[#allocation9 + $0x150] sm:$0xf]
        %v3285 = vld [vmem:[#allocation9 + $0x154] sm:$0xf]
        %v3286 = vld [vmem:[#allocation9 + $0x158] sm:$0xf]
        %v3287 = vld [vmem:[#allocation9 + $0x15c] sm:$0xf]
        %v3288 = vld [vmem:[#allocation9 + $0x160] sm:$0xf]
        %v3289 = vld [vmem:[#allocation9 + $0x164] sm:$0xf]
        %v3290 = vld [vmem:[#allocation9 + $0x168] sm:$0xf]
        %v3291 = vld [vmem:[#allocation9 + $0x16c] sm:$0xf]
        %v3292 = vld [vmem:[#allocation9 + $0x170] sm:$0xf]
        %v3293 = vld [vmem:[#allocation9 + $0x174] sm:$0xf]
        %v3294 = vld [vmem:[#allocation9 + $0x178] sm:$0xf]
        %v3295 = vld [vmem:[#allocation9 + $0x17c] sm:$0xf]
        %v3360 = vunpack.c.l.b16 %v3184
        %v3361 = vunpack.c.h.b16 %v3184
        %v3362 = vunpack.c.l.b16 %v3185
        %v3363 = vunpack.c.l.b16 %v3186
        %v3364 = vunpack.c.h.b16 %v3186
        %v3365 = vunpack.c.l.b16 %v3187
        %v3366 = vunpack.c.l.b16 %v3188
        %v3367 = vunpack.c.h.b16 %v3188
        %v3368 = vunpack.c.l.b16 %v3189
        %v3369 = vunpack.c.l.b16 %v3190
        %v3370 = vunpack.c.h.b16 %v3190
        %v3371 = vunpack.c.l.b16 %v3191
        %v3372 = vunpack.c.l.b16 %v3192
        %v3373 = vunpack.c.h.b16 %v3192
        %v3374 = vunpack.c.l.b16 %v3193
        %v3375 = vunpack.c.l.b16 %v3194
        %v3376 = vunpack.c.h.b16 %v3194
        %v3377 = vunpack.c.l.b16 %v3195
        %v3378 = vunpack.c.l.b16 %v3196
        %v3379 = vunpack.c.h.b16 %v3196
        %v3380 = vunpack.c.l.b16 %v3197
        %v3381 = vunpack.c.l.b16 %v3198
        %v3382 = vunpack.c.h.b16 %v3198
        %v3383 = vunpack.c.l.b16 %v3199
        %v3384 = vunpack.c.l.b16 %v3200
        %v3385 = vunpack.c.h.b16 %v3200
        %v3386 = vunpack.c.l.b16 %v3201
        %v3387 = vunpack.c.l.b16 %v3202
        %v3388 = vunpack.c.h.b16 %v3202
        %v3389 = vunpack.c.l.b16 %v3203
        %v3390 = vunpack.c.l.b16 %v3204
        %v3391 = vunpack.c.h.b16 %v3204
        %v3392 = vunpack.c.l.b16 %v3205
        %v3393 = vunpack.c.l.b16 %v3206
        %v3394 = vunpack.c.h.b16 %v3206
        %v3395 = vunpack.c.l.b16 %v3207
        %v3396 = vunpack.c.l.b16 %v3208
        %v3397 = vunpack.c.h.b16 %v3208
        %v3398 = vunpack.c.l.b16 %v3209
        %v3399 = vunpack.c.l.b16 %v3210
        %v3400 = vunpack.c.h.b16 %v3210
        %v3401 = vunpack.c.l.b16 %v3211
        %v3402 = vunpack.c.l.b16 %v3212
        %v3403 = vunpack.c.h.b16 %v3212
        %v3404 = vunpack.c.l.b16 %v3213
        %v3405 = vunpack.c.l.b16 %v3214
        %v3406 = vunpack.c.h.b16 %v3214
        %v3407 = vunpack.c.l.b16 %v3215
        %v3408 = vunpack.c.l.b16 %v3216
        %v3409 = vunpack.c.h.b16 %v3216
        %v3410 = vunpack.c.l.b16 %v3217
        %v3411 = vunpack.c.l.b16 %v3218
        %v3412 = vunpack.c.h.b16 %v3218
        %v3413 = vunpack.c.l.b16 %v3219
        %v3414 = vunpack.c.l.b16 %v3220
        %v3415 = vunpack.c.h.b16 %v3220
        %v3416 = vunpack.c.l.b16 %v3221
        %v3417 = vunpack.c.l.b16 %v3222
        %v3418 = vunpack.c.h.b16 %v3222
        %v3419 = vunpack.c.l.b16 %v3223
        %v3420 = vunpack.c.l.b16 %v3224
        %v3421 = vunpack.c.h.b16 %v3224
        %v3422 = vunpack.c.l.b16 %v3225
        %v3423 = vunpack.c.l.b16 %v3226
        %v3424 = vunpack.c.h.b16 %v3226
        %v3425 = vunpack.c.l.b16 %v3227
        %v3426 = vunpack.c.l.b16 %v3228
        %v3427 = vunpack.c.h.b16 %v3228
        %v3428 = vunpack.c.l.b16 %v3229
        %v3429 = vunpack.c.l.b16 %v3230
        %v3430 = vunpack.c.h.b16 %v3230
        %v3431 = vunpack.c.l.b16 %v3231
        %v3432 = vunpack.c.l.b16 %v3232
        %v3433 = vunpack.c.h.b16 %v3232
        %v3434 = vunpack.c.l.b16 %v3233
        %v3435 = vunpack.c.l.b16 %v3234
        %v3436 = vunpack.c.h.b16 %v3234
        %v3437 = vunpack.c.l.b16 %v3235
        %v3438 = vunpack.c.l.b16 %v3236
        %v3439 = vunpack.c.h.b16 %v3236
        %v3440 = vunpack.c.l.b16 %v3237
        %v3441 = vunpack.c.l.b16 %v3238
        %v3442 = vunpack.c.h.b16 %v3238
        %v3443 = vunpack.c.l.b16 %v3239
        %v3444 = vunpack.c.l.b16 %v3240
        %v3445 = vunpack.c.h.b16 %v3240
        %v3446 = vunpack.c.l.b16 %v3241
        %v3447 = vunpack.c.l.b16 %v3242
        %v3448 = vunpack.c.h.b16 %v3242
        %v3449 = vunpack.c.l.b16 %v3243
        %v3450 = vunpack.c.l.b16 %v3244
        %v3451 = vunpack.c.h.b16 %v3244
        %v3452 = vunpack.c.l.b16 %v3245
        %v3453 = vunpack.c.l.b16 %v3246
        %v3454 = vunpack.c.h.b16 %v3246
        %v3455 = vunpack.c.l.b16 %v3247
        %v3456 = vpack.c.b16 %v3363, %v3360
        %v3457 = vpack.c.b16 %v3364, %v3361
        %v3458 = vpack.c.b16 %v3365, %v3362
        %v3459 = vpack.c.b16 %v3369, %v3366
        %v3460 = vpack.c.b16 %v3370, %v3367
        %v3461 = vpack.c.b16 %v3371, %v3368
        %v3462 = vpack.c.b16 %v3375, %v3372
        %v3463 = vpack.c.b16 %v3376, %v3373
        %v3464 = vpack.c.b16 %v3377, %v3374
        %v3465 = vpack.c.b16 %v3381, %v3378
        %v3466 = vpack.c.b16 %v3382, %v3379
        %v3467 = vpack.c.b16 %v3383, %v3380
        %v3468 = vpack.c.b16 %v3387, %v3384
        %v3469 = vpack.c.b16 %v3388, %v3385
        %v3470 = vpack.c.b16 %v3389, %v3386
        %v3471 = vpack.c.b16 %v3393, %v3390
        %v3472 = vpack.c.b16 %v3394, %v3391
        %v3473 = vpack.c.b16 %v3395, %v3392
        %v3474 = vpack.c.b16 %v3399, %v3396
        %v3475 = vpack.c.b16 %v3400, %v3397
        %v3476 = vpack.c.b16 %v3401, %v3398
        %v3477 = vpack.c.b16 %v3405, %v3402
        %v3478 = vpack.c.b16 %v3406, %v3403
        %v3479 = vpack.c.b16 %v3407, %v3404
        %v3480 = vpack.c.b16 %v3411, %v3408
        %v3481 = vpack.c.b16 %v3412, %v3409
        %v3482 = vpack.c.b16 %v3413, %v3410
        %v3483 = vpack.c.b16 %v3417, %v3414
        %v3484 = vpack.c.b16 %v3418, %v3415
        %v3485 = vpack.c.b16 %v3419, %v3416
        %v3486 = vpack.c.b16 %v3423, %v3420
        %v3487 = vpack.c.b16 %v3424, %v3421
        %v3488 = vpack.c.b16 %v3425, %v3422
        %v3489 = vpack.c.b16 %v3429, %v3426
        %v3490 = vpack.c.b16 %v3430, %v3427
        %v3491 = vpack.c.b16 %v3431, %v3428
        %v3492 = vpack.c.b16 %v3435, %v3432
        %v3493 = vpack.c.b16 %v3436, %v3433
        %v3494 = vpack.c.b16 %v3437, %v3434
        %v3495 = vpack.c.b16 %v3441, %v3438
        %v3496 = vpack.c.b16 %v3442, %v3439
        %v3497 = vpack.c.b16 %v3443, %v3440
        %v3498 = vpack.c.b16 %v3447, %v3444
        %v3499 = vpack.c.b16 %v3448, %v3445
        %v3500 = vpack.c.b16 %v3449, %v3446
        %v3501 = vpack.c.b16 %v3453, %v3450
        %v3502 = vpack.c.b16 %v3454, %v3451
        %v3503 = vpack.c.b16 %v3455, %v3452
        %v3600 = vunpack.c.l.b16 %v3248
        %v3601 = vunpack.c.l.b16 %v3249
        %v3602 = vunpack.c.l.b16 %v3250
        %v3603 = vunpack.c.l.b16 %v3251
        %v3604 = vunpack.c.l.b16 %v3252
        %v3605 = vunpack.c.l.b16 %v3253
        %v3606 = vunpack.c.l.b16 %v3254
        %v3607 = vunpack.c.l.b16 %v3255
        %v3608 = vunpack.c.l.b16 %v3256
        %v3609 = vunpack.c.l.b16 %v3257
        %v3610 = vunpack.c.l.b16 %v3258
        %v3611 = vunpack.c.l.b16 %v3259
        %v3612 = vunpack.c.l.b16 %v3260
        %v3613 = vunpack.c.l.b16 %v3261
        %v3614 = vunpack.c.l.b16 %v3262
        %v3615 = vunpack.c.l.b16 %v3263
        %v3616 = vunpack.c.l.b16 %v3264
        %v3617 = vunpack.c.l.b16 %v3265
        %v3618 = vunpack.c.l.b16 %v3266
        %v3619 = vunpack.c.l.b16 %v3267
        %v3620 = vunpack.c.l.b16 %v3268
        %v3621 = vunpack.c.l.b16 %v3269
        %v3622 = vunpack.c.l.b16 %v3270
        %v3623 = vunpack.c.l.b16 %v3271
        %v3624 = vunpack.c.l.b16 %v3272
        %v3625 = vunpack.c.l.b16 %v3273
        %v3626 = vunpack.c.l.b16 %v3274
        %v3627 = vunpack.c.l.b16 %v3275
        %v3628 = vunpack.c.l.b16 %v3276
        %v3629 = vunpack.c.l.b16 %v3277
        %v3630 = vunpack.c.l.b16 %v3278
        %v3631 = vunpack.c.l.b16 %v3279
        %v3632 = vunpack.c.l.b16 %v3280
        %v3633 = vunpack.c.l.b16 %v3281
        %v3634 = vunpack.c.l.b16 %v3282
        %v3635 = vunpack.c.l.b16 %v3283
        %v3636 = vunpack.c.l.b16 %v3284
        %v3637 = vunpack.c.l.b16 %v3285
        %v3638 = vunpack.c.l.b16 %v3286
        %v3639 = vunpack.c.l.b16 %v3287
        %v3640 = vunpack.c.l.b16 %v3288
        %v3641 = vunpack.c.l.b16 %v3289
        %v3642 = vunpack.c.l.b16 %v3290
        %v3643 = vunpack.c.l.b16 %v3291
        %v3644 = vunpack.c.l.b16 %v3292
        %v3645 = vunpack.c.l.b16 %v3293
        %v3646 = vunpack.c.l.b16 %v3294
        %v3647 = vunpack.c.l.b16 %v3295
        %v3648 = vpack.c.b16 %v3601, %v3600
        %v3649 = vpack.c.b16 %v3603, %v3602
        %v3650 = vpack.c.b16 %v3605, %v3604
        %v3651 = vpack.c.b16 %v3607, %v3606
        %v3652 = vpack.c.b16 %v3609, %v3608
        %v3653 = vpack.c.b16 %v3611, %v3610
        %v3654 = vpack.c.b16 %v3613, %v3612
        %v3655 = vpack.c.b16 %v3615, %v3614
        %v3656 = vpack.c.b16 %v3617, %v3616
        %v3657 = vpack.c.b16 %v3619, %v3618
        %v3658 = vpack.c.b16 %v3621, %v3620
        %v3659 = vpack.c.b16 %v3623, %v3622
        %v3660 = vpack.c.b16 %v3625, %v3624
        %v3661 = vpack.c.b16 %v3627, %v3626
        %v3662 = vpack.c.b16 %v3629, %v3628
        %v3663 = vpack.c.b16 %v3631, %v3630
        %v3664 = vpack.c.b16 %v3633, %v3632
        %v3665 = vpack.c.b16 %v3635, %v3634
        %v3666 = vpack.c.b16 %v3637, %v3636
        %v3667 = vpack.c.b16 %v3639, %v3638
        %v3668 = vpack.c.b16 %v3641, %v3640
        %v3669 = vpack.c.b16 %v3643, %v3642
        %v3670 = vpack.c.b16 %v3645, %v3644
        %v3671 = vpack.c.b16 %v3647, %v3646
        %3696 = vmatprep.subr.bf16.mxu0 0
        %3697 = vmatpush1.bf16.msra.mxu0 %v3655
        %3698 = vmatprep.subr.bf16.mxu0 0
        %3699 = vmatpush1.bf16.msra.mxu0 %v3654
        %3700 = vmatprep.subr.bf16.mxu0 0
        %3701 = vmatpush1.bf16.msra.mxu0 %v3653
        %3702 = vmatprep.subr.bf16.mxu0 0
        %3703 = vmatpush1.bf16.msra.mxu0 %v3652
        %3704 = vmatprep.subr.bf16.mxu0 0
        %3705 = vmatpush1.bf16.msra.mxu0 %v3651
        %3706 = vmatprep.subr.bf16.mxu0 0
        %3707 = vmatpush1.bf16.msra.mxu0 %v3650
        %3708 = vmatprep.subr.bf16.mxu0 0
        %3709 = vmatpush1.bf16.msra.mxu0 %v3649
        %3710 = vmatprep.subr.bf16.mxu0 0
        %3711 = vmatpush1.bf16.msra.mxu0 %v3648
        %3712 = vmatprep.subr.bf16.mxu0 0
        %3713 = vmatpush2.bf16.msra.mxu0 %v3663
        %3714 = vmatprep.subr.bf16.mxu0 0
        %3715 = vmatpush2.bf16.msra.mxu0 %v3662
        %3716 = vmatprep.subr.bf16.mxu0 0
        %3717 = vmatpush2.bf16.msra.mxu0 %v3661
        %3718 = vmatprep.subr.bf16.mxu0 0
        %3719 = vmatpush2.bf16.msra.mxu0 %v3660
        %3720 = vmatprep.subr.bf16.mxu0 0
        %3721 = vmatpush2.bf16.msra.mxu0 %v3659
        %3722 = vmatprep.subr.bf16.mxu0 0
        %3723 = vmatpush2.bf16.msra.mxu0 %v3658
        %3724 = vmatprep.subr.bf16.mxu0 0
        %3725 = vmatpush2.bf16.msra.mxu0 %v3657
        %3726 = vmatprep.subr.bf16.mxu0 0
        %3727 = vmatpush2.bf16.msra.mxu0 %v3656
        %3728 = vmatprep.mubr.bf16.mxu0 %v3457
        %3729 = vmatmul.mubr.bf16.gmra.mxu0 %v3456
        %v3730 = vpop.f32.mrf.mxu0
        %v3731 = vadd.f32 0.0, %v3730
        %v3732 = vpop.f32.mrf.mxu0
        %v3733 = vpop.f32.mrf.mxu0
        %v3734 = vadd.f32 0.0, %v3733
        %v3735 = vpop.f32.mrf.mxu0
        %3736 = vmatprep.mubr.bf16.mxu0 %v3460
        %3737 = vmatmul.mubr.bf16.gmra.mxu0 %v3459
        %v3738 = vpop.f32.mrf.mxu0
        %v3739 = vadd.f32 0.0, %v3738
        %v3740 = vpop.f32.mrf.mxu0
        %v3741 = vpop.f32.mrf.mxu0
        %v3742 = vadd.f32 0.0, %v3741
        %v3743 = vpop.f32.mrf.mxu0
        %3744 = vmatprep.mubr.bf16.mxu0 %v3463
        %3745 = vmatmul.mubr.bf16.gmra.mxu0 %v3462
        %v3746 = vpop.f32.mrf.mxu0
        %v3747 = vadd.f32 0.0, %v3746
        %v3748 = vpop.f32.mrf.mxu0
        %v3749 = vpop.f32.mrf.mxu0
        %v3750 = vadd.f32 0.0, %v3749
        %v3751 = vpop.f32.mrf.mxu0
        %3752 = vmatprep.mubr.bf16.mxu0 %v3466
        %3753 = vmatmul.mubr.bf16.gmra.mxu0 %v3465
        %v3754 = vpop.f32.mrf.mxu0
        %v3755 = vadd.f32 0.0, %v3754
        %v3756 = vpop.f32.mrf.mxu0
        %v3757 = vpop.f32.mrf.mxu0
        %v3758 = vadd.f32 0.0, %v3757
        %v3759 = vpop.f32.mrf.mxu0
        %3760 = vmatprep.mubr.bf16.mxu0 %v3469
        %3761 = vmatmul.mubr.bf16.gmra.mxu0 %v3468
        %v3762 = vpop.f32.mrf.mxu0
        %v3763 = vadd.f32 0.0, %v3762
        %v3764 = vpop.f32.mrf.mxu0
        %v3765 = vpop.f32.mrf.mxu0
        %v3766 = vadd.f32 0.0, %v3765
        %v3767 = vpop.f32.mrf.mxu0
        %3768 = vmatprep.mubr.bf16.mxu0 %v3472
        %3769 = vmatmul.mubr.bf16.gmra.mxu0 %v3471
        %v3770 = vpop.f32.mrf.mxu0
        %v3771 = vadd.f32 0.0, %v3770
        %v3772 = vpop.f32.mrf.mxu0
        %v3773 = vpop.f32.mrf.mxu0
        %v3774 = vadd.f32 0.0, %v3773
        %v3775 = vpop.f32.mrf.mxu0
        %3776 = vmatprep.mubr.bf16.mxu0 %v3475
        %3777 = vmatmul.mubr.bf16.gmra.mxu0 %v3474
        %v3778 = vpop.f32.mrf.mxu0
        %v3779 = vadd.f32 0.0, %v3778
        %v3780 = vpop.f32.mrf.mxu0
        %v3781 = vpop.f32.mrf.mxu0
        %v3782 = vadd.f32 0.0, %v3781
        %v3783 = vpop.f32.mrf.mxu0
        %3784 = vmatprep.mubr.bf16.mxu0 %v3478
        %3785 = vmatmul.mubr.bf16.gmra.mxu0 %v3477
        %v3786 = vpop.f32.mrf.mxu0
        %v3787 = vadd.f32 0.0, %v3786
        %v3788 = vpop.f32.mrf.mxu0
        %v3789 = vpop.f32.mrf.mxu0
        %v3790 = vadd.f32 0.0, %v3789
        %v3791 = vpop.f32.mrf.mxu0
        %3792 = vmatprep.mubr.bf16.mxu0 %v3481
        %3793 = vmatmul.mubr.bf16.gmra.mxu0 %v3480
        %v3794 = vpop.f32.mrf.mxu0
        %v3795 = vadd.f32 0.0, %v3794
        %v3796 = vpop.f32.mrf.mxu0
        %v3797 = vpop.f32.mrf.mxu0
        %v3798 = vadd.f32 0.0, %v3797
        %v3799 = vpop.f32.mrf.mxu0
        %3800 = vmatprep.mubr.bf16.mxu0 %v3484
        %3801 = vmatmul.mubr.bf16.gmra.mxu0 %v3483
        %v3802 = vpop.f32.mrf.mxu0
        %v3803 = vadd.f32 0.0, %v3802
        %v3804 = vpop.f32.mrf.mxu0
        %v3805 = vpop.f32.mrf.mxu0
        %v3806 = vadd.f32 0.0, %v3805
        %v3807 = vpop.f32.mrf.mxu0
        %3808 = vmatprep.mubr.bf16.mxu0 %v3487
        %3809 = vmatmul.mubr.bf16.gmra.mxu0 %v3486
        %v3810 = vpop.f32.mrf.mxu0
        %v3811 = vadd.f32 0.0, %v3810
        %v3812 = vpop.f32.mrf.mxu0
        %v3813 = vpop.f32.mrf.mxu0
        %v3814 = vadd.f32 0.0, %v3813
        %v3815 = vpop.f32.mrf.mxu0
        %3816 = vmatprep.mubr.bf16.mxu0 %v3490
        %3817 = vmatmul.mubr.bf16.gmra.mxu0 %v3489
        %v3818 = vpop.f32.mrf.mxu0
        %v3819 = vadd.f32 0.0, %v3818
        %v3820 = vpop.f32.mrf.mxu0
        %v3821 = vpop.f32.mrf.mxu0
        %v3822 = vadd.f32 0.0, %v3821
        %v3823 = vpop.f32.mrf.mxu0
        %3824 = vmatprep.mubr.bf16.mxu0 %v3493
        %3825 = vmatmul.mubr.bf16.gmra.mxu0 %v3492
        %v3826 = vpop.f32.mrf.mxu0
        %v3827 = vadd.f32 0.0, %v3826
        %v3828 = vpop.f32.mrf.mxu0
        %v3829 = vpop.f32.mrf.mxu0
        %v3830 = vadd.f32 0.0, %v3829
        %v3831 = vpop.f32.mrf.mxu0
        %3832 = vmatprep.mubr.bf16.mxu0 %v3496
        %3833 = vmatmul.mubr.bf16.gmra.mxu0 %v3495
        %v3834 = vpop.f32.mrf.mxu0
        %v3835 = vadd.f32 0.0, %v3834
        %v3836 = vpop.f32.mrf.mxu0
        %v3837 = vpop.f32.mrf.mxu0
        %v3838 = vadd.f32 0.0, %v3837
        %v3839 = vpop.f32.mrf.mxu0
        %3840 = vmatprep.mubr.bf16.mxu0 %v3499
        %3841 = vmatmul.mubr.bf16.gmra.mxu0 %v3498
        %v3842 = vpop.f32.mrf.mxu0
        %v3843 = vadd.f32 0.0, %v3842
        %v3844 = vpop.f32.mrf.mxu0
        %v3845 = vpop.f32.mrf.mxu0
        %v3846 = vadd.f32 0.0, %v3845
        %v3847 = vpop.f32.mrf.mxu0
        %3848 = vmatprep.mubr.bf16.mxu0 %v3502
        %3849 = vmatmul.mubr.bf16.gmra.mxu0 %v3501
        %v3850 = vpop.f32.mrf.mxu0
        %v3851 = vadd.f32 0.0, %v3850
        %v3852 = vpop.f32.mrf.mxu0
        %v3853 = vpop.f32.mrf.mxu0
        %v3854 = vadd.f32 0.0, %v3853
        %v3855 = vpop.f32.mrf.mxu0
        %3856 = vdwg.mxu0
        %3857 = vmatprep.subr.bf16.mxu0 0
        %3858 = vmatpush1.bf16.msra.mxu0 %v3671
        %3859 = vmatprep.subr.bf16.mxu0 0
        %3860 = vmatpush1.bf16.msra.mxu0 %v3670
        %3861 = vmatprep.subr.bf16.mxu0 0
        %3862 = vmatpush1.bf16.msra.mxu0 %v3669
        %3863 = vmatprep.subr.bf16.mxu0 0
        %3864 = vmatpush1.bf16.msra.mxu0 %v3668
        %3865 = vmatprep.subr.bf16.mxu0 0
        %3866 = vmatpush1.bf16.msra.mxu0 %v3667
        %3867 = vmatprep.subr.bf16.mxu0 0
        %3868 = vmatpush1.bf16.msra.mxu0 %v3666
        %3869 = vmatprep.subr.bf16.mxu0 0
        %3870 = vmatpush1.bf16.msra.mxu0 %v3665
        %3871 = vmatprep.subr.bf16.mxu0 0
        %3872 = vmatpush1.bf16.msra.mxu0 %v3664
        %3873 = vmatprep.subr.bf16.mxu0 0
        %3874 = vmatpush2.bf16.msra.mxu0 0
        %3875 = vmatprep.subr.bf16.mxu0 0
        %3876 = vmatpush2.bf16.msra.mxu0 0
        %3877 = vmatprep.subr.bf16.mxu0 0
        %3878 = vmatpush2.bf16.msra.mxu0 0
        %3879 = vmatprep.subr.bf16.mxu0 0
        %3880 = vmatpush2.bf16.msra.mxu0 0
        %3881 = vmatprep.subr.bf16.mxu0 0
        %3882 = vmatpush2.bf16.msra.mxu0 0
        %3883 = vmatprep.subr.bf16.mxu0 0
        %3884 = vmatpush2.bf16.msra.mxu0 0
        %3885 = vmatprep.subr.bf16.mxu0 0
        %3886 = vmatpush2.bf16.msra.mxu0 0
        %3887 = vmatprep.subr.bf16.mxu0 0
        %3888 = vmatpush2.bf16.msra.mxu0 0
        %3889 = vmatprep.mubr.bf16.mxu0 0
        %3890 = vmatmul.mubr.bf16.gmra.mxu0 %v3458
        %v3891 = vpop.f32.mrf.mxu0
        %v3892 = vadd.f32 %v3731, %v3891
        %v3893 = vpop.f32.mrf.mxu0
        %v3894 = vpop.f32.mrf.mxu0
        %v3895 = vadd.f32 %v3734, %v3894
        %v3896 = vpop.f32.mrf.mxu0
        %3897 = vmatprep.mubr.bf16.mxu0 0
        %3898 = vmatmul.mubr.bf16.gmra.mxu0 %v3461
        %v3899 = vpop.f32.mrf.mxu0
        %v3900 = vadd.f32 %v3739, %v3899
        %v3901 = vpop.f32.mrf.mxu0
        %v3902 = vpop.f32.mrf.mxu0
        %v3903 = vadd.f32 %v3742, %v3902
        %v3904 = vpop.f32.mrf.mxu0
        %3905 = vmatprep.mubr.bf16.mxu0 0
        %3906 = vmatmul.mubr.bf16.gmra.mxu0 %v3464
        %v3907 = vpop.f32.mrf.mxu0
        %v3908 = vadd.f32 %v3747, %v3907
        %v3909 = vpop.f32.mrf.mxu0
        %v3910 = vpop.f32.mrf.mxu0
        %v3911 = vadd.f32 %v3750, %v3910
        %v3912 = vpop.f32.mrf.mxu0
        %3913 = vmatprep.mubr.bf16.mxu0 0
        %3914 = vmatmul.mubr.bf16.gmra.mxu0 %v3467
        %v3915 = vpop.f32.mrf.mxu0
        %v3916 = vadd.f32 %v3755, %v3915
        %v3917 = vpop.f32.mrf.mxu0
        %v3918 = vpop.f32.mrf.mxu0
        %v3919 = vadd.f32 %v3758, %v3918
        %v3920 = vpop.f32.mrf.mxu0
        %3921 = vmatprep.mubr.bf16.mxu0 0
        %3922 = vmatmul.mubr.bf16.gmra.mxu0 %v3470
        %v3923 = vpop.f32.mrf.mxu0
        %v3924 = vadd.f32 %v3763, %v3923
        %v3925 = vpop.f32.mrf.mxu0
        %v3926 = vpop.f32.mrf.mxu0
        %v3927 = vadd.f32 %v3766, %v3926
        %v3928 = vpop.f32.mrf.mxu0
        %3929 = vmatprep.mubr.bf16.mxu0 0
        %3930 = vmatmul.mubr.bf16.gmra.mxu0 %v3473
        %v3931 = vpop.f32.mrf.mxu0
        %v3932 = vadd.f32 %v3771, %v3931
        %v3933 = vpop.f32.mrf.mxu0
        %v3934 = vpop.f32.mrf.mxu0
        %v3935 = vadd.f32 %v3774, %v3934
        %v3936 = vpop.f32.mrf.mxu0
        %3937 = vmatprep.mubr.bf16.mxu0 0
        %3938 = vmatmul.mubr.bf16.gmra.mxu0 %v3476
        %v3939 = vpop.f32.mrf.mxu0
        %v3940 = vadd.f32 %v3779, %v3939
        %v3941 = vpop.f32.mrf.mxu0
        %v3942 = vpop.f32.mrf.mxu0
        %v3943 = vadd.f32 %v3782, %v3942
        %v3944 = vpop.f32.mrf.mxu0
        %3945 = vmatprep.mubr.bf16.mxu0 0
        %3946 = vmatmul.mubr.bf16.gmra.mxu0 %v3479
        %v3947 = vpop.f32.mrf.mxu0
        %v3948 = vadd.f32 %v3787, %v3947
        %v3949 = vpop.f32.mrf.mxu0
        %v3950 = vpop.f32.mrf.mxu0
        %v3951 = vadd.f32 %v3790, %v3950
        %v3952 = vpop.f32.mrf.mxu0
        %3953 = vmatprep.mubr.bf16.mxu0 0
        %3954 = vmatmul.mubr.bf16.gmra.mxu0 %v3482
        %v3955 = vpop.f32.mrf.mxu0
        %v3956 = vadd.f32 %v3795, %v3955
        %v3957 = vpop.f32.mrf.mxu0
        %v3958 = vpop.f32.mrf.mxu0
        %v3959 = vadd.f32 %v3798, %v3958
        %v3960 = vpop.f32.mrf.mxu0
        %3961 = vmatprep.mubr.bf16.mxu0 0
        %3962 = vmatmul.mubr.bf16.gmra.mxu0 %v3485
        %v3963 = vpop.f32.mrf.mxu0
        %v3964 = vadd.f32 %v3803, %v3963
        %v3965 = vpop.f32.mrf.mxu0
        %v3966 = vpop.f32.mrf.mxu0
        %v3967 = vadd.f32 %v3806, %v3966
        %v3968 = vpop.f32.mrf.mxu0
        %3969 = vmatprep.mubr.bf16.mxu0 0
        %3970 = vmatmul.mubr.bf16.gmra.mxu0 %v3488
        %v3971 = vpop.f32.mrf.mxu0
        %v3972 = vadd.f32 %v3811, %v3971
        %v3973 = vpop.f32.mrf.mxu0
        %v3974 = vpop.f32.mrf.mxu0
        %v3975 = vadd.f32 %v3814, %v3974
        %v3976 = vpop.f32.mrf.mxu0
        %3977 = vmatprep.mubr.bf16.mxu0 0
        %3978 = vmatmul.mubr.bf16.gmra.mxu0 %v3491
        %v3979 = vpop.f32.mrf.mxu0
        %v3980 = vadd.f32 %v3819, %v3979
        %v3981 = vpop.f32.mrf.mxu0
        %v3982 = vpop.f32.mrf.mxu0
        %v3983 = vadd.f32 %v3822, %v3982
        %v3984 = vpop.f32.mrf.mxu0
        %3985 = vmatprep.mubr.bf16.mxu0 0
        %3986 = vmatmul.mubr.bf16.gmra.mxu0 %v3494
        %v3987 = vpop.f32.mrf.mxu0
        %v3988 = vadd.f32 %v3827, %v3987
        %v3989 = vpop.f32.mrf.mxu0
        %v3990 = vpop.f32.mrf.mxu0
        %v3991 = vadd.f32 %v3830, %v3990
        %v3992 = vpop.f32.mrf.mxu0
        %3993 = vmatprep.mubr.bf16.mxu0 0
        %3994 = vmatmul.mubr.bf16.gmra.mxu0 %v3497
        %v3995 = vpop.f32.mrf.mxu0
        %v3996 = vadd.f32 %v3835, %v3995
        %v3997 = vpop.f32.mrf.mxu0
        %v3998 = vpop.f32.mrf.mxu0
        %v3999 = vadd.f32 %v3838, %v3998
        %v4000 = vpop.f32.mrf.mxu0
        %4001 = vmatprep.mubr.bf16.mxu0 0
        %4002 = vmatmul.mubr.bf16.gmra.mxu0 %v3500
        %v4003 = vpop.f32.mrf.mxu0
        %v4004 = vadd.f32 %v3843, %v4003
        %v4005 = vpop.f32.mrf.mxu0
        %v4006 = vpop.f32.mrf.mxu0
        %v4007 = vadd.f32 %v3846, %v4006
        %v4008 = vpop.f32.mrf.mxu0
        %4009 = vmatprep.mubr.bf16.mxu0 0
        %4010 = vmatmul.mubr.bf16.gmra.mxu0 %v3503
        %v4011 = vpop.f32.mrf.mxu0
        %v4012 = vadd.f32 %v3851, %v4011
        %v4013 = vpop.f32.mrf.mxu0
        %v4014 = vpop.f32.mrf.mxu0
        %v4015 = vadd.f32 %v3854, %v4014
        %v4016 = vpop.f32.mrf.mxu0
        %4017 = vdwg.mxu0
        %v4082 = vunpack.c.l.b16 %v2240
        %v4083 = vunpack.c.h.b16 %v2240
        %v4084 = vunpack.c.l.b16 %v2241
        %v4085 = vunpack.c.l.b16 %v2242
        %v4086 = vunpack.c.h.b16 %v2242
        %v4087 = vunpack.c.l.b16 %v2243
        %v4088 = vunpack.c.l.b16 %v2244
        %v4089 = vunpack.c.h.b16 %v2244
        %v4090 = vunpack.c.l.b16 %v2245
        %v4091 = vunpack.c.l.b16 %v2246
        %v4092 = vunpack.c.h.b16 %v2246
        %v4093 = vunpack.c.l.b16 %v2247
        %v4094 = vunpack.c.l.b16 %v2248
        %v4095 = vunpack.c.h.b16 %v2248
        %v4096 = vunpack.c.l.b16 %v2249
        %v4097 = vunpack.c.l.b16 %v2250
        %v4098 = vunpack.c.h.b16 %v2250
        %v4099 = vunpack.c.l.b16 %v2251
        %v4100 = vunpack.c.l.b16 %v2252
        %v4101 = vunpack.c.h.b16 %v2252
        %v4102 = vunpack.c.l.b16 %v2253
        %v4103 = vunpack.c.l.b16 %v2254
        %v4104 = vunpack.c.h.b16 %v2254
        %v4105 = vunpack.c.l.b16 %v2255
        %v4106 = vunpack.c.l.b16 %v2256
        %v4107 = vunpack.c.h.b16 %v2256
        %v4108 = vunpack.c.l.b16 %v2257
        %v4109 = vunpack.c.l.b16 %v2258
        %v4110 = vunpack.c.h.b16 %v2258
        %v4111 = vunpack.c.l.b16 %v2259
        %v4112 = vunpack.c.l.b16 %v2260
        %v4113 = vunpack.c.h.b16 %v2260
        %v4114 = vunpack.c.l.b16 %v2261
        %v4115 = vunpack.c.l.b16 %v2262
        %v4116 = vunpack.c.h.b16 %v2262
        %v4117 = vunpack.c.l.b16 %v2263
        %v4118 = vunpack.c.l.b16 %v2264
        %v4119 = vunpack.c.h.b16 %v2264
        %v4120 = vunpack.c.l.b16 %v2265
        %v4121 = vunpack.c.l.b16 %v2266
        %v4122 = vunpack.c.h.b16 %v2266
        %v4123 = vunpack.c.l.b16 %v2267
        %v4124 = vunpack.c.l.b16 %v2268
        %v4125 = vunpack.c.h.b16 %v2268
        %v4126 = vunpack.c.l.b16 %v2269
        %v4127 = vunpack.c.l.b16 %v2270
        %v4128 = vunpack.c.h.b16 %v2270
        %v4129 = vunpack.c.l.b16 %v2271
        %v4130 = vunpack.c.l.b16 %v2272
        %v4131 = vunpack.c.h.b16 %v2272
        %v4132 = vunpack.c.l.b16 %v2273
        %v4133 = vunpack.c.l.b16 %v2274
        %v4134 = vunpack.c.h.b16 %v2274
        %v4135 = vunpack.c.l.b16 %v2275
        %v4136 = vunpack.c.l.b16 %v2276
        %v4137 = vunpack.c.h.b16 %v2276
        %v4138 = vunpack.c.l.b16 %v2277
        %v4139 = vunpack.c.l.b16 %v2278
        %v4140 = vunpack.c.h.b16 %v2278
        %v4141 = vunpack.c.l.b16 %v2279
        %v4142 = vunpack.c.l.b16 %v2280
        %v4143 = vunpack.c.h.b16 %v2280
        %v4144 = vunpack.c.l.b16 %v2281
        %v4145 = vunpack.c.l.b16 %v2282
        %v4146 = vunpack.c.h.b16 %v2282
        %v4147 = vunpack.c.l.b16 %v2283
        %v4148 = vunpack.c.l.b16 %v2284
        %v4149 = vunpack.c.h.b16 %v2284
        %v4150 = vunpack.c.l.b16 %v2285
        %v4151 = vunpack.c.l.b16 %v2286
        %v4152 = vunpack.c.h.b16 %v2286
        %v4153 = vunpack.c.l.b16 %v2287
        %v4154 = vunpack.c.l.b16 %v2288
        %v4155 = vunpack.c.h.b16 %v2288
        %v4156 = vunpack.c.l.b16 %v2289
        %v4157 = vunpack.c.l.b16 %v2290
        %v4158 = vunpack.c.h.b16 %v2290
        %v4159 = vunpack.c.l.b16 %v2291
        %v4160 = vunpack.c.l.b16 %v2292
        %v4161 = vunpack.c.h.b16 %v2292
        %v4162 = vunpack.c.l.b16 %v2293
        %v4163 = vunpack.c.l.b16 %v2294
        %v4164 = vunpack.c.h.b16 %v2294
        %v4165 = vunpack.c.l.b16 %v2295
        %v4166 = vunpack.c.l.b16 %v2296
        %v4167 = vunpack.c.h.b16 %v2296
        %v4168 = vunpack.c.l.b16 %v2297
        %v4169 = vunpack.c.l.b16 %v2298
        %v4170 = vunpack.c.h.b16 %v2298
        %v4171 = vunpack.c.l.b16 %v2299
        %v4172 = vunpack.c.l.b16 %v2300
        %v4173 = vunpack.c.h.b16 %v2300
        %v4174 = vunpack.c.l.b16 %v2301
        %v4175 = vunpack.c.l.b16 %v2302
        %v4176 = vunpack.c.h.b16 %v2302
        %v4177 = vunpack.c.l.b16 %v2303
        %v4178 = vpack.c.b16 %v4085, %v4082
        %v4179 = vpack.c.b16 %v4086, %v4083
        %v4180 = vpack.c.b16 %v4087, %v4084
        %v4181 = vpack.c.b16 %v4091, %v4088
        %v4182 = vpack.c.b16 %v4092, %v4089
        %v4183 = vpack.c.b16 %v4093, %v4090
        %v4184 = vpack.c.b16 %v4097, %v4094
        %v4185 = vpack.c.b16 %v4098, %v4095
        %v4186 = vpack.c.b16 %v4099, %v4096
        %v4187 = vpack.c.b16 %v4103, %v4100
        %v4188 = vpack.c.b16 %v4104, %v4101
        %v4189 = vpack.c.b16 %v4105, %v4102
        %v4190 = vpack.c.b16 %v4109, %v4106
        %v4191 = vpack.c.b16 %v4110, %v4107
        %v4192 = vpack.c.b16 %v4111, %v4108
        %v4193 = vpack.c.b16 %v4115, %v4112
        %v4194 = vpack.c.b16 %v4116, %v4113
        %v4195 = vpack.c.b16 %v4117, %v4114
        %v4196 = vpack.c.b16 %v4121, %v4118
        %v4197 = vpack.c.b16 %v4122, %v4119
        %v4198 = vpack.c.b16 %v4123, %v4120
        %v4199 = vpack.c.b16 %v4127, %v4124
        %v4200 = vpack.c.b16 %v4128, %v4125
        %v4201 = vpack.c.b16 %v4129, %v4126
        %v4202 = vpack.c.b16 %v4133, %v4130
        %v4203 = vpack.c.b16 %v4134, %v4131
        %v4204 = vpack.c.b16 %v4135, %v4132
        %v4205 = vpack.c.b16 %v4139, %v4136
        %v4206 = vpack.c.b16 %v4140, %v4137
        %v4207 = vpack.c.b16 %v4141, %v4138
        %v4208 = vpack.c.b16 %v4145, %v4142
        %v4209 = vpack.c.b16 %v4146, %v4143
        %v4210 = vpack.c.b16 %v4147, %v4144
        %v4211 = vpack.c.b16 %v4151, %v4148
        %v4212 = vpack.c.b16 %v4152, %v4149
        %v4213 = vpack.c.b16 %v4153, %v4150
        %v4214 = vpack.c.b16 %v4157, %v4154
        %v4215 = vpack.c.b16 %v4158, %v4155
        %v4216 = vpack.c.b16 %v4159, %v4156
        %v4217 = vpack.c.b16 %v4163, %v4160
        %v4218 = vpack.c.b16 %v4164, %v4161
        %v4219 = vpack.c.b16 %v4165, %v4162
        %v4220 = vpack.c.b16 %v4169, %v4166
        %v4221 = vpack.c.b16 %v4170, %v4167
        %v4222 = vpack.c.b16 %v4171, %v4168
        %v4223 = vpack.c.b16 %v4175, %v4172
        %v4224 = vpack.c.b16 %v4176, %v4173
        %v4225 = vpack.c.b16 %v4177, %v4174
        %v4322 = vunpack.c.l.b16 %v2304
        %v4323 = vunpack.c.l.b16 %v2305
        %v4324 = vunpack.c.l.b16 %v2306
        %v4325 = vunpack.c.l.b16 %v2307
        %v4326 = vunpack.c.l.b16 %v2308
        %v4327 = vunpack.c.l.b16 %v2309
        %v4328 = vunpack.c.l.b16 %v2310
        %v4329 = vunpack.c.l.b16 %v2311
        %v4330 = vunpack.c.l.b16 %v2312
        %v4331 = vunpack.c.l.b16 %v2313
        %v4332 = vunpack.c.l.b16 %v2314
        %v4333 = vunpack.c.l.b16 %v2315
        %v4334 = vunpack.c.l.b16 %v2316
        %v4335 = vunpack.c.l.b16 %v2317
        %v4336 = vunpack.c.l.b16 %v2318
        %v4337 = vunpack.c.l.b16 %v2319
        %v4338 = vunpack.c.l.b16 %v2320
        %v4339 = vunpack.c.l.b16 %v2321
        %v4340 = vunpack.c.l.b16 %v2322
        %v4341 = vunpack.c.l.b16 %v2323
        %v4342 = vunpack.c.l.b16 %v2324
        %v4343 = vunpack.c.l.b16 %v2325
        %v4344 = vunpack.c.l.b16 %v2326
        %v4345 = vunpack.c.l.b16 %v2327
        %v4346 = vunpack.c.l.b16 %v2328
        %v4347 = vunpack.c.l.b16 %v2329
        %v4348 = vunpack.c.l.b16 %v2330
        %v4349 = vunpack.c.l.b16 %v2331
        %v4350 = vunpack.c.l.b16 %v2332
        %v4351 = vunpack.c.l.b16 %v2333
        %v4352 = vunpack.c.l.b16 %v2334
        %v4353 = vunpack.c.l.b16 %v2335
        %v4354 = vunpack.c.l.b16 %v2336
        %v4355 = vunpack.c.l.b16 %v2337
        %v4356 = vunpack.c.l.b16 %v2338
        %v4357 = vunpack.c.l.b16 %v2339
        %v4358 = vunpack.c.l.b16 %v2340
        %v4359 = vunpack.c.l.b16 %v2341
        %v4360 = vunpack.c.l.b16 %v2342
        %v4361 = vunpack.c.l.b16 %v2343
        %v4362 = vunpack.c.l.b16 %v2344
        %v4363 = vunpack.c.l.b16 %v2345
        %v4364 = vunpack.c.l.b16 %v2346
        %v4365 = vunpack.c.l.b16 %v2347
        %v4366 = vunpack.c.l.b16 %v2348
        %v4367 = vunpack.c.l.b16 %v2349
        %v4368 = vunpack.c.l.b16 %v2350
        %v4369 = vunpack.c.l.b16 %v2351
        %v4370 = vpack.c.b16 %v4323, %v4322
        %v4371 = vpack.c.b16 %v4325, %v4324
        %v4372 = vpack.c.b16 %v4327, %v4326
        %v4373 = vpack.c.b16 %v4329, %v4328
        %v4374 = vpack.c.b16 %v4331, %v4330
        %v4375 = vpack.c.b16 %v4333, %v4332
        %v4376 = vpack.c.b16 %v4335, %v4334
        %v4377 = vpack.c.b16 %v4337, %v4336
        %v4378 = vpack.c.b16 %v4339, %v4338
        %v4379 = vpack.c.b16 %v4341, %v4340
        %v4380 = vpack.c.b16 %v4343, %v4342
        %v4381 = vpack.c.b16 %v4345, %v4344
        %v4382 = vpack.c.b16 %v4347, %v4346
        %v4383 = vpack.c.b16 %v4349, %v4348
        %v4384 = vpack.c.b16 %v4351, %v4350
        %v4385 = vpack.c.b16 %v4353, %v4352
        %v4386 = vpack.c.b16 %v4355, %v4354
        %v4387 = vpack.c.b16 %v4357, %v4356
        %v4388 = vpack.c.b16 %v4359, %v4358
        %v4389 = vpack.c.b16 %v4361, %v4360
        %v4390 = vpack.c.b16 %v4363, %v4362
        %v4391 = vpack.c.b16 %v4365, %v4364
        %v4392 = vpack.c.b16 %v4367, %v4366
        %v4393 = vpack.c.b16 %v4369, %v4368
        %4418 = vmatprep.subr.bf16.mxu0 0
        %4419 = vmatpush1.bf16.msra.mxu0 %v4377
        %4420 = vmatprep.subr.bf16.mxu0 0
        %4421 = vmatpush1.bf16.msra.mxu0 %v4376
        %4422 = vmatprep.subr.bf16.mxu0 0
        %4423 = vmatpush1.bf16.msra.mxu0 %v4375
        %4424 = vmatprep.subr.bf16.mxu0 0
        %4425 = vmatpush1.bf16.msra.mxu0 %v4374
        %4426 = vmatprep.subr.bf16.mxu0 0
        %4427 = vmatpush1.bf16.msra.mxu0 %v4373
        %4428 = vmatprep.subr.bf16.mxu0 0
        %4429 = vmatpush1.bf16.msra.mxu0 %v4372
        %4430 = vmatprep.subr.bf16.mxu0 0
        %4431 = vmatpush1.bf16.msra.mxu0 %v4371
        %4432 = vmatprep.subr.bf16.mxu0 0
        %4433 = vmatpush1.bf16.msra.mxu0 %v4370
        %4434 = vmatprep.subr.bf16.mxu0 0
        %4435 = vmatpush2.bf16.msra.mxu0 %v4385
        %4436 = vmatprep.subr.bf16.mxu0 0
        %4437 = vmatpush2.bf16.msra.mxu0 %v4384
        %4438 = vmatprep.subr.bf16.mxu0 0
        %4439 = vmatpush2.bf16.msra.mxu0 %v4383
        %4440 = vmatprep.subr.bf16.mxu0 0
        %4441 = vmatpush2.bf16.msra.mxu0 %v4382
        %4442 = vmatprep.subr.bf16.mxu0 0
        %4443 = vmatpush2.bf16.msra.mxu0 %v4381
        %4444 = vmatprep.subr.bf16.mxu0 0
        %4445 = vmatpush2.bf16.msra.mxu0 %v4380
        %4446 = vmatprep.subr.bf16.mxu0 0
        %4447 = vmatpush2.bf16.msra.mxu0 %v4379
        %4448 = vmatprep.subr.bf16.mxu0 0
        %4449 = vmatpush2.bf16.msra.mxu0 %v4378
        %4450 = vmatprep.mubr.bf16.mxu0 %v4179
        %4451 = vmatmul.mubr.bf16.gmra.mxu0 %v4178
        %v4452 = vpop.f32.mrf.mxu0
        %v4453 = vadd.f32 %v3892, %v4452
        %v4454 = vpop.f32.mrf.mxu0
        %v4455 = vpop.f32.mrf.mxu0
        %v4456 = vadd.f32 %v3895, %v4455
        %v4457 = vpop.f32.mrf.mxu0
        %4458 = vmatprep.mubr.bf16.mxu0 %v4182
        %4459 = vmatmul.mubr.bf16.gmra.mxu0 %v4181
        %v4460 = vpop.f32.mrf.mxu0
        %v4461 = vadd.f32 %v3900, %v4460
        %v4462 = vpop.f32.mrf.mxu0
        %v4463 = vpop.f32.mrf.mxu0
        %v4464 = vadd.f32 %v3903, %v4463
        %v4465 = vpop.f32.mrf.mxu0
        %4466 = vmatprep.mubr.bf16.mxu0 %v4185
        %4467 = vmatmul.mubr.bf16.gmra.mxu0 %v4184
        %v4468 = vpop.f32.mrf.mxu0
        %v4469 = vadd.f32 %v3908, %v4468
        %v4470 = vpop.f32.mrf.mxu0
        %v4471 = vpop.f32.mrf.mxu0
        %v4472 = vadd.f32 %v3911, %v4471
        %v4473 = vpop.f32.mrf.mxu0
        %4474 = vmatprep.mubr.bf16.mxu0 %v4188
        %4475 = vmatmul.mubr.bf16.gmra.mxu0 %v4187
        %v4476 = vpop.f32.mrf.mxu0
        %v4477 = vadd.f32 %v3916, %v4476
        %v4478 = vpop.f32.mrf.mxu0
        %v4479 = vpop.f32.mrf.mxu0
        %v4480 = vadd.f32 %v3919, %v4479
        %v4481 = vpop.f32.mrf.mxu0
        %4482 = vmatprep.mubr.bf16.mxu0 %v4191
        %4483 = vmatmul.mubr.bf16.gmra.mxu0 %v4190
        %v4484 = vpop.f32.mrf.mxu0
        %v4485 = vadd.f32 %v3924, %v4484
        %v4486 = vpop.f32.mrf.mxu0
        %v4487 = vpop.f32.mrf.mxu0
        %v4488 = vadd.f32 %v3927, %v4487
        %v4489 = vpop.f32.mrf.mxu0
        %4490 = vmatprep.mubr.bf16.mxu0 %v4194
        %4491 = vmatmul.mubr.bf16.gmra.mxu0 %v4193
        %v4492 = vpop.f32.mrf.mxu0
        %v4493 = vadd.f32 %v3932, %v4492
        %v4494 = vpop.f32.mrf.mxu0
        %v4495 = vpop.f32.mrf.mxu0
        %v4496 = vadd.f32 %v3935, %v4495
        %v4497 = vpop.f32.mrf.mxu0
        %4498 = vmatprep.mubr.bf16.mxu0 %v4197
        %4499 = vmatmul.mubr.bf16.gmra.mxu0 %v4196
        %v4500 = vpop.f32.mrf.mxu0
        %v4501 = vadd.f32 %v3940, %v4500
        %v4502 = vpop.f32.mrf.mxu0
        %v4503 = vpop.f32.mrf.mxu0
        %v4504 = vadd.f32 %v3943, %v4503
        %v4505 = vpop.f32.mrf.mxu0
        %4506 = vmatprep.mubr.bf16.mxu0 %v4200
        %4507 = vmatmul.mubr.bf16.gmra.mxu0 %v4199
        %v4508 = vpop.f32.mrf.mxu0
        %v4509 = vadd.f32 %v3948, %v4508
        %v4510 = vpop.f32.mrf.mxu0
        %v4511 = vpop.f32.mrf.mxu0
        %v4512 = vadd.f32 %v3951, %v4511
        %v4513 = vpop.f32.mrf.mxu0
        %4514 = vmatprep.mubr.bf16.mxu0 %v4203
        %4515 = vmatmul.mubr.bf16.gmra.mxu0 %v4202
        %v4516 = vpop.f32.mrf.mxu0
        %v4517 = vadd.f32 %v3956, %v4516
        %v4518 = vpop.f32.mrf.mxu0
        %v4519 = vpop.f32.mrf.mxu0
        %v4520 = vadd.f32 %v3959, %v4519
        %v4521 = vpop.f32.mrf.mxu0
        %4522 = vmatprep.mubr.bf16.mxu0 %v4206
        %4523 = vmatmul.mubr.bf16.gmra.mxu0 %v4205
        %v4524 = vpop.f32.mrf.mxu0
        %v4525 = vadd.f32 %v3964, %v4524
        %v4526 = vpop.f32.mrf.mxu0
        %v4527 = vpop.f32.mrf.mxu0
        %v4528 = vadd.f32 %v3967, %v4527
        %v4529 = vpop.f32.mrf.mxu0
        %4530 = vmatprep.mubr.bf16.mxu0 %v4209
        %4531 = vmatmul.mubr.bf16.gmra.mxu0 %v4208
        %v4532 = vpop.f32.mrf.mxu0
        %v4533 = vadd.f32 %v3972, %v4532
        %v4534 = vpop.f32.mrf.mxu0
        %v4535 = vpop.f32.mrf.mxu0
        %v4536 = vadd.f32 %v3975, %v4535
        %v4537 = vpop.f32.mrf.mxu0
        %4538 = vmatprep.mubr.bf16.mxu0 %v4212
        %4539 = vmatmul.mubr.bf16.gmra.mxu0 %v4211
        %v4540 = vpop.f32.mrf.mxu0
        %v4541 = vadd.f32 %v3980, %v4540
        %v4542 = vpop.f32.mrf.mxu0
        %v4543 = vpop.f32.mrf.mxu0
        %v4544 = vadd.f32 %v3983, %v4543
        %v4545 = vpop.f32.mrf.mxu0
        %4546 = vmatprep.mubr.bf16.mxu0 %v4215
        %4547 = vmatmul.mubr.bf16.gmra.mxu0 %v4214
        %v4548 = vpop.f32.mrf.mxu0
        %v4549 = vadd.f32 %v3988, %v4548
        %v4550 = vpop.f32.mrf.mxu0
        %v4551 = vpop.f32.mrf.mxu0
        %v4552 = vadd.f32 %v3991, %v4551
        %v4553 = vpop.f32.mrf.mxu0
        %4554 = vmatprep.mubr.bf16.mxu0 %v4218
        %4555 = vmatmul.mubr.bf16.gmra.mxu0 %v4217
        %v4556 = vpop.f32.mrf.mxu0
        %v4557 = vadd.f32 %v3996, %v4556
        %v4558 = vpop.f32.mrf.mxu0
        %v4559 = vpop.f32.mrf.mxu0
        %v4560 = vadd.f32 %v3999, %v4559
        %v4561 = vpop.f32.mrf.mxu0
        %4562 = vmatprep.mubr.bf16.mxu0 %v4221
        %4563 = vmatmul.mubr.bf16.gmra.mxu0 %v4220
        %v4564 = vpop.f32.mrf.mxu0
        %v4565 = vadd.f32 %v4004, %v4564
        %v4566 = vpop.f32.mrf.mxu0
        %v4567 = vpop.f32.mrf.mxu0
        %v4568 = vadd.f32 %v4007, %v4567
        %v4569 = vpop.f32.mrf.mxu0
        %4570 = vmatprep.mubr.bf16.mxu0 %v4224
        %4571 = vmatmul.mubr.bf16.gmra.mxu0 %v4223
        %v4572 = vpop.f32.mrf.mxu0
        %v4573 = vadd.f32 %v4012, %v4572
        %v4574 = vpop.f32.mrf.mxu0
        %v4575 = vpop.f32.mrf.mxu0
        %v4576 = vadd.f32 %v4015, %v4575
        %v4577 = vpop.f32.mrf.mxu0
        %4578 = vdwg.mxu0
        %4579 = vmatprep.subr.bf16.mxu0 0
        %4580 = vmatpush1.bf16.msra.mxu0 %v4393
        %4581 = vmatprep.subr.bf16.mxu0 0
        %4582 = vmatpush1.bf16.msra.mxu0 %v4392
        %4583 = vmatprep.subr.bf16.mxu0 0
        %4584 = vmatpush1.bf16.msra.mxu0 %v4391
        %4585 = vmatprep.subr.bf16.mxu0 0
        %4586 = vmatpush1.bf16.msra.mxu0 %v4390
        %4587 = vmatprep.subr.bf16.mxu0 0
        %4588 = vmatpush1.bf16.msra.mxu0 %v4389
        %4589 = vmatprep.subr.bf16.mxu0 0
        %4590 = vmatpush1.bf16.msra.mxu0 %v4388
        %4591 = vmatprep.subr.bf16.mxu0 0
        %4592 = vmatpush1.bf16.msra.mxu0 %v4387
        %4593 = vmatprep.subr.bf16.mxu0 0
        %4594 = vmatpush1.bf16.msra.mxu0 %v4386
        %4595 = vmatprep.subr.bf16.mxu0 0
        %4596 = vmatpush2.bf16.msra.mxu0 0
        %4597 = vmatprep.subr.bf16.mxu0 0
        %4598 = vmatpush2.bf16.msra.mxu0 0
        %4599 = vmatprep.subr.bf16.mxu0 0
        %4600 = vmatpush2.bf16.msra.mxu0 0
        %4601 = vmatprep.subr.bf16.mxu0 0
        %4602 = vmatpush2.bf16.msra.mxu0 0
        %4603 = vmatprep.subr.bf16.mxu0 0
        %4604 = vmatpush2.bf16.msra.mxu0 0
        %4605 = vmatprep.subr.bf16.mxu0 0
        %4606 = vmatpush2.bf16.msra.mxu0 0
        %4607 = vmatprep.subr.bf16.mxu0 0
        %4608 = vmatpush2.bf16.msra.mxu0 0
        %4609 = vmatprep.subr.bf16.mxu0 0
        %4610 = vmatpush2.bf16.msra.mxu0 0
        %4611 = vmatprep.mubr.bf16.mxu0 0
        %4612 = vmatmul.mubr.bf16.gmra.mxu0 %v4180
        %v4613 = vpop.f32.mrf.mxu0
        %v4614 = vadd.f32 %v4453, %v4613
        %v4615 = vpop.f32.mrf.mxu0
        %v4616 = vpop.f32.mrf.mxu0
        %v4617 = vadd.f32 %v4456, %v4616
        %v4618 = vpop.f32.mrf.mxu0
        %4619 = vmatprep.mubr.bf16.mxu0 0
        %4620 = vmatmul.mubr.bf16.gmra.mxu0 %v4183
        %v4621 = vpop.f32.mrf.mxu0
        %v4622 = vadd.f32 %v4461, %v4621
        %v4623 = vpop.f32.mrf.mxu0
        %v4624 = vpop.f32.mrf.mxu0
        %v4625 = vadd.f32 %v4464, %v4624
        %v4626 = vpop.f32.mrf.mxu0
        %4627 = vmatprep.mubr.bf16.mxu0 0
        %4628 = vmatmul.mubr.bf16.gmra.mxu0 %v4186
        %v4629 = vpop.f32.mrf.mxu0
        %v4630 = vadd.f32 %v4469, %v4629
        %v4631 = vpop.f32.mrf.mxu0
        %v4632 = vpop.f32.mrf.mxu0
        %v4633 = vadd.f32 %v4472, %v4632
        %v4634 = vpop.f32.mrf.mxu0
        %4635 = vmatprep.mubr.bf16.mxu0 0
        %4636 = vmatmul.mubr.bf16.gmra.mxu0 %v4189
        %v4637 = vpop.f32.mrf.mxu0
        %v4638 = vadd.f32 %v4477, %v4637
        %v4639 = vpop.f32.mrf.mxu0
        %v4640 = vpop.f32.mrf.mxu0
        %v4641 = vadd.f32 %v4480, %v4640
        %v4642 = vpop.f32.mrf.mxu0
        %4643 = vmatprep.mubr.bf16.mxu0 0
        %4644 = vmatmul.mubr.bf16.gmra.mxu0 %v4192
        %v4645 = vpop.f32.mrf.mxu0
        %v4646 = vadd.f32 %v4485, %v4645
        %v4647 = vpop.f32.mrf.mxu0
        %v4648 = vpop.f32.mrf.mxu0
        %v4649 = vadd.f32 %v4488, %v4648
        %v4650 = vpop.f32.mrf.mxu0
        %4651 = vmatprep.mubr.bf16.mxu0 0
        %4652 = vmatmul.mubr.bf16.gmra.mxu0 %v4195
        %v4653 = vpop.f32.mrf.mxu0
        %v4654 = vadd.f32 %v4493, %v4653
        %v4655 = vpop.f32.mrf.mxu0
        %v4656 = vpop.f32.mrf.mxu0
        %v4657 = vadd.f32 %v4496, %v4656
        %v4658 = vpop.f32.mrf.mxu0
        %4659 = vmatprep.mubr.bf16.mxu0 0
        %4660 = vmatmul.mubr.bf16.gmra.mxu0 %v4198
        %v4661 = vpop.f32.mrf.mxu0
        %v4662 = vadd.f32 %v4501, %v4661
        %v4663 = vpop.f32.mrf.mxu0
        %v4664 = vpop.f32.mrf.mxu0
        %v4665 = vadd.f32 %v4504, %v4664
        %v4666 = vpop.f32.mrf.mxu0
        %4667 = vmatprep.mubr.bf16.mxu0 0
        %4668 = vmatmul.mubr.bf16.gmra.mxu0 %v4201
        %v4669 = vpop.f32.mrf.mxu0
        %v4670 = vadd.f32 %v4509, %v4669
        %v4671 = vpop.f32.mrf.mxu0
        %v4672 = vpop.f32.mrf.mxu0
        %v4673 = vadd.f32 %v4512, %v4672
        %v4674 = vpop.f32.mrf.mxu0
        %4675 = vmatprep.mubr.bf16.mxu0 0
        %4676 = vmatmul.mubr.bf16.gmra.mxu0 %v4204
        %v4677 = vpop.f32.mrf.mxu0
        %v4678 = vadd.f32 %v4517, %v4677
        %v4679 = vpop.f32.mrf.mxu0
        %v4680 = vpop.f32.mrf.mxu0
        %v4681 = vadd.f32 %v4520, %v4680
        %v4682 = vpop.f32.mrf.mxu0
        %4683 = vmatprep.mubr.bf16.mxu0 0
        %4684 = vmatmul.mubr.bf16.gmra.mxu0 %v4207
        %v4685 = vpop.f32.mrf.mxu0
        %v4686 = vadd.f32 %v4525, %v4685
        %v4687 = vpop.f32.mrf.mxu0
        %v4688 = vpop.f32.mrf.mxu0
        %v4689 = vadd.f32 %v4528, %v4688
        %v4690 = vpop.f32.mrf.mxu0
        %4691 = vmatprep.mubr.bf16.mxu0 0
        %4692 = vmatmul.mubr.bf16.gmra.mxu0 %v4210
        %v4693 = vpop.f32.mrf.mxu0
        %v4694 = vadd.f32 %v4533, %v4693
        %v4695 = vpop.f32.mrf.mxu0
        %v4696 = vpop.f32.mrf.mxu0
        %v4697 = vadd.f32 %v4536, %v4696
        %v4698 = vpop.f32.mrf.mxu0
        %4699 = vmatprep.mubr.bf16.mxu0 0
        %4700 = vmatmul.mubr.bf16.gmra.mxu0 %v4213
        %v4701 = vpop.f32.mrf.mxu0
        %v4702 = vadd.f32 %v4541, %v4701
        %v4703 = vpop.f32.mrf.mxu0
        %v4704 = vpop.f32.mrf.mxu0
        %v4705 = vadd.f32 %v4544, %v4704
        %v4706 = vpop.f32.mrf.mxu0
        %4707 = vmatprep.mubr.bf16.mxu0 0
        %4708 = vmatmul.mubr.bf16.gmra.mxu0 %v4216
        %v4709 = vpop.f32.mrf.mxu0
        %v4710 = vadd.f32 %v4549, %v4709
        %v4711 = vpop.f32.mrf.mxu0
        %v4712 = vpop.f32.mrf.mxu0
        %v4713 = vadd.f32 %v4552, %v4712
        %v4714 = vpop.f32.mrf.mxu0
        %4715 = vmatprep.mubr.bf16.mxu0 0
        %4716 = vmatmul.mubr.bf16.gmra.mxu0 %v4219
        %v4717 = vpop.f32.mrf.mxu0
        %v4718 = vadd.f32 %v4557, %v4717
        %v4719 = vpop.f32.mrf.mxu0
        %v4720 = vpop.f32.mrf.mxu0
        %v4721 = vadd.f32 %v4560, %v4720
        %v4722 = vpop.f32.mrf.mxu0
        %4723 = vmatprep.mubr.bf16.mxu0 0
        %4724 = vmatmul.mubr.bf16.gmra.mxu0 %v4222
        %v4725 = vpop.f32.mrf.mxu0
        %v4726 = vadd.f32 %v4565, %v4725
        %v4727 = vpop.f32.mrf.mxu0
        %v4728 = vpop.f32.mrf.mxu0
        %v4729 = vadd.f32 %v4568, %v4728
        %v4730 = vpop.f32.mrf.mxu0
        %4731 = vmatprep.mubr.bf16.mxu0 0
        %4732 = vmatmul.mubr.bf16.gmra.mxu0 %v4225
        %v4733 = vpop.f32.mrf.mxu0
        %v4734 = vadd.f32 %v4573, %v4733
        %v4735 = vpop.f32.mrf.mxu0
        %v4736 = vpop.f32.mrf.mxu0
        %v4737 = vadd.f32 %v4576, %v4736
        %v4738 = vpop.f32.mrf.mxu0
        %4739 = vdwg.mxu0
        %s4740 = scalar_lea.vmem [#allocation2], 24
        %v4741 = vld [vmem:[%s4740] sm:$0xf]
        %v4742 = vld [vmem:[%s4740 + $0x4] sm:$0xf]
        %v4743 = vld [vmem:[%s4740 + $0xc] sm:$0xf]
        %v4744 = vld [vmem:[%s4740 + $0x10] sm:$0xf]
        %v4745 = vld [vmem:[%s4740 + $0x18] sm:$0xf]
        %v4746 = vld [vmem:[%s4740 + $0x1c] sm:$0xf]
        %v4747 = vld [vmem:[%s4740 + $0x24] sm:$0xf]
        %v4748 = vld [vmem:[%s4740 + $0x28] sm:$0xf]
        %v4749 = vld [vmem:[%s4740 + $0x30] sm:$0xf]
        %v4750 = vld [vmem:[%s4740 + $0x34] sm:$0xf]
        %v4751 = vld [vmem:[%s4740 + $0x3c] sm:$0xf]
        %v4752 = vld [vmem:[%s4740 + $0x40] sm:$0xf]
        %v4753 = vld [vmem:[%s4740 + $0x48] sm:$0xf]
        %v4754 = vld [vmem:[%s4740 + $0x4c] sm:$0xf]
        %v4755 = vld [vmem:[%s4740 + $0x54] sm:$0xf]
        %v4756 = vld [vmem:[%s4740 + $0x58] sm:$0xf]
        %v4757 = vld [vmem:[%s4740 + $0x60] sm:$0xf]
        %v4758 = vld [vmem:[%s4740 + $0x64] sm:$0xf]
        %v4759 = vld [vmem:[%s4740 + $0x6c] sm:$0xf]
        %v4760 = vld [vmem:[%s4740 + $0x70] sm:$0xf]
        %v4761 = vld [vmem:[%s4740 + $0x78] sm:$0xf]
        %v4762 = vld [vmem:[%s4740 + $0x7c] sm:$0xf]
        %v4763 = vld [vmem:[%s4740 + $0x84] sm:$0xf]
        %v4764 = vld [vmem:[%s4740 + $0x88] sm:$0xf]
        %v4765 = vld [vmem:[%s4740 + $0x90] sm:$0xf]
        %v4766 = vld [vmem:[%s4740 + $0x94] sm:$0xf]
        %v4767 = vld [vmem:[%s4740 + $0x9c] sm:$0xf]
        %v4768 = vld [vmem:[%s4740 + $0xa0] sm:$0xf]
        %v4769 = vld [vmem:[%s4740 + $0xa8] sm:$0xf]
        %v4770 = vld [vmem:[%s4740 + $0xac] sm:$0xf]
        %v4771 = vld [vmem:[%s4740 + $0xb4] sm:$0xf]
        %v4772 = vld [vmem:[%s4740 + $0xb8] sm:$0xf]
        %4773 = vst [vmem:[#allocation3] sm:$0xf] %v4741
        %4774 = vst [vmem:[#allocation3 + $0xc] sm:$0xf] %v4742
        %4775 = vst [vmem:[#allocation3 + $0x18] sm:$0xf] %v4743
        %4776 = vst [vmem:[#allocation3 + $0x24] sm:$0xf] %v4744
        %4777 = vst [vmem:[#allocation3 + $0x30] sm:$0xf] %v4745
        %4778 = vst [vmem:[#allocation3 + $0x3c] sm:$0xf] %v4746
        %4779 = vst [vmem:[#allocation3 + $0x48] sm:$0xf] %v4747
        %4780 = vst [vmem:[#allocation3 + $0x54] sm:$0xf] %v4748
        %4781 = vst [vmem:[#allocation3 + $0x60] sm:$0xf] %v4749
        %4782 = vst [vmem:[#allocation3 + $0x6c] sm:$0xf] %v4750
        %4783 = vst [vmem:[#allocation3 + $0x78] sm:$0xf] %v4751
        %4784 = vst [vmem:[#allocation3 + $0x84] sm:$0xf] %v4752
        %4785 = vst [vmem:[#allocation3 + $0x90] sm:$0xf] %v4753
        %4786 = vst [vmem:[#allocation3 + $0x9c] sm:$0xf] %v4754
        %4787 = vst [vmem:[#allocation3 + $0xa8] sm:$0xf] %v4755
        %4788 = vst [vmem:[#allocation3 + $0xb4] sm:$0xf] %v4756
        %4789 = vst [vmem:[#allocation3 + $0xc0] sm:$0xf] %v4757
        %4790 = vst [vmem:[#allocation3 + $0xcc] sm:$0xf] %v4758
        %4791 = vst [vmem:[#allocation3 + $0xd8] sm:$0xf] %v4759
        %4792 = vst [vmem:[#allocation3 + $0xe4] sm:$0xf] %v4760
        %4793 = vst [vmem:[#allocation3 + $0xf0] sm:$0xf] %v4761
        %4794 = vst [vmem:[#allocation3 + $0xfc] sm:$0xf] %v4762
        %4795 = vst [vmem:[#allocation3 + $0x108] sm:$0xf] %v4763
        %4796 = vst [vmem:[#allocation3 + $0x114] sm:$0xf] %v4764
        %4797 = vst [vmem:[#allocation3 + $0x120] sm:$0xf] %v4765
        %4798 = vst [vmem:[#allocation3 + $0x12c] sm:$0xf] %v4766
        %4799 = vst [vmem:[#allocation3 + $0x138] sm:$0xf] %v4767
        %4800 = vst [vmem:[#allocation3 + $0x144] sm:$0xf] %v4768
        %4801 = vst [vmem:[#allocation3 + $0x150] sm:$0xf] %v4769
        %4802 = vst [vmem:[#allocation3 + $0x15c] sm:$0xf] %v4770
        %4803 = vst [vmem:[#allocation3 + $0x168] sm:$0xf] %v4771
        %4804 = vst [vmem:[#allocation3 + $0x174] sm:$0xf] %v4772
        %v4805 = vld [vmem:[%s4740] sm:$0xf]
        %v4806 = vld [vmem:[%s4740 + $0x4] sm:$0xf]
        %v4807 = vld [vmem:[%s4740 + $0x8] sm:$0x1]
        %v4808 = vld [vmem:[%s4740 + $0xc] sm:$0xf]
        %v4809 = vld [vmem:[%s4740 + $0x10] sm:$0xf]
        %v4810 = vld [vmem:[%s4740 + $0x14] sm:$0x1]
        %v4811 = vld [vmem:[%s4740 + $0x18] sm:$0xf]
        %v4812 = vld [vmem:[%s4740 + $0x1c] sm:$0xf]
        %v4813 = vld [vmem:[%s4740 + $0x20] sm:$0x1]
        %v4814 = vld [vmem:[%s4740 + $0x24] sm:$0xf]
        %v4815 = vld [vmem:[%s4740 + $0x28] sm:$0xf]
        %v4816 = vld [vmem:[%s4740 + $0x2c] sm:$0x1]
        %v4817 = vld [vmem:[%s4740 + $0x30] sm:$0xf]
        %v4818 = vld [vmem:[%s4740 + $0x34] sm:$0xf]
        %v4819 = vld [vmem:[%s4740 + $0x38] sm:$0x1]
        %v4820 = vld [vmem:[%s4740 + $0x3c] sm:$0xf]
        %v4821 = vld [vmem:[%s4740 + $0x40] sm:$0xf]
        %v4822 = vld [vmem:[%s4740 + $0x44] sm:$0x1]
        %v4823 = vld [vmem:[%s4740 + $0x48] sm:$0xf]
        %v4824 = vld [vmem:[%s4740 + $0x4c] sm:$0xf]
        %v4825 = vld [vmem:[%s4740 + $0x50] sm:$0x1]
        %v4826 = vld [vmem:[%s4740 + $0x54] sm:$0xf]
        %v4827 = vld [vmem:[%s4740 + $0x58] sm:$0xf]
        %v4828 = vld [vmem:[%s4740 + $0x5c] sm:$0x1]
        %v4829 = vld [vmem:[%s4740 + $0x60] sm:$0xf]
        %v4830 = vld [vmem:[%s4740 + $0x64] sm:$0xf]
        %v4831 = vld [vmem:[%s4740 + $0x68] sm:$0x1]
        %v4832 = vld [vmem:[%s4740 + $0x6c] sm:$0xf]
        %v4833 = vld [vmem:[%s4740 + $0x70] sm:$0xf]
        %v4834 = vld [vmem:[%s4740 + $0x74] sm:$0x1]
        %v4835 = vld [vmem:[%s4740 + $0x78] sm:$0xf]
        %v4836 = vld [vmem:[%s4740 + $0x7c] sm:$0xf]
        %v4837 = vld [vmem:[%s4740 + $0x80] sm:$0x1]
        %v4838 = vld [vmem:[%s4740 + $0x84] sm:$0xf]
        %v4839 = vld [vmem:[%s4740 + $0x88] sm:$0xf]
        %v4840 = vld [vmem:[%s4740 + $0x8c] sm:$0x1]
        %v4841 = vld [vmem:[%s4740 + $0x90] sm:$0xf]
        %v4842 = vld [vmem:[%s4740 + $0x94] sm:$0xf]
        %v4843 = vld [vmem:[%s4740 + $0x98] sm:$0x1]
        %v4844 = vld [vmem:[%s4740 + $0x9c] sm:$0xf]
        %v4845 = vld [vmem:[%s4740 + $0xa0] sm:$0xf]
        %v4846 = vld [vmem:[%s4740 + $0xa4] sm:$0x1]
        %v4847 = vld [vmem:[%s4740 + $0xa8] sm:$0xf]
        %v4848 = vld [vmem:[%s4740 + $0xac] sm:$0xf]
        %v4849 = vld [vmem:[%s4740 + $0xb0] sm:$0x1]
        %v4850 = vld [vmem:[%s4740 + $0xb4] sm:$0xf]
        %v4851 = vld [vmem:[%s4740 + $0xb8] sm:$0xf]
        %v4852 = vld [vmem:[%s4740 + $0xbc] sm:$0x1]
        %v4854 = vshrl.u32 %v4805, 16
        %v4856 = vrot.slane %v4854, 4
        %v4857 = vshll.u32 %v4805, 16
        %v4859 = vrot.slane %v4857, 5
        %v4860 = vor.u32 %v4856, %v4859
        %v4861 = vrot.slane %v4860, 4
        %v4863 = vshll.u32 %v4806, 16
        %v4865 = vrot.slane %v4863, 5
        %v4866 = vsel %vm1516, %v4861, %v4865
        %v4867 = vshrl.u32 %v4806, 16
        %v4869 = vrot.slane %v4867, 4
        %v4870 = vor.u32 %v4869, %v4865
        %v4871 = vrot.slane %v4870, 4
        %v4873 = vshll.u32 %v4807, 16
        %v4875 = vrot.slane %v4873, 5
        %v4876 = vsel %vm1516, %v4871, %v4875
        %v4878 = vshrl.u32 %v4808, 16
        %v4880 = vrot.slane %v4878, 4
        %v4881 = vshll.u32 %v4808, 16
        %v4883 = vrot.slane %v4881, 5
        %v4884 = vor.u32 %v4880, %v4883
        %v4885 = vrot.slane %v4884, 4
        %v4887 = vshll.u32 %v4809, 16
        %v4889 = vrot.slane %v4887, 5
        %v4890 = vsel %vm1516, %v4885, %v4889
        %v4891 = vshrl.u32 %v4809, 16
        %v4893 = vrot.slane %v4891, 4
        %v4894 = vor.u32 %v4893, %v4889
        %v4895 = vrot.slane %v4894, 4
        %v4897 = vshll.u32 %v4810, 16
        %v4899 = vrot.slane %v4897, 5
        %v4900 = vsel %vm1516, %v4895, %v4899
        %v4902 = vshrl.u32 %v4811, 16
        %v4904 = vrot.slane %v4902, 4
        %v4905 = vshll.u32 %v4811, 16
        %v4907 = vrot.slane %v4905, 5
        %v4908 = vor.u32 %v4904, %v4907
        %v4909 = vrot.slane %v4908, 4
        %v4911 = vshll.u32 %v4812, 16
        %v4913 = vrot.slane %v4911, 5
        %v4914 = vsel %vm1516, %v4909, %v4913
        %v4915 = vshrl.u32 %v4812, 16
        %v4917 = vrot.slane %v4915, 4
        %v4918 = vor.u32 %v4917, %v4913
        %v4919 = vrot.slane %v4918, 4
        %v4921 = vshll.u32 %v4813, 16
        %v4923 = vrot.slane %v4921, 5
        %v4924 = vsel %vm1516, %v4919, %v4923
        %v4926 = vshrl.u32 %v4814, 16
        %v4928 = vrot.slane %v4926, 4
        %v4929 = vshll.u32 %v4814, 16
        %v4931 = vrot.slane %v4929, 5
        %v4932 = vor.u32 %v4928, %v4931
        %v4933 = vrot.slane %v4932, 4
        %v4935 = vshll.u32 %v4815, 16
        %v4937 = vrot.slane %v4935, 5
        %v4938 = vsel %vm1516, %v4933, %v4937
        %v4939 = vshrl.u32 %v4815, 16
        %v4941 = vrot.slane %v4939, 4
        %v4942 = vor.u32 %v4941, %v4937
        %v4943 = vrot.slane %v4942, 4
        %v4945 = vshll.u32 %v4816, 16
        %v4947 = vrot.slane %v4945, 5
        %v4948 = vsel %vm1516, %v4943, %v4947
        %v4950 = vshrl.u32 %v4817, 16
        %v4952 = vrot.slane %v4950, 4
        %v4953 = vshll.u32 %v4817, 16
        %v4955 = vrot.slane %v4953, 5
        %v4956 = vor.u32 %v4952, %v4955
        %v4957 = vrot.slane %v4956, 4
        %v4959 = vshll.u32 %v4818, 16
        %v4961 = vrot.slane %v4959, 5
        %v4962 = vsel %vm1516, %v4957, %v4961
        %v4963 = vshrl.u32 %v4818, 16
        %v4965 = vrot.slane %v4963, 4
        %v4966 = vor.u32 %v4965, %v4961
        %v4967 = vrot.slane %v4966, 4
        %v4969 = vshll.u32 %v4819, 16
        %v4971 = vrot.slane %v4969, 5
        %v4972 = vsel %vm1516, %v4967, %v4971
        %v4974 = vshrl.u32 %v4820, 16
        %v4976 = vrot.slane %v4974, 4
        %v4977 = vshll.u32 %v4820, 16
        %v4979 = vrot.slane %v4977, 5
        %v4980 = vor.u32 %v4976, %v4979
        %v4981 = vrot.slane %v4980, 4
        %v4983 = vshll.u32 %v4821, 16
        %v4985 = vrot.slane %v4983, 5
        %v4986 = vsel %vm1516, %v4981, %v4985
        %v4987 = vshrl.u32 %v4821, 16
        %v4989 = vrot.slane %v4987, 4
        %v4990 = vor.u32 %v4989, %v4985
        %v4991 = vrot.slane %v4990, 4
        %v4993 = vshll.u32 %v4822, 16
        %v4995 = vrot.slane %v4993, 5
        %v4996 = vsel %vm1516, %v4991, %v4995
        %v4998 = vshrl.u32 %v4823, 16
        %v5000 = vrot.slane %v4998, 4
        %v5001 = vshll.u32 %v4823, 16
        %v5003 = vrot.slane %v5001, 5
        %v5004 = vor.u32 %v5000, %v5003
        %v5005 = vrot.slane %v5004, 4
        %v5007 = vshll.u32 %v4824, 16
        %v5009 = vrot.slane %v5007, 5
        %v5010 = vsel %vm1516, %v5005, %v5009
        %v5011 = vshrl.u32 %v4824, 16
        %v5013 = vrot.slane %v5011, 4
        %v5014 = vor.u32 %v5013, %v5009
        %v5015 = vrot.slane %v5014, 4
        %v5017 = vshll.u32 %v4825, 16
        %v5019 = vrot.slane %v5017, 5
        %v5020 = vsel %vm1516, %v5015, %v5019
        %v5022 = vshrl.u32 %v4826, 16
        %v5024 = vrot.slane %v5022, 4
        %v5025 = vshll.u32 %v4826, 16
        %v5027 = vrot.slane %v5025, 5
        %v5028 = vor.u32 %v5024, %v5027
        %v5029 = vrot.slane %v5028, 4
        %v5031 = vshll.u32 %v4827, 16
        %v5033 = vrot.slane %v5031, 5
        %v5034 = vsel %vm1516, %v5029, %v5033
        %v5035 = vshrl.u32 %v4827, 16
        %v5037 = vrot.slane %v5035, 4
        %v5038 = vor.u32 %v5037, %v5033
        %v5039 = vrot.slane %v5038, 4
        %v5041 = vshll.u32 %v4828, 16
        %v5043 = vrot.slane %v5041, 5
        %v5044 = vsel %vm1516, %v5039, %v5043
        %v5046 = vshrl.u32 %v4829, 16
        %v5048 = vrot.slane %v5046, 4
        %v5049 = vshll.u32 %v4829, 16
        %v5051 = vrot.slane %v5049, 5
        %v5052 = vor.u32 %v5048, %v5051
        %v5053 = vrot.slane %v5052, 4
        %v5055 = vshll.u32 %v4830, 16
        %v5057 = vrot.slane %v5055, 5
        %v5058 = vsel %vm1516, %v5053, %v5057
        %v5059 = vshrl.u32 %v4830, 16
        %v5061 = vrot.slane %v5059, 4
        %v5062 = vor.u32 %v5061, %v5057
        %v5063 = vrot.slane %v5062, 4
        %v5065 = vshll.u32 %v4831, 16
        %v5067 = vrot.slane %v5065, 5
        %v5068 = vsel %vm1516, %v5063, %v5067
        %v5070 = vshrl.u32 %v4832, 16
        %v5072 = vrot.slane %v5070, 4
        %v5073 = vshll.u32 %v4832, 16
        %v5075 = vrot.slane %v5073, 5
        %v5076 = vor.u32 %v5072, %v5075
        %v5077 = vrot.slane %v5076, 4
        %v5079 = vshll.u32 %v4833, 16
        %v5081 = vrot.slane %v5079, 5
        %v5082 = vsel %vm1516, %v5077, %v5081
        %v5083 = vshrl.u32 %v4833, 16
        %v5085 = vrot.slane %v5083, 4
        %v5086 = vor.u32 %v5085, %v5081
        %v5087 = vrot.slane %v5086, 4
        %v5089 = vshll.u32 %v4834, 16
        %v5091 = vrot.slane %v5089, 5
        %v5092 = vsel %vm1516, %v5087, %v5091
        %v5094 = vshrl.u32 %v4835, 16
        %v5096 = vrot.slane %v5094, 4
        %v5097 = vshll.u32 %v4835, 16
        %v5099 = vrot.slane %v5097, 5
        %v5100 = vor.u32 %v5096, %v5099
        %v5101 = vrot.slane %v5100, 4
        %v5103 = vshll.u32 %v4836, 16
        %v5105 = vrot.slane %v5103, 5
        %v5106 = vsel %vm1516, %v5101, %v5105
        %v5107 = vshrl.u32 %v4836, 16
        %v5109 = vrot.slane %v5107, 4
        %v5110 = vor.u32 %v5109, %v5105
        %v5111 = vrot.slane %v5110, 4
        %v5113 = vshll.u32 %v4837, 16
        %v5115 = vrot.slane %v5113, 5
        %v5116 = vsel %vm1516, %v5111, %v5115
        %v5118 = vshrl.u32 %v4838, 16
        %v5120 = vrot.slane %v5118, 4
        %v5121 = vshll.u32 %v4838, 16
        %v5123 = vrot.slane %v5121, 5
        %v5124 = vor.u32 %v5120, %v5123
        %v5125 = vrot.slane %v5124, 4
        %v5127 = vshll.u32 %v4839, 16
        %v5129 = vrot.slane %v5127, 5
        %v5130 = vsel %vm1516, %v5125, %v5129
        %v5131 = vshrl.u32 %v4839, 16
        %v5133 = vrot.slane %v5131, 4
        %v5134 = vor.u32 %v5133, %v5129
        %v5135 = vrot.slane %v5134, 4
        %v5137 = vshll.u32 %v4840, 16
        %v5139 = vrot.slane %v5137, 5
        %v5140 = vsel %vm1516, %v5135, %v5139
        %v5142 = vshrl.u32 %v4841, 16
        %v5144 = vrot.slane %v5142, 4
        %v5145 = vshll.u32 %v4841, 16
        %v5147 = vrot.slane %v5145, 5
        %v5148 = vor.u32 %v5144, %v5147
        %v5149 = vrot.slane %v5148, 4
        %v5151 = vshll.u32 %v4842, 16
        %v5153 = vrot.slane %v5151, 5
        %v5154 = vsel %vm1516, %v5149, %v5153
        %v5155 = vshrl.u32 %v4842, 16
        %v5157 = vrot.slane %v5155, 4
        %v5158 = vor.u32 %v5157, %v5153
        %v5159 = vrot.slane %v5158, 4
        %v5161 = vshll.u32 %v4843, 16
        %v5163 = vrot.slane %v5161, 5
        %v5164 = vsel %vm1516, %v5159, %v5163
        %v5166 = vshrl.u32 %v4844, 16
        %v5168 = vrot.slane %v5166, 4
        %v5169 = vshll.u32 %v4844, 16
        %v5171 = vrot.slane %v5169, 5
        %v5172 = vor.u32 %v5168, %v5171
        %v5173 = vrot.slane %v5172, 4
        %v5175 = vshll.u32 %v4845, 16
        %v5177 = vrot.slane %v5175, 5
        %v5178 = vsel %vm1516, %v5173, %v5177
        %v5179 = vshrl.u32 %v4845, 16
        %v5181 = vrot.slane %v5179, 4
        %v5182 = vor.u32 %v5181, %v5177
        %v5183 = vrot.slane %v5182, 4
        %v5185 = vshll.u32 %v4846, 16
        %v5187 = vrot.slane %v5185, 5
        %v5188 = vsel %vm1516, %v5183, %v5187
        %v5190 = vshrl.u32 %v4847, 16
        %v5192 = vrot.slane %v5190, 4
        %v5193 = vshll.u32 %v4847, 16
        %v5195 = vrot.slane %v5193, 5
        %v5196 = vor.u32 %v5192, %v5195
        %v5197 = vrot.slane %v5196, 4
        %v5199 = vshll.u32 %v4848, 16
        %v5201 = vrot.slane %v5199, 5
        %v5202 = vsel %vm1516, %v5197, %v5201
        %v5203 = vshrl.u32 %v4848, 16
        %v5205 = vrot.slane %v5203, 4
        %v5206 = vor.u32 %v5205, %v5201
        %v5207 = vrot.slane %v5206, 4
        %v5209 = vshll.u32 %v4849, 16
        %v5211 = vrot.slane %v5209, 5
        %v5212 = vsel %vm1516, %v5207, %v5211
        %v5214 = vshrl.u32 %v4850, 16
        %v5216 = vrot.slane %v5214, 4
        %v5217 = vshll.u32 %v4850, 16
        %v5219 = vrot.slane %v5217, 5
        %v5220 = vor.u32 %v5216, %v5219
        %v5221 = vrot.slane %v5220, 4
        %v5223 = vshll.u32 %v4851, 16
        %v5225 = vrot.slane %v5223, 5
        %v5226 = vsel %vm1516, %v5221, %v5225
        %v5227 = vshrl.u32 %v4851, 16
        %v5229 = vrot.slane %v5227, 4
        %v5230 = vor.u32 %v5229, %v5225
        %v5231 = vrot.slane %v5230, 4
        %v5233 = vshll.u32 %v4852, 16
        %v5235 = vrot.slane %v5233, 5
        %v5236 = vsel %vm1516, %v5231, %v5235
        %5269 = vst [vmem:[#allocation3 + $0x4] sm:$0xf] %v4866
        %5270 = vst [vmem:[#allocation3 + $0x10] sm:$0xf] %v4876
        %5271 = vst [vmem:[#allocation3 + $0x1c] sm:$0xf] %v4890
        %5272 = vst [vmem:[#allocation3 + $0x28] sm:$0xf] %v4900
        %5273 = vst [vmem:[#allocation3 + $0x34] sm:$0xf] %v4914
        %5274 = vst [vmem:[#allocation3 + $0x40] sm:$0xf] %v4924
        %5275 = vst [vmem:[#allocation3 + $0x4c] sm:$0xf] %v4938
        %5276 = vst [vmem:[#allocation3 + $0x58] sm:$0xf] %v4948
        %5277 = vst [vmem:[#allocation3 + $0x64] sm:$0xf] %v4962
        %5278 = vst [vmem:[#allocation3 + $0x70] sm:$0xf] %v4972
        %5279 = vst [vmem:[#allocation3 + $0x7c] sm:$0xf] %v4986
        %5280 = vst [vmem:[#allocation3 + $0x88] sm:$0xf] %v4996
        %5281 = vst [vmem:[#allocation3 + $0x94] sm:$0xf] %v5010
        %5282 = vst [vmem:[#allocation3 + $0xa0] sm:$0xf] %v5020
        %5283 = vst [vmem:[#allocation3 + $0xac] sm:$0xf] %v5034
        %5284 = vst [vmem:[#allocation3 + $0xb8] sm:$0xf] %v5044
        %5285 = vst [vmem:[#allocation3 + $0xc4] sm:$0xf] %v5058
        %5286 = vst [vmem:[#allocation3 + $0xd0] sm:$0xf] %v5068
        %5287 = vst [vmem:[#allocation3 + $0xdc] sm:$0xf] %v5082
        %5288 = vst [vmem:[#allocation3 + $0xe8] sm:$0xf] %v5092
        %5289 = vst [vmem:[#allocation3 + $0xf4] sm:$0xf] %v5106
        %5290 = vst [vmem:[#allocation3 + $0x100] sm:$0xf] %v5116
        %5291 = vst [vmem:[#allocation3 + $0x10c] sm:$0xf] %v5130
        %5292 = vst [vmem:[#allocation3 + $0x118] sm:$0xf] %v5140
        %5293 = vst [vmem:[#allocation3 + $0x124] sm:$0xf] %v5154
        %5294 = vst [vmem:[#allocation3 + $0x130] sm:$0xf] %v5164
        %5295 = vst [vmem:[#allocation3 + $0x13c] sm:$0xf] %v5178
        %5296 = vst [vmem:[#allocation3 + $0x148] sm:$0xf] %v5188
        %5297 = vst [vmem:[#allocation3 + $0x154] sm:$0xf] %v5202
        %5298 = vst [vmem:[#allocation3 + $0x160] sm:$0xf] %v5212
        %5299 = vst [vmem:[#allocation3 + $0x16c] sm:$0xf] %v5226
        %5300 = vst [vmem:[#allocation3 + $0x178] sm:$0xf] %v5236
        %v5301 = vld [vmem:[%s4740] sm:$0xe]
        %v5302 = vld [vmem:[%s4740 + $0x4] sm:$0xf]
        %v5303 = vld [vmem:[%s4740 + $0x8] sm:$0x1]
        %v5304 = vld [vmem:[%s4740 + $0xc] sm:$0xe]
        %v5305 = vld [vmem:[%s4740 + $0x10] sm:$0xf]
        %v5306 = vld [vmem:[%s4740 + $0x14] sm:$0x1]
        %v5307 = vld [vmem:[%s4740 + $0x18] sm:$0xe]
        %v5308 = vld [vmem:[%s4740 + $0x1c] sm:$0xf]
        %v5309 = vld [vmem:[%s4740 + $0x20] sm:$0x1]
        %v5310 = vld [vmem:[%s4740 + $0x24] sm:$0xe]
        %v5311 = vld [vmem:[%s4740 + $0x28] sm:$0xf]
        %v5312 = vld [vmem:[%s4740 + $0x2c] sm:$0x1]
        %v5313 = vld [vmem:[%s4740 + $0x30] sm:$0xe]
        %v5314 = vld [vmem:[%s4740 + $0x34] sm:$0xf]
        %v5315 = vld [vmem:[%s4740 + $0x38] sm:$0x1]
        %v5316 = vld [vmem:[%s4740 + $0x3c] sm:$0xe]
        %v5317 = vld [vmem:[%s4740 + $0x40] sm:$0xf]
        %v5318 = vld [vmem:[%s4740 + $0x44] sm:$0x1]
        %v5319 = vld [vmem:[%s4740 + $0x48] sm:$0xe]
        %v5320 = vld [vmem:[%s4740 + $0x4c] sm:$0xf]
        %v5321 = vld [vmem:[%s4740 + $0x50] sm:$0x1]
        %v5322 = vld [vmem:[%s4740 + $0x54] sm:$0xe]
        %v5323 = vld [vmem:[%s4740 + $0x58] sm:$0xf]
        %v5324 = vld [vmem:[%s4740 + $0x5c] sm:$0x1]
        %v5325 = vld [vmem:[%s4740 + $0x60] sm:$0xe]
        %v5326 = vld [vmem:[%s4740 + $0x64] sm:$0xf]
        %v5327 = vld [vmem:[%s4740 + $0x68] sm:$0x1]
        %v5328 = vld [vmem:[%s4740 + $0x6c] sm:$0xe]
        %v5329 = vld [vmem:[%s4740 + $0x70] sm:$0xf]
        %v5330 = vld [vmem:[%s4740 + $0x74] sm:$0x1]
        %v5331 = vld [vmem:[%s4740 + $0x78] sm:$0xe]
        %v5332 = vld [vmem:[%s4740 + $0x7c] sm:$0xf]
        %v5333 = vld [vmem:[%s4740 + $0x80] sm:$0x1]
        %v5334 = vld [vmem:[%s4740 + $0x84] sm:$0xe]
        %v5335 = vld [vmem:[%s4740 + $0x88] sm:$0xf]
        %v5336 = vld [vmem:[%s4740 + $0x8c] sm:$0x1]
        %v5337 = vld [vmem:[%s4740 + $0x90] sm:$0xe]
        %v5338 = vld [vmem:[%s4740 + $0x94] sm:$0xf]
        %v5339 = vld [vmem:[%s4740 + $0x98] sm:$0x1]
        %v5340 = vld [vmem:[%s4740 + $0x9c] sm:$0xe]
        %v5341 = vld [vmem:[%s4740 + $0xa0] sm:$0xf]
        %v5342 = vld [vmem:[%s4740 + $0xa4] sm:$0x1]
        %v5343 = vld [vmem:[%s4740 + $0xa8] sm:$0xe]
        %v5344 = vld [vmem:[%s4740 + $0xac] sm:$0xf]
        %v5345 = vld [vmem:[%s4740 + $0xb0] sm:$0x1]
        %v5346 = vld [vmem:[%s4740 + $0xb4] sm:$0xe]
        %v5347 = vld [vmem:[%s4740 + $0xb8] sm:$0xf]
        %v5348 = vld [vmem:[%s4740 + $0xbc] sm:$0x1]
        %v5397 = vrot.slane %v5301, 5
        %v5398 = vrot.slane %v5397, 4
        %v5399 = vrot.slane %v5302, 5
        %v5400 = vsel %vm2063, %v5398, %v5399
        %v5401 = vrot.slane %v5399, 4
        %v5402 = vrot.slane %v5303, 5
        %v5403 = vsel %vm2063, %v5401, %v5402
        %v5404 = vrot.slane %v5304, 5
        %v5405 = vrot.slane %v5404, 4
        %v5406 = vrot.slane %v5305, 5
        %v5407 = vsel %vm2063, %v5405, %v5406
        %v5408 = vrot.slane %v5406, 4
        %v5409 = vrot.slane %v5306, 5
        %v5410 = vsel %vm2063, %v5408, %v5409
        %v5411 = vrot.slane %v5307, 5
        %v5412 = vrot.slane %v5411, 4
        %v5413 = vrot.slane %v5308, 5
        %v5414 = vsel %vm2063, %v5412, %v5413
        %v5415 = vrot.slane %v5413, 4
        %v5416 = vrot.slane %v5309, 5
        %v5417 = vsel %vm2063, %v5415, %v5416
        %v5418 = vrot.slane %v5310, 5
        %v5419 = vrot.slane %v5418, 4
        %v5420 = vrot.slane %v5311, 5
        %v5421 = vsel %vm2063, %v5419, %v5420
        %v5422 = vrot.slane %v5420, 4
        %v5423 = vrot.slane %v5312, 5
        %v5424 = vsel %vm2063, %v5422, %v5423
        %v5425 = vrot.slane %v5313, 5
        %v5426 = vrot.slane %v5425, 4
        %v5427 = vrot.slane %v5314, 5
        %v5428 = vsel %vm2063, %v5426, %v5427
        %v5429 = vrot.slane %v5427, 4
        %v5430 = vrot.slane %v5315, 5
        %v5431 = vsel %vm2063, %v5429, %v5430
        %v5432 = vrot.slane %v5316, 5
        %v5433 = vrot.slane %v5432, 4
        %v5434 = vrot.slane %v5317, 5
        %v5435 = vsel %vm2063, %v5433, %v5434
        %v5436 = vrot.slane %v5434, 4
        %v5437 = vrot.slane %v5318, 5
        %v5438 = vsel %vm2063, %v5436, %v5437
        %v5439 = vrot.slane %v5319, 5
        %v5440 = vrot.slane %v5439, 4
        %v5441 = vrot.slane %v5320, 5
        %v5442 = vsel %vm2063, %v5440, %v5441
        %v5443 = vrot.slane %v5441, 4
        %v5444 = vrot.slane %v5321, 5
        %v5445 = vsel %vm2063, %v5443, %v5444
        %v5446 = vrot.slane %v5322, 5
        %v5447 = vrot.slane %v5446, 4
        %v5448 = vrot.slane %v5323, 5
        %v5449 = vsel %vm2063, %v5447, %v5448
        %v5450 = vrot.slane %v5448, 4
        %v5451 = vrot.slane %v5324, 5
        %v5452 = vsel %vm2063, %v5450, %v5451
        %v5453 = vrot.slane %v5325, 5
        %v5454 = vrot.slane %v5453, 4
        %v5455 = vrot.slane %v5326, 5
        %v5456 = vsel %vm2063, %v5454, %v5455
        %v5457 = vrot.slane %v5455, 4
        %v5458 = vrot.slane %v5327, 5
        %v5459 = vsel %vm2063, %v5457, %v5458
        %v5460 = vrot.slane %v5328, 5
        %v5461 = vrot.slane %v5460, 4
        %v5462 = vrot.slane %v5329, 5
        %v5463 = vsel %vm2063, %v5461, %v5462
        %v5464 = vrot.slane %v5462, 4
        %v5465 = vrot.slane %v5330, 5
        %v5466 = vsel %vm2063, %v5464, %v5465
        %v5467 = vrot.slane %v5331, 5
        %v5468 = vrot.slane %v5467, 4
        %v5469 = vrot.slane %v5332, 5
        %v5470 = vsel %vm2063, %v5468, %v5469
        %v5471 = vrot.slane %v5469, 4
        %v5472 = vrot.slane %v5333, 5
        %v5473 = vsel %vm2063, %v5471, %v5472
        %v5474 = vrot.slane %v5334, 5
        %v5475 = vrot.slane %v5474, 4
        %v5476 = vrot.slane %v5335, 5
        %v5477 = vsel %vm2063, %v5475, %v5476
        %v5478 = vrot.slane %v5476, 4
        %v5479 = vrot.slane %v5336, 5
        %v5480 = vsel %vm2063, %v5478, %v5479
        %v5481 = vrot.slane %v5337, 5
        %v5482 = vrot.slane %v5481, 4
        %v5483 = vrot.slane %v5338, 5
        %v5484 = vsel %vm2063, %v5482, %v5483
        %v5485 = vrot.slane %v5483, 4
        %v5486 = vrot.slane %v5339, 5
        %v5487 = vsel %vm2063, %v5485, %v5486
        %v5488 = vrot.slane %v5340, 5
        %v5489 = vrot.slane %v5488, 4
        %v5490 = vrot.slane %v5341, 5
        %v5491 = vsel %vm2063, %v5489, %v5490
        %v5492 = vrot.slane %v5490, 4
        %v5493 = vrot.slane %v5342, 5
        %v5494 = vsel %vm2063, %v5492, %v5493
        %v5495 = vrot.slane %v5343, 5
        %v5496 = vrot.slane %v5495, 4
        %v5497 = vrot.slane %v5344, 5
        %v5498 = vsel %vm2063, %v5496, %v5497
        %v5499 = vrot.slane %v5497, 4
        %v5500 = vrot.slane %v5345, 5
        %v5501 = vsel %vm2063, %v5499, %v5500
        %v5502 = vrot.slane %v5346, 5
        %v5503 = vrot.slane %v5502, 4
        %v5504 = vrot.slane %v5347, 5
        %v5505 = vsel %vm2063, %v5503, %v5504
        %v5506 = vrot.slane %v5504, 4
        %v5507 = vrot.slane %v5348, 5
        %v5508 = vsel %vm2063, %v5506, %v5507
        %5541 = vst [vmem:[#allocation3 + $0x8] sm:$0xf] %v5400
        %5542 = vst [vmem:[#allocation3 + $0x14] sm:$0xf] %v5403
        %5543 = vst [vmem:[#allocation3 + $0x20] sm:$0xf] %v5407
        %5544 = vst [vmem:[#allocation3 + $0x2c] sm:$0xf] %v5410
        %5545 = vst [vmem:[#allocation3 + $0x38] sm:$0xf] %v5414
        %5546 = vst [vmem:[#allocation3 + $0x44] sm:$0xf] %v5417
        %5547 = vst [vmem:[#allocation3 + $0x50] sm:$0xf] %v5421
        %5548 = vst [vmem:[#allocation3 + $0x5c] sm:$0xf] %v5424
        %5549 = vst [vmem:[#allocation3 + $0x68] sm:$0xf] %v5428
        %5550 = vst [vmem:[#allocation3 + $0x74] sm:$0xf] %v5431
        %5551 = vst [vmem:[#allocation3 + $0x80] sm:$0xf] %v5435
        %5552 = vst [vmem:[#allocation3 + $0x8c] sm:$0xf] %v5438
        %5553 = vst [vmem:[#allocation3 + $0x98] sm:$0xf] %v5442
        %5554 = vst [vmem:[#allocation3 + $0xa4] sm:$0xf] %v5445
        %5555 = vst [vmem:[#allocation3 + $0xb0] sm:$0xf] %v5449
        %5556 = vst [vmem:[#allocation3 + $0xbc] sm:$0xf] %v5452
        %5557 = vst [vmem:[#allocation3 + $0xc8] sm:$0xf] %v5456
        %5558 = vst [vmem:[#allocation3 + $0xd4] sm:$0xf] %v5459
        %5559 = vst [vmem:[#allocation3 + $0xe0] sm:$0xf] %v5463
        %5560 = vst [vmem:[#allocation3 + $0xec] sm:$0xf] %v5466
        %5561 = vst [vmem:[#allocation3 + $0xf8] sm:$0xf] %v5470
        %5562 = vst [vmem:[#allocation3 + $0x104] sm:$0xf] %v5473
        %5563 = vst [vmem:[#allocation3 + $0x110] sm:$0xf] %v5477
        %5564 = vst [vmem:[#allocation3 + $0x11c] sm:$0xf] %v5480
        %5565 = vst [vmem:[#allocation3 + $0x128] sm:$0xf] %v5484
        %5566 = vst [vmem:[#allocation3 + $0x134] sm:$0xf] %v5487
        %5567 = vst [vmem:[#allocation3 + $0x140] sm:$0xf] %v5491
        %5568 = vst [vmem:[#allocation3 + $0x14c] sm:$0xf] %v5494
        %5569 = vst [vmem:[#allocation3 + $0x158] sm:$0xf] %v5498
        %5570 = vst [vmem:[#allocation3 + $0x164] sm:$0xf] %v5501
        %5571 = vst [vmem:[#allocation3 + $0x170] sm:$0xf] %v5505
        %5572 = vst [vmem:[#allocation3 + $0x17c] sm:$0xf] %v5508
        %v5573 = vld [vmem:[#allocation3] sm:$0xff]
        %v5574 = vld [vmem:[#allocation3 + $0x8] sm:$0xf]
        %v5575 = vld [vmem:[#allocation3 + $0xc] sm:$0xff]
        %v5576 = vld [vmem:[#allocation3 + $0x14] sm:$0xf]
        %v5577 = vld [vmem:[#allocation3 + $0x18] sm:$0xff]
        %v5578 = vld [vmem:[#allocation3 + $0x20] sm:$0xf]
        %v5579 = vld [vmem:[#allocation3 + $0x24] sm:$0xff]
        %v5580 = vld [vmem:[#allocation3 + $0x2c] sm:$0xf]
        %v5581 = vld [vmem:[#allocation3 + $0x30] sm:$0xff]
        %v5582 = vld [vmem:[#allocation3 + $0x38] sm:$0xf]
        %v5583 = vld [vmem:[#allocation3 + $0x3c] sm:$0xff]
        %v5584 = vld [vmem:[#allocation3 + $0x44] sm:$0xf]
        %v5585 = vld [vmem:[#allocation3 + $0x48] sm:$0xff]
        %v5586 = vld [vmem:[#allocation3 + $0x50] sm:$0xf]
        %v5587 = vld [vmem:[#allocation3 + $0x54] sm:$0xff]
        %v5588 = vld [vmem:[#allocation3 + $0x5c] sm:$0xf]
        %v5589 = vld [vmem:[#allocation3 + $0x60] sm:$0xff]
        %v5590 = vld [vmem:[#allocation3 + $0x68] sm:$0xf]
        %v5591 = vld [vmem:[#allocation3 + $0x6c] sm:$0xff]
        %v5592 = vld [vmem:[#allocation3 + $0x74] sm:$0xf]
        %v5593 = vld [vmem:[#allocation3 + $0x78] sm:$0xff]
        %v5594 = vld [vmem:[#allocation3 + $0x80] sm:$0xf]
        %v5595 = vld [vmem:[#allocation3 + $0x84] sm:$0xff]
        %v5596 = vld [vmem:[#allocation3 + $0x8c] sm:$0xf]
        %v5597 = vld [vmem:[#allocation3 + $0x90] sm:$0xff]
        %v5598 = vld [vmem:[#allocation3 + $0x98] sm:$0xf]
        %v5599 = vld [vmem:[#allocation3 + $0x9c] sm:$0xff]
        %v5600 = vld [vmem:[#allocation3 + $0xa4] sm:$0xf]
        %v5601 = vld [vmem:[#allocation3 + $0xa8] sm:$0xff]
        %v5602 = vld [vmem:[#allocation3 + $0xb0] sm:$0xf]
        %v5603 = vld [vmem:[#allocation3 + $0xb4] sm:$0xff]
        %v5604 = vld [vmem:[#allocation3 + $0xbc] sm:$0xf]
        %v5605 = vld [vmem:[#allocation3 + $0xc0] sm:$0xff]
        %v5606 = vld [vmem:[#allocation3 + $0xc8] sm:$0xf]
        %v5607 = vld [vmem:[#allocation3 + $0xcc] sm:$0xff]
        %v5608 = vld [vmem:[#allocation3 + $0xd4] sm:$0xf]
        %v5609 = vld [vmem:[#allocation3 + $0xd8] sm:$0xff]
        %v5610 = vld [vmem:[#allocation3 + $0xe0] sm:$0xf]
        %v5611 = vld [vmem:[#allocation3 + $0xe4] sm:$0xff]
        %v5612 = vld [vmem:[#allocation3 + $0xec] sm:$0xf]
        %v5613 = vld [vmem:[#allocation3 + $0xf0] sm:$0xff]
        %v5614 = vld [vmem:[#allocation3 + $0xf8] sm:$0xf]
        %v5615 = vld [vmem:[#allocation3 + $0xfc] sm:$0xff]
        %v5616 = vld [vmem:[#allocation3 + $0x104] sm:$0xf]
        %v5617 = vld [vmem:[#allocation3 + $0x108] sm:$0xff]
        %v5618 = vld [vmem:[#allocation3 + $0x110] sm:$0xf]
        %v5619 = vld [vmem:[#allocation3 + $0x114] sm:$0xff]
        %v5620 = vld [vmem:[#allocation3 + $0x11c] sm:$0xf]
        %v5621 = vld [vmem:[#allocation3 + $0x120] sm:$0xff]
        %v5622 = vld [vmem:[#allocation3 + $0x128] sm:$0xf]
        %v5623 = vld [vmem:[#allocation3 + $0x12c] sm:$0xff]
        %v5624 = vld [vmem:[#allocation3 + $0x134] sm:$0xf]
        %v5625 = vld [vmem:[#allocation3 + $0x138] sm:$0xff]
        %v5626 = vld [vmem:[#allocation3 + $0x140] sm:$0xf]
        %v5627 = vld [vmem:[#allocation3 + $0x144] sm:$0xff]
        %v5628 = vld [vmem:[#allocation3 + $0x14c] sm:$0xf]
        %v5629 = vld [vmem:[#allocation3 + $0x150] sm:$0xff]
        %v5630 = vld [vmem:[#allocation3 + $0x158] sm:$0xf]
        %v5631 = vld [vmem:[#allocation3 + $0x15c] sm:$0xff]
        %v5632 = vld [vmem:[#allocation3 + $0x164] sm:$0xf]
        %v5633 = vld [vmem:[#allocation3 + $0x168] sm:$0xff]
        %v5634 = vld [vmem:[#allocation3 + $0x170] sm:$0xf]
        %v5635 = vld [vmem:[#allocation3 + $0x174] sm:$0xff]
        %v5636 = vld [vmem:[#allocation3 + $0x17c] sm:$0xf]
        %v5637 = vld [vmem:[#allocation9 + $0x180] sm:$0xf]
        %v5638 = vld [vmem:[#allocation9 + $0x184] sm:$0xf]
        %v5639 = vld [vmem:[#allocation9 + $0x188] sm:$0xf]
        %v5640 = vld [vmem:[#allocation9 + $0x18c] sm:$0xf]
        %v5641 = vld [vmem:[#allocation9 + $0x190] sm:$0xf]
        %v5642 = vld [vmem:[#allocation9 + $0x194] sm:$0xf]
        %v5643 = vld [vmem:[#allocation9 + $0x198] sm:$0xf]
        %v5644 = vld [vmem:[#allocation9 + $0x19c] sm:$0xf]
        %v5645 = vld [vmem:[#allocation9 + $0x1a0] sm:$0xf]
        %v5646 = vld [vmem:[#allocation9 + $0x1a4] sm:$0xf]
        %v5647 = vld [vmem:[#allocation9 + $0x1a8] sm:$0xf]
        %v5648 = vld [vmem:[#allocation9 + $0x1ac] sm:$0xf]
        %v5649 = vld [vmem:[#allocation9 + $0x1b0] sm:$0xf]
        %v5650 = vld [vmem:[#allocation9 + $0x1b4] sm:$0xf]
        %v5651 = vld [vmem:[#allocation9 + $0x1b8] sm:$0xf]
        %v5652 = vld [vmem:[#allocation9 + $0x1bc] sm:$0xf]
        %v5653 = vld [vmem:[#allocation9 + $0x1c0] sm:$0xf]
        %v5654 = vld [vmem:[#allocation9 + $0x1c4] sm:$0xf]
        %v5655 = vld [vmem:[#allocation9 + $0x1c8] sm:$0xf]
        %v5656 = vld [vmem:[#allocation9 + $0x1cc] sm:$0xf]
        %v5657 = vld [vmem:[#allocation9 + $0x1d0] sm:$0xf]
        %v5658 = vld [vmem:[#allocation9 + $0x1d4] sm:$0xf]
        %v5659 = vld [vmem:[#allocation9 + $0x1d8] sm:$0xf]
        %v5660 = vld [vmem:[#allocation9 + $0x1dc] sm:$0xf]
        %v5661 = vld [vmem:[#allocation9 + $0x1e0] sm:$0xf]
        %v5662 = vld [vmem:[#allocation9 + $0x1e4] sm:$0xf]
        %v5663 = vld [vmem:[#allocation9 + $0x1e8] sm:$0xf]
        %v5664 = vld [vmem:[#allocation9 + $0x1ec] sm:$0xf]
        %v5665 = vld [vmem:[#allocation9 + $0x1f0] sm:$0xf]
        %v5666 = vld [vmem:[#allocation9 + $0x1f4] sm:$0xf]
        %v5667 = vld [vmem:[#allocation9 + $0x1f8] sm:$0xf]
        %v5668 = vld [vmem:[#allocation9 + $0x1fc] sm:$0xf]
        %v5669 = vld [vmem:[#allocation9 + $0x200] sm:$0xf]
        %v5670 = vld [vmem:[#allocation9 + $0x204] sm:$0xf]
        %v5671 = vld [vmem:[#allocation9 + $0x208] sm:$0xf]
        %v5672 = vld [vmem:[#allocation9 + $0x20c] sm:$0xf]
        %v5673 = vld [vmem:[#allocation9 + $0x210] sm:$0xf]
        %v5674 = vld [vmem:[#allocation9 + $0x214] sm:$0xf]
        %v5675 = vld [vmem:[#allocation9 + $0x218] sm:$0xf]
        %v5676 = vld [vmem:[#allocation9 + $0x21c] sm:$0xf]
        %v5677 = vld [vmem:[#allocation9 + $0x220] sm:$0xf]
        %v5678 = vld [vmem:[#allocation9 + $0x224] sm:$0xf]
        %v5679 = vld [vmem:[#allocation9 + $0x228] sm:$0xf]
        %v5680 = vld [vmem:[#allocation9 + $0x22c] sm:$0xf]
        %v5681 = vld [vmem:[#allocation9 + $0x230] sm:$0xf]
        %v5682 = vld [vmem:[#allocation9 + $0x234] sm:$0xf]
        %v5683 = vld [vmem:[#allocation9 + $0x238] sm:$0xf]
        %v5684 = vld [vmem:[#allocation9 + $0x23c] sm:$0xf]
        %v5749 = vunpack.c.l.b16 %v5573
        %v5750 = vunpack.c.h.b16 %v5573
        %v5751 = vunpack.c.l.b16 %v5574
        %v5752 = vunpack.c.l.b16 %v5575
        %v5753 = vunpack.c.h.b16 %v5575
        %v5754 = vunpack.c.l.b16 %v5576
        %v5755 = vunpack.c.l.b16 %v5577
        %v5756 = vunpack.c.h.b16 %v5577
        %v5757 = vunpack.c.l.b16 %v5578
        %v5758 = vunpack.c.l.b16 %v5579
        %v5759 = vunpack.c.h.b16 %v5579
        %v5760 = vunpack.c.l.b16 %v5580
        %v5761 = vunpack.c.l.b16 %v5581
        %v5762 = vunpack.c.h.b16 %v5581
        %v5763 = vunpack.c.l.b16 %v5582
        %v5764 = vunpack.c.l.b16 %v5583
        %v5765 = vunpack.c.h.b16 %v5583
        %v5766 = vunpack.c.l.b16 %v5584
        %v5767 = vunpack.c.l.b16 %v5585
        %v5768 = vunpack.c.h.b16 %v5585
        %v5769 = vunpack.c.l.b16 %v5586
        %v5770 = vunpack.c.l.b16 %v5587
        %v5771 = vunpack.c.h.b16 %v5587
        %v5772 = vunpack.c.l.b16 %v5588
        %v5773 = vunpack.c.l.b16 %v5589
        %v5774 = vunpack.c.h.b16 %v5589
        %v5775 = vunpack.c.l.b16 %v5590
        %v5776 = vunpack.c.l.b16 %v5591
        %v5777 = vunpack.c.h.b16 %v5591
        %v5778 = vunpack.c.l.b16 %v5592
        %v5779 = vunpack.c.l.b16 %v5593
        %v5780 = vunpack.c.h.b16 %v5593
        %v5781 = vunpack.c.l.b16 %v5594
        %v5782 = vunpack.c.l.b16 %v5595
        %v5783 = vunpack.c.h.b16 %v5595
        %v5784 = vunpack.c.l.b16 %v5596
        %v5785 = vunpack.c.l.b16 %v5597
        %v5786 = vunpack.c.h.b16 %v5597
        %v5787 = vunpack.c.l.b16 %v5598
        %v5788 = vunpack.c.l.b16 %v5599
        %v5789 = vunpack.c.h.b16 %v5599
        %v5790 = vunpack.c.l.b16 %v5600
        %v5791 = vunpack.c.l.b16 %v5601
        %v5792 = vunpack.c.h.b16 %v5601
        %v5793 = vunpack.c.l.b16 %v5602
        %v5794 = vunpack.c.l.b16 %v5603
        %v5795 = vunpack.c.h.b16 %v5603
        %v5796 = vunpack.c.l.b16 %v5604
        %v5797 = vunpack.c.l.b16 %v5605
        %v5798 = vunpack.c.h.b16 %v5605
        %v5799 = vunpack.c.l.b16 %v5606
        %v5800 = vunpack.c.l.b16 %v5607
        %v5801 = vunpack.c.h.b16 %v5607
        %v5802 = vunpack.c.l.b16 %v5608
        %v5803 = vunpack.c.l.b16 %v5609
        %v5804 = vunpack.c.h.b16 %v5609
        %v5805 = vunpack.c.l.b16 %v5610
        %v5806 = vunpack.c.l.b16 %v5611
        %v5807 = vunpack.c.h.b16 %v5611
        %v5808 = vunpack.c.l.b16 %v5612
        %v5809 = vunpack.c.l.b16 %v5613
        %v5810 = vunpack.c.h.b16 %v5613
        %v5811 = vunpack.c.l.b16 %v5614
        %v5812 = vunpack.c.l.b16 %v5615
        %v5813 = vunpack.c.h.b16 %v5615
        %v5814 = vunpack.c.l.b16 %v5616
        %v5815 = vunpack.c.l.b16 %v5617
        %v5816 = vunpack.c.h.b16 %v5617
        %v5817 = vunpack.c.l.b16 %v5618
        %v5818 = vunpack.c.l.b16 %v5619
        %v5819 = vunpack.c.h.b16 %v5619
        %v5820 = vunpack.c.l.b16 %v5620
        %v5821 = vunpack.c.l.b16 %v5621
        %v5822 = vunpack.c.h.b16 %v5621
        %v5823 = vunpack.c.l.b16 %v5622
        %v5824 = vunpack.c.l.b16 %v5623
        %v5825 = vunpack.c.h.b16 %v5623
        %v5826 = vunpack.c.l.b16 %v5624
        %v5827 = vunpack.c.l.b16 %v5625
        %v5828 = vunpack.c.h.b16 %v5625
        %v5829 = vunpack.c.l.b16 %v5626
        %v5830 = vunpack.c.l.b16 %v5627
        %v5831 = vunpack.c.h.b16 %v5627
        %v5832 = vunpack.c.l.b16 %v5628
        %v5833 = vunpack.c.l.b16 %v5629
        %v5834 = vunpack.c.h.b16 %v5629
        %v5835 = vunpack.c.l.b16 %v5630
        %v5836 = vunpack.c.l.b16 %v5631
        %v5837 = vunpack.c.h.b16 %v5631
        %v5838 = vunpack.c.l.b16 %v5632
        %v5839 = vunpack.c.l.b16 %v5633
        %v5840 = vunpack.c.h.b16 %v5633
        %v5841 = vunpack.c.l.b16 %v5634
        %v5842 = vunpack.c.l.b16 %v5635
        %v5843 = vunpack.c.h.b16 %v5635
        %v5844 = vunpack.c.l.b16 %v5636
        %v5845 = vpack.c.b16 %v5752, %v5749
        %v5846 = vpack.c.b16 %v5753, %v5750
        %v5847 = vpack.c.b16 %v5754, %v5751
        %v5848 = vpack.c.b16 %v5758, %v5755
        %v5849 = vpack.c.b16 %v5759, %v5756
        %v5850 = vpack.c.b16 %v5760, %v5757
        %v5851 = vpack.c.b16 %v5764, %v5761
        %v5852 = vpack.c.b16 %v5765, %v5762
        %v5853 = vpack.c.b16 %v5766, %v5763
        %v5854 = vpack.c.b16 %v5770, %v5767
        %v5855 = vpack.c.b16 %v5771, %v5768
        %v5856 = vpack.c.b16 %v5772, %v5769
        %v5857 = vpack.c.b16 %v5776, %v5773
        %v5858 = vpack.c.b16 %v5777, %v5774
        %v5859 = vpack.c.b16 %v5778, %v5775
        %v5860 = vpack.c.b16 %v5782, %v5779
        %v5861 = vpack.c.b16 %v5783, %v5780
        %v5862 = vpack.c.b16 %v5784, %v5781
        %v5863 = vpack.c.b16 %v5788, %v5785
        %v5864 = vpack.c.b16 %v5789, %v5786
        %v5865 = vpack.c.b16 %v5790, %v5787
        %v5866 = vpack.c.b16 %v5794, %v5791
        %v5867 = vpack.c.b16 %v5795, %v5792
        %v5868 = vpack.c.b16 %v5796, %v5793
        %v5869 = vpack.c.b16 %v5800, %v5797
        %v5870 = vpack.c.b16 %v5801, %v5798
        %v5871 = vpack.c.b16 %v5802, %v5799
        %v5872 = vpack.c.b16 %v5806, %v5803
        %v5873 = vpack.c.b16 %v5807, %v5804
        %v5874 = vpack.c.b16 %v5808, %v5805
        %v5875 = vpack.c.b16 %v5812, %v5809
        %v5876 = vpack.c.b16 %v5813, %v5810
        %v5877 = vpack.c.b16 %v5814, %v5811
        %v5878 = vpack.c.b16 %v5818, %v5815
        %v5879 = vpack.c.b16 %v5819, %v5816
        %v5880 = vpack.c.b16 %v5820, %v5817
        %v5881 = vpack.c.b16 %v5824, %v5821
        %v5882 = vpack.c.b16 %v5825, %v5822
        %v5883 = vpack.c.b16 %v5826, %v5823
        %v5884 = vpack.c.b16 %v5830, %v5827
        %v5885 = vpack.c.b16 %v5831, %v5828
        %v5886 = vpack.c.b16 %v5832, %v5829
        %v5887 = vpack.c.b16 %v5836, %v5833
        %v5888 = vpack.c.b16 %v5837, %v5834
        %v5889 = vpack.c.b16 %v5838, %v5835
        %v5890 = vpack.c.b16 %v5842, %v5839
        %v5891 = vpack.c.b16 %v5843, %v5840
        %v5892 = vpack.c.b16 %v5844, %v5841
        %v5989 = vunpack.c.l.b16 %v5637
        %v5990 = vunpack.c.l.b16 %v5638
        %v5991 = vunpack.c.l.b16 %v5639
        %v5992 = vunpack.c.l.b16 %v5640
        %v5993 = vunpack.c.l.b16 %v5641
        %v5994 = vunpack.c.l.b16 %v5642
        %v5995 = vunpack.c.l.b16 %v5643
        %v5996 = vunpack.c.l.b16 %v5644
        %v5997 = vunpack.c.l.b16 %v5645
        %v5998 = vunpack.c.l.b16 %v5646
        %v5999 = vunpack.c.l.b16 %v5647
        %v6000 = vunpack.c.l.b16 %v5648
        %v6001 = vunpack.c.l.b16 %v5649
        %v6002 = vunpack.c.l.b16 %v5650
        %v6003 = vunpack.c.l.b16 %v5651
        %v6004 = vunpack.c.l.b16 %v5652
        %v6005 = vunpack.c.l.b16 %v5653
        %v6006 = vunpack.c.l.b16 %v5654
        %v6007 = vunpack.c.l.b16 %v5655
        %v6008 = vunpack.c.l.b16 %v5656
        %v6009 = vunpack.c.l.b16 %v5657
        %v6010 = vunpack.c.l.b16 %v5658
        %v6011 = vunpack.c.l.b16 %v5659
        %v6012 = vunpack.c.l.b16 %v5660
        %v6013 = vunpack.c.l.b16 %v5661
        %v6014 = vunpack.c.l.b16 %v5662
        %v6015 = vunpack.c.l.b16 %v5663
        %v6016 = vunpack.c.l.b16 %v5664
        %v6017 = vunpack.c.l.b16 %v5665
        %v6018 = vunpack.c.l.b16 %v5666
        %v6019 = vunpack.c.l.b16 %v5667
        %v6020 = vunpack.c.l.b16 %v5668
        %v6021 = vunpack.c.l.b16 %v5669
        %v6022 = vunpack.c.l.b16 %v5670
        %v6023 = vunpack.c.l.b16 %v5671
        %v6024 = vunpack.c.l.b16 %v5672
        %v6025 = vunpack.c.l.b16 %v5673
        %v6026 = vunpack.c.l.b16 %v5674
        %v6027 = vunpack.c.l.b16 %v5675
        %v6028 = vunpack.c.l.b16 %v5676
        %v6029 = vunpack.c.l.b16 %v5677
        %v6030 = vunpack.c.l.b16 %v5678
        %v6031 = vunpack.c.l.b16 %v5679
        %v6032 = vunpack.c.l.b16 %v5680
        %v6033 = vunpack.c.l.b16 %v5681
        %v6034 = vunpack.c.l.b16 %v5682
        %v6035 = vunpack.c.l.b16 %v5683
        %v6036 = vunpack.c.l.b16 %v5684
        %v6037 = vpack.c.b16 %v5990, %v5989
        %v6038 = vpack.c.b16 %v5992, %v5991
        %v6039 = vpack.c.b16 %v5994, %v5993
        %v6040 = vpack.c.b16 %v5996, %v5995
        %v6041 = vpack.c.b16 %v5998, %v5997
        %v6042 = vpack.c.b16 %v6000, %v5999
        %v6043 = vpack.c.b16 %v6002, %v6001
        %v6044 = vpack.c.b16 %v6004, %v6003
        %v6045 = vpack.c.b16 %v6006, %v6005
        %v6046 = vpack.c.b16 %v6008, %v6007
        %v6047 = vpack.c.b16 %v6010, %v6009
        %v6048 = vpack.c.b16 %v6012, %v6011
        %v6049 = vpack.c.b16 %v6014, %v6013
        %v6050 = vpack.c.b16 %v6016, %v6015
        %v6051 = vpack.c.b16 %v6018, %v6017
        %v6052 = vpack.c.b16 %v6020, %v6019
        %v6053 = vpack.c.b16 %v6022, %v6021
        %v6054 = vpack.c.b16 %v6024, %v6023
        %v6055 = vpack.c.b16 %v6026, %v6025
        %v6056 = vpack.c.b16 %v6028, %v6027
        %v6057 = vpack.c.b16 %v6030, %v6029
        %v6058 = vpack.c.b16 %v6032, %v6031
        %v6059 = vpack.c.b16 %v6034, %v6033
        %v6060 = vpack.c.b16 %v6036, %v6035
        %6085 = vmatprep.subr.bf16.mxu0 0
        %6086 = vmatpush1.bf16.msra.mxu0 %v6044
        %6087 = vmatprep.subr.bf16.mxu0 0
        %6088 = vmatpush1.bf16.msra.mxu0 %v6043
        %6089 = vmatprep.subr.bf16.mxu0 0
        %6090 = vmatpush1.bf16.msra.mxu0 %v6042
        %6091 = vmatprep.subr.bf16.mxu0 0
        %6092 = vmatpush1.bf16.msra.mxu0 %v6041
        %6093 = vmatprep.subr.bf16.mxu0 0
        %6094 = vmatpush1.bf16.msra.mxu0 %v6040
        %6095 = vmatprep.subr.bf16.mxu0 0
        %6096 = vmatpush1.bf16.msra.mxu0 %v6039
        %6097 = vmatprep.subr.bf16.mxu0 0
        %6098 = vmatpush1.bf16.msra.mxu0 %v6038
        %6099 = vmatprep.subr.bf16.mxu0 0
        %6100 = vmatpush1.bf16.msra.mxu0 %v6037
        %6101 = vmatprep.subr.bf16.mxu0 0
        %6102 = vmatpush2.bf16.msra.mxu0 %v6052
        %6103 = vmatprep.subr.bf16.mxu0 0
        %6104 = vmatpush2.bf16.msra.mxu0 %v6051
        %6105 = vmatprep.subr.bf16.mxu0 0
        %6106 = vmatpush2.bf16.msra.mxu0 %v6050
        %6107 = vmatprep.subr.bf16.mxu0 0
        %6108 = vmatpush2.bf16.msra.mxu0 %v6049
        %6109 = vmatprep.subr.bf16.mxu0 0
        %6110 = vmatpush2.bf16.msra.mxu0 %v6048
        %6111 = vmatprep.subr.bf16.mxu0 0
        %6112 = vmatpush2.bf16.msra.mxu0 %v6047
        %6113 = vmatprep.subr.bf16.mxu0 0
        %6114 = vmatpush2.bf16.msra.mxu0 %v6046
        %6115 = vmatprep.subr.bf16.mxu0 0
        %6116 = vmatpush2.bf16.msra.mxu0 %v6045
        %6117 = vmatprep.mubr.bf16.mxu0 %v5846
        %6118 = vmatmul.mubr.bf16.gmra.mxu0 %v5845
        %v6119 = vpop.f32.mrf.mxu0
        %v6120 = vadd.f32 0.0, %v6119
        %v6121 = vpop.f32.mrf.mxu0
        %v6122 = vpop.f32.mrf.mxu0
        %v6123 = vadd.f32 0.0, %v6122
        %v6124 = vpop.f32.mrf.mxu0
        %6125 = vmatprep.mubr.bf16.mxu0 %v5849
        %6126 = vmatmul.mubr.bf16.gmra.mxu0 %v5848
        %v6127 = vpop.f32.mrf.mxu0
        %v6128 = vadd.f32 0.0, %v6127
        %v6129 = vpop.f32.mrf.mxu0
        %v6130 = vpop.f32.mrf.mxu0
        %v6131 = vadd.f32 0.0, %v6130
        %v6132 = vpop.f32.mrf.mxu0
        %6133 = vmatprep.mubr.bf16.mxu0 %v5852
        %6134 = vmatmul.mubr.bf16.gmra.mxu0 %v5851
        %v6135 = vpop.f32.mrf.mxu0
        %v6136 = vadd.f32 0.0, %v6135
        %v6137 = vpop.f32.mrf.mxu0
        %v6138 = vpop.f32.mrf.mxu0
        %v6139 = vadd.f32 0.0, %v6138
        %v6140 = vpop.f32.mrf.mxu0
        %6141 = vmatprep.mubr.bf16.mxu0 %v5855
        %6142 = vmatmul.mubr.bf16.gmra.mxu0 %v5854
        %v6143 = vpop.f32.mrf.mxu0
        %v6144 = vadd.f32 0.0, %v6143
        %v6145 = vpop.f32.mrf.mxu0
        %v6146 = vpop.f32.mrf.mxu0
        %v6147 = vadd.f32 0.0, %v6146
        %v6148 = vpop.f32.mrf.mxu0
        %6149 = vmatprep.mubr.bf16.mxu0 %v5858
        %6150 = vmatmul.mubr.bf16.gmra.mxu0 %v5857
        %v6151 = vpop.f32.mrf.mxu0
        %v6152 = vadd.f32 0.0, %v6151
        %v6153 = vpop.f32.mrf.mxu0
        %v6154 = vpop.f32.mrf.mxu0
        %v6155 = vadd.f32 0.0, %v6154
        %v6156 = vpop.f32.mrf.mxu0
        %6157 = vmatprep.mubr.bf16.mxu0 %v5861
        %6158 = vmatmul.mubr.bf16.gmra.mxu0 %v5860
        %v6159 = vpop.f32.mrf.mxu0
        %v6160 = vadd.f32 0.0, %v6159
        %v6161 = vpop.f32.mrf.mxu0
        %v6162 = vpop.f32.mrf.mxu0
        %v6163 = vadd.f32 0.0, %v6162
        %v6164 = vpop.f32.mrf.mxu0
        %6165 = vmatprep.mubr.bf16.mxu0 %v5864
        %6166 = vmatmul.mubr.bf16.gmra.mxu0 %v5863
        %v6167 = vpop.f32.mrf.mxu0
        %v6168 = vadd.f32 0.0, %v6167
        %v6169 = vpop.f32.mrf.mxu0
        %v6170 = vpop.f32.mrf.mxu0
        %v6171 = vadd.f32 0.0, %v6170
        %v6172 = vpop.f32.mrf.mxu0
        %6173 = vmatprep.mubr.bf16.mxu0 %v5867
        %6174 = vmatmul.mubr.bf16.gmra.mxu0 %v5866
        %v6175 = vpop.f32.mrf.mxu0
        %v6176 = vadd.f32 0.0, %v6175
        %v6177 = vpop.f32.mrf.mxu0
        %v6178 = vpop.f32.mrf.mxu0
        %v6179 = vadd.f32 0.0, %v6178
        %v6180 = vpop.f32.mrf.mxu0
        %6181 = vmatprep.mubr.bf16.mxu0 %v5870
        %6182 = vmatmul.mubr.bf16.gmra.mxu0 %v5869
        %v6183 = vpop.f32.mrf.mxu0
        %v6184 = vadd.f32 0.0, %v6183
        %v6185 = vpop.f32.mrf.mxu0
        %v6186 = vpop.f32.mrf.mxu0
        %v6187 = vadd.f32 0.0, %v6186
        %v6188 = vpop.f32.mrf.mxu0
        %6189 = vmatprep.mubr.bf16.mxu0 %v5873
        %6190 = vmatmul.mubr.bf16.gmra.mxu0 %v5872
        %v6191 = vpop.f32.mrf.mxu0
        %v6192 = vadd.f32 0.0, %v6191
        %v6193 = vpop.f32.mrf.mxu0
        %v6194 = vpop.f32.mrf.mxu0
        %v6195 = vadd.f32 0.0, %v6194
        %v6196 = vpop.f32.mrf.mxu0
        %6197 = vmatprep.mubr.bf16.mxu0 %v5876
        %6198 = vmatmul.mubr.bf16.gmra.mxu0 %v5875
        %v6199 = vpop.f32.mrf.mxu0
        %v6200 = vadd.f32 0.0, %v6199
        %v6201 = vpop.f32.mrf.mxu0
        %v6202 = vpop.f32.mrf.mxu0
        %v6203 = vadd.f32 0.0, %v6202
        %v6204 = vpop.f32.mrf.mxu0
        %6205 = vmatprep.mubr.bf16.mxu0 %v5879
        %6206 = vmatmul.mubr.bf16.gmra.mxu0 %v5878
        %v6207 = vpop.f32.mrf.mxu0
        %v6208 = vadd.f32 0.0, %v6207
        %v6209 = vpop.f32.mrf.mxu0
        %v6210 = vpop.f32.mrf.mxu0
        %v6211 = vadd.f32 0.0, %v6210
        %v6212 = vpop.f32.mrf.mxu0
        %6213 = vmatprep.mubr.bf16.mxu0 %v5882
        %6214 = vmatmul.mubr.bf16.gmra.mxu0 %v5881
        %v6215 = vpop.f32.mrf.mxu0
        %v6216 = vadd.f32 0.0, %v6215
        %v6217 = vpop.f32.mrf.mxu0
        %v6218 = vpop.f32.mrf.mxu0
        %v6219 = vadd.f32 0.0, %v6218
        %v6220 = vpop.f32.mrf.mxu0
        %6221 = vmatprep.mubr.bf16.mxu0 %v5885
        %6222 = vmatmul.mubr.bf16.gmra.mxu0 %v5884
        %v6223 = vpop.f32.mrf.mxu0
        %v6224 = vadd.f32 0.0, %v6223
        %v6225 = vpop.f32.mrf.mxu0
        %v6226 = vpop.f32.mrf.mxu0
        %v6227 = vadd.f32 0.0, %v6226
        %v6228 = vpop.f32.mrf.mxu0
        %6229 = vmatprep.mubr.bf16.mxu0 %v5888
        %6230 = vmatmul.mubr.bf16.gmra.mxu0 %v5887
        %v6231 = vpop.f32.mrf.mxu0
        %v6232 = vadd.f32 0.0, %v6231
        %v6233 = vpop.f32.mrf.mxu0
        %v6234 = vpop.f32.mrf.mxu0
        %v6235 = vadd.f32 0.0, %v6234
        %v6236 = vpop.f32.mrf.mxu0
        %6237 = vmatprep.mubr.bf16.mxu0 %v5891
        %6238 = vmatmul.mubr.bf16.gmra.mxu0 %v5890
        %v6239 = vpop.f32.mrf.mxu0
        %v6240 = vadd.f32 0.0, %v6239
        %v6241 = vpop.f32.mrf.mxu0
        %v6242 = vpop.f32.mrf.mxu0
        %v6243 = vadd.f32 0.0, %v6242
        %v6244 = vpop.f32.mrf.mxu0
        %6245 = vdwg.mxu0
        %6246 = vmatprep.subr.bf16.mxu0 0
        %6247 = vmatpush1.bf16.msra.mxu0 %v6060
        %6248 = vmatprep.subr.bf16.mxu0 0
        %6249 = vmatpush1.bf16.msra.mxu0 %v6059
        %6250 = vmatprep.subr.bf16.mxu0 0
        %6251 = vmatpush1.bf16.msra.mxu0 %v6058
        %6252 = vmatprep.subr.bf16.mxu0 0
        %6253 = vmatpush1.bf16.msra.mxu0 %v6057
        %6254 = vmatprep.subr.bf16.mxu0 0
        %6255 = vmatpush1.bf16.msra.mxu0 %v6056
        %6256 = vmatprep.subr.bf16.mxu0 0
        %6257 = vmatpush1.bf16.msra.mxu0 %v6055
        %6258 = vmatprep.subr.bf16.mxu0 0
        %6259 = vmatpush1.bf16.msra.mxu0 %v6054
        %6260 = vmatprep.subr.bf16.mxu0 0
        %6261 = vmatpush1.bf16.msra.mxu0 %v6053
        %6262 = vmatprep.subr.bf16.mxu0 0
        %6263 = vmatpush2.bf16.msra.mxu0 0
        %6264 = vmatprep.subr.bf16.mxu0 0
        %6265 = vmatpush2.bf16.msra.mxu0 0
        %6266 = vmatprep.subr.bf16.mxu0 0
        %6267 = vmatpush2.bf16.msra.mxu0 0
        %6268 = vmatprep.subr.bf16.mxu0 0
        %6269 = vmatpush2.bf16.msra.mxu0 0
        %6270 = vmatprep.subr.bf16.mxu0 0
        %6271 = vmatpush2.bf16.msra.mxu0 0
        %6272 = vmatprep.subr.bf16.mxu0 0
        %6273 = vmatpush2.bf16.msra.mxu0 0
        %6274 = vmatprep.subr.bf16.mxu0 0
        %6275 = vmatpush2.bf16.msra.mxu0 0
        %6276 = vmatprep.subr.bf16.mxu0 0
        %6277 = vmatpush2.bf16.msra.mxu0 0
        %6278 = vmatprep.mubr.bf16.mxu0 0
        %6279 = vmatmul.mubr.bf16.gmra.mxu0 %v5847
        %v6280 = vpop.f32.mrf.mxu0
        %v6281 = vadd.f32 %v6120, %v6280
        %v6282 = vpop.f32.mrf.mxu0
        %v6283 = vpop.f32.mrf.mxu0
        %v6284 = vadd.f32 %v6123, %v6283
        %v6285 = vpop.f32.mrf.mxu0
        %6286 = vmatprep.mubr.bf16.mxu0 0
        %6287 = vmatmul.mubr.bf16.gmra.mxu0 %v5850
        %v6288 = vpop.f32.mrf.mxu0
        %v6289 = vadd.f32 %v6128, %v6288
        %v6290 = vpop.f32.mrf.mxu0
        %v6291 = vpop.f32.mrf.mxu0
        %v6292 = vadd.f32 %v6131, %v6291
        %v6293 = vpop.f32.mrf.mxu0
        %6294 = vmatprep.mubr.bf16.mxu0 0
        %6295 = vmatmul.mubr.bf16.gmra.mxu0 %v5853
        %v6296 = vpop.f32.mrf.mxu0
        %v6297 = vadd.f32 %v6136, %v6296
        %v6298 = vpop.f32.mrf.mxu0
        %v6299 = vpop.f32.mrf.mxu0
        %v6300 = vadd.f32 %v6139, %v6299
        %v6301 = vpop.f32.mrf.mxu0
        %6302 = vmatprep.mubr.bf16.mxu0 0
        %6303 = vmatmul.mubr.bf16.gmra.mxu0 %v5856
        %v6304 = vpop.f32.mrf.mxu0
        %v6305 = vadd.f32 %v6144, %v6304
        %v6306 = vpop.f32.mrf.mxu0
        %v6307 = vpop.f32.mrf.mxu0
        %v6308 = vadd.f32 %v6147, %v6307
        %v6309 = vpop.f32.mrf.mxu0
        %6310 = vmatprep.mubr.bf16.mxu0 0
        %6311 = vmatmul.mubr.bf16.gmra.mxu0 %v5859
        %v6312 = vpop.f32.mrf.mxu0
        %v6313 = vadd.f32 %v6152, %v6312
        %v6314 = vpop.f32.mrf.mxu0
        %v6315 = vpop.f32.mrf.mxu0
        %v6316 = vadd.f32 %v6155, %v6315
        %v6317 = vpop.f32.mrf.mxu0
        %6318 = vmatprep.mubr.bf16.mxu0 0
        %6319 = vmatmul.mubr.bf16.gmra.mxu0 %v5862
        %v6320 = vpop.f32.mrf.mxu0
        %v6321 = vadd.f32 %v6160, %v6320
        %v6322 = vpop.f32.mrf.mxu0
        %v6323 = vpop.f32.mrf.mxu0
        %v6324 = vadd.f32 %v6163, %v6323
        %v6325 = vpop.f32.mrf.mxu0
        %6326 = vmatprep.mubr.bf16.mxu0 0
        %6327 = vmatmul.mubr.bf16.gmra.mxu0 %v5865
        %v6328 = vpop.f32.mrf.mxu0
        %v6329 = vadd.f32 %v6168, %v6328
        %v6330 = vpop.f32.mrf.mxu0
        %v6331 = vpop.f32.mrf.mxu0
        %v6332 = vadd.f32 %v6171, %v6331
        %v6333 = vpop.f32.mrf.mxu0
        %6334 = vmatprep.mubr.bf16.mxu0 0
        %6335 = vmatmul.mubr.bf16.gmra.mxu0 %v5868
        %v6336 = vpop.f32.mrf.mxu0
        %v6337 = vadd.f32 %v6176, %v6336
        %v6338 = vpop.f32.mrf.mxu0
        %v6339 = vpop.f32.mrf.mxu0
        %v6340 = vadd.f32 %v6179, %v6339
        %v6341 = vpop.f32.mrf.mxu0
        %6342 = vmatprep.mubr.bf16.mxu0 0
        %6343 = vmatmul.mubr.bf16.gmra.mxu0 %v5871
        %v6344 = vpop.f32.mrf.mxu0
        %v6345 = vadd.f32 %v6184, %v6344
        %v6346 = vpop.f32.mrf.mxu0
        %v6347 = vpop.f32.mrf.mxu0
        %v6348 = vadd.f32 %v6187, %v6347
        %v6349 = vpop.f32.mrf.mxu0
        %6350 = vmatprep.mubr.bf16.mxu0 0
        %6351 = vmatmul.mubr.bf16.gmra.mxu0 %v5874
        %v6352 = vpop.f32.mrf.mxu0
        %v6353 = vadd.f32 %v6192, %v6352
        %v6354 = vpop.f32.mrf.mxu0
        %v6355 = vpop.f32.mrf.mxu0
        %v6356 = vadd.f32 %v6195, %v6355
        %v6357 = vpop.f32.mrf.mxu0
        %6358 = vmatprep.mubr.bf16.mxu0 0
        %6359 = vmatmul.mubr.bf16.gmra.mxu0 %v5877
        %v6360 = vpop.f32.mrf.mxu0
        %v6361 = vadd.f32 %v6200, %v6360
        %v6362 = vpop.f32.mrf.mxu0
        %v6363 = vpop.f32.mrf.mxu0
        %v6364 = vadd.f32 %v6203, %v6363
        %v6365 = vpop.f32.mrf.mxu0
        %6366 = vmatprep.mubr.bf16.mxu0 0
        %6367 = vmatmul.mubr.bf16.gmra.mxu0 %v5880
        %v6368 = vpop.f32.mrf.mxu0
        %v6369 = vadd.f32 %v6208, %v6368
        %v6370 = vpop.f32.mrf.mxu0
        %v6371 = vpop.f32.mrf.mxu0
        %v6372 = vadd.f32 %v6211, %v6371
        %v6373 = vpop.f32.mrf.mxu0
        %6374 = vmatprep.mubr.bf16.mxu0 0
        %6375 = vmatmul.mubr.bf16.gmra.mxu0 %v5883
        %v6376 = vpop.f32.mrf.mxu0
        %v6377 = vadd.f32 %v6216, %v6376
        %v6378 = vpop.f32.mrf.mxu0
        %v6379 = vpop.f32.mrf.mxu0
        %v6380 = vadd.f32 %v6219, %v6379
        %v6381 = vpop.f32.mrf.mxu0
        %6382 = vmatprep.mubr.bf16.mxu0 0
        %6383 = vmatmul.mubr.bf16.gmra.mxu0 %v5886
        %v6384 = vpop.f32.mrf.mxu0
        %v6385 = vadd.f32 %v6224, %v6384
        %v6386 = vpop.f32.mrf.mxu0
        %v6387 = vpop.f32.mrf.mxu0
        %v6388 = vadd.f32 %v6227, %v6387
        %v6389 = vpop.f32.mrf.mxu0
        %6390 = vmatprep.mubr.bf16.mxu0 0
        %6391 = vmatmul.mubr.bf16.gmra.mxu0 %v5889
        %v6392 = vpop.f32.mrf.mxu0
        %v6393 = vadd.f32 %v6232, %v6392
        %v6394 = vpop.f32.mrf.mxu0
        %v6395 = vpop.f32.mrf.mxu0
        %v6396 = vadd.f32 %v6235, %v6395
        %v6397 = vpop.f32.mrf.mxu0
        %6398 = vmatprep.mubr.bf16.mxu0 0
        %6399 = vmatmul.mubr.bf16.gmra.mxu0 %v5892
        %v6400 = vpop.f32.mrf.mxu0
        %v6401 = vadd.f32 %v6240, %v6400
        %v6402 = vpop.f32.mrf.mxu0
        %v6403 = vpop.f32.mrf.mxu0
        %v6404 = vadd.f32 %v6243, %v6403
        %v6405 = vpop.f32.mrf.mxu0
        %6406 = vdwg.mxu0
        %v6407 = vadd.f32 %v4614, %v6281
        %v6408 = vadd.f32 %v4617, %v6284
        %v6409 = vadd.f32 %v4622, %v6289
        %v6410 = vadd.f32 %v4625, %v6292
        %v6411 = vadd.f32 %v4630, %v6297
        %v6412 = vadd.f32 %v4633, %v6300
        %v6413 = vadd.f32 %v4638, %v6305
        %v6414 = vadd.f32 %v4641, %v6308
        %v6415 = vadd.f32 %v4646, %v6313
        %v6416 = vadd.f32 %v4649, %v6316
        %v6417 = vadd.f32 %v4654, %v6321
        %v6418 = vadd.f32 %v4657, %v6324
        %v6419 = vadd.f32 %v4662, %v6329
        %v6420 = vadd.f32 %v4665, %v6332
        %v6421 = vadd.f32 %v4670, %v6337
        %v6422 = vadd.f32 %v4673, %v6340
        %v6423 = vadd.f32 %v4678, %v6345
        %v6424 = vadd.f32 %v4681, %v6348
        %v6425 = vadd.f32 %v4686, %v6353
        %v6426 = vadd.f32 %v4689, %v6356
        %v6427 = vadd.f32 %v4694, %v6361
        %v6428 = vadd.f32 %v4697, %v6364
        %v6429 = vadd.f32 %v4702, %v6369
        %v6430 = vadd.f32 %v4705, %v6372
        %v6431 = vadd.f32 %v4710, %v6377
        %v6432 = vadd.f32 %v4713, %v6380
        %v6433 = vadd.f32 %v4718, %v6385
        %v6434 = vadd.f32 %v4721, %v6388
        %v6435 = vadd.f32 %v4726, %v6393
        %v6436 = vadd.f32 %v4729, %v6396
        %v6437 = vadd.f32 %v4734, %v6401
        %v6438 = vadd.f32 %v4737, %v6404
        %v6439 = vlaneseq
        %v6440 = vshrl.u32 %v6439, 7
        %v6441 = vsub.s32 4, %v6440
        %v6442 = vrot.slane %v374, %v6441
        %v6443 = vmul.f32 %v6407, %v6442
        %v6444 = vmul.f32 %v6408, %v6442
        %v6445 = vmul.f32 %v6409, %v6442
        %v6446 = vmul.f32 %v6410, %v6442
        %v6447 = vmul.f32 %v6411, %v6442
        %v6448 = vmul.f32 %v6412, %v6442
        %v6449 = vmul.f32 %v6413, %v6442
        %v6450 = vmul.f32 %v6414, %v6442
        %v6451 = vmul.f32 %v6415, %v6442
        %v6452 = vmul.f32 %v6416, %v6442
        %v6453 = vmul.f32 %v6417, %v6442
        %v6454 = vmul.f32 %v6418, %v6442
        %v6455 = vmul.f32 %v6419, %v6442
        %v6456 = vmul.f32 %v6420, %v6442
        %v6457 = vmul.f32 %v6421, %v6442
        %v6458 = vmul.f32 %v6422, %v6442
        %v6459 = vmul.f32 %v6423, %v6442
        %v6460 = vmul.f32 %v6424, %v6442
        %v6461 = vmul.f32 %v6425, %v6442
        %v6462 = vmul.f32 %v6426, %v6442
        %v6463 = vmul.f32 %v6427, %v6442
        %v6464 = vmul.f32 %v6428, %v6442
        %v6465 = vmul.f32 %v6429, %v6442
        %v6466 = vmul.f32 %v6430, %v6442
        %v6467 = vmul.f32 %v6431, %v6442
        %v6468 = vmul.f32 %v6432, %v6442
        %v6469 = vmul.f32 %v6433, %v6442
        %v6470 = vmul.f32 %v6434, %v6442
        %v6471 = vmul.f32 %v6435, %v6442
        %v6472 = vmul.f32 %v6436, %v6442
        %v6473 = vmul.f32 %v6437, %v6442
        %v6474 = vmul.f32 %v6438, %v6442
        %v6475 = vlaneseq
        %v6476 = vshrl.u32 %v6475, 7
        %v6477 = vsub.s32 5, %v6476
        %v6478 = vrot.slane %v374, %v6477
        %v6479 = vadd.f32 %v6443, %v6478
        %v6480 = vadd.f32 %v6444, %v6478
        %v6481 = vadd.f32 %v6445, %v6478
        %v6482 = vadd.f32 %v6446, %v6478
        %v6483 = vadd.f32 %v6447, %v6478
        %v6484 = vadd.f32 %v6448, %v6478
        %v6485 = vadd.f32 %v6449, %v6478
        %v6486 = vadd.f32 %v6450, %v6478
        %v6487 = vadd.f32 %v6451, %v6478
        %v6488 = vadd.f32 %v6452, %v6478
        %v6489 = vadd.f32 %v6453, %v6478
        %v6490 = vadd.f32 %v6454, %v6478
        %v6491 = vadd.f32 %v6455, %v6478
        %v6492 = vadd.f32 %v6456, %v6478
        %v6493 = vadd.f32 %v6457, %v6478
        %v6494 = vadd.f32 %v6458, %v6478
        %v6495 = vadd.f32 %v6459, %v6478
        %v6496 = vadd.f32 %v6460, %v6478
        %v6497 = vadd.f32 %v6461, %v6478
        %v6498 = vadd.f32 %v6462, %v6478
        %v6499 = vadd.f32 %v6463, %v6478
        %v6500 = vadd.f32 %v6464, %v6478
        %v6501 = vadd.f32 %v6465, %v6478
        %v6502 = vadd.f32 %v6466, %v6478
        %v6503 = vadd.f32 %v6467, %v6478
        %v6504 = vadd.f32 %v6468, %v6478
        %v6505 = vadd.f32 %v6469, %v6478
        %v6506 = vadd.f32 %v6470, %v6478
        %v6507 = vadd.f32 %v6471, %v6478
        %v6508 = vadd.f32 %v6472, %v6478
        %v6509 = vadd.f32 %v6473, %v6478
        %v6510 = vadd.f32 %v6474, %v6478
        %v6511 = vmax.f32 %v6479, 0.0
        %v6512 = vmax.f32 %v6480, 0.0
        %v6513 = vmax.f32 %v6481, 0.0
        %v6514 = vmax.f32 %v6482, 0.0
        %v6515 = vmax.f32 %v6483, 0.0
        %v6516 = vmax.f32 %v6484, 0.0
        %v6517 = vmax.f32 %v6485, 0.0
        %v6518 = vmax.f32 %v6486, 0.0
        %v6519 = vmax.f32 %v6487, 0.0
        %v6520 = vmax.f32 %v6488, 0.0
        %v6521 = vmax.f32 %v6489, 0.0
        %v6522 = vmax.f32 %v6490, 0.0
        %v6523 = vmax.f32 %v6491, 0.0
        %v6524 = vmax.f32 %v6492, 0.0
        %v6525 = vmax.f32 %v6493, 0.0
        %v6526 = vmax.f32 %v6494, 0.0
        %v6527 = vmax.f32 %v6495, 0.0
        %v6528 = vmax.f32 %v6496, 0.0
        %v6529 = vmax.f32 %v6497, 0.0
        %v6530 = vmax.f32 %v6498, 0.0
        %v6531 = vmax.f32 %v6499, 0.0
        %v6532 = vmax.f32 %v6500, 0.0
        %v6533 = vmax.f32 %v6501, 0.0
        %v6534 = vmax.f32 %v6502, 0.0
        %v6535 = vmax.f32 %v6503, 0.0
        %v6536 = vmax.f32 %v6504, 0.0
        %v6537 = vmax.f32 %v6505, 0.0
        %v6538 = vmax.f32 %v6506, 0.0
        %v6539 = vmax.f32 %v6507, 0.0
        %v6540 = vmax.f32 %v6508, 0.0
        %v6541 = vmax.f32 %v6509, 0.0
        %v6542 = vmax.f32 %v6510, 0.0
        %v6543 = vpack.c.bf16 %v6512, %v6511
        %v6544 = vpack.c.bf16 %v6514, %v6513
        %v6545 = vpack.c.bf16 %v6516, %v6515
        %v6546 = vpack.c.bf16 %v6518, %v6517
        %v6547 = vpack.c.bf16 %v6520, %v6519
        %v6548 = vpack.c.bf16 %v6522, %v6521
        %v6549 = vpack.c.bf16 %v6524, %v6523
        %v6550 = vpack.c.bf16 %v6526, %v6525
        %v6551 = vpack.c.bf16 %v6528, %v6527
        %v6552 = vpack.c.bf16 %v6530, %v6529
        %v6553 = vpack.c.bf16 %v6532, %v6531
        %v6554 = vpack.c.bf16 %v6534, %v6533
        %v6555 = vpack.c.bf16 %v6536, %v6535
        %v6556 = vpack.c.bf16 %v6538, %v6537
        %v6557 = vpack.c.bf16 %v6540, %v6539
        %v6558 = vpack.c.bf16 %v6542, %v6541
        %v6575 = vunpack.c.l.b16 %v6543
        %v6576 = vunpack.c.h.b16 %v6543
        %v6577 = vunpack.c.l.b16 %v6544
        %v6578 = vunpack.c.h.b16 %v6544
        %v6579 = vunpack.c.l.b16 %v6545
        %v6580 = vunpack.c.h.b16 %v6545
        %v6581 = vunpack.c.l.b16 %v6546
        %v6582 = vunpack.c.h.b16 %v6546
        %v6583 = vunpack.c.l.b16 %v6547
        %v6584 = vunpack.c.h.b16 %v6547
        %v6585 = vunpack.c.l.b16 %v6548
        %v6586 = vunpack.c.h.b16 %v6548
        %v6587 = vunpack.c.l.b16 %v6549
        %v6588 = vunpack.c.h.b16 %v6549
        %v6589 = vunpack.c.l.b16 %v6550
        %v6590 = vunpack.c.h.b16 %v6550
        %v6591 = vunpack.c.l.b16 %v6551
        %v6592 = vunpack.c.h.b16 %v6551
        %v6593 = vunpack.c.l.b16 %v6552
        %v6594 = vunpack.c.h.b16 %v6552
        %v6595 = vunpack.c.l.b16 %v6553
        %v6596 = vunpack.c.h.b16 %v6553
        %v6597 = vunpack.c.l.b16 %v6554
        %v6598 = vunpack.c.h.b16 %v6554
        %v6599 = vunpack.c.l.b16 %v6555
        %v6600 = vunpack.c.h.b16 %v6555
        %v6601 = vunpack.c.l.b16 %v6556
        %v6602 = vunpack.c.h.b16 %v6556
        %v6603 = vunpack.c.l.b16 %v6557
        %v6604 = vunpack.c.h.b16 %v6557
        %v6605 = vunpack.c.l.b16 %v6558
        %v6606 = vunpack.c.h.b16 %v6558
        %v6607 = vpack.c.b16 %v6575, %v6575
        %v6608 = vpack.c.b16 %v6576, %v6576
        %v6609 = vpack.c.b16 %v6577, %v6577
        %v6610 = vpack.c.b16 %v6578, %v6578
        %v6611 = vpack.c.b16 %v6579, %v6579
        %v6612 = vpack.c.b16 %v6580, %v6580
        %v6613 = vpack.c.b16 %v6581, %v6581
        %v6614 = vpack.c.b16 %v6582, %v6582
        %v6615 = vpack.c.b16 %v6583, %v6583
        %v6616 = vpack.c.b16 %v6584, %v6584
        %v6617 = vpack.c.b16 %v6585, %v6585
        %v6618 = vpack.c.b16 %v6586, %v6586
        %v6619 = vpack.c.b16 %v6587, %v6587
        %v6620 = vpack.c.b16 %v6588, %v6588
        %v6621 = vpack.c.b16 %v6589, %v6589
        %v6622 = vpack.c.b16 %v6590, %v6590
        %v6623 = vpack.c.b16 %v6591, %v6591
        %v6624 = vpack.c.b16 %v6592, %v6592
        %v6625 = vpack.c.b16 %v6593, %v6593
        %v6626 = vpack.c.b16 %v6594, %v6594
        %v6627 = vpack.c.b16 %v6595, %v6595
        %v6628 = vpack.c.b16 %v6596, %v6596
        %v6629 = vpack.c.b16 %v6597, %v6597
        %v6630 = vpack.c.b16 %v6598, %v6598
        %v6631 = vpack.c.b16 %v6599, %v6599
        %v6632 = vpack.c.b16 %v6600, %v6600
        %v6633 = vpack.c.b16 %v6601, %v6601
        %v6634 = vpack.c.b16 %v6602, %v6602
        %v6635 = vpack.c.b16 %v6603, %v6603
        %v6636 = vpack.c.b16 %v6604, %v6604
        %v6637 = vpack.c.b16 %v6605, %v6605
        %v6638 = vpack.c.b16 %v6606, %v6606
        %v6640 = vshrl.u32 %v6607, 16
        %v6642 = vrot.slane %v6640, 7
        %v6643 = vshll.u32 %v6607, 16
        %v6645 = vor.u32 %v6642, %v6643
        %v6646 = vrot.slane %v6642, 4
        %v6648 = vshrl.u32 %v6608, 16
        %v6650 = vrot.slane %v6648, 7
        %v6651 = vshll.u32 %v6608, 16
        %v6653 = vor.u32 %v6650, %v6651
        %v6654 = vsel %vm967, %v6646, %v6653
        %v6655 = vrot.slane %v6650, 4
        %v6657 = vshrl.u32 %v6609, 16
        %v6659 = vrot.slane %v6657, 7
        %v6660 = vshll.u32 %v6609, 16
        %v6662 = vor.u32 %v6659, %v6660
        %v6663 = vrot.slane %v6659, 4
        %v6665 = vshrl.u32 %v6610, 16
        %v6667 = vrot.slane %v6665, 7
        %v6668 = vshll.u32 %v6610, 16
        %v6670 = vor.u32 %v6667, %v6668
        %v6671 = vsel %vm967, %v6663, %v6670
        %v6672 = vrot.slane %v6667, 4
        %v6674 = vshrl.u32 %v6611, 16
        %v6676 = vrot.slane %v6674, 7
        %v6677 = vshll.u32 %v6611, 16
        %v6679 = vor.u32 %v6676, %v6677
        %v6680 = vrot.slane %v6676, 4
        %v6682 = vshrl.u32 %v6612, 16
        %v6684 = vrot.slane %v6682, 7
        %v6685 = vshll.u32 %v6612, 16
        %v6687 = vor.u32 %v6684, %v6685
        %v6688 = vsel %vm967, %v6680, %v6687
        %v6689 = vrot.slane %v6684, 4
        %v6691 = vshrl.u32 %v6613, 16
        %v6693 = vrot.slane %v6691, 7
        %v6694 = vshll.u32 %v6613, 16
        %v6696 = vor.u32 %v6693, %v6694
        %v6697 = vrot.slane %v6693, 4
        %v6699 = vshrl.u32 %v6614, 16
        %v6701 = vrot.slane %v6699, 7
        %v6702 = vshll.u32 %v6614, 16
        %v6704 = vor.u32 %v6701, %v6702
        %v6705 = vsel %vm967, %v6697, %v6704
        %v6706 = vrot.slane %v6701, 4
        %v6708 = vshrl.u32 %v6615, 16
        %v6710 = vrot.slane %v6708, 7
        %v6711 = vshll.u32 %v6615, 16
        %v6713 = vor.u32 %v6710, %v6711
        %v6714 = vrot.slane %v6710, 4
        %v6716 = vshrl.u32 %v6616, 16
        %v6718 = vrot.slane %v6716, 7
        %v6719 = vshll.u32 %v6616, 16
        %v6721 = vor.u32 %v6718, %v6719
        %v6722 = vsel %vm967, %v6714, %v6721
        %v6723 = vrot.slane %v6718, 4
        %v6725 = vshrl.u32 %v6617, 16
        %v6727 = vrot.slane %v6725, 7
        %v6728 = vshll.u32 %v6617, 16
        %v6730 = vor.u32 %v6727, %v6728
        %v6731 = vrot.slane %v6727, 4
        %v6733 = vshrl.u32 %v6618, 16
        %v6735 = vrot.slane %v6733, 7
        %v6736 = vshll.u32 %v6618, 16
        %v6738 = vor.u32 %v6735, %v6736
        %v6739 = vsel %vm967, %v6731, %v6738
        %v6740 = vrot.slane %v6735, 4
        %v6742 = vshrl.u32 %v6619, 16
        %v6744 = vrot.slane %v6742, 7
        %v6745 = vshll.u32 %v6619, 16
        %v6747 = vor.u32 %v6744, %v6745
        %v6748 = vrot.slane %v6744, 4
        %v6750 = vshrl.u32 %v6620, 16
        %v6752 = vrot.slane %v6750, 7
        %v6753 = vshll.u32 %v6620, 16
        %v6755 = vor.u32 %v6752, %v6753
        %v6756 = vsel %vm967, %v6748, %v6755
        %v6757 = vrot.slane %v6752, 4
        %v6759 = vshrl.u32 %v6621, 16
        %v6761 = vrot.slane %v6759, 7
        %v6762 = vshll.u32 %v6621, 16
        %v6764 = vor.u32 %v6761, %v6762
        %v6765 = vrot.slane %v6761, 4
        %v6767 = vshrl.u32 %v6622, 16
        %v6769 = vrot.slane %v6767, 7
        %v6770 = vshll.u32 %v6622, 16
        %v6772 = vor.u32 %v6769, %v6770
        %v6773 = vsel %vm967, %v6765, %v6772
        %v6774 = vrot.slane %v6769, 4
        %v6776 = vshrl.u32 %v6623, 16
        %v6778 = vrot.slane %v6776, 7
        %v6779 = vshll.u32 %v6623, 16
        %v6781 = vor.u32 %v6778, %v6779
        %v6782 = vrot.slane %v6778, 4
        %v6784 = vshrl.u32 %v6624, 16
        %v6786 = vrot.slane %v6784, 7
        %v6787 = vshll.u32 %v6624, 16
        %v6789 = vor.u32 %v6786, %v6787
        %v6790 = vsel %vm967, %v6782, %v6789
        %v6791 = vrot.slane %v6786, 4
        %v6793 = vshrl.u32 %v6625, 16
        %v6795 = vrot.slane %v6793, 7
        %v6796 = vshll.u32 %v6625, 16
        %v6798 = vor.u32 %v6795, %v6796
        %v6799 = vrot.slane %v6795, 4
        %v6801 = vshrl.u32 %v6626, 16
        %v6803 = vrot.slane %v6801, 7
        %v6804 = vshll.u32 %v6626, 16
        %v6806 = vor.u32 %v6803, %v6804
        %v6807 = vsel %vm967, %v6799, %v6806
        %v6808 = vrot.slane %v6803, 4
        %v6810 = vshrl.u32 %v6627, 16
        %v6812 = vrot.slane %v6810, 7
        %v6813 = vshll.u32 %v6627, 16
        %v6815 = vor.u32 %v6812, %v6813
        %v6816 = vrot.slane %v6812, 4
        %v6818 = vshrl.u32 %v6628, 16
        %v6820 = vrot.slane %v6818, 7
        %v6821 = vshll.u32 %v6628, 16
        %v6823 = vor.u32 %v6820, %v6821
        %v6824 = vsel %vm967, %v6816, %v6823
        %v6825 = vrot.slane %v6820, 4
        %v6827 = vshrl.u32 %v6629, 16
        %v6829 = vrot.slane %v6827, 7
        %v6830 = vshll.u32 %v6629, 16
        %v6832 = vor.u32 %v6829, %v6830
        %v6833 = vrot.slane %v6829, 4
        %v6835 = vshrl.u32 %v6630, 16
        %v6837 = vrot.slane %v6835, 7
        %v6838 = vshll.u32 %v6630, 16
        %v6840 = vor.u32 %v6837, %v6838
        %v6841 = vsel %vm967, %v6833, %v6840
        %v6842 = vrot.slane %v6837, 4
        %v6844 = vshrl.u32 %v6631, 16
        %v6846 = vrot.slane %v6844, 7
        %v6847 = vshll.u32 %v6631, 16
        %v6849 = vor.u32 %v6846, %v6847
        %v6850 = vrot.slane %v6846, 4
        %v6852 = vshrl.u32 %v6632, 16
        %v6854 = vrot.slane %v6852, 7
        %v6855 = vshll.u32 %v6632, 16
        %v6857 = vor.u32 %v6854, %v6855
        %v6858 = vsel %vm967, %v6850, %v6857
        %v6859 = vrot.slane %v6854, 4
        %v6861 = vshrl.u32 %v6633, 16
        %v6863 = vrot.slane %v6861, 7
        %v6864 = vshll.u32 %v6633, 16
        %v6866 = vor.u32 %v6863, %v6864
        %v6867 = vrot.slane %v6863, 4
        %v6869 = vshrl.u32 %v6634, 16
        %v6871 = vrot.slane %v6869, 7
        %v6872 = vshll.u32 %v6634, 16
        %v6874 = vor.u32 %v6871, %v6872
        %v6875 = vsel %vm967, %v6867, %v6874
        %v6876 = vrot.slane %v6871, 4
        %v6878 = vshrl.u32 %v6635, 16
        %v6880 = vrot.slane %v6878, 7
        %v6881 = vshll.u32 %v6635, 16
        %v6883 = vor.u32 %v6880, %v6881
        %v6884 = vrot.slane %v6880, 4
        %v6886 = vshrl.u32 %v6636, 16
        %v6888 = vrot.slane %v6886, 7
        %v6889 = vshll.u32 %v6636, 16
        %v6891 = vor.u32 %v6888, %v6889
        %v6892 = vsel %vm967, %v6884, %v6891
        %v6893 = vrot.slane %v6888, 4
        %v6895 = vshrl.u32 %v6637, 16
        %v6897 = vrot.slane %v6895, 7
        %v6898 = vshll.u32 %v6637, 16
        %v6900 = vor.u32 %v6897, %v6898
        %v6901 = vrot.slane %v6897, 4
        %v6903 = vshrl.u32 %v6638, 16
        %v6905 = vrot.slane %v6903, 7
        %v6906 = vshll.u32 %v6638, 16
        %v6908 = vor.u32 %v6905, %v6906
        %v6909 = vsel %vm967, %v6901, %v6908
        %v6910 = vrot.slane %v6905, 4
        %v6959 = vld [vmem:[%s768] sm:$0xf]
        %v6960 = vsel %vm1289, %v6645, %v6959
        %6961 = vst [vmem:[%s768] sm:$0xf] %v6960
        %6962 = vst [vmem:[%s768 + $0x4] sm:$0xf] %v6654
        %v6963 = vld [vmem:[%s768 + $0x8] sm:$0x1]
        %v6964 = vsel %vm771, %v6655, %v6963
        %6965 = vst [vmem:[%s768 + $0x8] sm:$0x1] %v6964
        %v6966 = vld [vmem:[%s768 + $0xc] sm:$0xf]
        %v6967 = vsel %vm1289, %v6662, %v6966
        %6968 = vst [vmem:[%s768 + $0xc] sm:$0xf] %v6967
        %6969 = vst [vmem:[%s768 + $0x10] sm:$0xf] %v6671
        %v6970 = vld [vmem:[%s768 + $0x14] sm:$0x1]
        %v6971 = vsel %vm771, %v6672, %v6970
        %6972 = vst [vmem:[%s768 + $0x14] sm:$0x1] %v6971
        %v6973 = vld [vmem:[%s768 + $0x18] sm:$0xf]
        %v6974 = vsel %vm1289, %v6679, %v6973
        %6975 = vst [vmem:[%s768 + $0x18] sm:$0xf] %v6974
        %6976 = vst [vmem:[%s768 + $0x1c] sm:$0xf] %v6688
        %v6977 = vld [vmem:[%s768 + $0x20] sm:$0x1]
        %v6978 = vsel %vm771, %v6689, %v6977
        %6979 = vst [vmem:[%s768 + $0x20] sm:$0x1] %v6978
        %v6980 = vld [vmem:[%s768 + $0x24] sm:$0xf]
        %v6981 = vsel %vm1289, %v6696, %v6980
        %6982 = vst [vmem:[%s768 + $0x24] sm:$0xf] %v6981
        %6983 = vst [vmem:[%s768 + $0x28] sm:$0xf] %v6705
        %v6984 = vld [vmem:[%s768 + $0x2c] sm:$0x1]
        %v6985 = vsel %vm771, %v6706, %v6984
        %6986 = vst [vmem:[%s768 + $0x2c] sm:$0x1] %v6985
        %v6987 = vld [vmem:[%s768 + $0x30] sm:$0xf]
        %v6988 = vsel %vm1289, %v6713, %v6987
        %6989 = vst [vmem:[%s768 + $0x30] sm:$0xf] %v6988
        %6990 = vst [vmem:[%s768 + $0x34] sm:$0xf] %v6722
        %v6991 = vld [vmem:[%s768 + $0x38] sm:$0x1]
        %v6992 = vsel %vm771, %v6723, %v6991
        %6993 = vst [vmem:[%s768 + $0x38] sm:$0x1] %v6992
        %v6994 = vld [vmem:[%s768 + $0x3c] sm:$0xf]
        %v6995 = vsel %vm1289, %v6730, %v6994
        %6996 = vst [vmem:[%s768 + $0x3c] sm:$0xf] %v6995
        %6997 = vst [vmem:[%s768 + $0x40] sm:$0xf] %v6739
        %v6998 = vld [vmem:[%s768 + $0x44] sm:$0x1]
        %v6999 = vsel %vm771, %v6740, %v6998
        %7000 = vst [vmem:[%s768 + $0x44] sm:$0x1] %v6999
        %v7001 = vld [vmem:[%s768 + $0x48] sm:$0xf]
        %v7002 = vsel %vm1289, %v6747, %v7001
        %7003 = vst [vmem:[%s768 + $0x48] sm:$0xf] %v7002
        %7004 = vst [vmem:[%s768 + $0x4c] sm:$0xf] %v6756
        %v7005 = vld [vmem:[%s768 + $0x50] sm:$0x1]
        %v7006 = vsel %vm771, %v6757, %v7005
        %7007 = vst [vmem:[%s768 + $0x50] sm:$0x1] %v7006
        %v7008 = vld [vmem:[%s768 + $0x54] sm:$0xf]
        %v7009 = vsel %vm1289, %v6764, %v7008
        %7010 = vst [vmem:[%s768 + $0x54] sm:$0xf] %v7009
        %7011 = vst [vmem:[%s768 + $0x58] sm:$0xf] %v6773
        %v7012 = vld [vmem:[%s768 + $0x5c] sm:$0x1]
        %v7013 = vsel %vm771, %v6774, %v7012
        %7014 = vst [vmem:[%s768 + $0x5c] sm:$0x1] %v7013
        %v7015 = vld [vmem:[%s768 + $0x60] sm:$0xf]
        %v7016 = vsel %vm1289, %v6781, %v7015
        %7017 = vst [vmem:[%s768 + $0x60] sm:$0xf] %v7016
        %7018 = vst [vmem:[%s768 + $0x64] sm:$0xf] %v6790
        %v7019 = vld [vmem:[%s768 + $0x68] sm:$0x1]
        %v7020 = vsel %vm771, %v6791, %v7019
        %7021 = vst [vmem:[%s768 + $0x68] sm:$0x1] %v7020
        %v7022 = vld [vmem:[%s768 + $0x6c] sm:$0xf]
        %v7023 = vsel %vm1289, %v6798, %v7022
        %7024 = vst [vmem:[%s768 + $0x6c] sm:$0xf] %v7023
        %7025 = vst [vmem:[%s768 + $0x70] sm:$0xf] %v6807
        %v7026 = vld [vmem:[%s768 + $0x74] sm:$0x1]
        %v7027 = vsel %vm771, %v6808, %v7026
        %7028 = vst [vmem:[%s768 + $0x74] sm:$0x1] %v7027
        %v7029 = vld [vmem:[%s768 + $0x78] sm:$0xf]
        %v7030 = vsel %vm1289, %v6815, %v7029
        %7031 = vst [vmem:[%s768 + $0x78] sm:$0xf] %v7030
        %7032 = vst [vmem:[%s768 + $0x7c] sm:$0xf] %v6824
        %v7033 = vld [vmem:[%s768 + $0x80] sm:$0x1]
        %v7034 = vsel %vm771, %v6825, %v7033
        %7035 = vst [vmem:[%s768 + $0x80] sm:$0x1] %v7034
        %v7036 = vld [vmem:[%s768 + $0x84] sm:$0xf]
        %v7037 = vsel %vm1289, %v6832, %v7036
        %7038 = vst [vmem:[%s768 + $0x84] sm:$0xf] %v7037
        %7039 = vst [vmem:[%s768 + $0x88] sm:$0xf] %v6841
        %v7040 = vld [vmem:[%s768 + $0x8c] sm:$0x1]
        %v7041 = vsel %vm771, %v6842, %v7040
        %7042 = vst [vmem:[%s768 + $0x8c] sm:$0x1] %v7041
        %v7043 = vld [vmem:[%s768 + $0x90] sm:$0xf]
        %v7044 = vsel %vm1289, %v6849, %v7043
        %7045 = vst [vmem:[%s768 + $0x90] sm:$0xf] %v7044
        %7046 = vst [vmem:[%s768 + $0x94] sm:$0xf] %v6858
        %v7047 = vld [vmem:[%s768 + $0x98] sm:$0x1]
        %v7048 = vsel %vm771, %v6859, %v7047
        %7049 = vst [vmem:[%s768 + $0x98] sm:$0x1] %v7048
        %v7050 = vld [vmem:[%s768 + $0x9c] sm:$0xf]
        %v7051 = vsel %vm1289, %v6866, %v7050
        %7052 = vst [vmem:[%s768 + $0x9c] sm:$0xf] %v7051
        %7053 = vst [vmem:[%s768 + $0xa0] sm:$0xf] %v6875
        %v7054 = vld [vmem:[%s768 + $0xa4] sm:$0x1]
        %v7055 = vsel %vm771, %v6876, %v7054
        %7056 = vst [vmem:[%s768 + $0xa4] sm:$0x1] %v7055
        %v7057 = vld [vmem:[%s768 + $0xa8] sm:$0xf]
        %v7058 = vsel %vm1289, %v6883, %v7057
        %7059 = vst [vmem:[%s768 + $0xa8] sm:$0xf] %v7058
        %7060 = vst [vmem:[%s768 + $0xac] sm:$0xf] %v6892
        %v7061 = vld [vmem:[%s768 + $0xb0] sm:$0x1]
        %v7062 = vsel %vm771, %v6893, %v7061
        %7063 = vst [vmem:[%s768 + $0xb0] sm:$0x1] %v7062
        %v7064 = vld [vmem:[%s768 + $0xb4] sm:$0xf]
        %v7065 = vsel %vm1289, %v6900, %v7064
        %7066 = vst [vmem:[%s768 + $0xb4] sm:$0xf] %v7065
        %7067 = vst [vmem:[%s768 + $0xb8] sm:$0xf] %v6909
        %v7068 = vld [vmem:[%s768 + $0xbc] sm:$0x1]
        %v7069 = vsel %vm771, %v6910, %v7068
        %7070 = vst [vmem:[%s768 + $0xbc] sm:$0x1] %v7069
        %v7071 = vld [vmem:[#allocation2] sm:$0xf]
        %v7072 = vld [vmem:[#allocation2 + $0x4] sm:$0xf]
        %v7073 = vld [vmem:[#allocation2 + $0xc] sm:$0xf]
        %v7074 = vld [vmem:[#allocation2 + $0x10] sm:$0xf]
        %v7075 = vld [vmem:[#allocation2 + $0x18] sm:$0xf]
        %v7076 = vld [vmem:[#allocation2 + $0x1c] sm:$0xf]
        %v7077 = vld [vmem:[#allocation2 + $0x24] sm:$0xf]
        %v7078 = vld [vmem:[#allocation2 + $0x28] sm:$0xf]
        %v7079 = vld [vmem:[#allocation2 + $0x30] sm:$0xf]
        %v7080 = vld [vmem:[#allocation2 + $0x34] sm:$0xf]
        %v7081 = vld [vmem:[#allocation2 + $0x3c] sm:$0xf]
        %v7082 = vld [vmem:[#allocation2 + $0x40] sm:$0xf]
        %v7083 = vld [vmem:[#allocation2 + $0x48] sm:$0xf]
        %v7084 = vld [vmem:[#allocation2 + $0x4c] sm:$0xf]
        %v7085 = vld [vmem:[#allocation2 + $0x54] sm:$0xf]
        %v7086 = vld [vmem:[#allocation2 + $0x58] sm:$0xf]
        %v7087 = vld [vmem:[#allocation2 + $0x60] sm:$0xf]
        %v7088 = vld [vmem:[#allocation2 + $0x64] sm:$0xf]
        %v7089 = vld [vmem:[#allocation2 + $0x6c] sm:$0xf]
        %v7090 = vld [vmem:[#allocation2 + $0x70] sm:$0xf]
        %v7091 = vld [vmem:[#allocation2 + $0x78] sm:$0xf]
        %v7092 = vld [vmem:[#allocation2 + $0x7c] sm:$0xf]
        %v7093 = vld [vmem:[#allocation2 + $0x84] sm:$0xf]
        %v7094 = vld [vmem:[#allocation2 + $0x88] sm:$0xf]
        %v7095 = vld [vmem:[#allocation2 + $0x90] sm:$0xf]
        %v7096 = vld [vmem:[#allocation2 + $0x94] sm:$0xf]
        %v7097 = vld [vmem:[#allocation2 + $0x9c] sm:$0xf]
        %v7098 = vld [vmem:[#allocation2 + $0xa0] sm:$0xf]
        %v7099 = vld [vmem:[#allocation2 + $0xa8] sm:$0xf]
        %v7100 = vld [vmem:[#allocation2 + $0xac] sm:$0xf]
        %v7101 = vld [vmem:[#allocation2 + $0xb4] sm:$0xf]
        %v7102 = vld [vmem:[#allocation2 + $0xb8] sm:$0xf]
        %7103 = vst [vmem:[#allocation3] sm:$0xf] %v7071
        %7104 = vst [vmem:[#allocation3 + $0xc] sm:$0xf] %v7072
        %7105 = vst [vmem:[#allocation3 + $0x18] sm:$0xf] %v7073
        %7106 = vst [vmem:[#allocation3 + $0x24] sm:$0xf] %v7074
        %7107 = vst [vmem:[#allocation3 + $0x30] sm:$0xf] %v7075
        %7108 = vst [vmem:[#allocation3 + $0x3c] sm:$0xf] %v7076
        %7109 = vst [vmem:[#allocation3 + $0x48] sm:$0xf] %v7077
        %7110 = vst [vmem:[#allocation3 + $0x54] sm:$0xf] %v7078
        %7111 = vst [vmem:[#allocation3 + $0x60] sm:$0xf] %v7079
        %7112 = vst [vmem:[#allocation3 + $0x6c] sm:$0xf] %v7080
        %7113 = vst [vmem:[#allocation3 + $0x78] sm:$0xf] %v7081
        %7114 = vst [vmem:[#allocation3 + $0x84] sm:$0xf] %v7082
        %7115 = vst [vmem:[#allocation3 + $0x90] sm:$0xf] %v7083
        %7116 = vst [vmem:[#allocation3 + $0x9c] sm:$0xf] %v7084
        %7117 = vst [vmem:[#allocation3 + $0xa8] sm:$0xf] %v7085
        %7118 = vst [vmem:[#allocation3 + $0xb4] sm:$0xf] %v7086
        %7119 = vst [vmem:[#allocation3 + $0xc0] sm:$0xf] %v7087
        %7120 = vst [vmem:[#allocation3 + $0xcc] sm:$0xf] %v7088
        %7121 = vst [vmem:[#allocation3 + $0xd8] sm:$0xf] %v7089
        %7122 = vst [vmem:[#allocation3 + $0xe4] sm:$0xf] %v7090
        %7123 = vst [vmem:[#allocation3 + $0xf0] sm:$0xf] %v7091
        %7124 = vst [vmem:[#allocation3 + $0xfc] sm:$0xf] %v7092
        %7125 = vst [vmem:[#allocation3 + $0x108] sm:$0xf] %v7093
        %7126 = vst [vmem:[#allocation3 + $0x114] sm:$0xf] %v7094
        %7127 = vst [vmem:[#allocation3 + $0x120] sm:$0xf] %v7095
        %7128 = vst [vmem:[#allocation3 + $0x12c] sm:$0xf] %v7096
        %7129 = vst [vmem:[#allocation3 + $0x138] sm:$0xf] %v7097
        %7130 = vst [vmem:[#allocation3 + $0x144] sm:$0xf] %v7098
        %7131 = vst [vmem:[#allocation3 + $0x150] sm:$0xf] %v7099
        %7132 = vst [vmem:[#allocation3 + $0x15c] sm:$0xf] %v7100
        %7133 = vst [vmem:[#allocation3 + $0x168] sm:$0xf] %v7101
        %7134 = vst [vmem:[#allocation3 + $0x174] sm:$0xf] %v7102
        %v7135 = vld [vmem:[#allocation2] sm:$0xf]
        %v7136 = vld [vmem:[#allocation2 + $0x4] sm:$0xf]
        %v7137 = vld [vmem:[#allocation2 + $0x8] sm:$0x1]
        %v7138 = vld [vmem:[#allocation2 + $0xc] sm:$0xf]
        %v7139 = vld [vmem:[#allocation2 + $0x10] sm:$0xf]
        %v7140 = vld [vmem:[#allocation2 + $0x14] sm:$0x1]
        %v7141 = vld [vmem:[#allocation2 + $0x18] sm:$0xf]
        %v7142 = vld [vmem:[#allocation2 + $0x1c] sm:$0xf]
        %v7143 = vld [vmem:[#allocation2 + $0x20] sm:$0x1]
        %v7144 = vld [vmem:[#allocation2 + $0x24] sm:$0xf]
        %v7145 = vld [vmem:[#allocation2 + $0x28] sm:$0xf]
        %v7146 = vld [vmem:[#allocation2 + $0x2c] sm:$0x1]
        %v7147 = vld [vmem:[#allocation2 + $0x30] sm:$0xf]
        %v7148 = vld [vmem:[#allocation2 + $0x34] sm:$0xf]
        %v7149 = vld [vmem:[#allocation2 + $0x38] sm:$0x1]
        %v7150 = vld [vmem:[#allocation2 + $0x3c] sm:$0xf]
        %v7151 = vld [vmem:[#allocation2 + $0x40] sm:$0xf]
        %v7152 = vld [vmem:[#allocation2 + $0x44] sm:$0x1]
        %v7153 = vld [vmem:[#allocation2 + $0x48] sm:$0xf]
        %v7154 = vld [vmem:[#allocation2 + $0x4c] sm:$0xf]
        %v7155 = vld [vmem:[#allocation2 + $0x50] sm:$0x1]
        %v7156 = vld [vmem:[#allocation2 + $0x54] sm:$0xf]
        %v7157 = vld [vmem:[#allocation2 + $0x58] sm:$0xf]
        %v7158 = vld [vmem:[#allocation2 + $0x5c] sm:$0x1]
        %v7159 = vld [vmem:[#allocation2 + $0x60] sm:$0xf]
        %v7160 = vld [vmem:[#allocation2 + $0x64] sm:$0xf]
        %v7161 = vld [vmem:[#allocation2 + $0x68] sm:$0x1]
        %v7162 = vld [vmem:[#allocation2 + $0x6c] sm:$0xf]
        %v7163 = vld [vmem:[#allocation2 + $0x70] sm:$0xf]
        %v7164 = vld [vmem:[#allocation2 + $0x74] sm:$0x1]
        %v7165 = vld [vmem:[#allocation2 + $0x78] sm:$0xf]
        %v7166 = vld [vmem:[#allocation2 + $0x7c] sm:$0xf]
        %v7167 = vld [vmem:[#allocation2 + $0x80] sm:$0x1]
        %v7168 = vld [vmem:[#allocation2 + $0x84] sm:$0xf]
        %v7169 = vld [vmem:[#allocation2 + $0x88] sm:$0xf]
        %v7170 = vld [vmem:[#allocation2 + $0x8c] sm:$0x1]
        %v7171 = vld [vmem:[#allocation2 + $0x90] sm:$0xf]
        %v7172 = vld [vmem:[#allocation2 + $0x94] sm:$0xf]
        %v7173 = vld [vmem:[#allocation2 + $0x98] sm:$0x1]
        %v7174 = vld [vmem:[#allocation2 + $0x9c] sm:$0xf]
        %v7175 = vld [vmem:[#allocation2 + $0xa0] sm:$0xf]
        %v7176 = vld [vmem:[#allocation2 + $0xa4] sm:$0x1]
        %v7177 = vld [vmem:[#allocation2 + $0xa8] sm:$0xf]
        %v7178 = vld [vmem:[#allocation2 + $0xac] sm:$0xf]
        %v7179 = vld [vmem:[#allocation2 + $0xb0] sm:$0x1]
        %v7180 = vld [vmem:[#allocation2 + $0xb4] sm:$0xf]
        %v7181 = vld [vmem:[#allocation2 + $0xb8] sm:$0xf]
        %v7182 = vld [vmem:[#allocation2 + $0xbc] sm:$0x1]
        %v7184 = vshrl.u32 %v7135, 16
        %v7186 = vrot.slane %v7184, 4
        %v7187 = vshll.u32 %v7135, 16
        %v7189 = vrot.slane %v7187, 5
        %v7190 = vor.u32 %v7186, %v7189
        %v7191 = vrot.slane %v7190, 4
        %v7193 = vshll.u32 %v7136, 16
        %v7195 = vrot.slane %v7193, 5
        %v7196 = vsel %vm1516, %v7191, %v7195
        %v7197 = vshrl.u32 %v7136, 16
        %v7199 = vrot.slane %v7197, 4
        %v7200 = vor.u32 %v7199, %v7195
        %v7201 = vrot.slane %v7200, 4
        %v7203 = vshll.u32 %v7137, 16
        %v7205 = vrot.slane %v7203, 5
        %v7206 = vsel %vm1516, %v7201, %v7205
        %v7208 = vshrl.u32 %v7138, 16
        %v7210 = vrot.slane %v7208, 4
        %v7211 = vshll.u32 %v7138, 16
        %v7213 = vrot.slane %v7211, 5
        %v7214 = vor.u32 %v7210, %v7213
        %v7215 = vrot.slane %v7214, 4
        %v7217 = vshll.u32 %v7139, 16
        %v7219 = vrot.slane %v7217, 5
        %v7220 = vsel %vm1516, %v7215, %v7219
        %v7221 = vshrl.u32 %v7139, 16
        %v7223 = vrot.slane %v7221, 4
        %v7224 = vor.u32 %v7223, %v7219
        %v7225 = vrot.slane %v7224, 4
        %v7227 = vshll.u32 %v7140, 16
        %v7229 = vrot.slane %v7227, 5
        %v7230 = vsel %vm1516, %v7225, %v7229
        %v7232 = vshrl.u32 %v7141, 16
        %v7234 = vrot.slane %v7232, 4
        %v7235 = vshll.u32 %v7141, 16
        %v7237 = vrot.slane %v7235, 5
        %v7238 = vor.u32 %v7234, %v7237
        %v7239 = vrot.slane %v7238, 4
        %v7241 = vshll.u32 %v7142, 16
        %v7243 = vrot.slane %v7241, 5
        %v7244 = vsel %vm1516, %v7239, %v7243
        %v7245 = vshrl.u32 %v7142, 16
        %v7247 = vrot.slane %v7245, 4
        %v7248 = vor.u32 %v7247, %v7243
        %v7249 = vrot.slane %v7248, 4
        %v7251 = vshll.u32 %v7143, 16
        %v7253 = vrot.slane %v7251, 5
        %v7254 = vsel %vm1516, %v7249, %v7253
        %v7256 = vshrl.u32 %v7144, 16
        %v7258 = vrot.slane %v7256, 4
        %v7259 = vshll.u32 %v7144, 16
        %v7261 = vrot.slane %v7259, 5
        %v7262 = vor.u32 %v7258, %v7261
        %v7263 = vrot.slane %v7262, 4
        %v7265 = vshll.u32 %v7145, 16
        %v7267 = vrot.slane %v7265, 5
        %v7268 = vsel %vm1516, %v7263, %v7267
        %v7269 = vshrl.u32 %v7145, 16
        %v7271 = vrot.slane %v7269, 4
        %v7272 = vor.u32 %v7271, %v7267
        %v7273 = vrot.slane %v7272, 4
        %v7275 = vshll.u32 %v7146, 16
        %v7277 = vrot.slane %v7275, 5
        %v7278 = vsel %vm1516, %v7273, %v7277
        %v7280 = vshrl.u32 %v7147, 16
        %v7282 = vrot.slane %v7280, 4
        %v7283 = vshll.u32 %v7147, 16
        %v7285 = vrot.slane %v7283, 5
        %v7286 = vor.u32 %v7282, %v7285
        %v7287 = vrot.slane %v7286, 4
        %v7289 = vshll.u32 %v7148, 16
        %v7291 = vrot.slane %v7289, 5
        %v7292 = vsel %vm1516, %v7287, %v7291
        %v7293 = vshrl.u32 %v7148, 16
        %v7295 = vrot.slane %v7293, 4
        %v7296 = vor.u32 %v7295, %v7291
        %v7297 = vrot.slane %v7296, 4
        %v7299 = vshll.u32 %v7149, 16
        %v7301 = vrot.slane %v7299, 5
        %v7302 = vsel %vm1516, %v7297, %v7301
        %v7304 = vshrl.u32 %v7150, 16
        %v7306 = vrot.slane %v7304, 4
        %v7307 = vshll.u32 %v7150, 16
        %v7309 = vrot.slane %v7307, 5
        %v7310 = vor.u32 %v7306, %v7309
        %v7311 = vrot.slane %v7310, 4
        %v7313 = vshll.u32 %v7151, 16
        %v7315 = vrot.slane %v7313, 5
        %v7316 = vsel %vm1516, %v7311, %v7315
        %v7317 = vshrl.u32 %v7151, 16
        %v7319 = vrot.slane %v7317, 4
        %v7320 = vor.u32 %v7319, %v7315
        %v7321 = vrot.slane %v7320, 4
        %v7323 = vshll.u32 %v7152, 16
        %v7325 = vrot.slane %v7323, 5
        %v7326 = vsel %vm1516, %v7321, %v7325
        %v7328 = vshrl.u32 %v7153, 16
        %v7330 = vrot.slane %v7328, 4
        %v7331 = vshll.u32 %v7153, 16
        %v7333 = vrot.slane %v7331, 5
        %v7334 = vor.u32 %v7330, %v7333
        %v7335 = vrot.slane %v7334, 4
        %v7337 = vshll.u32 %v7154, 16
        %v7339 = vrot.slane %v7337, 5
        %v7340 = vsel %vm1516, %v7335, %v7339
        %v7341 = vshrl.u32 %v7154, 16
        %v7343 = vrot.slane %v7341, 4
        %v7344 = vor.u32 %v7343, %v7339
        %v7345 = vrot.slane %v7344, 4
        %v7347 = vshll.u32 %v7155, 16
        %v7349 = vrot.slane %v7347, 5
        %v7350 = vsel %vm1516, %v7345, %v7349
        %v7352 = vshrl.u32 %v7156, 16
        %v7354 = vrot.slane %v7352, 4
        %v7355 = vshll.u32 %v7156, 16
        %v7357 = vrot.slane %v7355, 5
        %v7358 = vor.u32 %v7354, %v7357
        %v7359 = vrot.slane %v7358, 4
        %v7361 = vshll.u32 %v7157, 16
        %v7363 = vrot.slane %v7361, 5
        %v7364 = vsel %vm1516, %v7359, %v7363
        %v7365 = vshrl.u32 %v7157, 16
        %v7367 = vrot.slane %v7365, 4
        %v7368 = vor.u32 %v7367, %v7363
        %v7369 = vrot.slane %v7368, 4
        %v7371 = vshll.u32 %v7158, 16
        %v7373 = vrot.slane %v7371, 5
        %v7374 = vsel %vm1516, %v7369, %v7373
        %v7376 = vshrl.u32 %v7159, 16
        %v7378 = vrot.slane %v7376, 4
        %v7379 = vshll.u32 %v7159, 16
        %v7381 = vrot.slane %v7379, 5
        %v7382 = vor.u32 %v7378, %v7381
        %v7383 = vrot.slane %v7382, 4
        %v7385 = vshll.u32 %v7160, 16
        %v7387 = vrot.slane %v7385, 5
        %v7388 = vsel %vm1516, %v7383, %v7387
        %v7389 = vshrl.u32 %v7160, 16
        %v7391 = vrot.slane %v7389, 4
        %v7392 = vor.u32 %v7391, %v7387
        %v7393 = vrot.slane %v7392, 4
        %v7395 = vshll.u32 %v7161, 16
        %v7397 = vrot.slane %v7395, 5
        %v7398 = vsel %vm1516, %v7393, %v7397
        %v7400 = vshrl.u32 %v7162, 16
        %v7402 = vrot.slane %v7400, 4
        %v7403 = vshll.u32 %v7162, 16
        %v7405 = vrot.slane %v7403, 5
        %v7406 = vor.u32 %v7402, %v7405
        %v7407 = vrot.slane %v7406, 4
        %v7409 = vshll.u32 %v7163, 16
        %v7411 = vrot.slane %v7409, 5
        %v7412 = vsel %vm1516, %v7407, %v7411
        %v7413 = vshrl.u32 %v7163, 16
        %v7415 = vrot.slane %v7413, 4
        %v7416 = vor.u32 %v7415, %v7411
        %v7417 = vrot.slane %v7416, 4
        %v7419 = vshll.u32 %v7164, 16
        %v7421 = vrot.slane %v7419, 5
        %v7422 = vsel %vm1516, %v7417, %v7421
        %v7424 = vshrl.u32 %v7165, 16
        %v7426 = vrot.slane %v7424, 4
        %v7427 = vshll.u32 %v7165, 16
        %v7429 = vrot.slane %v7427, 5
        %v7430 = vor.u32 %v7426, %v7429
        %v7431 = vrot.slane %v7430, 4
        %v7433 = vshll.u32 %v7166, 16
        %v7435 = vrot.slane %v7433, 5
        %v7436 = vsel %vm1516, %v7431, %v7435
        %v7437 = vshrl.u32 %v7166, 16
        %v7439 = vrot.slane %v7437, 4
        %v7440 = vor.u32 %v7439, %v7435
        %v7441 = vrot.slane %v7440, 4
        %v7443 = vshll.u32 %v7167, 16
        %v7445 = vrot.slane %v7443, 5
        %v7446 = vsel %vm1516, %v7441, %v7445
        %v7448 = vshrl.u32 %v7168, 16
        %v7450 = vrot.slane %v7448, 4
        %v7451 = vshll.u32 %v7168, 16
        %v7453 = vrot.slane %v7451, 5
        %v7454 = vor.u32 %v7450, %v7453
        %v7455 = vrot.slane %v7454, 4
        %v7457 = vshll.u32 %v7169, 16
        %v7459 = vrot.slane %v7457, 5
        %v7460 = vsel %vm1516, %v7455, %v7459
        %v7461 = vshrl.u32 %v7169, 16
        %v7463 = vrot.slane %v7461, 4
        %v7464 = vor.u32 %v7463, %v7459
        %v7465 = vrot.slane %v7464, 4
        %v7467 = vshll.u32 %v7170, 16
        %v7469 = vrot.slane %v7467, 5
        %v7470 = vsel %vm1516, %v7465, %v7469
        %v7472 = vshrl.u32 %v7171, 16
        %v7474 = vrot.slane %v7472, 4
        %v7475 = vshll.u32 %v7171, 16
        %v7477 = vrot.slane %v7475, 5
        %v7478 = vor.u32 %v7474, %v7477
        %v7479 = vrot.slane %v7478, 4
        %v7481 = vshll.u32 %v7172, 16
        %v7483 = vrot.slane %v7481, 5
        %v7484 = vsel %vm1516, %v7479, %v7483
        %v7485 = vshrl.u32 %v7172, 16
        %v7487 = vrot.slane %v7485, 4
        %v7488 = vor.u32 %v7487, %v7483
        %v7489 = vrot.slane %v7488, 4
        %v7491 = vshll.u32 %v7173, 16
        %v7493 = vrot.slane %v7491, 5
        %v7494 = vsel %vm1516, %v7489, %v7493
        %v7496 = vshrl.u32 %v7174, 16
        %v7498 = vrot.slane %v7496, 4
        %v7499 = vshll.u32 %v7174, 16
        %v7501 = vrot.slane %v7499, 5
        %v7502 = vor.u32 %v7498, %v7501
        %v7503 = vrot.slane %v7502, 4
        %v7505 = vshll.u32 %v7175, 16
        %v7507 = vrot.slane %v7505, 5
        %v7508 = vsel %vm1516, %v7503, %v7507
        %v7509 = vshrl.u32 %v7175, 16
        %v7511 = vrot.slane %v7509, 4
        %v7512 = vor.u32 %v7511, %v7507
        %v7513 = vrot.slane %v7512, 4
        %v7515 = vshll.u32 %v7176, 16
        %v7517 = vrot.slane %v7515, 5
        %v7518 = vsel %vm1516, %v7513, %v7517
        %v7520 = vshrl.u32 %v7177, 16
        %v7522 = vrot.slane %v7520, 4
        %v7523 = vshll.u32 %v7177, 16
        %v7525 = vrot.slane %v7523, 5
        %v7526 = vor.u32 %v7522, %v7525
        %v7527 = vrot.slane %v7526, 4
        %v7529 = vshll.u32 %v7178, 16
        %v7531 = vrot.slane %v7529, 5
        %v7532 = vsel %vm1516, %v7527, %v7531
        %v7533 = vshrl.u32 %v7178, 16
        %v7535 = vrot.slane %v7533, 4
        %v7536 = vor.u32 %v7535, %v7531
        %v7537 = vrot.slane %v7536, 4
        %v7539 = vshll.u32 %v7179, 16
        %v7541 = vrot.slane %v7539, 5
        %v7542 = vsel %vm1516, %v7537, %v7541
        %v7544 = vshrl.u32 %v7180, 16
        %v7546 = vrot.slane %v7544, 4
        %v7547 = vshll.u32 %v7180, 16
        %v7549 = vrot.slane %v7547, 5
        %v7550 = vor.u32 %v7546, %v7549
        %v7551 = vrot.slane %v7550, 4
        %v7553 = vshll.u32 %v7181, 16
        %v7555 = vrot.slane %v7553, 5
        %v7556 = vsel %vm1516, %v7551, %v7555
        %v7557 = vshrl.u32 %v7181, 16
        %v7559 = vrot.slane %v7557, 4
        %v7560 = vor.u32 %v7559, %v7555
        %v7561 = vrot.slane %v7560, 4
        %v7563 = vshll.u32 %v7182, 16
        %v7565 = vrot.slane %v7563, 5
        %v7566 = vsel %vm1516, %v7561, %v7565
        %7599 = vst [vmem:[#allocation3 + $0x4] sm:$0xf] %v7196
        %7600 = vst [vmem:[#allocation3 + $0x10] sm:$0xf] %v7206
        %7601 = vst [vmem:[#allocation3 + $0x1c] sm:$0xf] %v7220
        %7602 = vst [vmem:[#allocation3 + $0x28] sm:$0xf] %v7230
        %7603 = vst [vmem:[#allocation3 + $0x34] sm:$0xf] %v7244
        %7604 = vst [vmem:[#allocation3 + $0x40] sm:$0xf] %v7254
        %7605 = vst [vmem:[#allocation3 + $0x4c] sm:$0xf] %v7268
        %7606 = vst [vmem:[#allocation3 + $0x58] sm:$0xf] %v7278
        %7607 = vst [vmem:[#allocation3 + $0x64] sm:$0xf] %v7292
        %7608 = vst [vmem:[#allocation3 + $0x70] sm:$0xf] %v7302
        %7609 = vst [vmem:[#allocation3 + $0x7c] sm:$0xf] %v7316
        %7610 = vst [vmem:[#allocation3 + $0x88] sm:$0xf] %v7326
        %7611 = vst [vmem:[#allocation3 + $0x94] sm:$0xf] %v7340
        %7612 = vst [vmem:[#allocation3 + $0xa0] sm:$0xf] %v7350
        %7613 = vst [vmem:[#allocation3 + $0xac] sm:$0xf] %v7364
        %7614 = vst [vmem:[#allocation3 + $0xb8] sm:$0xf] %v7374
        %7615 = vst [vmem:[#allocation3 + $0xc4] sm:$0xf] %v7388
        %7616 = vst [vmem:[#allocation3 + $0xd0] sm:$0xf] %v7398
        %7617 = vst [vmem:[#allocation3 + $0xdc] sm:$0xf] %v7412
        %7618 = vst [vmem:[#allocation3 + $0xe8] sm:$0xf] %v7422
        %7619 = vst [vmem:[#allocation3 + $0xf4] sm:$0xf] %v7436
        %7620 = vst [vmem:[#allocation3 + $0x100] sm:$0xf] %v7446
        %7621 = vst [vmem:[#allocation3 + $0x10c] sm:$0xf] %v7460
        %7622 = vst [vmem:[#allocation3 + $0x118] sm:$0xf] %v7470
        %7623 = vst [vmem:[#allocation3 + $0x124] sm:$0xf] %v7484
        %7624 = vst [vmem:[#allocation3 + $0x130] sm:$0xf] %v7494
        %7625 = vst [vmem:[#allocation3 + $0x13c] sm:$0xf] %v7508
        %7626 = vst [vmem:[#allocation3 + $0x148] sm:$0xf] %v7518
        %7627 = vst [vmem:[#allocation3 + $0x154] sm:$0xf] %v7532
        %7628 = vst [vmem:[#allocation3 + $0x160] sm:$0xf] %v7542
        %7629 = vst [vmem:[#allocation3 + $0x16c] sm:$0xf] %v7556
        %7630 = vst [vmem:[#allocation3 + $0x178] sm:$0xf] %v7566
        %v7631 = vld [vmem:[#allocation2] sm:$0xe]
        %v7632 = vld [vmem:[#allocation2 + $0x4] sm:$0xf]
        %v7633 = vld [vmem:[#allocation2 + $0x8] sm:$0x1]
        %v7634 = vld [vmem:[#allocation2 + $0xc] sm:$0xe]
        %v7635 = vld [vmem:[#allocation2 + $0x10] sm:$0xf]
        %v7636 = vld [vmem:[#allocation2 + $0x14] sm:$0x1]
        %v7637 = vld [vmem:[#allocation2 + $0x18] sm:$0xe]
        %v7638 = vld [vmem:[#allocation2 + $0x1c] sm:$0xf]
        %v7639 = vld [vmem:[#allocation2 + $0x20] sm:$0x1]
        %v7640 = vld [vmem:[#allocation2 + $0x24] sm:$0xe]
        %v7641 = vld [vmem:[#allocation2 + $0x28] sm:$0xf]
        %v7642 = vld [vmem:[#allocation2 + $0x2c] sm:$0x1]
        %v7643 = vld [vmem:[#allocation2 + $0x30] sm:$0xe]
        %v7644 = vld [vmem:[#allocation2 + $0x34] sm:$0xf]
        %v7645 = vld [vmem:[#allocation2 + $0x38] sm:$0x1]
        %v7646 = vld [vmem:[#allocation2 + $0x3c] sm:$0xe]
        %v7647 = vld [vmem:[#allocation2 + $0x40] sm:$0xf]
        %v7648 = vld [vmem:[#allocation2 + $0x44] sm:$0x1]
        %v7649 = vld [vmem:[#allocation2 + $0x48] sm:$0xe]
        %v7650 = vld [vmem:[#allocation2 + $0x4c] sm:$0xf]
        %v7651 = vld [vmem:[#allocation2 + $0x50] sm:$0x1]
        %v7652 = vld [vmem:[#allocation2 + $0x54] sm:$0xe]
        %v7653 = vld [vmem:[#allocation2 + $0x58] sm:$0xf]
        %v7654 = vld [vmem:[#allocation2 + $0x5c] sm:$0x1]
        %v7655 = vld [vmem:[#allocation2 + $0x60] sm:$0xe]
        %v7656 = vld [vmem:[#allocation2 + $0x64] sm:$0xf]
        %v7657 = vld [vmem:[#allocation2 + $0x68] sm:$0x1]
        %v7658 = vld [vmem:[#allocation2 + $0x6c] sm:$0xe]
        %v7659 = vld [vmem:[#allocation2 + $0x70] sm:$0xf]
        %v7660 = vld [vmem:[#allocation2 + $0x74] sm:$0x1]
        %v7661 = vld [vmem:[#allocation2 + $0x78] sm:$0xe]
        %v7662 = vld [vmem:[#allocation2 + $0x7c] sm:$0xf]
        %v7663 = vld [vmem:[#allocation2 + $0x80] sm:$0x1]
        %v7664 = vld [vmem:[#allocation2 + $0x84] sm:$0xe]
        %v7665 = vld [vmem:[#allocation2 + $0x88] sm:$0xf]
        %v7666 = vld [vmem:[#allocation2 + $0x8c] sm:$0x1]
        %v7667 = vld [vmem:[#allocation2 + $0x90] sm:$0xe]
        %v7668 = vld [vmem:[#allocation2 + $0x94] sm:$0xf]
        %v7669 = vld [vmem:[#allocation2 + $0x98] sm:$0x1]
        %v7670 = vld [vmem:[#allocation2 + $0x9c] sm:$0xe]
        %v7671 = vld [vmem:[#allocation2 + $0xa0] sm:$0xf]
        %v7672 = vld [vmem:[#allocation2 + $0xa4] sm:$0x1]
        %v7673 = vld [vmem:[#allocation2 + $0xa8] sm:$0xe]
        %v7674 = vld [vmem:[#allocation2 + $0xac] sm:$0xf]
        %v7675 = vld [vmem:[#allocation2 + $0xb0] sm:$0x1]
        %v7676 = vld [vmem:[#allocation2 + $0xb4] sm:$0xe]
        %v7677 = vld [vmem:[#allocation2 + $0xb8] sm:$0xf]
        %v7678 = vld [vmem:[#allocation2 + $0xbc] sm:$0x1]
        %v7727 = vrot.slane %v7631, 5
        %v7728 = vrot.slane %v7727, 4
        %v7729 = vrot.slane %v7632, 5
        %v7730 = vsel %vm2063, %v7728, %v7729
        %v7731 = vrot.slane %v7729, 4
        %v7732 = vrot.slane %v7633, 5
        %v7733 = vsel %vm2063, %v7731, %v7732
        %v7734 = vrot.slane %v7634, 5
        %v7735 = vrot.slane %v7734, 4
        %v7736 = vrot.slane %v7635, 5
        %v7737 = vsel %vm2063, %v7735, %v7736
        %v7738 = vrot.slane %v7736, 4
        %v7739 = vrot.slane %v7636, 5
        %v7740 = vsel %vm2063, %v7738, %v7739
        %v7741 = vrot.slane %v7637, 5
        %v7742 = vrot.slane %v7741, 4
        %v7743 = vrot.slane %v7638, 5
        %v7744 = vsel %vm2063, %v7742, %v7743
        %v7745 = vrot.slane %v7743, 4
        %v7746 = vrot.slane %v7639, 5
        %v7747 = vsel %vm2063, %v7745, %v7746
        %v7748 = vrot.slane %v7640, 5
        %v7749 = vrot.slane %v7748, 4
        %v7750 = vrot.slane %v7641, 5
        %v7751 = vsel %vm2063, %v7749, %v7750
        %v7752 = vrot.slane %v7750, 4
        %v7753 = vrot.slane %v7642, 5
        %v7754 = vsel %vm2063, %v7752, %v7753
        %v7755 = vrot.slane %v7643, 5
        %v7756 = vrot.slane %v7755, 4
        %v7757 = vrot.slane %v7644, 5
        %v7758 = vsel %vm2063, %v7756, %v7757
        %v7759 = vrot.slane %v7757, 4
        %v7760 = vrot.slane %v7645, 5
        %v7761 = vsel %vm2063, %v7759, %v7760
        %v7762 = vrot.slane %v7646, 5
        %v7763 = vrot.slane %v7762, 4
        %v7764 = vrot.slane %v7647, 5
        %v7765 = vsel %vm2063, %v7763, %v7764
        %v7766 = vrot.slane %v7764, 4
        %v7767 = vrot.slane %v7648, 5
        %v7768 = vsel %vm2063, %v7766, %v7767
        %v7769 = vrot.slane %v7649, 5
        %v7770 = vrot.slane %v7769, 4
        %v7771 = vrot.slane %v7650, 5
        %v7772 = vsel %vm2063, %v7770, %v7771
        %v7773 = vrot.slane %v7771, 4
        %v7774 = vrot.slane %v7651, 5
        %v7775 = vsel %vm2063, %v7773, %v7774
        %v7776 = vrot.slane %v7652, 5
        %v7777 = vrot.slane %v7776, 4
        %v7778 = vrot.slane %v7653, 5
        %v7779 = vsel %vm2063, %v7777, %v7778
        %v7780 = vrot.slane %v7778, 4
        %v7781 = vrot.slane %v7654, 5
        %v7782 = vsel %vm2063, %v7780, %v7781
        %v7783 = vrot.slane %v7655, 5
        %v7784 = vrot.slane %v7783, 4
        %v7785 = vrot.slane %v7656, 5
        %v7786 = vsel %vm2063, %v7784, %v7785
        %v7787 = vrot.slane %v7785, 4
        %v7788 = vrot.slane %v7657, 5
        %v7789 = vsel %vm2063, %v7787, %v7788
        %v7790 = vrot.slane %v7658, 5
        %v7791 = vrot.slane %v7790, 4
        %v7792 = vrot.slane %v7659, 5
        %v7793 = vsel %vm2063, %v7791, %v7792
        %v7794 = vrot.slane %v7792, 4
        %v7795 = vrot.slane %v7660, 5
        %v7796 = vsel %vm2063, %v7794, %v7795
        %v7797 = vrot.slane %v7661, 5
        %v7798 = vrot.slane %v7797, 4
        %v7799 = vrot.slane %v7662, 5
        %v7800 = vsel %vm2063, %v7798, %v7799
        %v7801 = vrot.slane %v7799, 4
        %v7802 = vrot.slane %v7663, 5
        %v7803 = vsel %vm2063, %v7801, %v7802
        %v7804 = vrot.slane %v7664, 5
        %v7805 = vrot.slane %v7804, 4
        %v7806 = vrot.slane %v7665, 5
        %v7807 = vsel %vm2063, %v7805, %v7806
        %v7808 = vrot.slane %v7806, 4
        %v7809 = vrot.slane %v7666, 5
        %v7810 = vsel %vm2063, %v7808, %v7809
        %v7811 = vrot.slane %v7667, 5
        %v7812 = vrot.slane %v7811, 4
        %v7813 = vrot.slane %v7668, 5
        %v7814 = vsel %vm2063, %v7812, %v7813
        %v7815 = vrot.slane %v7813, 4
        %v7816 = vrot.slane %v7669, 5
        %v7817 = vsel %vm2063, %v7815, %v7816
        %v7818 = vrot.slane %v7670, 5
        %v7819 = vrot.slane %v7818, 4
        %v7820 = vrot.slane %v7671, 5
        %v7821 = vsel %vm2063, %v7819, %v7820
        %v7822 = vrot.slane %v7820, 4
        %v7823 = vrot.slane %v7672, 5
        %v7824 = vsel %vm2063, %v7822, %v7823
        %v7825 = vrot.slane %v7673, 5
        %v7826 = vrot.slane %v7825, 4
        %v7827 = vrot.slane %v7674, 5
        %v7828 = vsel %vm2063, %v7826, %v7827
        %v7829 = vrot.slane %v7827, 4
        %v7830 = vrot.slane %v7675, 5
        %v7831 = vsel %vm2063, %v7829, %v7830
        %v7832 = vrot.slane %v7676, 5
        %v7833 = vrot.slane %v7832, 4
        %v7834 = vrot.slane %v7677, 5
        %v7835 = vsel %vm2063, %v7833, %v7834
        %v7836 = vrot.slane %v7834, 4
        %v7837 = vrot.slane %v7678, 5
        %v7838 = vsel %vm2063, %v7836, %v7837
        %7871 = vst [vmem:[#allocation3 + $0x8] sm:$0xf] %v7730
        %7872 = vst [vmem:[#allocation3 + $0x14] sm:$0xf] %v7733
        %7873 = vst [vmem:[#allocation3 + $0x20] sm:$0xf] %v7737
        %7874 = vst [vmem:[#allocation3 + $0x2c] sm:$0xf] %v7740
        %7875 = vst [vmem:[#allocation3 + $0x38] sm:$0xf] %v7744
        %7876 = vst [vmem:[#allocation3 + $0x44] sm:$0xf] %v7747
        %7877 = vst [vmem:[#allocation3 + $0x50] sm:$0xf] %v7751
        %7878 = vst [vmem:[#allocation3 + $0x5c] sm:$0xf] %v7754
        %7879 = vst [vmem:[#allocation3 + $0x68] sm:$0xf] %v7758
        %7880 = vst [vmem:[#allocation3 + $0x74] sm:$0xf] %v7761
        %7881 = vst [vmem:[#allocation3 + $0x80] sm:$0xf] %v7765
        %7882 = vst [vmem:[#allocation3 + $0x8c] sm:$0xf] %v7768
        %7883 = vst [vmem:[#allocation3 + $0x98] sm:$0xf] %v7772
        %7884 = vst [vmem:[#allocation3 + $0xa4] sm:$0xf] %v7775
        %7885 = vst [vmem:[#allocation3 + $0xb0] sm:$0xf] %v7779
        %7886 = vst [vmem:[#allocation3 + $0xbc] sm:$0xf] %v7782
        %7887 = vst [vmem:[#allocation3 + $0xc8] sm:$0xf] %v7786
        %7888 = vst [vmem:[#allocation3 + $0xd4] sm:$0xf] %v7789
        %7889 = vst [vmem:[#allocation3 + $0xe0] sm:$0xf] %v7793
        %7890 = vst [vmem:[#allocation3 + $0xec] sm:$0xf] %v7796
        %7891 = vst [vmem:[#allocation3 + $0xf8] sm:$0xf] %v7800
        %7892 = vst [vmem:[#allocation3 + $0x104] sm:$0xf] %v7803
        %7893 = vst [vmem:[#allocation3 + $0x110] sm:$0xf] %v7807
        %7894 = vst [vmem:[#allocation3 + $0x11c] sm:$0xf] %v7810
        %7895 = vst [vmem:[#allocation3 + $0x128] sm:$0xf] %v7814
        %7896 = vst [vmem:[#allocation3 + $0x134] sm:$0xf] %v7817
        %7897 = vst [vmem:[#allocation3 + $0x140] sm:$0xf] %v7821
        %7898 = vst [vmem:[#allocation3 + $0x14c] sm:$0xf] %v7824
        %7899 = vst [vmem:[#allocation3 + $0x158] sm:$0xf] %v7828
        %7900 = vst [vmem:[#allocation3 + $0x164] sm:$0xf] %v7831
        %7901 = vst [vmem:[#allocation3 + $0x170] sm:$0xf] %v7835
        %7902 = vst [vmem:[#allocation3 + $0x17c] sm:$0xf] %v7838
        %v7903 = vld [vmem:[#allocation3] sm:$0xff]
        %v7904 = vld [vmem:[#allocation3 + $0x8] sm:$0xf]
        %v7905 = vld [vmem:[#allocation3 + $0xc] sm:$0xff]
        %v7906 = vld [vmem:[#allocation3 + $0x14] sm:$0xf]
        %v7907 = vld [vmem:[#allocation3 + $0x18] sm:$0xff]
        %v7908 = vld [vmem:[#allocation3 + $0x20] sm:$0xf]
        %v7909 = vld [vmem:[#allocation3 + $0x24] sm:$0xff]
        %v7910 = vld [vmem:[#allocation3 + $0x2c] sm:$0xf]
        %v7911 = vld [vmem:[#allocation3 + $0x30] sm:$0xff]
        %v7912 = vld [vmem:[#allocation3 + $0x38] sm:$0xf]
        %v7913 = vld [vmem:[#allocation3 + $0x3c] sm:$0xff]
        %v7914 = vld [vmem:[#allocation3 + $0x44] sm:$0xf]
        %v7915 = vld [vmem:[#allocation3 + $0x48] sm:$0xff]
        %v7916 = vld [vmem:[#allocation3 + $0x50] sm:$0xf]
        %v7917 = vld [vmem:[#allocation3 + $0x54] sm:$0xff]
        %v7918 = vld [vmem:[#allocation3 + $0x5c] sm:$0xf]
        %v7919 = vld [vmem:[#allocation3 + $0x60] sm:$0xff]
        %v7920 = vld [vmem:[#allocation3 + $0x68] sm:$0xf]
        %v7921 = vld [vmem:[#allocation3 + $0x6c] sm:$0xff]
        %v7922 = vld [vmem:[#allocation3 + $0x74] sm:$0xf]
        %v7923 = vld [vmem:[#allocation3 + $0x78] sm:$0xff]
        %v7924 = vld [vmem:[#allocation3 + $0x80] sm:$0xf]
        %v7925 = vld [vmem:[#allocation3 + $0x84] sm:$0xff]
        %v7926 = vld [vmem:[#allocation3 + $0x8c] sm:$0xf]
        %v7927 = vld [vmem:[#allocation3 + $0x90] sm:$0xff]
        %v7928 = vld [vmem:[#allocation3 + $0x98] sm:$0xf]
        %v7929 = vld [vmem:[#allocation3 + $0x9c] sm:$0xff]
        %v7930 = vld [vmem:[#allocation3 + $0xa4] sm:$0xf]
        %v7931 = vld [vmem:[#allocation3 + $0xa8] sm:$0xff]
        %v7932 = vld [vmem:[#allocation3 + $0xb0] sm:$0xf]
        %v7933 = vld [vmem:[#allocation3 + $0xb4] sm:$0xff]
        %v7934 = vld [vmem:[#allocation3 + $0xbc] sm:$0xf]
        %v7935 = vld [vmem:[#allocation3 + $0xc0] sm:$0xff]
        %v7936 = vld [vmem:[#allocation3 + $0xc8] sm:$0xf]
        %v7937 = vld [vmem:[#allocation3 + $0xcc] sm:$0xff]
        %v7938 = vld [vmem:[#allocation3 + $0xd4] sm:$0xf]
        %v7939 = vld [vmem:[#allocation3 + $0xd8] sm:$0xff]
        %v7940 = vld [vmem:[#allocation3 + $0xe0] sm:$0xf]
        %v7941 = vld [vmem:[#allocation3 + $0xe4] sm:$0xff]
        %v7942 = vld [vmem:[#allocation3 + $0xec] sm:$0xf]
        %v7943 = vld [vmem:[#allocation3 + $0xf0] sm:$0xff]
        %v7944 = vld [vmem:[#allocation3 + $0xf8] sm:$0xf]
        %v7945 = vld [vmem:[#allocation3 + $0xfc] sm:$0xff]
        %v7946 = vld [vmem:[#allocation3 + $0x104] sm:$0xf]
        %v7947 = vld [vmem:[#allocation3 + $0x108] sm:$0xff]
        %v7948 = vld [vmem:[#allocation3 + $0x110] sm:$0xf]
        %v7949 = vld [vmem:[#allocation3 + $0x114] sm:$0xff]
        %v7950 = vld [vmem:[#allocation3 + $0x11c] sm:$0xf]
        %v7951 = vld [vmem:[#allocation3 + $0x120] sm:$0xff]
        %v7952 = vld [vmem:[#allocation3 + $0x128] sm:$0xf]
        %v7953 = vld [vmem:[#allocation3 + $0x12c] sm:$0xff]
        %v7954 = vld [vmem:[#allocation3 + $0x134] sm:$0xf]
        %v7955 = vld [vmem:[#allocation3 + $0x138] sm:$0xff]
        %v7956 = vld [vmem:[#allocation3 + $0x140] sm:$0xf]
        %v7957 = vld [vmem:[#allocation3 + $0x144] sm:$0xff]
        %v7958 = vld [vmem:[#allocation3 + $0x14c] sm:$0xf]
        %v7959 = vld [vmem:[#allocation3 + $0x150] sm:$0xff]
        %v7960 = vld [vmem:[#allocation3 + $0x158] sm:$0xf]
        %v7961 = vld [vmem:[#allocation3 + $0x15c] sm:$0xff]
        %v7962 = vld [vmem:[#allocation3 + $0x164] sm:$0xf]
        %v7963 = vld [vmem:[#allocation3 + $0x168] sm:$0xff]
        %v7964 = vld [vmem:[#allocation3 + $0x170] sm:$0xf]
        %v7965 = vld [vmem:[#allocation3 + $0x174] sm:$0xff]
        %v7966 = vld [vmem:[#allocation3 + $0x17c] sm:$0xf]
        %v7967 = vld [vmem:[#allocation10] sm:$0xf]
        %v7968 = vld [vmem:[#allocation10 + $0x4] sm:$0xf]
        %v7969 = vld [vmem:[#allocation10 + $0x8] sm:$0xf]
        %v7970 = vld [vmem:[#allocation10 + $0xc] sm:$0xf]
        %v7971 = vld [vmem:[#allocation10 + $0x10] sm:$0xf]
        %v7972 = vld [vmem:[#allocation10 + $0x14] sm:$0xf]
        %v7973 = vld [vmem:[#allocation10 + $0x18] sm:$0xf]
        %v7974 = vld [vmem:[#allocation10 + $0x1c] sm:$0xf]
        %v7975 = vld [vmem:[#allocation10 + $0x20] sm:$0xf]
        %v7976 = vld [vmem:[#allocation10 + $0x24] sm:$0xf]
        %v7977 = vld [vmem:[#allocation10 + $0x28] sm:$0xf]
        %v7978 = vld [vmem:[#allocation10 + $0x2c] sm:$0xf]
        %v7979 = vld [vmem:[#allocation10 + $0x30] sm:$0xf]
        %v7980 = vld [vmem:[#allocation10 + $0x34] sm:$0xf]
        %v7981 = vld [vmem:[#allocation10 + $0x38] sm:$0xf]
        %v7982 = vld [vmem:[#allocation10 + $0x3c] sm:$0xf]
        %v7983 = vld [vmem:[#allocation10 + $0x40] sm:$0xf]
        %v7984 = vld [vmem:[#allocation10 + $0x44] sm:$0xf]
        %v7985 = vld [vmem:[#allocation10 + $0x48] sm:$0xf]
        %v7986 = vld [vmem:[#allocation10 + $0x4c] sm:$0xf]
        %v7987 = vld [vmem:[#allocation10 + $0x50] sm:$0xf]
        %v7988 = vld [vmem:[#allocation10 + $0x54] sm:$0xf]
        %v7989 = vld [vmem:[#allocation10 + $0x58] sm:$0xf]
        %v7990 = vld [vmem:[#allocation10 + $0x5c] sm:$0xf]
        %v7991 = vld [vmem:[#allocation10 + $0x60] sm:$0xf]
        %v7992 = vld [vmem:[#allocation10 + $0x64] sm:$0xf]
        %v7993 = vld [vmem:[#allocation10 + $0x68] sm:$0xf]
        %v7994 = vld [vmem:[#allocation10 + $0x6c] sm:$0xf]
        %v7995 = vld [vmem:[#allocation10 + $0x70] sm:$0xf]
        %v7996 = vld [vmem:[#allocation10 + $0x74] sm:$0xf]
        %v7997 = vld [vmem:[#allocation10 + $0x78] sm:$0xf]
        %v7998 = vld [vmem:[#allocation10 + $0x7c] sm:$0xf]
        %v7999 = vld [vmem:[#allocation10 + $0x80] sm:$0xf]
        %v8000 = vld [vmem:[#allocation10 + $0x84] sm:$0xf]
        %v8001 = vld [vmem:[#allocation10 + $0x88] sm:$0xf]
        %v8002 = vld [vmem:[#allocation10 + $0x8c] sm:$0xf]
        %v8003 = vld [vmem:[#allocation10 + $0x90] sm:$0xf]
        %v8004 = vld [vmem:[#allocation10 + $0x94] sm:$0xf]
        %v8005 = vld [vmem:[#allocation10 + $0x98] sm:$0xf]
        %v8006 = vld [vmem:[#allocation10 + $0x9c] sm:$0xf]
        %v8007 = vld [vmem:[#allocation10 + $0xa0] sm:$0xf]
        %v8008 = vld [vmem:[#allocation10 + $0xa4] sm:$0xf]
        %v8009 = vld [vmem:[#allocation10 + $0xa8] sm:$0xf]
        %v8010 = vld [vmem:[#allocation10 + $0xac] sm:$0xf]
        %v8011 = vld [vmem:[#allocation10 + $0xb0] sm:$0xf]
        %v8012 = vld [vmem:[#allocation10 + $0xb4] sm:$0xf]
        %v8013 = vld [vmem:[#allocation10 + $0xb8] sm:$0xf]
        %v8014 = vld [vmem:[#allocation10 + $0xbc] sm:$0xf]
        %v8015 = vld [vmem:[%s768] sm:$0xf]
        %v8016 = vld [vmem:[%s768 + $0x4] sm:$0xf]
        %v8017 = vld [vmem:[%s768 + $0xc] sm:$0xf]
        %v8018 = vld [vmem:[%s768 + $0x10] sm:$0xf]
        %v8019 = vld [vmem:[%s768 + $0x18] sm:$0xf]
        %v8020 = vld [vmem:[%s768 + $0x1c] sm:$0xf]
        %v8021 = vld [vmem:[%s768 + $0x24] sm:$0xf]
        %v8022 = vld [vmem:[%s768 + $0x28] sm:$0xf]
        %v8023 = vld [vmem:[%s768 + $0x30] sm:$0xf]
        %v8024 = vld [vmem:[%s768 + $0x34] sm:$0xf]
        %v8025 = vld [vmem:[%s768 + $0x3c] sm:$0xf]
        %v8026 = vld [vmem:[%s768 + $0x40] sm:$0xf]
        %v8027 = vld [vmem:[%s768 + $0x48] sm:$0xf]
        %v8028 = vld [vmem:[%s768 + $0x4c] sm:$0xf]
        %v8029 = vld [vmem:[%s768 + $0x54] sm:$0xf]
        %v8030 = vld [vmem:[%s768 + $0x58] sm:$0xf]
        %v8031 = vld [vmem:[%s768 + $0x60] sm:$0xf]
        %v8032 = vld [vmem:[%s768 + $0x64] sm:$0xf]
        %v8033 = vld [vmem:[%s768 + $0x6c] sm:$0xf]
        %v8034 = vld [vmem:[%s768 + $0x70] sm:$0xf]
        %v8035 = vld [vmem:[%s768 + $0x78] sm:$0xf]
        %v8036 = vld [vmem:[%s768 + $0x7c] sm:$0xf]
        %v8037 = vld [vmem:[%s768 + $0x84] sm:$0xf]
        %v8038 = vld [vmem:[%s768 + $0x88] sm:$0xf]
        %v8039 = vld [vmem:[%s768 + $0x90] sm:$0xf]
        %v8040 = vld [vmem:[%s768 + $0x94] sm:$0xf]
        %v8041 = vld [vmem:[%s768 + $0x9c] sm:$0xf]
        %v8042 = vld [vmem:[%s768 + $0xa0] sm:$0xf]
        %v8043 = vld [vmem:[%s768 + $0xa8] sm:$0xf]
        %v8044 = vld [vmem:[%s768 + $0xac] sm:$0xf]
        %v8045 = vld [vmem:[%s768 + $0xb4] sm:$0xf]
        %v8046 = vld [vmem:[%s768 + $0xb8] sm:$0xf]
        %8047 = vst [vmem:[#allocation3] sm:$0xf] %v8015
        %8048 = vst [vmem:[#allocation3 + $0xc] sm:$0xf] %v8016
        %8049 = vst [vmem:[#allocation3 + $0x18] sm:$0xf] %v8017
        %8050 = vst [vmem:[#allocation3 + $0x24] sm:$0xf] %v8018
        %8051 = vst [vmem:[#allocation3 + $0x30] sm:$0xf] %v8019
        %8052 = vst [vmem:[#allocation3 + $0x3c] sm:$0xf] %v8020
        %8053 = vst [vmem:[#allocation3 + $0x48] sm:$0xf] %v8021
        %8054 = vst [vmem:[#allocation3 + $0x54] sm:$0xf] %v8022
        %8055 = vst [vmem:[#allocation3 + $0x60] sm:$0xf] %v8023
        %8056 = vst [vmem:[#allocation3 + $0x6c] sm:$0xf] %v8024
        %8057 = vst [vmem:[#allocation3 + $0x78] sm:$0xf] %v8025
        %8058 = vst [vmem:[#allocation3 + $0x84] sm:$0xf] %v8026
        %8059 = vst [vmem:[#allocation3 + $0x90] sm:$0xf] %v8027
        %8060 = vst [vmem:[#allocation3 + $0x9c] sm:$0xf] %v8028
        %8061 = vst [vmem:[#allocation3 + $0xa8] sm:$0xf] %v8029
        %8062 = vst [vmem:[#allocation3 + $0xb4] sm:$0xf] %v8030
        %8063 = vst [vmem:[#allocation3 + $0xc0] sm:$0xf] %v8031
        %8064 = vst [vmem:[#allocation3 + $0xcc] sm:$0xf] %v8032
        %8065 = vst [vmem:[#allocation3 + $0xd8] sm:$0xf] %v8033
        %8066 = vst [vmem:[#allocation3 + $0xe4] sm:$0xf] %v8034
        %8067 = vst [vmem:[#allocation3 + $0xf0] sm:$0xf] %v8035
        %8068 = vst [vmem:[#allocation3 + $0xfc] sm:$0xf] %v8036
        %8069 = vst [vmem:[#allocation3 + $0x108] sm:$0xf] %v8037
        %8070 = vst [vmem:[#allocation3 + $0x114] sm:$0xf] %v8038
        %8071 = vst [vmem:[#allocation3 + $0x120] sm:$0xf] %v8039
        %8072 = vst [vmem:[#allocation3 + $0x12c] sm:$0xf] %v8040
        %8073 = vst [vmem:[#allocation3 + $0x138] sm:$0xf] %v8041
        %8074 = vst [vmem:[#allocation3 + $0x144] sm:$0xf] %v8042
        %8075 = vst [vmem:[#allocation3 + $0x150] sm:$0xf] %v8043
        %8076 = vst [vmem:[#allocation3 + $0x15c] sm:$0xf] %v8044
        %8077 = vst [vmem:[#allocation3 + $0x168] sm:$0xf] %v8045
        %8078 = vst [vmem:[#allocation3 + $0x174] sm:$0xf] %v8046
        %v8079 = vld [vmem:[%s768] sm:$0xf]
        %v8080 = vld [vmem:[%s768 + $0x4] sm:$0xf]
        %v8081 = vld [vmem:[%s768 + $0x8] sm:$0x1]
        %v8082 = vld [vmem:[%s768 + $0xc] sm:$0xf]
        %v8083 = vld [vmem:[%s768 + $0x10] sm:$0xf]
        %v8084 = vld [vmem:[%s768 + $0x14] sm:$0x1]
        %v8085 = vld [vmem:[%s768 + $0x18] sm:$0xf]
        %v8086 = vld [vmem:[%s768 + $0x1c] sm:$0xf]
        %v8087 = vld [vmem:[%s768 + $0x20] sm:$0x1]
        %v8088 = vld [vmem:[%s768 + $0x24] sm:$0xf]
        %v8089 = vld [vmem:[%s768 + $0x28] sm:$0xf]
        %v8090 = vld [vmem:[%s768 + $0x2c] sm:$0x1]
        %v8091 = vld [vmem:[%s768 + $0x30] sm:$0xf]
        %v8092 = vld [vmem:[%s768 + $0x34] sm:$0xf]
        %v8093 = vld [vmem:[%s768 + $0x38] sm:$0x1]
        %v8094 = vld [vmem:[%s768 + $0x3c] sm:$0xf]
        %v8095 = vld [vmem:[%s768 + $0x40] sm:$0xf]
        %v8096 = vld [vmem:[%s768 + $0x44] sm:$0x1]
        %v8097 = vld [vmem:[%s768 + $0x48] sm:$0xf]
        %v8098 = vld [vmem:[%s768 + $0x4c] sm:$0xf]
        %v8099 = vld [vmem:[%s768 + $0x50] sm:$0x1]
        %v8100 = vld [vmem:[%s768 + $0x54] sm:$0xf]
        %v8101 = vld [vmem:[%s768 + $0x58] sm:$0xf]
        %v8102 = vld [vmem:[%s768 + $0x5c] sm:$0x1]
        %v8103 = vld [vmem:[%s768 + $0x60] sm:$0xf]
        %v8104 = vld [vmem:[%s768 + $0x64] sm:$0xf]
        %v8105 = vld [vmem:[%s768 + $0x68] sm:$0x1]
        %v8106 = vld [vmem:[%s768 + $0x6c] sm:$0xf]
        %v8107 = vld [vmem:[%s768 + $0x70] sm:$0xf]
        %v8108 = vld [vmem:[%s768 + $0x74] sm:$0x1]
        %v8109 = vld [vmem:[%s768 + $0x78] sm:$0xf]
        %v8110 = vld [vmem:[%s768 + $0x7c] sm:$0xf]
        %v8111 = vld [vmem:[%s768 + $0x80] sm:$0x1]
        %v8112 = vld [vmem:[%s768 + $0x84] sm:$0xf]
        %v8113 = vld [vmem:[%s768 + $0x88] sm:$0xf]
        %v8114 = vld [vmem:[%s768 + $0x8c] sm:$0x1]
        %v8115 = vld [vmem:[%s768 + $0x90] sm:$0xf]
        %v8116 = vld [vmem:[%s768 + $0x94] sm:$0xf]
        %v8117 = vld [vmem:[%s768 + $0x98] sm:$0x1]
        %v8118 = vld [vmem:[%s768 + $0x9c] sm:$0xf]
        %v8119 = vld [vmem:[%s768 + $0xa0] sm:$0xf]
        %v8120 = vld [vmem:[%s768 + $0xa4] sm:$0x1]
        %v8121 = vld [vmem:[%s768 + $0xa8] sm:$0xf]
        %v8122 = vld [vmem:[%s768 + $0xac] sm:$0xf]
        %v8123 = vld [vmem:[%s768 + $0xb0] sm:$0x1]
        %v8124 = vld [vmem:[%s768 + $0xb4] sm:$0xf]
        %v8125 = vld [vmem:[%s768 + $0xb8] sm:$0xf]
        %v8126 = vld [vmem:[%s768 + $0xbc] sm:$0x1]
        %v8128 = vshrl.u32 %v8079, 16
        %v8130 = vrot.slane %v8128, 4
        %v8131 = vshll.u32 %v8079, 16
        %v8133 = vrot.slane %v8131, 5
        %v8134 = vor.u32 %v8130, %v8133
        %v8135 = vrot.slane %v8134, 4
        %v8137 = vshll.u32 %v8080, 16
        %v8139 = vrot.slane %v8137, 5
        %v8140 = vsel %vm1516, %v8135, %v8139
        %v8141 = vshrl.u32 %v8080, 16
        %v8143 = vrot.slane %v8141, 4
        %v8144 = vor.u32 %v8143, %v8139
        %v8145 = vrot.slane %v8144, 4
        %v8147 = vshll.u32 %v8081, 16
        %v8149 = vrot.slane %v8147, 5
        %v8150 = vsel %vm1516, %v8145, %v8149
        %v8152 = vshrl.u32 %v8082, 16
        %v8154 = vrot.slane %v8152, 4
        %v8155 = vshll.u32 %v8082, 16
        %v8157 = vrot.slane %v8155, 5
        %v8158 = vor.u32 %v8154, %v8157
        %v8159 = vrot.slane %v8158, 4
        %v8161 = vshll.u32 %v8083, 16
        %v8163 = vrot.slane %v8161, 5
        %v8164 = vsel %vm1516, %v8159, %v8163
        %v8165 = vshrl.u32 %v8083, 16
        %v8167 = vrot.slane %v8165, 4
        %v8168 = vor.u32 %v8167, %v8163
        %v8169 = vrot.slane %v8168, 4
        %v8171 = vshll.u32 %v8084, 16
        %v8173 = vrot.slane %v8171, 5
        %v8174 = vsel %vm1516, %v8169, %v8173
        %v8176 = vshrl.u32 %v8085, 16
        %v8178 = vrot.slane %v8176, 4
        %v8179 = vshll.u32 %v8085, 16
        %v8181 = vrot.slane %v8179, 5
        %v8182 = vor.u32 %v8178, %v8181
        %v8183 = vrot.slane %v8182, 4
        %v8185 = vshll.u32 %v8086, 16
        %v8187 = vrot.slane %v8185, 5
        %v8188 = vsel %vm1516, %v8183, %v8187
        %v8189 = vshrl.u32 %v8086, 16
        %v8191 = vrot.slane %v8189, 4
        %v8192 = vor.u32 %v8191, %v8187
        %v8193 = vrot.slane %v8192, 4
        %v8195 = vshll.u32 %v8087, 16
        %v8197 = vrot.slane %v8195, 5
        %v8198 = vsel %vm1516, %v8193, %v8197
        %v8200 = vshrl.u32 %v8088, 16
        %v8202 = vrot.slane %v8200, 4
        %v8203 = vshll.u32 %v8088, 16
        %v8205 = vrot.slane %v8203, 5
        %v8206 = vor.u32 %v8202, %v8205
        %v8207 = vrot.slane %v8206, 4
        %v8209 = vshll.u32 %v8089, 16
        %v8211 = vrot.slane %v8209, 5
        %v8212 = vsel %vm1516, %v8207, %v8211
        %v8213 = vshrl.u32 %v8089, 16
        %v8215 = vrot.slane %v8213, 4
        %v8216 = vor.u32 %v8215, %v8211
        %v8217 = vrot.slane %v8216, 4
        %v8219 = vshll.u32 %v8090, 16
        %v8221 = vrot.slane %v8219, 5
        %v8222 = vsel %vm1516, %v8217, %v8221
        %v8224 = vshrl.u32 %v8091, 16
        %v8226 = vrot.slane %v8224, 4
        %v8227 = vshll.u32 %v8091, 16
        %v8229 = vrot.slane %v8227, 5
        %v8230 = vor.u32 %v8226, %v8229
        %v8231 = vrot.slane %v8230, 4
        %v8233 = vshll.u32 %v8092, 16
        %v8235 = vrot.slane %v8233, 5
        %v8236 = vsel %vm1516, %v8231, %v8235
        %v8237 = vshrl.u32 %v8092, 16
        %v8239 = vrot.slane %v8237, 4
        %v8240 = vor.u32 %v8239, %v8235
        %v8241 = vrot.slane %v8240, 4
        %v8243 = vshll.u32 %v8093, 16
        %v8245 = vrot.slane %v8243, 5
        %v8246 = vsel %vm1516, %v8241, %v8245
        %v8248 = vshrl.u32 %v8094, 16
        %v8250 = vrot.slane %v8248, 4
        %v8251 = vshll.u32 %v8094, 16
        %v8253 = vrot.slane %v8251, 5
        %v8254 = vor.u32 %v8250, %v8253
        %v8255 = vrot.slane %v8254, 4
        %v8257 = vshll.u32 %v8095, 16
        %v8259 = vrot.slane %v8257, 5
        %v8260 = vsel %vm1516, %v8255, %v8259
        %v8261 = vshrl.u32 %v8095, 16
        %v8263 = vrot.slane %v8261, 4
        %v8264 = vor.u32 %v8263, %v8259
        %v8265 = vrot.slane %v8264, 4
        %v8267 = vshll.u32 %v8096, 16
        %v8269 = vrot.slane %v8267, 5
        %v8270 = vsel %vm1516, %v8265, %v8269
        %v8272 = vshrl.u32 %v8097, 16
        %v8274 = vrot.slane %v8272, 4
        %v8275 = vshll.u32 %v8097, 16
        %v8277 = vrot.slane %v8275, 5
        %v8278 = vor.u32 %v8274, %v8277
        %v8279 = vrot.slane %v8278, 4
        %v8281 = vshll.u32 %v8098, 16
        %v8283 = vrot.slane %v8281, 5
        %v8284 = vsel %vm1516, %v8279, %v8283
        %v8285 = vshrl.u32 %v8098, 16
        %v8287 = vrot.slane %v8285, 4
        %v8288 = vor.u32 %v8287, %v8283
        %v8289 = vrot.slane %v8288, 4
        %v8291 = vshll.u32 %v8099, 16
        %v8293 = vrot.slane %v8291, 5
        %v8294 = vsel %vm1516, %v8289, %v8293
        %v8296 = vshrl.u32 %v8100, 16
        %v8298 = vrot.slane %v8296, 4
        %v8299 = vshll.u32 %v8100, 16
        %v8301 = vrot.slane %v8299, 5
        %v8302 = vor.u32 %v8298, %v8301
        %v8303 = vrot.slane %v8302, 4
        %v8305 = vshll.u32 %v8101, 16
        %v8307 = vrot.slane %v8305, 5
        %v8308 = vsel %vm1516, %v8303, %v8307
        %v8309 = vshrl.u32 %v8101, 16
        %v8311 = vrot.slane %v8309, 4
        %v8312 = vor.u32 %v8311, %v8307
        %v8313 = vrot.slane %v8312, 4
        %v8315 = vshll.u32 %v8102, 16
        %v8317 = vrot.slane %v8315, 5
        %v8318 = vsel %vm1516, %v8313, %v8317
        %v8320 = vshrl.u32 %v8103, 16
        %v8322 = vrot.slane %v8320, 4
        %v8323 = vshll.u32 %v8103, 16
        %v8325 = vrot.slane %v8323, 5
        %v8326 = vor.u32 %v8322, %v8325
        %v8327 = vrot.slane %v8326, 4
        %v8329 = vshll.u32 %v8104, 16
        %v8331 = vrot.slane %v8329, 5
        %v8332 = vsel %vm1516, %v8327, %v8331
        %v8333 = vshrl.u32 %v8104, 16
        %v8335 = vrot.slane %v8333, 4
        %v8336 = vor.u32 %v8335, %v8331
        %v8337 = vrot.slane %v8336, 4
        %v8339 = vshll.u32 %v8105, 16
        %v8341 = vrot.slane %v8339, 5
        %v8342 = vsel %vm1516, %v8337, %v8341
        %v8344 = vshrl.u32 %v8106, 16
        %v8346 = vrot.slane %v8344, 4
        %v8347 = vshll.u32 %v8106, 16
        %v8349 = vrot.slane %v8347, 5
        %v8350 = vor.u32 %v8346, %v8349
        %v8351 = vrot.slane %v8350, 4
        %v8353 = vshll.u32 %v8107, 16
        %v8355 = vrot.slane %v8353, 5
        %v8356 = vsel %vm1516, %v8351, %v8355
        %v8357 = vshrl.u32 %v8107, 16
        %v8359 = vrot.slane %v8357, 4
        %v8360 = vor.u32 %v8359, %v8355
        %v8361 = vrot.slane %v8360, 4
        %v8363 = vshll.u32 %v8108, 16
        %v8365 = vrot.slane %v8363, 5
        %v8366 = vsel %vm1516, %v8361, %v8365
        %v8368 = vshrl.u32 %v8109, 16
        %v8370 = vrot.slane %v8368, 4
        %v8371 = vshll.u32 %v8109, 16
        %v8373 = vrot.slane %v8371, 5
        %v8374 = vor.u32 %v8370, %v8373
        %v8375 = vrot.slane %v8374, 4
        %v8377 = vshll.u32 %v8110, 16
        %v8379 = vrot.slane %v8377, 5
        %v8380 = vsel %vm1516, %v8375, %v8379
        %v8381 = vshrl.u32 %v8110, 16
        %v8383 = vrot.slane %v8381, 4
        %v8384 = vor.u32 %v8383, %v8379
        %v8385 = vrot.slane %v8384, 4
        %v8387 = vshll.u32 %v8111, 16
        %v8389 = vrot.slane %v8387, 5
        %v8390 = vsel %vm1516, %v8385, %v8389
        %v8392 = vshrl.u32 %v8112, 16
        %v8394 = vrot.slane %v8392, 4
        %v8395 = vshll.u32 %v8112, 16
        %v8397 = vrot.slane %v8395, 5
        %v8398 = vor.u32 %v8394, %v8397
        %v8399 = vrot.slane %v8398, 4
        %v8401 = vshll.u32 %v8113, 16
        %v8403 = vrot.slane %v8401, 5
        %v8404 = vsel %vm1516, %v8399, %v8403
        %v8405 = vshrl.u32 %v8113, 16
        %v8407 = vrot.slane %v8405, 4
        %v8408 = vor.u32 %v8407, %v8403
        %v8409 = vrot.slane %v8408, 4
        %v8411 = vshll.u32 %v8114, 16
        %v8413 = vrot.slane %v8411, 5
        %v8414 = vsel %vm1516, %v8409, %v8413
        %v8416 = vshrl.u32 %v8115, 16
        %v8418 = vrot.slane %v8416, 4
        %v8419 = vshll.u32 %v8115, 16
        %v8421 = vrot.slane %v8419, 5
        %v8422 = vor.u32 %v8418, %v8421
        %v8423 = vrot.slane %v8422, 4
        %v8425 = vshll.u32 %v8116, 16
        %v8427 = vrot.slane %v8425, 5
        %v8428 = vsel %vm1516, %v8423, %v8427
        %v8429 = vshrl.u32 %v8116, 16
        %v8431 = vrot.slane %v8429, 4
        %v8432 = vor.u32 %v8431, %v8427
        %v8433 = vrot.slane %v8432, 4
        %v8435 = vshll.u32 %v8117, 16
        %v8437 = vrot.slane %v8435, 5
        %v8438 = vsel %vm1516, %v8433, %v8437
        %v8440 = vshrl.u32 %v8118, 16
        %v8442 = vrot.slane %v8440, 4
        %v8443 = vshll.u32 %v8118, 16
        %v8445 = vrot.slane %v8443, 5
        %v8446 = vor.u32 %v8442, %v8445
        %v8447 = vrot.slane %v8446, 4
        %v8449 = vshll.u32 %v8119, 16
        %v8451 = vrot.slane %v8449, 5
        %v8452 = vsel %vm1516, %v8447, %v8451
        %v8453 = vshrl.u32 %v8119, 16
        %v8455 = vrot.slane %v8453, 4
        %v8456 = vor.u32 %v8455, %v8451
        %v8457 = vrot.slane %v8456, 4
        %v8459 = vshll.u32 %v8120, 16
        %v8461 = vrot.slane %v8459, 5
        %v8462 = vsel %vm1516, %v8457, %v8461
        %v8464 = vshrl.u32 %v8121, 16
        %v8466 = vrot.slane %v8464, 4
        %v8467 = vshll.u32 %v8121, 16
        %v8469 = vrot.slane %v8467, 5
        %v8470 = vor.u32 %v8466, %v8469
        %v8471 = vrot.slane %v8470, 4
        %v8473 = vshll.u32 %v8122, 16
        %v8475 = vrot.slane %v8473, 5
        %v8476 = vsel %vm1516, %v8471, %v8475
        %v8477 = vshrl.u32 %v8122, 16
        %v8479 = vrot.slane %v8477, 4
        %v8480 = vor.u32 %v8479, %v8475
        %v8481 = vrot.slane %v8480, 4
        %v8483 = vshll.u32 %v8123, 16
        %v8485 = vrot.slane %v8483, 5
        %v8486 = vsel %vm1516, %v8481, %v8485
        %v8488 = vshrl.u32 %v8124, 16
        %v8490 = vrot.slane %v8488, 4
        %v8491 = vshll.u32 %v8124, 16
        %v8493 = vrot.slane %v8491, 5
        %v8494 = vor.u32 %v8490, %v8493
        %v8495 = vrot.slane %v8494, 4
        %v8497 = vshll.u32 %v8125, 16
        %v8499 = vrot.slane %v8497, 5
        %v8500 = vsel %vm1516, %v8495, %v8499
        %v8501 = vshrl.u32 %v8125, 16
        %v8503 = vrot.slane %v8501, 4
        %v8504 = vor.u32 %v8503, %v8499
        %v8505 = vrot.slane %v8504, 4
        %v8507 = vshll.u32 %v8126, 16
        %v8509 = vrot.slane %v8507, 5
        %v8510 = vsel %vm1516, %v8505, %v8509
        %8543 = vst [vmem:[#allocation3 + $0x4] sm:$0xf] %v8140
        %8544 = vst [vmem:[#allocation3 + $0x10] sm:$0xf] %v8150
        %8545 = vst [vmem:[#allocation3 + $0x1c] sm:$0xf] %v8164
        %8546 = vst [vmem:[#allocation3 + $0x28] sm:$0xf] %v8174
        %8547 = vst [vmem:[#allocation3 + $0x34] sm:$0xf] %v8188
        %8548 = vst [vmem:[#allocation3 + $0x40] sm:$0xf] %v8198
        %8549 = vst [vmem:[#allocation3 + $0x4c] sm:$0xf] %v8212
        %8550 = vst [vmem:[#allocation3 + $0x58] sm:$0xf] %v8222
        %8551 = vst [vmem:[#allocation3 + $0x64] sm:$0xf] %v8236
        %8552 = vst [vmem:[#allocation3 + $0x70] sm:$0xf] %v8246
        %8553 = vst [vmem:[#allocation3 + $0x7c] sm:$0xf] %v8260
        %8554 = vst [vmem:[#allocation3 + $0x88] sm:$0xf] %v8270
        %8555 = vst [vmem:[#allocation3 + $0x94] sm:$0xf] %v8284
        %8556 = vst [vmem:[#allocation3 + $0xa0] sm:$0xf] %v8294
        %8557 = vst [vmem:[#allocation3 + $0xac] sm:$0xf] %v8308
        %8558 = vst [vmem:[#allocation3 + $0xb8] sm:$0xf] %v8318
        %8559 = vst [vmem:[#allocation3 + $0xc4] sm:$0xf] %v8332
        %8560 = vst [vmem:[#allocation3 + $0xd0] sm:$0xf] %v8342
        %8561 = vst [vmem:[#allocation3 + $0xdc] sm:$0xf] %v8356
        %8562 = vst [vmem:[#allocation3 + $0xe8] sm:$0xf] %v8366
        %8563 = vst [vmem:[#allocation3 + $0xf4] sm:$0xf] %v8380
        %8564 = vst [vmem:[#allocation3 + $0x100] sm:$0xf] %v8390
        %8565 = vst [vmem:[#allocation3 + $0x10c] sm:$0xf] %v8404
        %8566 = vst [vmem:[#allocation3 + $0x118] sm:$0xf] %v8414
        %8567 = vst [vmem:[#allocation3 + $0x124] sm:$0xf] %v8428
        %8568 = vst [vmem:[#allocation3 + $0x130] sm:$0xf] %v8438
        %8569 = vst [vmem:[#allocation3 + $0x13c] sm:$0xf] %v8452
        %8570 = vst [vmem:[#allocation3 + $0x148] sm:$0xf] %v8462
        %8571 = vst [vmem:[#allocation3 + $0x154] sm:$0xf] %v8476
        %8572 = vst [vmem:[#allocation3 + $0x160] sm:$0xf] %v8486
        %8573 = vst [vmem:[#allocation3 + $0x16c] sm:$0xf] %v8500
        %8574 = vst [vmem:[#allocation3 + $0x178] sm:$0xf] %v8510
        %v8575 = vld [vmem:[%s768] sm:$0xe]
        %v8576 = vld [vmem:[%s768 + $0x4] sm:$0xf]
        %v8577 = vld [vmem:[%s768 + $0x8] sm:$0x1]
        %v8578 = vld [vmem:[%s768 + $0xc] sm:$0xe]
        %v8579 = vld [vmem:[%s768 + $0x10] sm:$0xf]
        %v8580 = vld [vmem:[%s768 + $0x14] sm:$0x1]
        %v8581 = vld [vmem:[%s768 + $0x18] sm:$0xe]
        %v8582 = vld [vmem:[%s768 + $0x1c] sm:$0xf]
        %v8583 = vld [vmem:[%s768 + $0x20] sm:$0x1]
        %v8584 = vld [vmem:[%s768 + $0x24] sm:$0xe]
        %v8585 = vld [vmem:[%s768 + $0x28] sm:$0xf]
        %v8586 = vld [vmem:[%s768 + $0x2c] sm:$0x1]
        %v8587 = vld [vmem:[%s768 + $0x30] sm:$0xe]
        %v8588 = vld [vmem:[%s768 + $0x34] sm:$0xf]
        %v8589 = vld [vmem:[%s768 + $0x38] sm:$0x1]
        %v8590 = vld [vmem:[%s768 + $0x3c] sm:$0xe]
        %v8591 = vld [vmem:[%s768 + $0x40] sm:$0xf]
        %v8592 = vld [vmem:[%s768 + $0x44] sm:$0x1]
        %v8593 = vld [vmem:[%s768 + $0x48] sm:$0xe]
        %v8594 = vld [vmem:[%s768 + $0x4c] sm:$0xf]
        %v8595 = vld [vmem:[%s768 + $0x50] sm:$0x1]
        %v8596 = vld [vmem:[%s768 + $0x54] sm:$0xe]
        %v8597 = vld [vmem:[%s768 + $0x58] sm:$0xf]
        %v8598 = vld [vmem:[%s768 + $0x5c] sm:$0x1]
        %v8599 = vld [vmem:[%s768 + $0x60] sm:$0xe]
        %v8600 = vld [vmem:[%s768 + $0x64] sm:$0xf]
        %v8601 = vld [vmem:[%s768 + $0x68] sm:$0x1]
        %v8602 = vld [vmem:[%s768 + $0x6c] sm:$0xe]
        %v8603 = vld [vmem:[%s768 + $0x70] sm:$0xf]
        %v8604 = vld [vmem:[%s768 + $0x74] sm:$0x1]
        %v8605 = vld [vmem:[%s768 + $0x78] sm:$0xe]
        %v8606 = vld [vmem:[%s768 + $0x7c] sm:$0xf]
        %v8607 = vld [vmem:[%s768 + $0x80] sm:$0x1]
        %v8608 = vld [vmem:[%s768 + $0x84] sm:$0xe]
        %v8609 = vld [vmem:[%s768 + $0x88] sm:$0xf]
        %v8610 = vld [vmem:[%s768 + $0x8c] sm:$0x1]
        %v8611 = vld [vmem:[%s768 + $0x90] sm:$0xe]
        %v8612 = vld [vmem:[%s768 + $0x94] sm:$0xf]
        %v8613 = vld [vmem:[%s768 + $0x98] sm:$0x1]
        %v8614 = vld [vmem:[%s768 + $0x9c] sm:$0xe]
        %v8615 = vld [vmem:[%s768 + $0xa0] sm:$0xf]
        %v8616 = vld [vmem:[%s768 + $0xa4] sm:$0x1]
        %v8617 = vld [vmem:[%s768 + $0xa8] sm:$0xe]
        %v8618 = vld [vmem:[%s768 + $0xac] sm:$0xf]
        %v8619 = vld [vmem:[%s768 + $0xb0] sm:$0x1]
        %v8620 = vld [vmem:[%s768 + $0xb4] sm:$0xe]
        %v8621 = vld [vmem:[%s768 + $0xb8] sm:$0xf]
        %v8622 = vld [vmem:[%s768 + $0xbc] sm:$0x1]
        %v8671 = vrot.slane %v8575, 5
        %v8672 = vrot.slane %v8671, 4
        %v8673 = vrot.slane %v8576, 5
        %v8674 = vsel %vm2063, %v8672, %v8673
        %v8675 = vrot.slane %v8673, 4
        %v8676 = vrot.slane %v8577, 5
        %v8677 = vsel %vm2063, %v8675, %v8676
        %v8678 = vrot.slane %v8578, 5
        %v8679 = vrot.slane %v8678, 4
        %v8680 = vrot.slane %v8579, 5
        %v8681 = vsel %vm2063, %v8679, %v8680
        %v8682 = vrot.slane %v8680, 4
        %v8683 = vrot.slane %v8580, 5
        %v8684 = vsel %vm2063, %v8682, %v8683
        %v8685 = vrot.slane %v8581, 5
        %v8686 = vrot.slane %v8685, 4
        %v8687 = vrot.slane %v8582, 5
        %v8688 = vsel %vm2063, %v8686, %v8687
        %v8689 = vrot.slane %v8687, 4
        %v8690 = vrot.slane %v8583, 5
        %v8691 = vsel %vm2063, %v8689, %v8690
        %v8692 = vrot.slane %v8584, 5
        %v8693 = vrot.slane %v8692, 4
        %v8694 = vrot.slane %v8585, 5
        %v8695 = vsel %vm2063, %v8693, %v8694
        %v8696 = vrot.slane %v8694, 4
        %v8697 = vrot.slane %v8586, 5
        %v8698 = vsel %vm2063, %v8696, %v8697
        %v8699 = vrot.slane %v8587, 5
        %v8700 = vrot.slane %v8699, 4
        %v8701 = vrot.slane %v8588, 5
        %v8702 = vsel %vm2063, %v8700, %v8701
        %v8703 = vrot.slane %v8701, 4
        %v8704 = vrot.slane %v8589, 5
        %v8705 = vsel %vm2063, %v8703, %v8704
        %v8706 = vrot.slane %v8590, 5
        %v8707 = vrot.slane %v8706, 4
        %v8708 = vrot.slane %v8591, 5
        %v8709 = vsel %vm2063, %v8707, %v8708
        %v8710 = vrot.slane %v8708, 4
        %v8711 = vrot.slane %v8592, 5
        %v8712 = vsel %vm2063, %v8710, %v8711
        %v8713 = vrot.slane %v8593, 5
        %v8714 = vrot.slane %v8713, 4
        %v8715 = vrot.slane %v8594, 5
        %v8716 = vsel %vm2063, %v8714, %v8715
        %v8717 = vrot.slane %v8715, 4
        %v8718 = vrot.slane %v8595, 5
        %v8719 = vsel %vm2063, %v8717, %v8718
        %v8720 = vrot.slane %v8596, 5
        %v8721 = vrot.slane %v8720, 4
        %v8722 = vrot.slane %v8597, 5
        %v8723 = vsel %vm2063, %v8721, %v8722
        %v8724 = vrot.slane %v8722, 4
        %v8725 = vrot.slane %v8598, 5
        %v8726 = vsel %vm2063, %v8724, %v8725
        %v8727 = vrot.slane %v8599, 5
        %v8728 = vrot.slane %v8727, 4
        %v8729 = vrot.slane %v8600, 5
        %v8730 = vsel %vm2063, %v8728, %v8729
        %v8731 = vrot.slane %v8729, 4
        %v8732 = vrot.slane %v8601, 5
        %v8733 = vsel %vm2063, %v8731, %v8732
        %v8734 = vrot.slane %v8602, 5
        %v8735 = vrot.slane %v8734, 4
        %v8736 = vrot.slane %v8603, 5
        %v8737 = vsel %vm2063, %v8735, %v8736
        %v8738 = vrot.slane %v8736, 4
        %v8739 = vrot.slane %v8604, 5
        %v8740 = vsel %vm2063, %v8738, %v8739
        %v8741 = vrot.slane %v8605, 5
        %v8742 = vrot.slane %v8741, 4
        %v8743 = vrot.slane %v8606, 5
        %v8744 = vsel %vm2063, %v8742, %v8743
        %v8745 = vrot.slane %v8743, 4
        %v8746 = vrot.slane %v8607, 5
        %v8747 = vsel %vm2063, %v8745, %v8746
        %v8748 = vrot.slane %v8608, 5
        %v8749 = vrot.slane %v8748, 4
        %v8750 = vrot.slane %v8609, 5
        %v8751 = vsel %vm2063, %v8749, %v8750
        %v8752 = vrot.slane %v8750, 4
        %v8753 = vrot.slane %v8610, 5
        %v8754 = vsel %vm2063, %v8752, %v8753
        %v8755 = vrot.slane %v8611, 5
        %v8756 = vrot.slane %v8755, 4
        %v8757 = vrot.slane %v8612, 5
        %v8758 = vsel %vm2063, %v8756, %v8757
        %v8759 = vrot.slane %v8757, 4
        %v8760 = vrot.slane %v8613, 5
        %v8761 = vsel %vm2063, %v8759, %v8760
        %v8762 = vrot.slane %v8614, 5
        %v8763 = vrot.slane %v8762, 4
        %v8764 = vrot.slane %v8615, 5
        %v8765 = vsel %vm2063, %v8763, %v8764
        %v8766 = vrot.slane %v8764, 4
        %v8767 = vrot.slane %v8616, 5
        %v8768 = vsel %vm2063, %v8766, %v8767
        %v8769 = vrot.slane %v8617, 5
        %v8770 = vrot.slane %v8769, 4
        %v8771 = vrot.slane %v8618, 5
        %v8772 = vsel %vm2063, %v8770, %v8771
        %v8773 = vrot.slane %v8771, 4
        %v8774 = vrot.slane %v8619, 5
        %v8775 = vsel %vm2063, %v8773, %v8774
        %v8776 = vrot.slane %v8620, 5
        %v8777 = vrot.slane %v8776, 4
        %v8778 = vrot.slane %v8621, 5
        %v8779 = vsel %vm2063, %v8777, %v8778
        %v8780 = vrot.slane %v8778, 4
        %v8781 = vrot.slane %v8622, 5
        %v8782 = vsel %vm2063, %v8780, %v8781
        %8815 = vst [vmem:[#allocation3 + $0x8] sm:$0xf] %v8674
        %8816 = vst [vmem:[#allocation3 + $0x14] sm:$0xf] %v8677
        %8817 = vst [vmem:[#allocation3 + $0x20] sm:$0xf] %v8681
        %8818 = vst [vmem:[#allocation3 + $0x2c] sm:$0xf] %v8684
        %8819 = vst [vmem:[#allocation3 + $0x38] sm:$0xf] %v8688
        %8820 = vst [vmem:[#allocation3 + $0x44] sm:$0xf] %v8691
        %8821 = vst [vmem:[#allocation3 + $0x50] sm:$0xf] %v8695
        %8822 = vst [vmem:[#allocation3 + $0x5c] sm:$0xf] %v8698
        %8823 = vst [vmem:[#allocation3 + $0x68] sm:$0xf] %v8702
        %8824 = vst [vmem:[#allocation3 + $0x74] sm:$0xf] %v8705
        %8825 = vst [vmem:[#allocation3 + $0x80] sm:$0xf] %v8709
        %8826 = vst [vmem:[#allocation3 + $0x8c] sm:$0xf] %v8712
        %8827 = vst [vmem:[#allocation3 + $0x98] sm:$0xf] %v8716
        %8828 = vst [vmem:[#allocation3 + $0xa4] sm:$0xf] %v8719
        %8829 = vst [vmem:[#allocation3 + $0xb0] sm:$0xf] %v8723
        %8830 = vst [vmem:[#allocation3 + $0xbc] sm:$0xf] %v8726
        %8831 = vst [vmem:[#allocation3 + $0xc8] sm:$0xf] %v8730
        %8832 = vst [vmem:[#allocation3 + $0xd4] sm:$0xf] %v8733
        %8833 = vst [vmem:[#allocation3 + $0xe0] sm:$0xf] %v8737
        %8834 = vst [vmem:[#allocation3 + $0xec] sm:$0xf] %v8740
        %8835 = vst [vmem:[#allocation3 + $0xf8] sm:$0xf] %v8744
        %8836 = vst [vmem:[#allocation3 + $0x104] sm:$0xf] %v8747
        %8837 = vst [vmem:[#allocation3 + $0x110] sm:$0xf] %v8751
        %8838 = vst [vmem:[#allocation3 + $0x11c] sm:$0xf] %v8754
        %8839 = vst [vmem:[#allocation3 + $0x128] sm:$0xf] %v8758
        %8840 = vst [vmem:[#allocation3 + $0x134] sm:$0xf] %v8761
        %8841 = vst [vmem:[#allocation3 + $0x140] sm:$0xf] %v8765
        %8842 = vst [vmem:[#allocation3 + $0x14c] sm:$0xf] %v8768
        %8843 = vst [vmem:[#allocation3 + $0x158] sm:$0xf] %v8772
        %8844 = vst [vmem:[#allocation3 + $0x164] sm:$0xf] %v8775
        %8845 = vst [vmem:[#allocation3 + $0x170] sm:$0xf] %v8779
        %8846 = vst [vmem:[#allocation3 + $0x17c] sm:$0xf] %v8782
        %v8847 = vld [vmem:[#allocation3] sm:$0xff]
        %v8848 = vld [vmem:[#allocation3 + $0x8] sm:$0xf]
        %v8849 = vld [vmem:[#allocation3 + $0xc] sm:$0xff]
        %v8850 = vld [vmem:[#allocation3 + $0x14] sm:$0xf]
        %v8851 = vld [vmem:[#allocation3 + $0x18] sm:$0xff]
        %v8852 = vld [vmem:[#allocation3 + $0x20] sm:$0xf]
        %v8853 = vld [vmem:[#allocation3 + $0x24] sm:$0xff]
        %v8854 = vld [vmem:[#allocation3 + $0x2c] sm:$0xf]
        %v8855 = vld [vmem:[#allocation3 + $0x30] sm:$0xff]
        %v8856 = vld [vmem:[#allocation3 + $0x38] sm:$0xf]
        %v8857 = vld [vmem:[#allocation3 + $0x3c] sm:$0xff]
        %v8858 = vld [vmem:[#allocation3 + $0x44] sm:$0xf]
        %v8859 = vld [vmem:[#allocation3 + $0x48] sm:$0xff]
        %v8860 = vld [vmem:[#allocation3 + $0x50] sm:$0xf]
        %v8861 = vld [vmem:[#allocation3 + $0x54] sm:$0xff]
        %v8862 = vld [vmem:[#allocation3 + $0x5c] sm:$0xf]
        %v8863 = vld [vmem:[#allocation3 + $0x60] sm:$0xff]
        %v8864 = vld [vmem:[#allocation3 + $0x68] sm:$0xf]
        %v8865 = vld [vmem:[#allocation3 + $0x6c] sm:$0xff]
        %v8866 = vld [vmem:[#allocation3 + $0x74] sm:$0xf]
        %v8867 = vld [vmem:[#allocation3 + $0x78] sm:$0xff]
        %v8868 = vld [vmem:[#allocation3 + $0x80] sm:$0xf]
        %v8869 = vld [vmem:[#allocation3 + $0x84] sm:$0xff]
        %v8870 = vld [vmem:[#allocation3 + $0x8c] sm:$0xf]
        %v8871 = vld [vmem:[#allocation3 + $0x90] sm:$0xff]
        %v8872 = vld [vmem:[#allocation3 + $0x98] sm:$0xf]
        %v8873 = vld [vmem:[#allocation3 + $0x9c] sm:$0xff]
        %v8874 = vld [vmem:[#allocation3 + $0xa4] sm:$0xf]
        %v8875 = vld [vmem:[#allocation3 + $0xa8] sm:$0xff]
        %v8876 = vld [vmem:[#allocation3 + $0xb0] sm:$0xf]
        %v8877 = vld [vmem:[#allocation3 + $0xb4] sm:$0xff]
        %v8878 = vld [vmem:[#allocation3 + $0xbc] sm:$0xf]
        %v8879 = vld [vmem:[#allocation3 + $0xc0] sm:$0xff]
        %v8880 = vld [vmem:[#allocation3 + $0xc8] sm:$0xf]
        %v8881 = vld [vmem:[#allocation3 + $0xcc] sm:$0xff]
        %v8882 = vld [vmem:[#allocation3 + $0xd4] sm:$0xf]
        %v8883 = vld [vmem:[#allocation3 + $0xd8] sm:$0xff]
        %v8884 = vld [vmem:[#allocation3 + $0xe0] sm:$0xf]
        %v8885 = vld [vmem:[#allocation3 + $0xe4] sm:$0xff]
        %v8886 = vld [vmem:[#allocation3 + $0xec] sm:$0xf]
        %v8887 = vld [vmem:[#allocation3 + $0xf0] sm:$0xff]
        %v8888 = vld [vmem:[#allocation3 + $0xf8] sm:$0xf]
        %v8889 = vld [vmem:[#allocation3 + $0xfc] sm:$0xff]
        %v8890 = vld [vmem:[#allocation3 + $0x104] sm:$0xf]
        %v8891 = vld [vmem:[#allocation3 + $0x108] sm:$0xff]
        %v8892 = vld [vmem:[#allocation3 + $0x110] sm:$0xf]
        %v8893 = vld [vmem:[#allocation3 + $0x114] sm:$0xff]
        %v8894 = vld [vmem:[#allocation3 + $0x11c] sm:$0xf]
        %v8895 = vld [vmem:[#allocation3 + $0x120] sm:$0xff]
        %v8896 = vld [vmem:[#allocation3 + $0x128] sm:$0xf]
        %v8897 = vld [vmem:[#allocation3 + $0x12c] sm:$0xff]
        %v8898 = vld [vmem:[#allocation3 + $0x134] sm:$0xf]
        %v8899 = vld [vmem:[#allocation3 + $0x138] sm:$0xff]
        %v8900 = vld [vmem:[#allocation3 + $0x140] sm:$0xf]
        %v8901 = vld [vmem:[#allocation3 + $0x144] sm:$0xff]
        %v8902 = vld [vmem:[#allocation3 + $0x14c] sm:$0xf]
        %v8903 = vld [vmem:[#allocation3 + $0x150] sm:$0xff]
        %v8904 = vld [vmem:[#allocation3 + $0x158] sm:$0xf]
        %v8905 = vld [vmem:[#allocation3 + $0x15c] sm:$0xff]
        %v8906 = vld [vmem:[#allocation3 + $0x164] sm:$0xf]
        %v8907 = vld [vmem:[#allocation3 + $0x168] sm:$0xff]
        %v8908 = vld [vmem:[#allocation3 + $0x170] sm:$0xf]
        %v8909 = vld [vmem:[#allocation3 + $0x174] sm:$0xff]
        %v8910 = vld [vmem:[#allocation3 + $0x17c] sm:$0xf]
        %v8911 = vld [vmem:[#allocation10 + $0xc0] sm:$0xf]
        %v8912 = vld [vmem:[#allocation10 + $0xc4] sm:$0xf]
        %v8913 = vld [vmem:[#allocation10 + $0xc8] sm:$0xf]
        %v8914 = vld [vmem:[#allocation10 + $0xcc] sm:$0xf]
        %v8915 = vld [vmem:[#allocation10 + $0xd0] sm:$0xf]
        %v8916 = vld [vmem:[#allocation10 + $0xd4] sm:$0xf]
        %v8917 = vld [vmem:[#allocation10 + $0xd8] sm:$0xf]
        %v8918 = vld [vmem:[#allocation10 + $0xdc] sm:$0xf]
        %v8919 = vld [vmem:[#allocation10 + $0xe0] sm:$0xf]
        %v8920 = vld [vmem:[#allocation10 + $0xe4] sm:$0xf]
        %v8921 = vld [vmem:[#allocation10 + $0xe8] sm:$0xf]
        %v8922 = vld [vmem:[#allocation10 + $0xec] sm:$0xf]
        %v8923 = vld [vmem:[#allocation10 + $0xf0] sm:$0xf]
        %v8924 = vld [vmem:[#allocation10 + $0xf4] sm:$0xf]
        %v8925 = vld [vmem:[#allocation10 + $0xf8] sm:$0xf]
        %v8926 = vld [vmem:[#allocation10 + $0xfc] sm:$0xf]
        %v8927 = vld [vmem:[#allocation10 + $0x100] sm:$0xf]
        %v8928 = vld [vmem:[#allocation10 + $0x104] sm:$0xf]
        %v8929 = vld [vmem:[#allocation10 + $0x108] sm:$0xf]
        %v8930 = vld [vmem:[#allocation10 + $0x10c] sm:$0xf]
        %v8931 = vld [vmem:[#allocation10 + $0x110] sm:$0xf]
        %v8932 = vld [vmem:[#allocation10 + $0x114] sm:$0xf]
        %v8933 = vld [vmem:[#allocation10 + $0x118] sm:$0xf]
        %v8934 = vld [vmem:[#allocation10 + $0x11c] sm:$0xf]
        %v8935 = vld [vmem:[#allocation10 + $0x120] sm:$0xf]
        %v8936 = vld [vmem:[#allocation10 + $0x124] sm:$0xf]
        %v8937 = vld [vmem:[#allocation10 + $0x128] sm:$0xf]
        %v8938 = vld [vmem:[#allocation10 + $0x12c] sm:$0xf]
        %v8939 = vld [vmem:[#allocation10 + $0x130] sm:$0xf]
        %v8940 = vld [vmem:[#allocation10 + $0x134] sm:$0xf]
        %v8941 = vld [vmem:[#allocation10 + $0x138] sm:$0xf]
        %v8942 = vld [vmem:[#allocation10 + $0x13c] sm:$0xf]
        %v8943 = vld [vmem:[#allocation10 + $0x140] sm:$0xf]
        %v8944 = vld [vmem:[#allocation10 + $0x144] sm:$0xf]
        %v8945 = vld [vmem:[#allocation10 + $0x148] sm:$0xf]
        %v8946 = vld [vmem:[#allocation10 + $0x14c] sm:$0xf]
        %v8947 = vld [vmem:[#allocation10 + $0x150] sm:$0xf]
        %v8948 = vld [vmem:[#allocation10 + $0x154] sm:$0xf]
        %v8949 = vld [vmem:[#allocation10 + $0x158] sm:$0xf]
        %v8950 = vld [vmem:[#allocation10 + $0x15c] sm:$0xf]
        %v8951 = vld [vmem:[#allocation10 + $0x160] sm:$0xf]
        %v8952 = vld [vmem:[#allocation10 + $0x164] sm:$0xf]
        %v8953 = vld [vmem:[#allocation10 + $0x168] sm:$0xf]
        %v8954 = vld [vmem:[#allocation10 + $0x16c] sm:$0xf]
        %v8955 = vld [vmem:[#allocation10 + $0x170] sm:$0xf]
        %v8956 = vld [vmem:[#allocation10 + $0x174] sm:$0xf]
        %v8957 = vld [vmem:[#allocation10 + $0x178] sm:$0xf]
        %v8958 = vld [vmem:[#allocation10 + $0x17c] sm:$0xf]
        %v9023 = vunpack.c.l.b16 %v8847
        %v9024 = vunpack.c.h.b16 %v8847
        %v9025 = vunpack.c.l.b16 %v8848
        %v9026 = vunpack.c.l.b16 %v8849
        %v9027 = vunpack.c.h.b16 %v8849
        %v9028 = vunpack.c.l.b16 %v8850
        %v9029 = vunpack.c.l.b16 %v8851
        %v9030 = vunpack.c.h.b16 %v8851
        %v9031 = vunpack.c.l.b16 %v8852
        %v9032 = vunpack.c.l.b16 %v8853
        %v9033 = vunpack.c.h.b16 %v8853
        %v9034 = vunpack.c.l.b16 %v8854
        %v9035 = vunpack.c.l.b16 %v8855
        %v9036 = vunpack.c.h.b16 %v8855
        %v9037 = vunpack.c.l.b16 %v8856
        %v9038 = vunpack.c.l.b16 %v8857
        %v9039 = vunpack.c.h.b16 %v8857
        %v9040 = vunpack.c.l.b16 %v8858
        %v9041 = vunpack.c.l.b16 %v8859
        %v9042 = vunpack.c.h.b16 %v8859
        %v9043 = vunpack.c.l.b16 %v8860
        %v9044 = vunpack.c.l.b16 %v8861
        %v9045 = vunpack.c.h.b16 %v8861
        %v9046 = vunpack.c.l.b16 %v8862
        %v9047 = vunpack.c.l.b16 %v8863
        %v9048 = vunpack.c.h.b16 %v8863
        %v9049 = vunpack.c.l.b16 %v8864
        %v9050 = vunpack.c.l.b16 %v8865
        %v9051 = vunpack.c.h.b16 %v8865
        %v9052 = vunpack.c.l.b16 %v8866
        %v9053 = vunpack.c.l.b16 %v8867
        %v9054 = vunpack.c.h.b16 %v8867
        %v9055 = vunpack.c.l.b16 %v8868
        %v9056 = vunpack.c.l.b16 %v8869
        %v9057 = vunpack.c.h.b16 %v8869
        %v9058 = vunpack.c.l.b16 %v8870
        %v9059 = vunpack.c.l.b16 %v8871
        %v9060 = vunpack.c.h.b16 %v8871
        %v9061 = vunpack.c.l.b16 %v8872
        %v9062 = vunpack.c.l.b16 %v8873
        %v9063 = vunpack.c.h.b16 %v8873
        %v9064 = vunpack.c.l.b16 %v8874
        %v9065 = vunpack.c.l.b16 %v8875
        %v9066 = vunpack.c.h.b16 %v8875
        %v9067 = vunpack.c.l.b16 %v8876
        %v9068 = vunpack.c.l.b16 %v8877
        %v9069 = vunpack.c.h.b16 %v8877
        %v9070 = vunpack.c.l.b16 %v8878
        %v9071 = vunpack.c.l.b16 %v8879
        %v9072 = vunpack.c.h.b16 %v8879
        %v9073 = vunpack.c.l.b16 %v8880
        %v9074 = vunpack.c.l.b16 %v8881
        %v9075 = vunpack.c.h.b16 %v8881
        %v9076 = vunpack.c.l.b16 %v8882
        %v9077 = vunpack.c.l.b16 %v8883
        %v9078 = vunpack.c.h.b16 %v8883
        %v9079 = vunpack.c.l.b16 %v8884
        %v9080 = vunpack.c.l.b16 %v8885
        %v9081 = vunpack.c.h.b16 %v8885
        %v9082 = vunpack.c.l.b16 %v8886
        %v9083 = vunpack.c.l.b16 %v8887
        %v9084 = vunpack.c.h.b16 %v8887
        %v9085 = vunpack.c.l.b16 %v8888
        %v9086 = vunpack.c.l.b16 %v8889
        %v9087 = vunpack.c.h.b16 %v8889
        %v9088 = vunpack.c.l.b16 %v8890
        %v9089 = vunpack.c.l.b16 %v8891
        %v9090 = vunpack.c.h.b16 %v8891
        %v9091 = vunpack.c.l.b16 %v8892
        %v9092 = vunpack.c.l.b16 %v8893
        %v9093 = vunpack.c.h.b16 %v8893
        %v9094 = vunpack.c.l.b16 %v8894
        %v9095 = vunpack.c.l.b16 %v8895
        %v9096 = vunpack.c.h.b16 %v8895
        %v9097 = vunpack.c.l.b16 %v8896
        %v9098 = vunpack.c.l.b16 %v8897
        %v9099 = vunpack.c.h.b16 %v8897
        %v9100 = vunpack.c.l.b16 %v8898
        %v9101 = vunpack.c.l.b16 %v8899
        %v9102 = vunpack.c.h.b16 %v8899
        %v9103 = vunpack.c.l.b16 %v8900
        %v9104 = vunpack.c.l.b16 %v8901
        %v9105 = vunpack.c.h.b16 %v8901
        %v9106 = vunpack.c.l.b16 %v8902
        %v9107 = vunpack.c.l.b16 %v8903
        %v9108 = vunpack.c.h.b16 %v8903
        %v9109 = vunpack.c.l.b16 %v8904
        %v9110 = vunpack.c.l.b16 %v8905
        %v9111 = vunpack.c.h.b16 %v8905
        %v9112 = vunpack.c.l.b16 %v8906
        %v9113 = vunpack.c.l.b16 %v8907
        %v9114 = vunpack.c.h.b16 %v8907
        %v9115 = vunpack.c.l.b16 %v8908
        %v9116 = vunpack.c.l.b16 %v8909
        %v9117 = vunpack.c.h.b16 %v8909
        %v9118 = vunpack.c.l.b16 %v8910
        %v9119 = vpack.c.b16 %v9026, %v9023
        %v9120 = vpack.c.b16 %v9027, %v9024
        %v9121 = vpack.c.b16 %v9028, %v9025
        %v9122 = vpack.c.b16 %v9032, %v9029
        %v9123 = vpack.c.b16 %v9033, %v9030
        %v9124 = vpack.c.b16 %v9034, %v9031
        %v9125 = vpack.c.b16 %v9038, %v9035
        %v9126 = vpack.c.b16 %v9039, %v9036
        %v9127 = vpack.c.b16 %v9040, %v9037
        %v9128 = vpack.c.b16 %v9044, %v9041
        %v9129 = vpack.c.b16 %v9045, %v9042
        %v9130 = vpack.c.b16 %v9046, %v9043
        %v9131 = vpack.c.b16 %v9050, %v9047
        %v9132 = vpack.c.b16 %v9051, %v9048
        %v9133 = vpack.c.b16 %v9052, %v9049
        %v9134 = vpack.c.b16 %v9056, %v9053
        %v9135 = vpack.c.b16 %v9057, %v9054
        %v9136 = vpack.c.b16 %v9058, %v9055
        %v9137 = vpack.c.b16 %v9062, %v9059
        %v9138 = vpack.c.b16 %v9063, %v9060
        %v9139 = vpack.c.b16 %v9064, %v9061
        %v9140 = vpack.c.b16 %v9068, %v9065
        %v9141 = vpack.c.b16 %v9069, %v9066
        %v9142 = vpack.c.b16 %v9070, %v9067
        %v9143 = vpack.c.b16 %v9074, %v9071
        %v9144 = vpack.c.b16 %v9075, %v9072
        %v9145 = vpack.c.b16 %v9076, %v9073
        %v9146 = vpack.c.b16 %v9080, %v9077
        %v9147 = vpack.c.b16 %v9081, %v9078
        %v9148 = vpack.c.b16 %v9082, %v9079
        %v9149 = vpack.c.b16 %v9086, %v9083
        %v9150 = vpack.c.b16 %v9087, %v9084
        %v9151 = vpack.c.b16 %v9088, %v9085
        %v9152 = vpack.c.b16 %v9092, %v9089
        %v9153 = vpack.c.b16 %v9093, %v9090
        %v9154 = vpack.c.b16 %v9094, %v9091
        %v9155 = vpack.c.b16 %v9098, %v9095
        %v9156 = vpack.c.b16 %v9099, %v9096
        %v9157 = vpack.c.b16 %v9100, %v9097
        %v9158 = vpack.c.b16 %v9104, %v9101
        %v9159 = vpack.c.b16 %v9105, %v9102
        %v9160 = vpack.c.b16 %v9106, %v9103
        %v9161 = vpack.c.b16 %v9110, %v9107
        %v9162 = vpack.c.b16 %v9111, %v9108
        %v9163 = vpack.c.b16 %v9112, %v9109
        %v9164 = vpack.c.b16 %v9116, %v9113
        %v9165 = vpack.c.b16 %v9117, %v9114
        %v9166 = vpack.c.b16 %v9118, %v9115
        %v9263 = vunpack.c.l.b16 %v8911
        %v9264 = vunpack.c.l.b16 %v8912
        %v9265 = vunpack.c.l.b16 %v8913
        %v9266 = vunpack.c.l.b16 %v8914
        %v9267 = vunpack.c.l.b16 %v8915
        %v9268 = vunpack.c.l.b16 %v8916
        %v9269 = vunpack.c.l.b16 %v8917
        %v9270 = vunpack.c.l.b16 %v8918
        %v9271 = vunpack.c.l.b16 %v8919
        %v9272 = vunpack.c.l.b16 %v8920
        %v9273 = vunpack.c.l.b16 %v8921
        %v9274 = vunpack.c.l.b16 %v8922
        %v9275 = vunpack.c.l.b16 %v8923
        %v9276 = vunpack.c.l.b16 %v8924
        %v9277 = vunpack.c.l.b16 %v8925
        %v9278 = vunpack.c.l.b16 %v8926
        %v9279 = vunpack.c.l.b16 %v8927
        %v9280 = vunpack.c.l.b16 %v8928
        %v9281 = vunpack.c.l.b16 %v8929
        %v9282 = vunpack.c.l.b16 %v8930
        %v9283 = vunpack.c.l.b16 %v8931
        %v9284 = vunpack.c.l.b16 %v8932
        %v9285 = vunpack.c.l.b16 %v8933
        %v9286 = vunpack.c.l.b16 %v8934
        %v9287 = vunpack.c.l.b16 %v8935
        %v9288 = vunpack.c.l.b16 %v8936
        %v9289 = vunpack.c.l.b16 %v8937
        %v9290 = vunpack.c.l.b16 %v8938
        %v9291 = vunpack.c.l.b16 %v8939
        %v9292 = vunpack.c.l.b16 %v8940
        %v9293 = vunpack.c.l.b16 %v8941
        %v9294 = vunpack.c.l.b16 %v8942
        %v9295 = vunpack.c.l.b16 %v8943
        %v9296 = vunpack.c.l.b16 %v8944
        %v9297 = vunpack.c.l.b16 %v8945
        %v9298 = vunpack.c.l.b16 %v8946
        %v9299 = vunpack.c.l.b16 %v8947
        %v9300 = vunpack.c.l.b16 %v8948
        %v9301 = vunpack.c.l.b16 %v8949
        %v9302 = vunpack.c.l.b16 %v8950
        %v9303 = vunpack.c.l.b16 %v8951
        %v9304 = vunpack.c.l.b16 %v8952
        %v9305 = vunpack.c.l.b16 %v8953
        %v9306 = vunpack.c.l.b16 %v8954
        %v9307 = vunpack.c.l.b16 %v8955
        %v9308 = vunpack.c.l.b16 %v8956
        %v9309 = vunpack.c.l.b16 %v8957
        %v9310 = vunpack.c.l.b16 %v8958
        %v9311 = vpack.c.b16 %v9264, %v9263
        %v9312 = vpack.c.b16 %v9266, %v9265
        %v9313 = vpack.c.b16 %v9268, %v9267
        %v9314 = vpack.c.b16 %v9270, %v9269
        %v9315 = vpack.c.b16 %v9272, %v9271
        %v9316 = vpack.c.b16 %v9274, %v9273
        %v9317 = vpack.c.b16 %v9276, %v9275
        %v9318 = vpack.c.b16 %v9278, %v9277
        %v9319 = vpack.c.b16 %v9280, %v9279
        %v9320 = vpack.c.b16 %v9282, %v9281
        %v9321 = vpack.c.b16 %v9284, %v9283
        %v9322 = vpack.c.b16 %v9286, %v9285
        %v9323 = vpack.c.b16 %v9288, %v9287
        %v9324 = vpack.c.b16 %v9290, %v9289
        %v9325 = vpack.c.b16 %v9292, %v9291
        %v9326 = vpack.c.b16 %v9294, %v9293
        %v9327 = vpack.c.b16 %v9296, %v9295
        %v9328 = vpack.c.b16 %v9298, %v9297
        %v9329 = vpack.c.b16 %v9300, %v9299
        %v9330 = vpack.c.b16 %v9302, %v9301
        %v9331 = vpack.c.b16 %v9304, %v9303
        %v9332 = vpack.c.b16 %v9306, %v9305
        %v9333 = vpack.c.b16 %v9308, %v9307
        %v9334 = vpack.c.b16 %v9310, %v9309
        %9359 = vmatprep.subr.bf16.mxu0 0
        %9360 = vmatpush1.bf16.msra.mxu0 %v9318
        %9361 = vmatprep.subr.bf16.mxu0 0
        %9362 = vmatpush1.bf16.msra.mxu0 %v9317
        %9363 = vmatprep.subr.bf16.mxu0 0
        %9364 = vmatpush1.bf16.msra.mxu0 %v9316
        %9365 = vmatprep.subr.bf16.mxu0 0
        %9366 = vmatpush1.bf16.msra.mxu0 %v9315
        %9367 = vmatprep.subr.bf16.mxu0 0
        %9368 = vmatpush1.bf16.msra.mxu0 %v9314
        %9369 = vmatprep.subr.bf16.mxu0 0
        %9370 = vmatpush1.bf16.msra.mxu0 %v9313
        %9371 = vmatprep.subr.bf16.mxu0 0
        %9372 = vmatpush1.bf16.msra.mxu0 %v9312
        %9373 = vmatprep.subr.bf16.mxu0 0
        %9374 = vmatpush1.bf16.msra.mxu0 %v9311
        %9375 = vmatprep.subr.bf16.mxu0 0
        %9376 = vmatpush2.bf16.msra.mxu0 %v9326
        %9377 = vmatprep.subr.bf16.mxu0 0
        %9378 = vmatpush2.bf16.msra.mxu0 %v9325
        %9379 = vmatprep.subr.bf16.mxu0 0
        %9380 = vmatpush2.bf16.msra.mxu0 %v9324
        %9381 = vmatprep.subr.bf16.mxu0 0
        %9382 = vmatpush2.bf16.msra.mxu0 %v9323
        %9383 = vmatprep.subr.bf16.mxu0 0
        %9384 = vmatpush2.bf16.msra.mxu0 %v9322
        %9385 = vmatprep.subr.bf16.mxu0 0
        %9386 = vmatpush2.bf16.msra.mxu0 %v9321
        %9387 = vmatprep.subr.bf16.mxu0 0
        %9388 = vmatpush2.bf16.msra.mxu0 %v9320
        %9389 = vmatprep.subr.bf16.mxu0 0
        %9390 = vmatpush2.bf16.msra.mxu0 %v9319
        %9391 = vmatprep.mubr.bf16.mxu0 %v9120
        %9392 = vmatmul.mubr.bf16.gmra.mxu0 %v9119
        %v9393 = vpop.f32.mrf.mxu0
        %v9394 = vadd.f32 0.0, %v9393
        %v9395 = vpop.f32.mrf.mxu0
        %v9396 = vpop.f32.mrf.mxu0
        %v9397 = vadd.f32 0.0, %v9396
        %v9398 = vpop.f32.mrf.mxu0
        %9399 = vmatprep.mubr.bf16.mxu0 %v9123
        %9400 = vmatmul.mubr.bf16.gmra.mxu0 %v9122
        %v9401 = vpop.f32.mrf.mxu0
        %v9402 = vadd.f32 0.0, %v9401
        %v9403 = vpop.f32.mrf.mxu0
        %v9404 = vpop.f32.mrf.mxu0
        %v9405 = vadd.f32 0.0, %v9404
        %v9406 = vpop.f32.mrf.mxu0
        %9407 = vmatprep.mubr.bf16.mxu0 %v9126
        %9408 = vmatmul.mubr.bf16.gmra.mxu0 %v9125
        %v9409 = vpop.f32.mrf.mxu0
        %v9410 = vadd.f32 0.0, %v9409
        %v9411 = vpop.f32.mrf.mxu0
        %v9412 = vpop.f32.mrf.mxu0
        %v9413 = vadd.f32 0.0, %v9412
        %v9414 = vpop.f32.mrf.mxu0
        %9415 = vmatprep.mubr.bf16.mxu0 %v9129
        %9416 = vmatmul.mubr.bf16.gmra.mxu0 %v9128
        %v9417 = vpop.f32.mrf.mxu0
        %v9418 = vadd.f32 0.0, %v9417
        %v9419 = vpop.f32.mrf.mxu0
        %v9420 = vpop.f32.mrf.mxu0
        %v9421 = vadd.f32 0.0, %v9420
        %v9422 = vpop.f32.mrf.mxu0
        %9423 = vmatprep.mubr.bf16.mxu0 %v9132
        %9424 = vmatmul.mubr.bf16.gmra.mxu0 %v9131
        %v9425 = vpop.f32.mrf.mxu0
        %v9426 = vadd.f32 0.0, %v9425
        %v9427 = vpop.f32.mrf.mxu0
        %v9428 = vpop.f32.mrf.mxu0
        %v9429 = vadd.f32 0.0, %v9428
        %v9430 = vpop.f32.mrf.mxu0
        %9431 = vmatprep.mubr.bf16.mxu0 %v9135
        %9432 = vmatmul.mubr.bf16.gmra.mxu0 %v9134
        %v9433 = vpop.f32.mrf.mxu0
        %v9434 = vadd.f32 0.0, %v9433
        %v9435 = vpop.f32.mrf.mxu0
        %v9436 = vpop.f32.mrf.mxu0
        %v9437 = vadd.f32 0.0, %v9436
        %v9438 = vpop.f32.mrf.mxu0
        %9439 = vmatprep.mubr.bf16.mxu0 %v9138
        %9440 = vmatmul.mubr.bf16.gmra.mxu0 %v9137
        %v9441 = vpop.f32.mrf.mxu0
        %v9442 = vadd.f32 0.0, %v9441
        %v9443 = vpop.f32.mrf.mxu0
        %v9444 = vpop.f32.mrf.mxu0
        %v9445 = vadd.f32 0.0, %v9444
        %v9446 = vpop.f32.mrf.mxu0
        %9447 = vmatprep.mubr.bf16.mxu0 %v9141
        %9448 = vmatmul.mubr.bf16.gmra.mxu0 %v9140
        %v9449 = vpop.f32.mrf.mxu0
        %v9450 = vadd.f32 0.0, %v9449
        %v9451 = vpop.f32.mrf.mxu0
        %v9452 = vpop.f32.mrf.mxu0
        %v9453 = vadd.f32 0.0, %v9452
        %v9454 = vpop.f32.mrf.mxu0
        %9455 = vmatprep.mubr.bf16.mxu0 %v9144
        %9456 = vmatmul.mubr.bf16.gmra.mxu0 %v9143
        %v9457 = vpop.f32.mrf.mxu0
        %v9458 = vadd.f32 0.0, %v9457
        %v9459 = vpop.f32.mrf.mxu0
        %v9460 = vpop.f32.mrf.mxu0
        %v9461 = vadd.f32 0.0, %v9460
        %v9462 = vpop.f32.mrf.mxu0
        %9463 = vmatprep.mubr.bf16.mxu0 %v9147
        %9464 = vmatmul.mubr.bf16.gmra.mxu0 %v9146
        %v9465 = vpop.f32.mrf.mxu0
        %v9466 = vadd.f32 0.0, %v9465
        %v9467 = vpop.f32.mrf.mxu0
        %v9468 = vpop.f32.mrf.mxu0
        %v9469 = vadd.f32 0.0, %v9468
        %v9470 = vpop.f32.mrf.mxu0
        %9471 = vmatprep.mubr.bf16.mxu0 %v9150
        %9472 = vmatmul.mubr.bf16.gmra.mxu0 %v9149
        %v9473 = vpop.f32.mrf.mxu0
        %v9474 = vadd.f32 0.0, %v9473
        %v9475 = vpop.f32.mrf.mxu0
        %v9476 = vpop.f32.mrf.mxu0
        %v9477 = vadd.f32 0.0, %v9476
        %v9478 = vpop.f32.mrf.mxu0
        %9479 = vmatprep.mubr.bf16.mxu0 %v9153
        %9480 = vmatmul.mubr.bf16.gmra.mxu0 %v9152
        %v9481 = vpop.f32.mrf.mxu0
        %v9482 = vadd.f32 0.0, %v9481
        %v9483 = vpop.f32.mrf.mxu0
        %v9484 = vpop.f32.mrf.mxu0
        %v9485 = vadd.f32 0.0, %v9484
        %v9486 = vpop.f32.mrf.mxu0
        %9487 = vmatprep.mubr.bf16.mxu0 %v9156
        %9488 = vmatmul.mubr.bf16.gmra.mxu0 %v9155
        %v9489 = vpop.f32.mrf.mxu0
        %v9490 = vadd.f32 0.0, %v9489
        %v9491 = vpop.f32.mrf.mxu0
        %v9492 = vpop.f32.mrf.mxu0
        %v9493 = vadd.f32 0.0, %v9492
        %v9494 = vpop.f32.mrf.mxu0
        %9495 = vmatprep.mubr.bf16.mxu0 %v9159
        %9496 = vmatmul.mubr.bf16.gmra.mxu0 %v9158
        %v9497 = vpop.f32.mrf.mxu0
        %v9498 = vadd.f32 0.0, %v9497
        %v9499 = vpop.f32.mrf.mxu0
        %v9500 = vpop.f32.mrf.mxu0
        %v9501 = vadd.f32 0.0, %v9500
        %v9502 = vpop.f32.mrf.mxu0
        %9503 = vmatprep.mubr.bf16.mxu0 %v9162
        %9504 = vmatmul.mubr.bf16.gmra.mxu0 %v9161
        %v9505 = vpop.f32.mrf.mxu0
        %v9506 = vadd.f32 0.0, %v9505
        %v9507 = vpop.f32.mrf.mxu0
        %v9508 = vpop.f32.mrf.mxu0
        %v9509 = vadd.f32 0.0, %v9508
        %v9510 = vpop.f32.mrf.mxu0
        %9511 = vmatprep.mubr.bf16.mxu0 %v9165
        %9512 = vmatmul.mubr.bf16.gmra.mxu0 %v9164
        %v9513 = vpop.f32.mrf.mxu0
        %v9514 = vadd.f32 0.0, %v9513
        %v9515 = vpop.f32.mrf.mxu0
        %v9516 = vpop.f32.mrf.mxu0
        %v9517 = vadd.f32 0.0, %v9516
        %v9518 = vpop.f32.mrf.mxu0
        %9519 = vdwg.mxu0
        %9520 = vmatprep.subr.bf16.mxu0 0
        %9521 = vmatpush1.bf16.msra.mxu0 %v9334
        %9522 = vmatprep.subr.bf16.mxu0 0
        %9523 = vmatpush1.bf16.msra.mxu0 %v9333
        %9524 = vmatprep.subr.bf16.mxu0 0
        %9525 = vmatpush1.bf16.msra.mxu0 %v9332
        %9526 = vmatprep.subr.bf16.mxu0 0
        %9527 = vmatpush1.bf16.msra.mxu0 %v9331
        %9528 = vmatprep.subr.bf16.mxu0 0
        %9529 = vmatpush1.bf16.msra.mxu0 %v9330
        %9530 = vmatprep.subr.bf16.mxu0 0
        %9531 = vmatpush1.bf16.msra.mxu0 %v9329
        %9532 = vmatprep.subr.bf16.mxu0 0
        %9533 = vmatpush1.bf16.msra.mxu0 %v9328
        %9534 = vmatprep.subr.bf16.mxu0 0
        %9535 = vmatpush1.bf16.msra.mxu0 %v9327
        %9536 = vmatprep.subr.bf16.mxu0 0
        %9537 = vmatpush2.bf16.msra.mxu0 0
        %9538 = vmatprep.subr.bf16.mxu0 0
        %9539 = vmatpush2.bf16.msra.mxu0 0
        %9540 = vmatprep.subr.bf16.mxu0 0
        %9541 = vmatpush2.bf16.msra.mxu0 0
        %9542 = vmatprep.subr.bf16.mxu0 0
        %9543 = vmatpush2.bf16.msra.mxu0 0
        %9544 = vmatprep.subr.bf16.mxu0 0
        %9545 = vmatpush2.bf16.msra.mxu0 0
        %9546 = vmatprep.subr.bf16.mxu0 0
        %9547 = vmatpush2.bf16.msra.mxu0 0
        %9548 = vmatprep.subr.bf16.mxu0 0
        %9549 = vmatpush2.bf16.msra.mxu0 0
        %9550 = vmatprep.subr.bf16.mxu0 0
        %9551 = vmatpush2.bf16.msra.mxu0 0
        %9552 = vmatprep.mubr.bf16.mxu0 0
        %9553 = vmatmul.mubr.bf16.gmra.mxu0 %v9121
        %v9554 = vpop.f32.mrf.mxu0
        %v9555 = vadd.f32 %v9394, %v9554
        %v9556 = vpop.f32.mrf.mxu0
        %v9557 = vpop.f32.mrf.mxu0
        %v9558 = vadd.f32 %v9397, %v9557
        %v9559 = vpop.f32.mrf.mxu0
        %9560 = vmatprep.mubr.bf16.mxu0 0
        %9561 = vmatmul.mubr.bf16.gmra.mxu0 %v9124
        %v9562 = vpop.f32.mrf.mxu0
        %v9563 = vadd.f32 %v9402, %v9562
        %v9564 = vpop.f32.mrf.mxu0
        %v9565 = vpop.f32.mrf.mxu0
        %v9566 = vadd.f32 %v9405, %v9565
        %v9567 = vpop.f32.mrf.mxu0
        %9568 = vmatprep.mubr.bf16.mxu0 0
        %9569 = vmatmul.mubr.bf16.gmra.mxu0 %v9127
        %v9570 = vpop.f32.mrf.mxu0
        %v9571 = vadd.f32 %v9410, %v9570
        %v9572 = vpop.f32.mrf.mxu0
        %v9573 = vpop.f32.mrf.mxu0
        %v9574 = vadd.f32 %v9413, %v9573
        %v9575 = vpop.f32.mrf.mxu0
        %9576 = vmatprep.mubr.bf16.mxu0 0
        %9577 = vmatmul.mubr.bf16.gmra.mxu0 %v9130
        %v9578 = vpop.f32.mrf.mxu0
        %v9579 = vadd.f32 %v9418, %v9578
        %v9580 = vpop.f32.mrf.mxu0
        %v9581 = vpop.f32.mrf.mxu0
        %v9582 = vadd.f32 %v9421, %v9581
        %v9583 = vpop.f32.mrf.mxu0
        %9584 = vmatprep.mubr.bf16.mxu0 0
        %9585 = vmatmul.mubr.bf16.gmra.mxu0 %v9133
        %v9586 = vpop.f32.mrf.mxu0
        %v9587 = vadd.f32 %v9426, %v9586
        %v9588 = vpop.f32.mrf.mxu0
        %v9589 = vpop.f32.mrf.mxu0
        %v9590 = vadd.f32 %v9429, %v9589
        %v9591 = vpop.f32.mrf.mxu0
        %9592 = vmatprep.mubr.bf16.mxu0 0
        %9593 = vmatmul.mubr.bf16.gmra.mxu0 %v9136
        %v9594 = vpop.f32.mrf.mxu0
        %v9595 = vadd.f32 %v9434, %v9594
        %v9596 = vpop.f32.mrf.mxu0
        %v9597 = vpop.f32.mrf.mxu0
        %v9598 = vadd.f32 %v9437, %v9597
        %v9599 = vpop.f32.mrf.mxu0
        %9600 = vmatprep.mubr.bf16.mxu0 0
        %9601 = vmatmul.mubr.bf16.gmra.mxu0 %v9139
        %v9602 = vpop.f32.mrf.mxu0
        %v9603 = vadd.f32 %v9442, %v9602
        %v9604 = vpop.f32.mrf.mxu0
        %v9605 = vpop.f32.mrf.mxu0
        %v9606 = vadd.f32 %v9445, %v9605
        %v9607 = vpop.f32.mrf.mxu0
        %9608 = vmatprep.mubr.bf16.mxu0 0
        %9609 = vmatmul.mubr.bf16.gmra.mxu0 %v9142
        %v9610 = vpop.f32.mrf.mxu0
        %v9611 = vadd.f32 %v9450, %v9610
        %v9612 = vpop.f32.mrf.mxu0
        %v9613 = vpop.f32.mrf.mxu0
        %v9614 = vadd.f32 %v9453, %v9613
        %v9615 = vpop.f32.mrf.mxu0
        %9616 = vmatprep.mubr.bf16.mxu0 0
        %9617 = vmatmul.mubr.bf16.gmra.mxu0 %v9145
        %v9618 = vpop.f32.mrf.mxu0
        %v9619 = vadd.f32 %v9458, %v9618
        %v9620 = vpop.f32.mrf.mxu0
        %v9621 = vpop.f32.mrf.mxu0
        %v9622 = vadd.f32 %v9461, %v9621
        %v9623 = vpop.f32.mrf.mxu0
        %9624 = vmatprep.mubr.bf16.mxu0 0
        %9625 = vmatmul.mubr.bf16.gmra.mxu0 %v9148
        %v9626 = vpop.f32.mrf.mxu0
        %v9627 = vadd.f32 %v9466, %v9626
        %v9628 = vpop.f32.mrf.mxu0
        %v9629 = vpop.f32.mrf.mxu0
        %v9630 = vadd.f32 %v9469, %v9629
        %v9631 = vpop.f32.mrf.mxu0
        %9632 = vmatprep.mubr.bf16.mxu0 0
        %9633 = vmatmul.mubr.bf16.gmra.mxu0 %v9151
        %v9634 = vpop.f32.mrf.mxu0
        %v9635 = vadd.f32 %v9474, %v9634
        %v9636 = vpop.f32.mrf.mxu0
        %v9637 = vpop.f32.mrf.mxu0
        %v9638 = vadd.f32 %v9477, %v9637
        %v9639 = vpop.f32.mrf.mxu0
        %9640 = vmatprep.mubr.bf16.mxu0 0
        %9641 = vmatmul.mubr.bf16.gmra.mxu0 %v9154
        %v9642 = vpop.f32.mrf.mxu0
        %v9643 = vadd.f32 %v9482, %v9642
        %v9644 = vpop.f32.mrf.mxu0
        %v9645 = vpop.f32.mrf.mxu0
        %v9646 = vadd.f32 %v9485, %v9645
        %v9647 = vpop.f32.mrf.mxu0
        %9648 = vmatprep.mubr.bf16.mxu0 0
        %9649 = vmatmul.mubr.bf16.gmra.mxu0 %v9157
        %v9650 = vpop.f32.mrf.mxu0
        %v9651 = vadd.f32 %v9490, %v9650
        %v9652 = vpop.f32.mrf.mxu0
        %v9653 = vpop.f32.mrf.mxu0
        %v9654 = vadd.f32 %v9493, %v9653
        %v9655 = vpop.f32.mrf.mxu0
        %9656 = vmatprep.mubr.bf16.mxu0 0
        %9657 = vmatmul.mubr.bf16.gmra.mxu0 %v9160
        %v9658 = vpop.f32.mrf.mxu0
        %v9659 = vadd.f32 %v9498, %v9658
        %v9660 = vpop.f32.mrf.mxu0
        %v9661 = vpop.f32.mrf.mxu0
        %v9662 = vadd.f32 %v9501, %v9661
        %v9663 = vpop.f32.mrf.mxu0
        %9664 = vmatprep.mubr.bf16.mxu0 0
        %9665 = vmatmul.mubr.bf16.gmra.mxu0 %v9163
        %v9666 = vpop.f32.mrf.mxu0
        %v9667 = vadd.f32 %v9506, %v9666
        %v9668 = vpop.f32.mrf.mxu0
        %v9669 = vpop.f32.mrf.mxu0
        %v9670 = vadd.f32 %v9509, %v9669
        %v9671 = vpop.f32.mrf.mxu0
        %9672 = vmatprep.mubr.bf16.mxu0 0
        %9673 = vmatmul.mubr.bf16.gmra.mxu0 %v9166
        %v9674 = vpop.f32.mrf.mxu0
        %v9675 = vadd.f32 %v9514, %v9674
        %v9676 = vpop.f32.mrf.mxu0
        %v9677 = vpop.f32.mrf.mxu0
        %v9678 = vadd.f32 %v9517, %v9677
        %v9679 = vpop.f32.mrf.mxu0
        %9680 = vdwg.mxu0
        %v9745 = vunpack.c.l.b16 %v7903
        %v9746 = vunpack.c.h.b16 %v7903
        %v9747 = vunpack.c.l.b16 %v7904
        %v9748 = vunpack.c.l.b16 %v7905
        %v9749 = vunpack.c.h.b16 %v7905
        %v9750 = vunpack.c.l.b16 %v7906
        %v9751 = vunpack.c.l.b16 %v7907
        %v9752 = vunpack.c.h.b16 %v7907
        %v9753 = vunpack.c.l.b16 %v7908
        %v9754 = vunpack.c.l.b16 %v7909
        %v9755 = vunpack.c.h.b16 %v7909
        %v9756 = vunpack.c.l.b16 %v7910
        %v9757 = vunpack.c.l.b16 %v7911
        %v9758 = vunpack.c.h.b16 %v7911
        %v9759 = vunpack.c.l.b16 %v7912
        %v9760 = vunpack.c.l.b16 %v7913
        %v9761 = vunpack.c.h.b16 %v7913
        %v9762 = vunpack.c.l.b16 %v7914
        %v9763 = vunpack.c.l.b16 %v7915
        %v9764 = vunpack.c.h.b16 %v7915
        %v9765 = vunpack.c.l.b16 %v7916
        %v9766 = vunpack.c.l.b16 %v7917
        %v9767 = vunpack.c.h.b16 %v7917
        %v9768 = vunpack.c.l.b16 %v7918
        %v9769 = vunpack.c.l.b16 %v7919
        %v9770 = vunpack.c.h.b16 %v7919
        %v9771 = vunpack.c.l.b16 %v7920
        %v9772 = vunpack.c.l.b16 %v7921
        %v9773 = vunpack.c.h.b16 %v7921
        %v9774 = vunpack.c.l.b16 %v7922
        %v9775 = vunpack.c.l.b16 %v7923
        %v9776 = vunpack.c.h.b16 %v7923
        %v9777 = vunpack.c.l.b16 %v7924
        %v9778 = vunpack.c.l.b16 %v7925
        %v9779 = vunpack.c.h.b16 %v7925
        %v9780 = vunpack.c.l.b16 %v7926
        %v9781 = vunpack.c.l.b16 %v7927
        %v9782 = vunpack.c.h.b16 %v7927
        %v9783 = vunpack.c.l.b16 %v7928
        %v9784 = vunpack.c.l.b16 %v7929
        %v9785 = vunpack.c.h.b16 %v7929
        %v9786 = vunpack.c.l.b16 %v7930
        %v9787 = vunpack.c.l.b16 %v7931
        %v9788 = vunpack.c.h.b16 %v7931
        %v9789 = vunpack.c.l.b16 %v7932
        %v9790 = vunpack.c.l.b16 %v7933
        %v9791 = vunpack.c.h.b16 %v7933
        %v9792 = vunpack.c.l.b16 %v7934
        %v9793 = vunpack.c.l.b16 %v7935
        %v9794 = vunpack.c.h.b16 %v7935
        %v9795 = vunpack.c.l.b16 %v7936
        %v9796 = vunpack.c.l.b16 %v7937
        %v9797 = vunpack.c.h.b16 %v7937
        %v9798 = vunpack.c.l.b16 %v7938
        %v9799 = vunpack.c.l.b16 %v7939
        %v9800 = vunpack.c.h.b16 %v7939
        %v9801 = vunpack.c.l.b16 %v7940
        %v9802 = vunpack.c.l.b16 %v7941
        %v9803 = vunpack.c.h.b16 %v7941
        %v9804 = vunpack.c.l.b16 %v7942
        %v9805 = vunpack.c.l.b16 %v7943
        %v9806 = vunpack.c.h.b16 %v7943
        %v9807 = vunpack.c.l.b16 %v7944
        %v9808 = vunpack.c.l.b16 %v7945
        %v9809 = vunpack.c.h.b16 %v7945
        %v9810 = vunpack.c.l.b16 %v7946
        %v9811 = vunpack.c.l.b16 %v7947
        %v9812 = vunpack.c.h.b16 %v7947
        %v9813 = vunpack.c.l.b16 %v7948
        %v9814 = vunpack.c.l.b16 %v7949
        %v9815 = vunpack.c.h.b16 %v7949
        %v9816 = vunpack.c.l.b16 %v7950
        %v9817 = vunpack.c.l.b16 %v7951
        %v9818 = vunpack.c.h.b16 %v7951
        %v9819 = vunpack.c.l.b16 %v7952
        %v9820 = vunpack.c.l.b16 %v7953
        %v9821 = vunpack.c.h.b16 %v7953
        %v9822 = vunpack.c.l.b16 %v7954
        %v9823 = vunpack.c.l.b16 %v7955
        %v9824 = vunpack.c.h.b16 %v7955
        %v9825 = vunpack.c.l.b16 %v7956
        %v9826 = vunpack.c.l.b16 %v7957
        %v9827 = vunpack.c.h.b16 %v7957
        %v9828 = vunpack.c.l.b16 %v7958
        %v9829 = vunpack.c.l.b16 %v7959
        %v9830 = vunpack.c.h.b16 %v7959
        %v9831 = vunpack.c.l.b16 %v7960
        %v9832 = vunpack.c.l.b16 %v7961
        %v9833 = vunpack.c.h.b16 %v7961
        %v9834 = vunpack.c.l.b16 %v7962
        %v9835 = vunpack.c.l.b16 %v7963
        %v9836 = vunpack.c.h.b16 %v7963
        %v9837 = vunpack.c.l.b16 %v7964
        %v9838 = vunpack.c.l.b16 %v7965
        %v9839 = vunpack.c.h.b16 %v7965
        %v9840 = vunpack.c.l.b16 %v7966
        %v9841 = vpack.c.b16 %v9748, %v9745
        %v9842 = vpack.c.b16 %v9749, %v9746
        %v9843 = vpack.c.b16 %v9750, %v9747
        %v9844 = vpack.c.b16 %v9754, %v9751
        %v9845 = vpack.c.b16 %v9755, %v9752
        %v9846 = vpack.c.b16 %v9756, %v9753
        %v9847 = vpack.c.b16 %v9760, %v9757
        %v9848 = vpack.c.b16 %v9761, %v9758
        %v9849 = vpack.c.b16 %v9762, %v9759
        %v9850 = vpack.c.b16 %v9766, %v9763
        %v9851 = vpack.c.b16 %v9767, %v9764
        %v9852 = vpack.c.b16 %v9768, %v9765
        %v9853 = vpack.c.b16 %v9772, %v9769
        %v9854 = vpack.c.b16 %v9773, %v9770
        %v9855 = vpack.c.b16 %v9774, %v9771
        %v9856 = vpack.c.b16 %v9778, %v9775
        %v9857 = vpack.c.b16 %v9779, %v9776
        %v9858 = vpack.c.b16 %v9780, %v9777
        %v9859 = vpack.c.b16 %v9784, %v9781
        %v9860 = vpack.c.b16 %v9785, %v9782
        %v9861 = vpack.c.b16 %v9786, %v9783
        %v9862 = vpack.c.b16 %v9790, %v9787
        %v9863 = vpack.c.b16 %v9791, %v9788
        %v9864 = vpack.c.b16 %v9792, %v9789
        %v9865 = vpack.c.b16 %v9796, %v9793
        %v9866 = vpack.c.b16 %v9797, %v9794
        %v9867 = vpack.c.b16 %v9798, %v9795
        %v9868 = vpack.c.b16 %v9802, %v9799
        %v9869 = vpack.c.b16 %v9803, %v9800
        %v9870 = vpack.c.b16 %v9804, %v9801
        %v9871 = vpack.c.b16 %v9808, %v9805
        %v9872 = vpack.c.b16 %v9809, %v9806
        %v9873 = vpack.c.b16 %v9810, %v9807
        %v9874 = vpack.c.b16 %v9814, %v9811
        %v9875 = vpack.c.b16 %v9815, %v9812
        %v9876 = vpack.c.b16 %v9816, %v9813
        %v9877 = vpack.c.b16 %v9820, %v9817
        %v9878 = vpack.c.b16 %v9821, %v9818
        %v9879 = vpack.c.b16 %v9822, %v9819
        %v9880 = vpack.c.b16 %v9826, %v9823
        %v9881 = vpack.c.b16 %v9827, %v9824
        %v9882 = vpack.c.b16 %v9828, %v9825
        %v9883 = vpack.c.b16 %v9832, %v9829
        %v9884 = vpack.c.b16 %v9833, %v9830
        %v9885 = vpack.c.b16 %v9834, %v9831
        %v9886 = vpack.c.b16 %v9838, %v9835
        %v9887 = vpack.c.b16 %v9839, %v9836
        %v9888 = vpack.c.b16 %v9840, %v9837
        %v9985 = vunpack.c.l.b16 %v7967
        %v9986 = vunpack.c.l.b16 %v7968
        %v9987 = vunpack.c.l.b16 %v7969
        %v9988 = vunpack.c.l.b16 %v7970
        %v9989 = vunpack.c.l.b16 %v7971
        %v9990 = vunpack.c.l.b16 %v7972
        %v9991 = vunpack.c.l.b16 %v7973
        %v9992 = vunpack.c.l.b16 %v7974
        %v9993 = vunpack.c.l.b16 %v7975
        %v9994 = vunpack.c.l.b16 %v7976
        %v9995 = vunpack.c.l.b16 %v7977
        %v9996 = vunpack.c.l.b16 %v7978
        %v9997 = vunpack.c.l.b16 %v7979
        %v9998 = vunpack.c.l.b16 %v7980
        %v9999 = vunpack.c.l.b16 %v7981
        %v10000 = vunpack.c.l.b16 %v7982
        %v10001 = vunpack.c.l.b16 %v7983
        %v10002 = vunpack.c.l.b16 %v7984
        %v10003 = vunpack.c.l.b16 %v7985
        %v10004 = vunpack.c.l.b16 %v7986
        %v10005 = vunpack.c.l.b16 %v7987
        %v10006 = vunpack.c.l.b16 %v7988
        %v10007 = vunpack.c.l.b16 %v7989
        %v10008 = vunpack.c.l.b16 %v7990
        %v10009 = vunpack.c.l.b16 %v7991
        %v10010 = vunpack.c.l.b16 %v7992
        %v10011 = vunpack.c.l.b16 %v7993
        %v10012 = vunpack.c.l.b16 %v7994
        %v10013 = vunpack.c.l.b16 %v7995
        %v10014 = vunpack.c.l.b16 %v7996
        %v10015 = vunpack.c.l.b16 %v7997
        %v10016 = vunpack.c.l.b16 %v7998
        %v10017 = vunpack.c.l.b16 %v7999
        %v10018 = vunpack.c.l.b16 %v8000
        %v10019 = vunpack.c.l.b16 %v8001
        %v10020 = vunpack.c.l.b16 %v8002
        %v10021 = vunpack.c.l.b16 %v8003
        %v10022 = vunpack.c.l.b16 %v8004
        %v10023 = vunpack.c.l.b16 %v8005
        %v10024 = vunpack.c.l.b16 %v8006
        %v10025 = vunpack.c.l.b16 %v8007
        %v10026 = vunpack.c.l.b16 %v8008
        %v10027 = vunpack.c.l.b16 %v8009
        %v10028 = vunpack.c.l.b16 %v8010
        %v10029 = vunpack.c.l.b16 %v8011
        %v10030 = vunpack.c.l.b16 %v8012
        %v10031 = vunpack.c.l.b16 %v8013
        %v10032 = vunpack.c.l.b16 %v8014
        %v10033 = vpack.c.b16 %v9986, %v9985
        %v10034 = vpack.c.b16 %v9988, %v9987
        %v10035 = vpack.c.b16 %v9990, %v9989
        %v10036 = vpack.c.b16 %v9992, %v9991
        %v10037 = vpack.c.b16 %v9994, %v9993
        %v10038 = vpack.c.b16 %v9996, %v9995
        %v10039 = vpack.c.b16 %v9998, %v9997
        %v10040 = vpack.c.b16 %v10000, %v9999
        %v10041 = vpack.c.b16 %v10002, %v10001
        %v10042 = vpack.c.b16 %v10004, %v10003
        %v10043 = vpack.c.b16 %v10006, %v10005
        %v10044 = vpack.c.b16 %v10008, %v10007
        %v10045 = vpack.c.b16 %v10010, %v10009
        %v10046 = vpack.c.b16 %v10012, %v10011
        %v10047 = vpack.c.b16 %v10014, %v10013
        %v10048 = vpack.c.b16 %v10016, %v10015
        %v10049 = vpack.c.b16 %v10018, %v10017
        %v10050 = vpack.c.b16 %v10020, %v10019
        %v10051 = vpack.c.b16 %v10022, %v10021
        %v10052 = vpack.c.b16 %v10024, %v10023
        %v10053 = vpack.c.b16 %v10026, %v10025
        %v10054 = vpack.c.b16 %v10028, %v10027
        %v10055 = vpack.c.b16 %v10030, %v10029
        %v10056 = vpack.c.b16 %v10032, %v10031
        %10081 = vmatprep.subr.bf16.mxu0 0
        %10082 = vmatpush1.bf16.msra.mxu0 %v10040
        %10083 = vmatprep.subr.bf16.mxu0 0
        %10084 = vmatpush1.bf16.msra.mxu0 %v10039
        %10085 = vmatprep.subr.bf16.mxu0 0
        %10086 = vmatpush1.bf16.msra.mxu0 %v10038
        %10087 = vmatprep.subr.bf16.mxu0 0
        %10088 = vmatpush1.bf16.msra.mxu0 %v10037
        %10089 = vmatprep.subr.bf16.mxu0 0
        %10090 = vmatpush1.bf16.msra.mxu0 %v10036
        %10091 = vmatprep.subr.bf16.mxu0 0
        %10092 = vmatpush1.bf16.msra.mxu0 %v10035
        %10093 = vmatprep.subr.bf16.mxu0 0
        %10094 = vmatpush1.bf16.msra.mxu0 %v10034
        %10095 = vmatprep.subr.bf16.mxu0 0
        %10096 = vmatpush1.bf16.msra.mxu0 %v10033
        %10097 = vmatprep.subr.bf16.mxu0 0
        %10098 = vmatpush2.bf16.msra.mxu0 %v10048
        %10099 = vmatprep.subr.bf16.mxu0 0
        %10100 = vmatpush2.bf16.msra.mxu0 %v10047
        %10101 = vmatprep.subr.bf16.mxu0 0
        %10102 = vmatpush2.bf16.msra.mxu0 %v10046
        %10103 = vmatprep.subr.bf16.mxu0 0
        %10104 = vmatpush2.bf16.msra.mxu0 %v10045
        %10105 = vmatprep.subr.bf16.mxu0 0
        %10106 = vmatpush2.bf16.msra.mxu0 %v10044
        %10107 = vmatprep.subr.bf16.mxu0 0
        %10108 = vmatpush2.bf16.msra.mxu0 %v10043
        %10109 = vmatprep.subr.bf16.mxu0 0
        %10110 = vmatpush2.bf16.msra.mxu0 %v10042
        %10111 = vmatprep.subr.bf16.mxu0 0
        %10112 = vmatpush2.bf16.msra.mxu0 %v10041
        %10113 = vmatprep.mubr.bf16.mxu0 %v9842
        %10114 = vmatmul.mubr.bf16.gmra.mxu0 %v9841
        %v10115 = vpop.f32.mrf.mxu0
        %v10116 = vadd.f32 %v9555, %v10115
        %v10117 = vpop.f32.mrf.mxu0
        %v10118 = vpop.f32.mrf.mxu0
        %v10119 = vadd.f32 %v9558, %v10118
        %v10120 = vpop.f32.mrf.mxu0
        %10121 = vmatprep.mubr.bf16.mxu0 %v9845
        %10122 = vmatmul.mubr.bf16.gmra.mxu0 %v9844
        %v10123 = vpop.f32.mrf.mxu0
        %v10124 = vadd.f32 %v9563, %v10123
        %v10125 = vpop.f32.mrf.mxu0
        %v10126 = vpop.f32.mrf.mxu0
        %v10127 = vadd.f32 %v9566, %v10126
        %v10128 = vpop.f32.mrf.mxu0
        %10129 = vmatprep.mubr.bf16.mxu0 %v9848
        %10130 = vmatmul.mubr.bf16.gmra.mxu0 %v9847
        %v10131 = vpop.f32.mrf.mxu0
        %v10132 = vadd.f32 %v9571, %v10131
        %v10133 = vpop.f32.mrf.mxu0
        %v10134 = vpop.f32.mrf.mxu0
        %v10135 = vadd.f32 %v9574, %v10134
        %v10136 = vpop.f32.mrf.mxu0
        %10137 = vmatprep.mubr.bf16.mxu0 %v9851
        %10138 = vmatmul.mubr.bf16.gmra.mxu0 %v9850
        %v10139 = vpop.f32.mrf.mxu0
        %v10140 = vadd.f32 %v9579, %v10139
        %v10141 = vpop.f32.mrf.mxu0
        %v10142 = vpop.f32.mrf.mxu0
        %v10143 = vadd.f32 %v9582, %v10142
        %v10144 = vpop.f32.mrf.mxu0
        %10145 = vmatprep.mubr.bf16.mxu0 %v9854
        %10146 = vmatmul.mubr.bf16.gmra.mxu0 %v9853
        %v10147 = vpop.f32.mrf.mxu0
        %v10148 = vadd.f32 %v9587, %v10147
        %v10149 = vpop.f32.mrf.mxu0
        %v10150 = vpop.f32.mrf.mxu0
        %v10151 = vadd.f32 %v9590, %v10150
        %v10152 = vpop.f32.mrf.mxu0
        %10153 = vmatprep.mubr.bf16.mxu0 %v9857
        %10154 = vmatmul.mubr.bf16.gmra.mxu0 %v9856
        %v10155 = vpop.f32.mrf.mxu0
        %v10156 = vadd.f32 %v9595, %v10155
        %v10157 = vpop.f32.mrf.mxu0
        %v10158 = vpop.f32.mrf.mxu0
        %v10159 = vadd.f32 %v9598, %v10158
        %v10160 = vpop.f32.mrf.mxu0
        %10161 = vmatprep.mubr.bf16.mxu0 %v9860
        %10162 = vmatmul.mubr.bf16.gmra.mxu0 %v9859
        %v10163 = vpop.f32.mrf.mxu0
        %v10164 = vadd.f32 %v9603, %v10163
        %v10165 = vpop.f32.mrf.mxu0
        %v10166 = vpop.f32.mrf.mxu0
        %v10167 = vadd.f32 %v9606, %v10166
        %v10168 = vpop.f32.mrf.mxu0
        %10169 = vmatprep.mubr.bf16.mxu0 %v9863
        %10170 = vmatmul.mubr.bf16.gmra.mxu0 %v9862
        %v10171 = vpop.f32.mrf.mxu0
        %v10172 = vadd.f32 %v9611, %v10171
        %v10173 = vpop.f32.mrf.mxu0
        %v10174 = vpop.f32.mrf.mxu0
        %v10175 = vadd.f32 %v9614, %v10174
        %v10176 = vpop.f32.mrf.mxu0
        %10177 = vmatprep.mubr.bf16.mxu0 %v9866
        %10178 = vmatmul.mubr.bf16.gmra.mxu0 %v9865
        %v10179 = vpop.f32.mrf.mxu0
        %v10180 = vadd.f32 %v9619, %v10179
        %v10181 = vpop.f32.mrf.mxu0
        %v10182 = vpop.f32.mrf.mxu0
        %v10183 = vadd.f32 %v9622, %v10182
        %v10184 = vpop.f32.mrf.mxu0
        %10185 = vmatprep.mubr.bf16.mxu0 %v9869
        %10186 = vmatmul.mubr.bf16.gmra.mxu0 %v9868
        %v10187 = vpop.f32.mrf.mxu0
        %v10188 = vadd.f32 %v9627, %v10187
        %v10189 = vpop.f32.mrf.mxu0
        %v10190 = vpop.f32.mrf.mxu0
        %v10191 = vadd.f32 %v9630, %v10190
        %v10192 = vpop.f32.mrf.mxu0
        %10193 = vmatprep.mubr.bf16.mxu0 %v9872
        %10194 = vmatmul.mubr.bf16.gmra.mxu0 %v9871
        %v10195 = vpop.f32.mrf.mxu0
        %v10196 = vadd.f32 %v9635, %v10195
        %v10197 = vpop.f32.mrf.mxu0
        %v10198 = vpop.f32.mrf.mxu0
        %v10199 = vadd.f32 %v9638, %v10198
        %v10200 = vpop.f32.mrf.mxu0
        %10201 = vmatprep.mubr.bf16.mxu0 %v9875
        %10202 = vmatmul.mubr.bf16.gmra.mxu0 %v9874
        %v10203 = vpop.f32.mrf.mxu0
        %v10204 = vadd.f32 %v9643, %v10203
        %v10205 = vpop.f32.mrf.mxu0
        %v10206 = vpop.f32.mrf.mxu0
        %v10207 = vadd.f32 %v9646, %v10206
        %v10208 = vpop.f32.mrf.mxu0
        %10209 = vmatprep.mubr.bf16.mxu0 %v9878
        %10210 = vmatmul.mubr.bf16.gmra.mxu0 %v9877
        %v10211 = vpop.f32.mrf.mxu0
        %v10212 = vadd.f32 %v9651, %v10211
        %v10213 = vpop.f32.mrf.mxu0
        %v10214 = vpop.f32.mrf.mxu0
        %v10215 = vadd.f32 %v9654, %v10214
        %v10216 = vpop.f32.mrf.mxu0
        %10217 = vmatprep.mubr.bf16.mxu0 %v9881
        %10218 = vmatmul.mubr.bf16.gmra.mxu0 %v9880
        %v10219 = vpop.f32.mrf.mxu0
        %v10220 = vadd.f32 %v9659, %v10219
        %v10221 = vpop.f32.mrf.mxu0
        %v10222 = vpop.f32.mrf.mxu0
        %v10223 = vadd.f32 %v9662, %v10222
        %v10224 = vpop.f32.mrf.mxu0
        %10225 = vmatprep.mubr.bf16.mxu0 %v9884
        %10226 = vmatmul.mubr.bf16.gmra.mxu0 %v9883
        %v10227 = vpop.f32.mrf.mxu0
        %v10228 = vadd.f32 %v9667, %v10227
        %v10229 = vpop.f32.mrf.mxu0
        %v10230 = vpop.f32.mrf.mxu0
        %v10231 = vadd.f32 %v9670, %v10230
        %v10232 = vpop.f32.mrf.mxu0
        %10233 = vmatprep.mubr.bf16.mxu0 %v9887
        %10234 = vmatmul.mubr.bf16.gmra.mxu0 %v9886
        %v10235 = vpop.f32.mrf.mxu0
        %v10236 = vadd.f32 %v9675, %v10235
        %v10237 = vpop.f32.mrf.mxu0
        %v10238 = vpop.f32.mrf.mxu0
        %v10239 = vadd.f32 %v9678, %v10238
        %v10240 = vpop.f32.mrf.mxu0
        %10241 = vdwg.mxu0
        %10242 = vmatprep.subr.bf16.mxu0 0
        %10243 = vmatpush1.bf16.msra.mxu0 %v10056
        %10244 = vmatprep.subr.bf16.mxu0 0
        %10245 = vmatpush1.bf16.msra.mxu0 %v10055
        %10246 = vmatprep.subr.bf16.mxu0 0
        %10247 = vmatpush1.bf16.msra.mxu0 %v10054
        %10248 = vmatprep.subr.bf16.mxu0 0
        %10249 = vmatpush1.bf16.msra.mxu0 %v10053
        %10250 = vmatprep.subr.bf16.mxu0 0
        %10251 = vmatpush1.bf16.msra.mxu0 %v10052
        %10252 = vmatprep.subr.bf16.mxu0 0
        %10253 = vmatpush1.bf16.msra.mxu0 %v10051
        %10254 = vmatprep.subr.bf16.mxu0 0
        %10255 = vmatpush1.bf16.msra.mxu0 %v10050
        %10256 = vmatprep.subr.bf16.mxu0 0
        %10257 = vmatpush1.bf16.msra.mxu0 %v10049
        %10258 = vmatprep.subr.bf16.mxu0 0
        %10259 = vmatpush2.bf16.msra.mxu0 0
        %10260 = vmatprep.subr.bf16.mxu0 0
        %10261 = vmatpush2.bf16.msra.mxu0 0
        %10262 = vmatprep.subr.bf16.mxu0 0
        %10263 = vmatpush2.bf16.msra.mxu0 0
        %10264 = vmatprep.subr.bf16.mxu0 0
        %10265 = vmatpush2.bf16.msra.mxu0 0
        %10266 = vmatprep.subr.bf16.mxu0 0
        %10267 = vmatpush2.bf16.msra.mxu0 0
        %10268 = vmatprep.subr.bf16.mxu0 0
        %10269 = vmatpush2.bf16.msra.mxu0 0
        %10270 = vmatprep.subr.bf16.mxu0 0
        %10271 = vmatpush2.bf16.msra.mxu0 0
        %10272 = vmatprep.subr.bf16.mxu0 0
        %10273 = vmatpush2.bf16.msra.mxu0 0
        %10274 = vmatprep.mubr.bf16.mxu0 0
        %10275 = vmatmul.mubr.bf16.gmra.mxu0 %v9843
        %v10276 = vpop.f32.mrf.mxu0
        %v10277 = vadd.f32 %v10116, %v10276
        %v10278 = vpop.f32.mrf.mxu0
        %v10279 = vpop.f32.mrf.mxu0
        %v10280 = vadd.f32 %v10119, %v10279
        %v10281 = vpop.f32.mrf.mxu0
        %10282 = vmatprep.mubr.bf16.mxu0 0
        %10283 = vmatmul.mubr.bf16.gmra.mxu0 %v9846
        %v10284 = vpop.f32.mrf.mxu0
        %v10285 = vadd.f32 %v10124, %v10284
        %v10286 = vpop.f32.mrf.mxu0
        %v10287 = vpop.f32.mrf.mxu0
        %v10288 = vadd.f32 %v10127, %v10287
        %v10289 = vpop.f32.mrf.mxu0
        %10290 = vmatprep.mubr.bf16.mxu0 0
        %10291 = vmatmul.mubr.bf16.gmra.mxu0 %v9849
        %v10292 = vpop.f32.mrf.mxu0
        %v10293 = vadd.f32 %v10132, %v10292
        %v10294 = vpop.f32.mrf.mxu0
        %v10295 = vpop.f32.mrf.mxu0
        %v10296 = vadd.f32 %v10135, %v10295
        %v10297 = vpop.f32.mrf.mxu0
        %10298 = vmatprep.mubr.bf16.mxu0 0
        %10299 = vmatmul.mubr.bf16.gmra.mxu0 %v9852
        %v10300 = vpop.f32.mrf.mxu0
        %v10301 = vadd.f32 %v10140, %v10300
        %v10302 = vpop.f32.mrf.mxu0
        %v10303 = vpop.f32.mrf.mxu0
        %v10304 = vadd.f32 %v10143, %v10303
        %v10305 = vpop.f32.mrf.mxu0
        %10306 = vmatprep.mubr.bf16.mxu0 0
        %10307 = vmatmul.mubr.bf16.gmra.mxu0 %v9855
        %v10308 = vpop.f32.mrf.mxu0
        %v10309 = vadd.f32 %v10148, %v10308
        %v10310 = vpop.f32.mrf.mxu0
        %v10311 = vpop.f32.mrf.mxu0
        %v10312 = vadd.f32 %v10151, %v10311
        %v10313 = vpop.f32.mrf.mxu0
        %10314 = vmatprep.mubr.bf16.mxu0 0
        %10315 = vmatmul.mubr.bf16.gmra.mxu0 %v9858
        %v10316 = vpop.f32.mrf.mxu0
        %v10317 = vadd.f32 %v10156, %v10316
        %v10318 = vpop.f32.mrf.mxu0
        %v10319 = vpop.f32.mrf.mxu0
        %v10320 = vadd.f32 %v10159, %v10319
        %v10321 = vpop.f32.mrf.mxu0
        %10322 = vmatprep.mubr.bf16.mxu0 0
        %10323 = vmatmul.mubr.bf16.gmra.mxu0 %v9861
        %v10324 = vpop.f32.mrf.mxu0
        %v10325 = vadd.f32 %v10164, %v10324
        %v10326 = vpop.f32.mrf.mxu0
        %v10327 = vpop.f32.mrf.mxu0
        %v10328 = vadd.f32 %v10167, %v10327
        %v10329 = vpop.f32.mrf.mxu0
        %10330 = vmatprep.mubr.bf16.mxu0 0
        %10331 = vmatmul.mubr.bf16.gmra.mxu0 %v9864
        %v10332 = vpop.f32.mrf.mxu0
        %v10333 = vadd.f32 %v10172, %v10332
        %v10334 = vpop.f32.mrf.mxu0
        %v10335 = vpop.f32.mrf.mxu0
        %v10336 = vadd.f32 %v10175, %v10335
        %v10337 = vpop.f32.mrf.mxu0
        %10338 = vmatprep.mubr.bf16.mxu0 0
        %10339 = vmatmul.mubr.bf16.gmra.mxu0 %v9867
        %v10340 = vpop.f32.mrf.mxu0
        %v10341 = vadd.f32 %v10180, %v10340
        %v10342 = vpop.f32.mrf.mxu0
        %v10343 = vpop.f32.mrf.mxu0
        %v10344 = vadd.f32 %v10183, %v10343
        %v10345 = vpop.f32.mrf.mxu0
        %10346 = vmatprep.mubr.bf16.mxu0 0
        %10347 = vmatmul.mubr.bf16.gmra.mxu0 %v9870
        %v10348 = vpop.f32.mrf.mxu0
        %v10349 = vadd.f32 %v10188, %v10348
        %v10350 = vpop.f32.mrf.mxu0
        %v10351 = vpop.f32.mrf.mxu0
        %v10352 = vadd.f32 %v10191, %v10351
        %v10353 = vpop.f32.mrf.mxu0
        %10354 = vmatprep.mubr.bf16.mxu0 0
        %10355 = vmatmul.mubr.bf16.gmra.mxu0 %v9873
        %v10356 = vpop.f32.mrf.mxu0
        %v10357 = vadd.f32 %v10196, %v10356
        %v10358 = vpop.f32.mrf.mxu0
        %v10359 = vpop.f32.mrf.mxu0
        %v10360 = vadd.f32 %v10199, %v10359
        %v10361 = vpop.f32.mrf.mxu0
        %10362 = vmatprep.mubr.bf16.mxu0 0
        %10363 = vmatmul.mubr.bf16.gmra.mxu0 %v9876
        %v10364 = vpop.f32.mrf.mxu0
        %v10365 = vadd.f32 %v10204, %v10364
        %v10366 = vpop.f32.mrf.mxu0
        %v10367 = vpop.f32.mrf.mxu0
        %v10368 = vadd.f32 %v10207, %v10367
        %v10369 = vpop.f32.mrf.mxu0
        %10370 = vmatprep.mubr.bf16.mxu0 0
        %10371 = vmatmul.mubr.bf16.gmra.mxu0 %v9879
        %v10372 = vpop.f32.mrf.mxu0
        %v10373 = vadd.f32 %v10212, %v10372
        %v10374 = vpop.f32.mrf.mxu0
        %v10375 = vpop.f32.mrf.mxu0
        %v10376 = vadd.f32 %v10215, %v10375
        %v10377 = vpop.f32.mrf.mxu0
        %10378 = vmatprep.mubr.bf16.mxu0 0
        %10379 = vmatmul.mubr.bf16.gmra.mxu0 %v9882
        %v10380 = vpop.f32.mrf.mxu0
        %v10381 = vadd.f32 %v10220, %v10380
        %v10382 = vpop.f32.mrf.mxu0
        %v10383 = vpop.f32.mrf.mxu0
        %v10384 = vadd.f32 %v10223, %v10383
        %v10385 = vpop.f32.mrf.mxu0
        %10386 = vmatprep.mubr.bf16.mxu0 0
        %10387 = vmatmul.mubr.bf16.gmra.mxu0 %v9885
        %v10388 = vpop.f32.mrf.mxu0
        %v10389 = vadd.f32 %v10228, %v10388
        %v10390 = vpop.f32.mrf.mxu0
        %v10391 = vpop.f32.mrf.mxu0
        %v10392 = vadd.f32 %v10231, %v10391
        %v10393 = vpop.f32.mrf.mxu0
        %10394 = vmatprep.mubr.bf16.mxu0 0
        %10395 = vmatmul.mubr.bf16.gmra.mxu0 %v9888
        %v10396 = vpop.f32.mrf.mxu0
        %v10397 = vadd.f32 %v10236, %v10396
        %v10398 = vpop.f32.mrf.mxu0
        %v10399 = vpop.f32.mrf.mxu0
        %v10400 = vadd.f32 %v10239, %v10399
        %v10401 = vpop.f32.mrf.mxu0
        %10402 = vdwg.mxu0
        %v10403 = vld [vmem:[%s4740] sm:$0xf]
        %v10404 = vld [vmem:[%s4740 + $0x4] sm:$0xf]
        %v10405 = vld [vmem:[%s4740 + $0xc] sm:$0xf]
        %v10406 = vld [vmem:[%s4740 + $0x10] sm:$0xf]
        %v10407 = vld [vmem:[%s4740 + $0x18] sm:$0xf]
        %v10408 = vld [vmem:[%s4740 + $0x1c] sm:$0xf]
        %v10409 = vld [vmem:[%s4740 + $0x24] sm:$0xf]
        %v10410 = vld [vmem:[%s4740 + $0x28] sm:$0xf]
        %v10411 = vld [vmem:[%s4740 + $0x30] sm:$0xf]
        %v10412 = vld [vmem:[%s4740 + $0x34] sm:$0xf]
        %v10413 = vld [vmem:[%s4740 + $0x3c] sm:$0xf]
        %v10414 = vld [vmem:[%s4740 + $0x40] sm:$0xf]
        %v10415 = vld [vmem:[%s4740 + $0x48] sm:$0xf]
        %v10416 = vld [vmem:[%s4740 + $0x4c] sm:$0xf]
        %v10417 = vld [vmem:[%s4740 + $0x54] sm:$0xf]
        %v10418 = vld [vmem:[%s4740 + $0x58] sm:$0xf]
        %v10419 = vld [vmem:[%s4740 + $0x60] sm:$0xf]
        %v10420 = vld [vmem:[%s4740 + $0x64] sm:$0xf]
        %v10421 = vld [vmem:[%s4740 + $0x6c] sm:$0xf]
        %v10422 = vld [vmem:[%s4740 + $0x70] sm:$0xf]
        %v10423 = vld [vmem:[%s4740 + $0x78] sm:$0xf]
        %v10424 = vld [vmem:[%s4740 + $0x7c] sm:$0xf]
        %v10425 = vld [vmem:[%s4740 + $0x84] sm:$0xf]
        %v10426 = vld [vmem:[%s4740 + $0x88] sm:$0xf]
        %v10427 = vld [vmem:[%s4740 + $0x90] sm:$0xf]
        %v10428 = vld [vmem:[%s4740 + $0x94] sm:$0xf]
        %v10429 = vld [vmem:[%s4740 + $0x9c] sm:$0xf]
        %v10430 = vld [vmem:[%s4740 + $0xa0] sm:$0xf]
        %v10431 = vld [vmem:[%s4740 + $0xa8] sm:$0xf]
        %v10432 = vld [vmem:[%s4740 + $0xac] sm:$0xf]
        %v10433 = vld [vmem:[%s4740 + $0xb4] sm:$0xf]
        %v10434 = vld [vmem:[%s4740 + $0xb8] sm:$0xf]
        %10435 = vst [vmem:[#allocation3] sm:$0xf] %v10403
        %10436 = vst [vmem:[#allocation3 + $0xc] sm:$0xf] %v10404
        %10437 = vst [vmem:[#allocation3 + $0x18] sm:$0xf] %v10405
        %10438 = vst [vmem:[#allocation3 + $0x24] sm:$0xf] %v10406
        %10439 = vst [vmem:[#allocation3 + $0x30] sm:$0xf] %v10407
        %10440 = vst [vmem:[#allocation3 + $0x3c] sm:$0xf] %v10408
        %10441 = vst [vmem:[#allocation3 + $0x48] sm:$0xf] %v10409
        %10442 = vst [vmem:[#allocation3 + $0x54] sm:$0xf] %v10410
        %10443 = vst [vmem:[#allocation3 + $0x60] sm:$0xf] %v10411
        %10444 = vst [vmem:[#allocation3 + $0x6c] sm:$0xf] %v10412
        %10445 = vst [vmem:[#allocation3 + $0x78] sm:$0xf] %v10413
        %10446 = vst [vmem:[#allocation3 + $0x84] sm:$0xf] %v10414
        %10447 = vst [vmem:[#allocation3 + $0x90] sm:$0xf] %v10415
        %10448 = vst [vmem:[#allocation3 + $0x9c] sm:$0xf] %v10416
        %10449 = vst [vmem:[#allocation3 + $0xa8] sm:$0xf] %v10417
        %10450 = vst [vmem:[#allocation3 + $0xb4] sm:$0xf] %v10418
        %10451 = vst [vmem:[#allocation3 + $0xc0] sm:$0xf] %v10419
        %10452 = vst [vmem:[#allocation3 + $0xcc] sm:$0xf] %v10420
        %10453 = vst [vmem:[#allocation3 + $0xd8] sm:$0xf] %v10421
        %10454 = vst [vmem:[#allocation3 + $0xe4] sm:$0xf] %v10422
        %10455 = vst [vmem:[#allocation3 + $0xf0] sm:$0xf] %v10423
        %10456 = vst [vmem:[#allocation3 + $0xfc] sm:$0xf] %v10424
        %10457 = vst [vmem:[#allocation3 + $0x108] sm:$0xf] %v10425
        %10458 = vst [vmem:[#allocation3 + $0x114] sm:$0xf] %v10426
        %10459 = vst [vmem:[#allocation3 + $0x120] sm:$0xf] %v10427
        %10460 = vst [vmem:[#allocation3 + $0x12c] sm:$0xf] %v10428
        %10461 = vst [vmem:[#allocation3 + $0x138] sm:$0xf] %v10429
        %10462 = vst [vmem:[#allocation3 + $0x144] sm:$0xf] %v10430
        %10463 = vst [vmem:[#allocation3 + $0x150] sm:$0xf] %v10431
        %10464 = vst [vmem:[#allocation3 + $0x15c] sm:$0xf] %v10432
        %10465 = vst [vmem:[#allocation3 + $0x168] sm:$0xf] %v10433
        %10466 = vst [vmem:[#allocation3 + $0x174] sm:$0xf] %v10434
        %v10467 = vld [vmem:[%s4740] sm:$0xf]
        %v10468 = vld [vmem:[%s4740 + $0x4] sm:$0xf]
        %v10469 = vld [vmem:[%s4740 + $0x8] sm:$0x1]
        %v10470 = vld [vmem:[%s4740 + $0xc] sm:$0xf]
        %v10471 = vld [vmem:[%s4740 + $0x10] sm:$0xf]
        %v10472 = vld [vmem:[%s4740 + $0x14] sm:$0x1]
        %v10473 = vld [vmem:[%s4740 + $0x18] sm:$0xf]
        %v10474 = vld [vmem:[%s4740 + $0x1c] sm:$0xf]
        %v10475 = vld [vmem:[%s4740 + $0x20] sm:$0x1]
        %v10476 = vld [vmem:[%s4740 + $0x24] sm:$0xf]
        %v10477 = vld [vmem:[%s4740 + $0x28] sm:$0xf]
        %v10478 = vld [vmem:[%s4740 + $0x2c] sm:$0x1]
        %v10479 = vld [vmem:[%s4740 + $0x30] sm:$0xf]
        %v10480 = vld [vmem:[%s4740 + $0x34] sm:$0xf]
        %v10481 = vld [vmem:[%s4740 + $0x38] sm:$0x1]
        %v10482 = vld [vmem:[%s4740 + $0x3c] sm:$0xf]
        %v10483 = vld [vmem:[%s4740 + $0x40] sm:$0xf]
        %v10484 = vld [vmem:[%s4740 + $0x44] sm:$0x1]
        %v10485 = vld [vmem:[%s4740 + $0x48] sm:$0xf]
        %v10486 = vld [vmem:[%s4740 + $0x4c] sm:$0xf]
        %v10487 = vld [vmem:[%s4740 + $0x50] sm:$0x1]
        %v10488 = vld [vmem:[%s4740 + $0x54] sm:$0xf]
        %v10489 = vld [vmem:[%s4740 + $0x58] sm:$0xf]
        %v10490 = vld [vmem:[%s4740 + $0x5c] sm:$0x1]
        %v10491 = vld [vmem:[%s4740 + $0x60] sm:$0xf]
        %v10492 = vld [vmem:[%s4740 + $0x64] sm:$0xf]
        %v10493 = vld [vmem:[%s4740 + $0x68] sm:$0x1]
        %v10494 = vld [vmem:[%s4740 + $0x6c] sm:$0xf]
        %v10495 = vld [vmem:[%s4740 + $0x70] sm:$0xf]
        %v10496 = vld [vmem:[%s4740 + $0x74] sm:$0x1]
        %v10497 = vld [vmem:[%s4740 + $0x78] sm:$0xf]
        %v10498 = vld [vmem:[%s4740 + $0x7c] sm:$0xf]
        %v10499 = vld [vmem:[%s4740 + $0x80] sm:$0x1]
        %v10500 = vld [vmem:[%s4740 + $0x84] sm:$0xf]
        %v10501 = vld [vmem:[%s4740 + $0x88] sm:$0xf]
        %v10502 = vld [vmem:[%s4740 + $0x8c] sm:$0x1]
        %v10503 = vld [vmem:[%s4740 + $0x90] sm:$0xf]
        %v10504 = vld [vmem:[%s4740 + $0x94] sm:$0xf]
        %v10505 = vld [vmem:[%s4740 + $0x98] sm:$0x1]
        %v10506 = vld [vmem:[%s4740 + $0x9c] sm:$0xf]
        %v10507 = vld [vmem:[%s4740 + $0xa0] sm:$0xf]
        %v10508 = vld [vmem:[%s4740 + $0xa4] sm:$0x1]
        %v10509 = vld [vmem:[%s4740 + $0xa8] sm:$0xf]
        %v10510 = vld [vmem:[%s4740 + $0xac] sm:$0xf]
        %v10511 = vld [vmem:[%s4740 + $0xb0] sm:$0x1]
        %v10512 = vld [vmem:[%s4740 + $0xb4] sm:$0xf]
        %v10513 = vld [vmem:[%s4740 + $0xb8] sm:$0xf]
        %v10514 = vld [vmem:[%s4740 + $0xbc] sm:$0x1]
        %v10516 = vshrl.u32 %v10467, 16
        %v10518 = vrot.slane %v10516, 4
        %v10519 = vshll.u32 %v10467, 16
        %v10521 = vrot.slane %v10519, 5
        %v10522 = vor.u32 %v10518, %v10521
        %v10523 = vrot.slane %v10522, 4
        %v10525 = vshll.u32 %v10468, 16
        %v10527 = vrot.slane %v10525, 5
        %v10528 = vsel %vm1516, %v10523, %v10527
        %v10529 = vshrl.u32 %v10468, 16
        %v10531 = vrot.slane %v10529, 4
        %v10532 = vor.u32 %v10531, %v10527
        %v10533 = vrot.slane %v10532, 4
        %v10535 = vshll.u32 %v10469, 16
        %v10537 = vrot.slane %v10535, 5
        %v10538 = vsel %vm1516, %v10533, %v10537
        %v10540 = vshrl.u32 %v10470, 16
        %v10542 = vrot.slane %v10540, 4
        %v10543 = vshll.u32 %v10470, 16
        %v10545 = vrot.slane %v10543, 5
        %v10546 = vor.u32 %v10542, %v10545
        %v10547 = vrot.slane %v10546, 4
        %v10549 = vshll.u32 %v10471, 16
        %v10551 = vrot.slane %v10549, 5
        %v10552 = vsel %vm1516, %v10547, %v10551
        %v10553 = vshrl.u32 %v10471, 16
        %v10555 = vrot.slane %v10553, 4
        %v10556 = vor.u32 %v10555, %v10551
        %v10557 = vrot.slane %v10556, 4
        %v10559 = vshll.u32 %v10472, 16
        %v10561 = vrot.slane %v10559, 5
        %v10562 = vsel %vm1516, %v10557, %v10561
        %v10564 = vshrl.u32 %v10473, 16
        %v10566 = vrot.slane %v10564, 4
        %v10567 = vshll.u32 %v10473, 16
        %v10569 = vrot.slane %v10567, 5
        %v10570 = vor.u32 %v10566, %v10569
        %v10571 = vrot.slane %v10570, 4
        %v10573 = vshll.u32 %v10474, 16
        %v10575 = vrot.slane %v10573, 5
        %v10576 = vsel %vm1516, %v10571, %v10575
        %v10577 = vshrl.u32 %v10474, 16
        %v10579 = vrot.slane %v10577, 4
        %v10580 = vor.u32 %v10579, %v10575
        %v10581 = vrot.slane %v10580, 4
        %v10583 = vshll.u32 %v10475, 16
        %v10585 = vrot.slane %v10583, 5
        %v10586 = vsel %vm1516, %v10581, %v10585
        %v10588 = vshrl.u32 %v10476, 16
        %v10590 = vrot.slane %v10588, 4
        %v10591 = vshll.u32 %v10476, 16
        %v10593 = vrot.slane %v10591, 5
        %v10594 = vor.u32 %v10590, %v10593
        %v10595 = vrot.slane %v10594, 4
        %v10597 = vshll.u32 %v10477, 16
        %v10599 = vrot.slane %v10597, 5
        %v10600 = vsel %vm1516, %v10595, %v10599
        %v10601 = vshrl.u32 %v10477, 16
        %v10603 = vrot.slane %v10601, 4
        %v10604 = vor.u32 %v10603, %v10599
        %v10605 = vrot.slane %v10604, 4
        %v10607 = vshll.u32 %v10478, 16
        %v10609 = vrot.slane %v10607, 5
        %v10610 = vsel %vm1516, %v10605, %v10609
        %v10612 = vshrl.u32 %v10479, 16
        %v10614 = vrot.slane %v10612, 4
        %v10615 = vshll.u32 %v10479, 16
        %v10617 = vrot.slane %v10615, 5
        %v10618 = vor.u32 %v10614, %v10617
        %v10619 = vrot.slane %v10618, 4
        %v10621 = vshll.u32 %v10480, 16
        %v10623 = vrot.slane %v10621, 5
        %v10624 = vsel %vm1516, %v10619, %v10623
        %v10625 = vshrl.u32 %v10480, 16
        %v10627 = vrot.slane %v10625, 4
        %v10628 = vor.u32 %v10627, %v10623
        %v10629 = vrot.slane %v10628, 4
        %v10631 = vshll.u32 %v10481, 16
        %v10633 = vrot.slane %v10631, 5
        %v10634 = vsel %vm1516, %v10629, %v10633
        %v10636 = vshrl.u32 %v10482, 16
        %v10638 = vrot.slane %v10636, 4
        %v10639 = vshll.u32 %v10482, 16
        %v10641 = vrot.slane %v10639, 5
        %v10642 = vor.u32 %v10638, %v10641
        %v10643 = vrot.slane %v10642, 4
        %v10645 = vshll.u32 %v10483, 16
        %v10647 = vrot.slane %v10645, 5
        %v10648 = vsel %vm1516, %v10643, %v10647
        %v10649 = vshrl.u32 %v10483, 16
        %v10651 = vrot.slane %v10649, 4
        %v10652 = vor.u32 %v10651, %v10647
        %v10653 = vrot.slane %v10652, 4
        %v10655 = vshll.u32 %v10484, 16
        %v10657 = vrot.slane %v10655, 5
        %v10658 = vsel %vm1516, %v10653, %v10657
        %v10660 = vshrl.u32 %v10485, 16
        %v10662 = vrot.slane %v10660, 4
        %v10663 = vshll.u32 %v10485, 16
        %v10665 = vrot.slane %v10663, 5
        %v10666 = vor.u32 %v10662, %v10665
        %v10667 = vrot.slane %v10666, 4
        %v10669 = vshll.u32 %v10486, 16
        %v10671 = vrot.slane %v10669, 5
        %v10672 = vsel %vm1516, %v10667, %v10671
        %v10673 = vshrl.u32 %v10486, 16
        %v10675 = vrot.slane %v10673, 4
        %v10676 = vor.u32 %v10675, %v10671
        %v10677 = vrot.slane %v10676, 4
        %v10679 = vshll.u32 %v10487, 16
        %v10681 = vrot.slane %v10679, 5
        %v10682 = vsel %vm1516, %v10677, %v10681
        %v10684 = vshrl.u32 %v10488, 16
        %v10686 = vrot.slane %v10684, 4
        %v10687 = vshll.u32 %v10488, 16
        %v10689 = vrot.slane %v10687, 5
        %v10690 = vor.u32 %v10686, %v10689
        %v10691 = vrot.slane %v10690, 4
        %v10693 = vshll.u32 %v10489, 16
        %v10695 = vrot.slane %v10693, 5
        %v10696 = vsel %vm1516, %v10691, %v10695
        %v10697 = vshrl.u32 %v10489, 16
        %v10699 = vrot.slane %v10697, 4
        %v10700 = vor.u32 %v10699, %v10695
        %v10701 = vrot.slane %v10700, 4
        %v10703 = vshll.u32 %v10490, 16
        %v10705 = vrot.slane %v10703, 5
        %v10706 = vsel %vm1516, %v10701, %v10705
        %v10708 = vshrl.u32 %v10491, 16
        %v10710 = vrot.slane %v10708, 4
        %v10711 = vshll.u32 %v10491, 16
        %v10713 = vrot.slane %v10711, 5
        %v10714 = vor.u32 %v10710, %v10713
        %v10715 = vrot.slane %v10714, 4
        %v10717 = vshll.u32 %v10492, 16
        %v10719 = vrot.slane %v10717, 5
        %v10720 = vsel %vm1516, %v10715, %v10719
        %v10721 = vshrl.u32 %v10492, 16
        %v10723 = vrot.slane %v10721, 4
        %v10724 = vor.u32 %v10723, %v10719
        %v10725 = vrot.slane %v10724, 4
        %v10727 = vshll.u32 %v10493, 16
        %v10729 = vrot.slane %v10727, 5
        %v10730 = vsel %vm1516, %v10725, %v10729
        %v10732 = vshrl.u32 %v10494, 16
        %v10734 = vrot.slane %v10732, 4
        %v10735 = vshll.u32 %v10494, 16
        %v10737 = vrot.slane %v10735, 5
        %v10738 = vor.u32 %v10734, %v10737
        %v10739 = vrot.slane %v10738, 4
        %v10741 = vshll.u32 %v10495, 16
        %v10743 = vrot.slane %v10741, 5
        %v10744 = vsel %vm1516, %v10739, %v10743
        %v10745 = vshrl.u32 %v10495, 16
        %v10747 = vrot.slane %v10745, 4
        %v10748 = vor.u32 %v10747, %v10743
        %v10749 = vrot.slane %v10748, 4
        %v10751 = vshll.u32 %v10496, 16
        %v10753 = vrot.slane %v10751, 5
        %v10754 = vsel %vm1516, %v10749, %v10753
        %v10756 = vshrl.u32 %v10497, 16
        %v10758 = vrot.slane %v10756, 4
        %v10759 = vshll.u32 %v10497, 16
        %v10761 = vrot.slane %v10759, 5
        %v10762 = vor.u32 %v10758, %v10761
        %v10763 = vrot.slane %v10762, 4
        %v10765 = vshll.u32 %v10498, 16
        %v10767 = vrot.slane %v10765, 5
        %v10768 = vsel %vm1516, %v10763, %v10767
        %v10769 = vshrl.u32 %v10498, 16
        %v10771 = vrot.slane %v10769, 4
        %v10772 = vor.u32 %v10771, %v10767
        %v10773 = vrot.slane %v10772, 4
        %v10775 = vshll.u32 %v10499, 16
        %v10777 = vrot.slane %v10775, 5
        %v10778 = vsel %vm1516, %v10773, %v10777
        %v10780 = vshrl.u32 %v10500, 16
        %v10782 = vrot.slane %v10780, 4
        %v10783 = vshll.u32 %v10500, 16
        %v10785 = vrot.slane %v10783, 5
        %v10786 = vor.u32 %v10782, %v10785
        %v10787 = vrot.slane %v10786, 4
        %v10789 = vshll.u32 %v10501, 16
        %v10791 = vrot.slane %v10789, 5
        %v10792 = vsel %vm1516, %v10787, %v10791
        %v10793 = vshrl.u32 %v10501, 16
        %v10795 = vrot.slane %v10793, 4
        %v10796 = vor.u32 %v10795, %v10791
        %v10797 = vrot.slane %v10796, 4
        %v10799 = vshll.u32 %v10502, 16
        %v10801 = vrot.slane %v10799, 5
        %v10802 = vsel %vm1516, %v10797, %v10801
        %v10804 = vshrl.u32 %v10503, 16
        %v10806 = vrot.slane %v10804, 4
        %v10807 = vshll.u32 %v10503, 16
        %v10809 = vrot.slane %v10807, 5
        %v10810 = vor.u32 %v10806, %v10809
        %v10811 = vrot.slane %v10810, 4
        %v10813 = vshll.u32 %v10504, 16
        %v10815 = vrot.slane %v10813, 5
        %v10816 = vsel %vm1516, %v10811, %v10815
        %v10817 = vshrl.u32 %v10504, 16
        %v10819 = vrot.slane %v10817, 4
        %v10820 = vor.u32 %v10819, %v10815
        %v10821 = vrot.slane %v10820, 4
        %v10823 = vshll.u32 %v10505, 16
        %v10825 = vrot.slane %v10823, 5
        %v10826 = vsel %vm1516, %v10821, %v10825
        %v10828 = vshrl.u32 %v10506, 16
        %v10830 = vrot.slane %v10828, 4
        %v10831 = vshll.u32 %v10506, 16
        %v10833 = vrot.slane %v10831, 5
        %v10834 = vor.u32 %v10830, %v10833
        %v10835 = vrot.slane %v10834, 4
        %v10837 = vshll.u32 %v10507, 16
        %v10839 = vrot.slane %v10837, 5
        %v10840 = vsel %vm1516, %v10835, %v10839
        %v10841 = vshrl.u32 %v10507, 16
        %v10843 = vrot.slane %v10841, 4
        %v10844 = vor.u32 %v10843, %v10839
        %v10845 = vrot.slane %v10844, 4
        %v10847 = vshll.u32 %v10508, 16
        %v10849 = vrot.slane %v10847, 5
        %v10850 = vsel %vm1516, %v10845, %v10849
        %v10852 = vshrl.u32 %v10509, 16
        %v10854 = vrot.slane %v10852, 4
        %v10855 = vshll.u32 %v10509, 16
        %v10857 = vrot.slane %v10855, 5
        %v10858 = vor.u32 %v10854, %v10857
        %v10859 = vrot.slane %v10858, 4
        %v10861 = vshll.u32 %v10510, 16
        %v10863 = vrot.slane %v10861, 5
        %v10864 = vsel %vm1516, %v10859, %v10863
        %v10865 = vshrl.u32 %v10510, 16
        %v10867 = vrot.slane %v10865, 4
        %v10868 = vor.u32 %v10867, %v10863
        %v10869 = vrot.slane %v10868, 4
        %v10871 = vshll.u32 %v10511, 16
        %v10873 = vrot.slane %v10871, 5
        %v10874 = vsel %vm1516, %v10869, %v10873
        %v10876 = vshrl.u32 %v10512, 16
        %v10878 = vrot.slane %v10876, 4
        %v10879 = vshll.u32 %v10512, 16
        %v10881 = vrot.slane %v10879, 5
        %v10882 = vor.u32 %v10878, %v10881
        %v10883 = vrot.slane %v10882, 4
        %v10885 = vshll.u32 %v10513, 16
        %v10887 = vrot.slane %v10885, 5
        %v10888 = vsel %vm1516, %v10883, %v10887
        %v10889 = vshrl.u32 %v10513, 16
        %v10891 = vrot.slane %v10889, 4
        %v10892 = vor.u32 %v10891, %v10887
        %v10893 = vrot.slane %v10892, 4
        %v10895 = vshll.u32 %v10514, 16
        %v10897 = vrot.slane %v10895, 5
        %v10898 = vsel %vm1516, %v10893, %v10897
        %10931 = vst [vmem:[#allocation3 + $0x4] sm:$0xf] %v10528
        %10932 = vst [vmem:[#allocation3 + $0x10] sm:$0xf] %v10538
        %10933 = vst [vmem:[#allocation3 + $0x1c] sm:$0xf] %v10552
        %10934 = vst [vmem:[#allocation3 + $0x28] sm:$0xf] %v10562
        %10935 = vst [vmem:[#allocation3 + $0x34] sm:$0xf] %v10576
        %10936 = vst [vmem:[#allocation3 + $0x40] sm:$0xf] %v10586
        %10937 = vst [vmem:[#allocation3 + $0x4c] sm:$0xf] %v10600
        %10938 = vst [vmem:[#allocation3 + $0x58] sm:$0xf] %v10610
        %10939 = vst [vmem:[#allocation3 + $0x64] sm:$0xf] %v10624
        %10940 = vst [vmem:[#allocation3 + $0x70] sm:$0xf] %v10634
        %10941 = vst [vmem:[#allocation3 + $0x7c] sm:$0xf] %v10648
        %10942 = vst [vmem:[#allocation3 + $0x88] sm:$0xf] %v10658
        %10943 = vst [vmem:[#allocation3 + $0x94] sm:$0xf] %v10672
        %10944 = vst [vmem:[#allocation3 + $0xa0] sm:$0xf] %v10682
        %10945 = vst [vmem:[#allocation3 + $0xac] sm:$0xf] %v10696
        %10946 = vst [vmem:[#allocation3 + $0xb8] sm:$0xf] %v10706
        %10947 = vst [vmem:[#allocation3 + $0xc4] sm:$0xf] %v10720
        %10948 = vst [vmem:[#allocation3 + $0xd0] sm:$0xf] %v10730
        %10949 = vst [vmem:[#allocation3 + $0xdc] sm:$0xf] %v10744
        %10950 = vst [vmem:[#allocation3 + $0xe8] sm:$0xf] %v10754
        %10951 = vst [vmem:[#allocation3 + $0xf4] sm:$0xf] %v10768
        %10952 = vst [vmem:[#allocation3 + $0x100] sm:$0xf] %v10778
        %10953 = vst [vmem:[#allocation3 + $0x10c] sm:$0xf] %v10792
        %10954 = vst [vmem:[#allocation3 + $0x118] sm:$0xf] %v10802
        %10955 = vst [vmem:[#allocation3 + $0x124] sm:$0xf] %v10816
        %10956 = vst [vmem:[#allocation3 + $0x130] sm:$0xf] %v10826
        %10957 = vst [vmem:[#allocation3 + $0x13c] sm:$0xf] %v10840
        %10958 = vst [vmem:[#allocation3 + $0x148] sm:$0xf] %v10850
        %10959 = vst [vmem:[#allocation3 + $0x154] sm:$0xf] %v10864
        %10960 = vst [vmem:[#allocation3 + $0x160] sm:$0xf] %v10874
        %10961 = vst [vmem:[#allocation3 + $0x16c] sm:$0xf] %v10888
        %10962 = vst [vmem:[#allocation3 + $0x178] sm:$0xf] %v10898
        %v10963 = vld [vmem:[%s4740] sm:$0xe]
        %v10964 = vld [vmem:[%s4740 + $0x4] sm:$0xf]
        %v10965 = vld [vmem:[%s4740 + $0x8] sm:$0x1]
        %v10966 = vld [vmem:[%s4740 + $0xc] sm:$0xe]
        %v10967 = vld [vmem:[%s4740 + $0x10] sm:$0xf]
        %v10968 = vld [vmem:[%s4740 + $0x14] sm:$0x1]
        %v10969 = vld [vmem:[%s4740 + $0x18] sm:$0xe]
        %v10970 = vld [vmem:[%s4740 + $0x1c] sm:$0xf]
        %v10971 = vld [vmem:[%s4740 + $0x20] sm:$0x1]
        %v10972 = vld [vmem:[%s4740 + $0x24] sm:$0xe]
        %v10973 = vld [vmem:[%s4740 + $0x28] sm:$0xf]
        %v10974 = vld [vmem:[%s4740 + $0x2c] sm:$0x1]
        %v10975 = vld [vmem:[%s4740 + $0x30] sm:$0xe]
        %v10976 = vld [vmem:[%s4740 + $0x34] sm:$0xf]
        %v10977 = vld [vmem:[%s4740 + $0x38] sm:$0x1]
        %v10978 = vld [vmem:[%s4740 + $0x3c] sm:$0xe]
        %v10979 = vld [vmem:[%s4740 + $0x40] sm:$0xf]
        %v10980 = vld [vmem:[%s4740 + $0x44] sm:$0x1]
        %v10981 = vld [vmem:[%s4740 + $0x48] sm:$0xe]
        %v10982 = vld [vmem:[%s4740 + $0x4c] sm:$0xf]
        %v10983 = vld [vmem:[%s4740 + $0x50] sm:$0x1]
        %v10984 = vld [vmem:[%s4740 + $0x54] sm:$0xe]
        %v10985 = vld [vmem:[%s4740 + $0x58] sm:$0xf]
        %v10986 = vld [vmem:[%s4740 + $0x5c] sm:$0x1]
        %v10987 = vld [vmem:[%s4740 + $0x60] sm:$0xe]
        %v10988 = vld [vmem:[%s4740 + $0x64] sm:$0xf]
        %v10989 = vld [vmem:[%s4740 + $0x68] sm:$0x1]
        %v10990 = vld [vmem:[%s4740 + $0x6c] sm:$0xe]
        %v10991 = vld [vmem:[%s4740 + $0x70] sm:$0xf]
        %v10992 = vld [vmem:[%s4740 + $0x74] sm:$0x1]
        %v10993 = vld [vmem:[%s4740 + $0x78] sm:$0xe]
        %v10994 = vld [vmem:[%s4740 + $0x7c] sm:$0xf]
        %v10995 = vld [vmem:[%s4740 + $0x80] sm:$0x1]
        %v10996 = vld [vmem:[%s4740 + $0x84] sm:$0xe]
        %v10997 = vld [vmem:[%s4740 + $0x88] sm:$0xf]
        %v10998 = vld [vmem:[%s4740 + $0x8c] sm:$0x1]
        %v10999 = vld [vmem:[%s4740 + $0x90] sm:$0xe]
        %v11000 = vld [vmem:[%s4740 + $0x94] sm:$0xf]
        %v11001 = vld [vmem:[%s4740 + $0x98] sm:$0x1]
        %v11002 = vld [vmem:[%s4740 + $0x9c] sm:$0xe]
        %v11003 = vld [vmem:[%s4740 + $0xa0] sm:$0xf]
        %v11004 = vld [vmem:[%s4740 + $0xa4] sm:$0x1]
        %v11005 = vld [vmem:[%s4740 + $0xa8] sm:$0xe]
        %v11006 = vld [vmem:[%s4740 + $0xac] sm:$0xf]
        %v11007 = vld [vmem:[%s4740 + $0xb0] sm:$0x1]
        %v11008 = vld [vmem:[%s4740 + $0xb4] sm:$0xe]
        %v11009 = vld [vmem:[%s4740 + $0xb8] sm:$0xf]
        %v11010 = vld [vmem:[%s4740 + $0xbc] sm:$0x1]
        %v11059 = vrot.slane %v10963, 5
        %v11060 = vrot.slane %v11059, 4
        %v11061 = vrot.slane %v10964, 5
        %v11062 = vsel %vm2063, %v11060, %v11061
        %v11063 = vrot.slane %v11061, 4
        %v11064 = vrot.slane %v10965, 5
        %v11065 = vsel %vm2063, %v11063, %v11064
        %v11066 = vrot.slane %v10966, 5
        %v11067 = vrot.slane %v11066, 4
        %v11068 = vrot.slane %v10967, 5
        %v11069 = vsel %vm2063, %v11067, %v11068
        %v11070 = vrot.slane %v11068, 4
        %v11071 = vrot.slane %v10968, 5
        %v11072 = vsel %vm2063, %v11070, %v11071
        %v11073 = vrot.slane %v10969, 5
        %v11074 = vrot.slane %v11073, 4
        %v11075 = vrot.slane %v10970, 5
        %v11076 = vsel %vm2063, %v11074, %v11075
        %v11077 = vrot.slane %v11075, 4
        %v11078 = vrot.slane %v10971, 5
        %v11079 = vsel %vm2063, %v11077, %v11078
        %v11080 = vrot.slane %v10972, 5
        %v11081 = vrot.slane %v11080, 4
        %v11082 = vrot.slane %v10973, 5
        %v11083 = vsel %vm2063, %v11081, %v11082
        %v11084 = vrot.slane %v11082, 4
        %v11085 = vrot.slane %v10974, 5
        %v11086 = vsel %vm2063, %v11084, %v11085
        %v11087 = vrot.slane %v10975, 5
        %v11088 = vrot.slane %v11087, 4
        %v11089 = vrot.slane %v10976, 5
        %v11090 = vsel %vm2063, %v11088, %v11089
        %v11091 = vrot.slane %v11089, 4
        %v11092 = vrot.slane %v10977, 5
        %v11093 = vsel %vm2063, %v11091, %v11092
        %v11094 = vrot.slane %v10978, 5
        %v11095 = vrot.slane %v11094, 4
        %v11096 = vrot.slane %v10979, 5
        %v11097 = vsel %vm2063, %v11095, %v11096
        %v11098 = vrot.slane %v11096, 4
        %v11099 = vrot.slane %v10980, 5
        %v11100 = vsel %vm2063, %v11098, %v11099
        %v11101 = vrot.slane %v10981, 5
        %v11102 = vrot.slane %v11101, 4
        %v11103 = vrot.slane %v10982, 5
        %v11104 = vsel %vm2063, %v11102, %v11103
        %v11105 = vrot.slane %v11103, 4
        %v11106 = vrot.slane %v10983, 5
        %v11107 = vsel %vm2063, %v11105, %v11106
        %v11108 = vrot.slane %v10984, 5
        %v11109 = vrot.slane %v11108, 4
        %v11110 = vrot.slane %v10985, 5
        %v11111 = vsel %vm2063, %v11109, %v11110
        %v11112 = vrot.slane %v11110, 4
        %v11113 = vrot.slane %v10986, 5
        %v11114 = vsel %vm2063, %v11112, %v11113
        %v11115 = vrot.slane %v10987, 5
        %v11116 = vrot.slane %v11115, 4
        %v11117 = vrot.slane %v10988, 5
        %v11118 = vsel %vm2063, %v11116, %v11117
        %v11119 = vrot.slane %v11117, 4
        %v11120 = vrot.slane %v10989, 5
        %v11121 = vsel %vm2063, %v11119, %v11120
        %v11122 = vrot.slane %v10990, 5
        %v11123 = vrot.slane %v11122, 4
        %v11124 = vrot.slane %v10991, 5
        %v11125 = vsel %vm2063, %v11123, %v11124
        %v11126 = vrot.slane %v11124, 4
        %v11127 = vrot.slane %v10992, 5
        %v11128 = vsel %vm2063, %v11126, %v11127
        %v11129 = vrot.slane %v10993, 5
        %v11130 = vrot.slane %v11129, 4
        %v11131 = vrot.slane %v10994, 5
        %v11132 = vsel %vm2063, %v11130, %v11131
        %v11133 = vrot.slane %v11131, 4
        %v11134 = vrot.slane %v10995, 5
        %v11135 = vsel %vm2063, %v11133, %v11134
        %v11136 = vrot.slane %v10996, 5
        %v11137 = vrot.slane %v11136, 4
        %v11138 = vrot.slane %v10997, 5
        %v11139 = vsel %vm2063, %v11137, %v11138
        %v11140 = vrot.slane %v11138, 4
        %v11141 = vrot.slane %v10998, 5
        %v11142 = vsel %vm2063, %v11140, %v11141
        %v11143 = vrot.slane %v10999, 5
        %v11144 = vrot.slane %v11143, 4
        %v11145 = vrot.slane %v11000, 5
        %v11146 = vsel %vm2063, %v11144, %v11145
        %v11147 = vrot.slane %v11145, 4
        %v11148 = vrot.slane %v11001, 5
        %v11149 = vsel %vm2063, %v11147, %v11148
        %v11150 = vrot.slane %v11002, 5
        %v11151 = vrot.slane %v11150, 4
        %v11152 = vrot.slane %v11003, 5
        %v11153 = vsel %vm2063, %v11151, %v11152
        %v11154 = vrot.slane %v11152, 4
        %v11155 = vrot.slane %v11004, 5
        %v11156 = vsel %vm2063, %v11154, %v11155
        %v11157 = vrot.slane %v11005, 5
        %v11158 = vrot.slane %v11157, 4
        %v11159 = vrot.slane %v11006, 5
        %v11160 = vsel %vm2063, %v11158, %v11159
        %v11161 = vrot.slane %v11159, 4
        %v11162 = vrot.slane %v11007, 5
        %v11163 = vsel %vm2063, %v11161, %v11162
        %v11164 = vrot.slane %v11008, 5
        %v11165 = vrot.slane %v11164, 4
        %v11166 = vrot.slane %v11009, 5
        %v11167 = vsel %vm2063, %v11165, %v11166
        %v11168 = vrot.slane %v11166, 4
        %v11169 = vrot.slane %v11010, 5
        %v11170 = vsel %vm2063, %v11168, %v11169
        %11203 = vst [vmem:[#allocation3 + $0x8] sm:$0xf] %v11062
        %11204 = vst [vmem:[#allocation3 + $0x14] sm:$0xf] %v11065
        %11205 = vst [vmem:[#allocation3 + $0x20] sm:$0xf] %v11069
        %11206 = vst [vmem:[#allocation3 + $0x2c] sm:$0xf] %v11072
        %11207 = vst [vmem:[#allocation3 + $0x38] sm:$0xf] %v11076
        %11208 = vst [vmem:[#allocation3 + $0x44] sm:$0xf] %v11079
        %11209 = vst [vmem:[#allocation3 + $0x50] sm:$0xf] %v11083
        %11210 = vst [vmem:[#allocation3 + $0x5c] sm:$0xf] %v11086
        %11211 = vst [vmem:[#allocation3 + $0x68] sm:$0xf] %v11090
        %11212 = vst [vmem:[#allocation3 + $0x74] sm:$0xf] %v11093
        %11213 = vst [vmem:[#allocation3 + $0x80] sm:$0xf] %v11097
        %11214 = vst [vmem:[#allocation3 + $0x8c] sm:$0xf] %v11100
        %11215 = vst [vmem:[#allocation3 + $0x98] sm:$0xf] %v11104
        %11216 = vst [vmem:[#allocation3 + $0xa4] sm:$0xf] %v11107
        %11217 = vst [vmem:[#allocation3 + $0xb0] sm:$0xf] %v11111
        %11218 = vst [vmem:[#allocation3 + $0xbc] sm:$0xf] %v11114
        %11219 = vst [vmem:[#allocation3 + $0xc8] sm:$0xf] %v11118
        %11220 = vst [vmem:[#allocation3 + $0xd4] sm:$0xf] %v11121
        %11221 = vst [vmem:[#allocation3 + $0xe0] sm:$0xf] %v11125
        %11222 = vst [vmem:[#allocation3 + $0xec] sm:$0xf] %v11128
        %11223 = vst [vmem:[#allocation3 + $0xf8] sm:$0xf] %v11132
        %11224 = vst [vmem:[#allocation3 + $0x104] sm:$0xf] %v11135
        %11225 = vst [vmem:[#allocation3 + $0x110] sm:$0xf] %v11139
        %11226 = vst [vmem:[#allocation3 + $0x11c] sm:$0xf] %v11142
        %11227 = vst [vmem:[#allocation3 + $0x128] sm:$0xf] %v11146
        %11228 = vst [vmem:[#allocation3 + $0x134] sm:$0xf] %v11149
        %11229 = vst [vmem:[#allocation3 + $0x140] sm:$0xf] %v11153
        %11230 = vst [vmem:[#allocation3 + $0x14c] sm:$0xf] %v11156
        %11231 = vst [vmem:[#allocation3 + $0x158] sm:$0xf] %v11160
        %11232 = vst [vmem:[#allocation3 + $0x164] sm:$0xf] %v11163
        %11233 = vst [vmem:[#allocation3 + $0x170] sm:$0xf] %v11167
        %11234 = vst [vmem:[#allocation3 + $0x17c] sm:$0xf] %v11170
        %v11235 = vld [vmem:[#allocation3] sm:$0xff]
        %v11236 = vld [vmem:[#allocation3 + $0x8] sm:$0xf]
        %v11237 = vld [vmem:[#allocation3 + $0xc] sm:$0xff]
        %v11238 = vld [vmem:[#allocation3 + $0x14] sm:$0xf]
        %v11239 = vld [vmem:[#allocation3 + $0x18] sm:$0xff]
        %v11240 = vld [vmem:[#allocation3 + $0x20] sm:$0xf]
        %v11241 = vld [vmem:[#allocation3 + $0x24] sm:$0xff]
        %v11242 = vld [vmem:[#allocation3 + $0x2c] sm:$0xf]
        %v11243 = vld [vmem:[#allocation3 + $0x30] sm:$0xff]
        %v11244 = vld [vmem:[#allocation3 + $0x38] sm:$0xf]
        %v11245 = vld [vmem:[#allocation3 + $0x3c] sm:$0xff]
        %v11246 = vld [vmem:[#allocation3 + $0x44] sm:$0xf]
        %v11247 = vld [vmem:[#allocation3 + $0x48] sm:$0xff]
        %v11248 = vld [vmem:[#allocation3 + $0x50] sm:$0xf]
        %v11249 = vld [vmem:[#allocation3 + $0x54] sm:$0xff]
        %v11250 = vld [vmem:[#allocation3 + $0x5c] sm:$0xf]
        %v11251 = vld [vmem:[#allocation3 + $0x60] sm:$0xff]
        %v11252 = vld [vmem:[#allocation3 + $0x68] sm:$0xf]
        %v11253 = vld [vmem:[#allocation3 + $0x6c] sm:$0xff]
        %v11254 = vld [vmem:[#allocation3 + $0x74] sm:$0xf]
        %v11255 = vld [vmem:[#allocation3 + $0x78] sm:$0xff]
        %v11256 = vld [vmem:[#allocation3 + $0x80] sm:$0xf]
        %v11257 = vld [vmem:[#allocation3 + $0x84] sm:$0xff]
        %v11258 = vld [vmem:[#allocation3 + $0x8c] sm:$0xf]
        %v11259 = vld [vmem:[#allocation3 + $0x90] sm:$0xff]
        %v11260 = vld [vmem:[#allocation3 + $0x98] sm:$0xf]
        %v11261 = vld [vmem:[#allocation3 + $0x9c] sm:$0xff]
        %v11262 = vld [vmem:[#allocation3 + $0xa4] sm:$0xf]
        %v11263 = vld [vmem:[#allocation3 + $0xa8] sm:$0xff]
        %v11264 = vld [vmem:[#allocation3 + $0xb0] sm:$0xf]
        %v11265 = vld [vmem:[#allocation3 + $0xb4] sm:$0xff]
        %v11266 = vld [vmem:[#allocation3 + $0xbc] sm:$0xf]
        %v11267 = vld [vmem:[#allocation3 + $0xc0] sm:$0xff]
        %v11268 = vld [vmem:[#allocation3 + $0xc8] sm:$0xf]
        %v11269 = vld [vmem:[#allocation3 + $0xcc] sm:$0xff]
        %v11270 = vld [vmem:[#allocation3 + $0xd4] sm:$0xf]
        %v11271 = vld [vmem:[#allocation3 + $0xd8] sm:$0xff]
        %v11272 = vld [vmem:[#allocation3 + $0xe0] sm:$0xf]
        %v11273 = vld [vmem:[#allocation3 + $0xe4] sm:$0xff]
        %v11274 = vld [vmem:[#allocation3 + $0xec] sm:$0xf]
        %v11275 = vld [vmem:[#allocation3 + $0xf0] sm:$0xff]
        %v11276 = vld [vmem:[#allocation3 + $0xf8] sm:$0xf]
        %v11277 = vld [vmem:[#allocation3 + $0xfc] sm:$0xff]
        %v11278 = vld [vmem:[#allocation3 + $0x104] sm:$0xf]
        %v11279 = vld [vmem:[#allocation3 + $0x108] sm:$0xff]
        %v11280 = vld [vmem:[#allocation3 + $0x110] sm:$0xf]
        %v11281 = vld [vmem:[#allocation3 + $0x114] sm:$0xff]
        %v11282 = vld [vmem:[#allocation3 + $0x11c] sm:$0xf]
        %v11283 = vld [vmem:[#allocation3 + $0x120] sm:$0xff]
        %v11284 = vld [vmem:[#allocation3 + $0x128] sm:$0xf]
        %v11285 = vld [vmem:[#allocation3 + $0x12c] sm:$0xff]
        %v11286 = vld [vmem:[#allocation3 + $0x134] sm:$0xf]
        %v11287 = vld [vmem:[#allocation3 + $0x138] sm:$0xff]
        %v11288 = vld [vmem:[#allocation3 + $0x140] sm:$0xf]
        %v11289 = vld [vmem:[#allocation3 + $0x144] sm:$0xff]
        %v11290 = vld [vmem:[#allocation3 + $0x14c] sm:$0xf]
        %v11291 = vld [vmem:[#allocation3 + $0x150] sm:$0xff]
        %v11292 = vld [vmem:[#allocation3 + $0x158] sm:$0xf]
        %v11293 = vld [vmem:[#allocation3 + $0x15c] sm:$0xff]
        %v11294 = vld [vmem:[#allocation3 + $0x164] sm:$0xf]
        %v11295 = vld [vmem:[#allocation3 + $0x168] sm:$0xff]
        %v11296 = vld [vmem:[#allocation3 + $0x170] sm:$0xf]
        %v11297 = vld [vmem:[#allocation3 + $0x174] sm:$0xff]
        %v11298 = vld [vmem:[#allocation3 + $0x17c] sm:$0xf]
        %v11299 = vld [vmem:[#allocation10 + $0x180] sm:$0xf]
        %v11300 = vld [vmem:[#allocation10 + $0x184] sm:$0xf]
        %v11301 = vld [vmem:[#allocation10 + $0x188] sm:$0xf]
        %v11302 = vld [vmem:[#allocation10 + $0x18c] sm:$0xf]
        %v11303 = vld [vmem:[#allocation10 + $0x190] sm:$0xf]
        %v11304 = vld [vmem:[#allocation10 + $0x194] sm:$0xf]
        %v11305 = vld [vmem:[#allocation10 + $0x198] sm:$0xf]
        %v11306 = vld [vmem:[#allocation10 + $0x19c] sm:$0xf]
        %v11307 = vld [vmem:[#allocation10 + $0x1a0] sm:$0xf]
        %v11308 = vld [vmem:[#allocation10 + $0x1a4] sm:$0xf]
        %v11309 = vld [vmem:[#allocation10 + $0x1a8] sm:$0xf]
        %v11310 = vld [vmem:[#allocation10 + $0x1ac] sm:$0xf]
        %v11311 = vld [vmem:[#allocation10 + $0x1b0] sm:$0xf]
        %v11312 = vld [vmem:[#allocation10 + $0x1b4] sm:$0xf]
        %v11313 = vld [vmem:[#allocation10 + $0x1b8] sm:$0xf]
        %v11314 = vld [vmem:[#allocation10 + $0x1bc] sm:$0xf]
        %v11315 = vld [vmem:[#allocation10 + $0x1c0] sm:$0xf]
        %v11316 = vld [vmem:[#allocation10 + $0x1c4] sm:$0xf]
        %v11317 = vld [vmem:[#allocation10 + $0x1c8] sm:$0xf]
        %v11318 = vld [vmem:[#allocation10 + $0x1cc] sm:$0xf]
        %v11319 = vld [vmem:[#allocation10 + $0x1d0] sm:$0xf]
        %v11320 = vld [vmem:[#allocation10 + $0x1d4] sm:$0xf]
        %v11321 = vld [vmem:[#allocation10 + $0x1d8] sm:$0xf]
        %v11322 = vld [vmem:[#allocation10 + $0x1dc] sm:$0xf]
        %v11323 = vld [vmem:[#allocation10 + $0x1e0] sm:$0xf]
        %v11324 = vld [vmem:[#allocation10 + $0x1e4] sm:$0xf]
        %v11325 = vld [vmem:[#allocation10 + $0x1e8] sm:$0xf]
        %v11326 = vld [vmem:[#allocation10 + $0x1ec] sm:$0xf]
        %v11327 = vld [vmem:[#allocation10 + $0x1f0] sm:$0xf]
        %v11328 = vld [vmem:[#allocation10 + $0x1f4] sm:$0xf]
        %v11329 = vld [vmem:[#allocation10 + $0x1f8] sm:$0xf]
        %v11330 = vld [vmem:[#allocation10 + $0x1fc] sm:$0xf]
        %v11331 = vld [vmem:[#allocation10 + $0x200] sm:$0xf]
        %v11332 = vld [vmem:[#allocation10 + $0x204] sm:$0xf]
        %v11333 = vld [vmem:[#allocation10 + $0x208] sm:$0xf]
        %v11334 = vld [vmem:[#allocation10 + $0x20c] sm:$0xf]
        %v11335 = vld [vmem:[#allocation10 + $0x210] sm:$0xf]
        %v11336 = vld [vmem:[#allocation10 + $0x214] sm:$0xf]
        %v11337 = vld [vmem:[#allocation10 + $0x218] sm:$0xf]
        %v11338 = vld [vmem:[#allocation10 + $0x21c] sm:$0xf]
        %v11339 = vld [vmem:[#allocation10 + $0x220] sm:$0xf]
        %v11340 = vld [vmem:[#allocation10 + $0x224] sm:$0xf]
        %v11341 = vld [vmem:[#allocation10 + $0x228] sm:$0xf]
        %v11342 = vld [vmem:[#allocation10 + $0x22c] sm:$0xf]
        %v11343 = vld [vmem:[#allocation10 + $0x230] sm:$0xf]
        %v11344 = vld [vmem:[#allocation10 + $0x234] sm:$0xf]
        %v11345 = vld [vmem:[#allocation10 + $0x238] sm:$0xf]
        %v11346 = vld [vmem:[#allocation10 + $0x23c] sm:$0xf]
        %v11411 = vunpack.c.l.b16 %v11235
        %v11412 = vunpack.c.h.b16 %v11235
        %v11413 = vunpack.c.l.b16 %v11236
        %v11414 = vunpack.c.l.b16 %v11237
        %v11415 = vunpack.c.h.b16 %v11237
        %v11416 = vunpack.c.l.b16 %v11238
        %v11417 = vunpack.c.l.b16 %v11239
        %v11418 = vunpack.c.h.b16 %v11239
        %v11419 = vunpack.c.l.b16 %v11240
        %v11420 = vunpack.c.l.b16 %v11241
        %v11421 = vunpack.c.h.b16 %v11241
        %v11422 = vunpack.c.l.b16 %v11242
        %v11423 = vunpack.c.l.b16 %v11243
        %v11424 = vunpack.c.h.b16 %v11243
        %v11425 = vunpack.c.l.b16 %v11244
        %v11426 = vunpack.c.l.b16 %v11245
        %v11427 = vunpack.c.h.b16 %v11245
        %v11428 = vunpack.c.l.b16 %v11246
        %v11429 = vunpack.c.l.b16 %v11247
        %v11430 = vunpack.c.h.b16 %v11247
        %v11431 = vunpack.c.l.b16 %v11248
        %v11432 = vunpack.c.l.b16 %v11249
        %v11433 = vunpack.c.h.b16 %v11249
        %v11434 = vunpack.c.l.b16 %v11250
        %v11435 = vunpack.c.l.b16 %v11251
        %v11436 = vunpack.c.h.b16 %v11251
        %v11437 = vunpack.c.l.b16 %v11252
        %v11438 = vunpack.c.l.b16 %v11253
        %v11439 = vunpack.c.h.b16 %v11253
        %v11440 = vunpack.c.l.b16 %v11254
        %v11441 = vunpack.c.l.b16 %v11255
        %v11442 = vunpack.c.h.b16 %v11255
        %v11443 = vunpack.c.l.b16 %v11256
        %v11444 = vunpack.c.l.b16 %v11257
        %v11445 = vunpack.c.h.b16 %v11257
        %v11446 = vunpack.c.l.b16 %v11258
        %v11447 = vunpack.c.l.b16 %v11259
        %v11448 = vunpack.c.h.b16 %v11259
        %v11449 = vunpack.c.l.b16 %v11260
        %v11450 = vunpack.c.l.b16 %v11261
        %v11451 = vunpack.c.h.b16 %v11261
        %v11452 = vunpack.c.l.b16 %v11262
        %v11453 = vunpack.c.l.b16 %v11263
        %v11454 = vunpack.c.h.b16 %v11263
        %v11455 = vunpack.c.l.b16 %v11264
        %v11456 = vunpack.c.l.b16 %v11265
        %v11457 = vunpack.c.h.b16 %v11265
        %v11458 = vunpack.c.l.b16 %v11266
        %v11459 = vunpack.c.l.b16 %v11267
        %v11460 = vunpack.c.h.b16 %v11267
        %v11461 = vunpack.c.l.b16 %v11268
        %v11462 = vunpack.c.l.b16 %v11269
        %v11463 = vunpack.c.h.b16 %v11269
        %v11464 = vunpack.c.l.b16 %v11270
        %v11465 = vunpack.c.l.b16 %v11271
        %v11466 = vunpack.c.h.b16 %v11271
        %v11467 = vunpack.c.l.b16 %v11272
        %v11468 = vunpack.c.l.b16 %v11273
        %v11469 = vunpack.c.h.b16 %v11273
        %v11470 = vunpack.c.l.b16 %v11274
        %v11471 = vunpack.c.l.b16 %v11275
        %v11472 = vunpack.c.h.b16 %v11275
        %v11473 = vunpack.c.l.b16 %v11276
        %v11474 = vunpack.c.l.b16 %v11277
        %v11475 = vunpack.c.h.b16 %v11277
        %v11476 = vunpack.c.l.b16 %v11278
        %v11477 = vunpack.c.l.b16 %v11279
        %v11478 = vunpack.c.h.b16 %v11279
        %v11479 = vunpack.c.l.b16 %v11280
        %v11480 = vunpack.c.l.b16 %v11281
        %v11481 = vunpack.c.h.b16 %v11281
        %v11482 = vunpack.c.l.b16 %v11282
        %v11483 = vunpack.c.l.b16 %v11283
        %v11484 = vunpack.c.h.b16 %v11283
        %v11485 = vunpack.c.l.b16 %v11284
        %v11486 = vunpack.c.l.b16 %v11285
        %v11487 = vunpack.c.h.b16 %v11285
        %v11488 = vunpack.c.l.b16 %v11286
        %v11489 = vunpack.c.l.b16 %v11287
        %v11490 = vunpack.c.h.b16 %v11287
        %v11491 = vunpack.c.l.b16 %v11288
        %v11492 = vunpack.c.l.b16 %v11289
        %v11493 = vunpack.c.h.b16 %v11289
        %v11494 = vunpack.c.l.b16 %v11290
        %v11495 = vunpack.c.l.b16 %v11291
        %v11496 = vunpack.c.h.b16 %v11291
        %v11497 = vunpack.c.l.b16 %v11292
        %v11498 = vunpack.c.l.b16 %v11293
        %v11499 = vunpack.c.h.b16 %v11293
        %v11500 = vunpack.c.l.b16 %v11294
        %v11501 = vunpack.c.l.b16 %v11295
        %v11502 = vunpack.c.h.b16 %v11295
        %v11503 = vunpack.c.l.b16 %v11296
        %v11504 = vunpack.c.l.b16 %v11297
        %v11505 = vunpack.c.h.b16 %v11297
        %v11506 = vunpack.c.l.b16 %v11298
        %v11507 = vpack.c.b16 %v11414, %v11411
        %v11508 = vpack.c.b16 %v11415, %v11412
        %v11509 = vpack.c.b16 %v11416, %v11413
        %v11510 = vpack.c.b16 %v11420, %v11417
        %v11511 = vpack.c.b16 %v11421, %v11418
        %v11512 = vpack.c.b16 %v11422, %v11419
        %v11513 = vpack.c.b16 %v11426, %v11423
        %v11514 = vpack.c.b16 %v11427, %v11424
        %v11515 = vpack.c.b16 %v11428, %v11425
        %v11516 = vpack.c.b16 %v11432, %v11429
        %v11517 = vpack.c.b16 %v11433, %v11430
        %v11518 = vpack.c.b16 %v11434, %v11431
        %v11519 = vpack.c.b16 %v11438, %v11435
        %v11520 = vpack.c.b16 %v11439, %v11436
        %v11521 = vpack.c.b16 %v11440, %v11437
        %v11522 = vpack.c.b16 %v11444, %v11441
        %v11523 = vpack.c.b16 %v11445, %v11442
        %v11524 = vpack.c.b16 %v11446, %v11443
        %v11525 = vpack.c.b16 %v11450, %v11447
        %v11526 = vpack.c.b16 %v11451, %v11448
        %v11527 = vpack.c.b16 %v11452, %v11449
        %v11528 = vpack.c.b16 %v11456, %v11453
        %v11529 = vpack.c.b16 %v11457, %v11454
        %v11530 = vpack.c.b16 %v11458, %v11455
        %v11531 = vpack.c.b16 %v11462, %v11459
        %v11532 = vpack.c.b16 %v11463, %v11460
        %v11533 = vpack.c.b16 %v11464, %v11461
        %v11534 = vpack.c.b16 %v11468, %v11465
        %v11535 = vpack.c.b16 %v11469, %v11466
        %v11536 = vpack.c.b16 %v11470, %v11467
        %v11537 = vpack.c.b16 %v11474, %v11471
        %v11538 = vpack.c.b16 %v11475, %v11472
        %v11539 = vpack.c.b16 %v11476, %v11473
        %v11540 = vpack.c.b16 %v11480, %v11477
        %v11541 = vpack.c.b16 %v11481, %v11478
        %v11542 = vpack.c.b16 %v11482, %v11479
        %v11543 = vpack.c.b16 %v11486, %v11483
        %v11544 = vpack.c.b16 %v11487, %v11484
        %v11545 = vpack.c.b16 %v11488, %v11485
        %v11546 = vpack.c.b16 %v11492, %v11489
        %v11547 = vpack.c.b16 %v11493, %v11490
        %v11548 = vpack.c.b16 %v11494, %v11491
        %v11549 = vpack.c.b16 %v11498, %v11495
        %v11550 = vpack.c.b16 %v11499, %v11496
        %v11551 = vpack.c.b16 %v11500, %v11497
        %v11552 = vpack.c.b16 %v11504, %v11501
        %v11553 = vpack.c.b16 %v11505, %v11502
        %v11554 = vpack.c.b16 %v11506, %v11503
        %v11651 = vunpack.c.l.b16 %v11299
        %v11652 = vunpack.c.l.b16 %v11300
        %v11653 = vunpack.c.l.b16 %v11301
        %v11654 = vunpack.c.l.b16 %v11302
        %v11655 = vunpack.c.l.b16 %v11303
        %v11656 = vunpack.c.l.b16 %v11304
        %v11657 = vunpack.c.l.b16 %v11305
        %v11658 = vunpack.c.l.b16 %v11306
        %v11659 = vunpack.c.l.b16 %v11307
        %v11660 = vunpack.c.l.b16 %v11308
        %v11661 = vunpack.c.l.b16 %v11309
        %v11662 = vunpack.c.l.b16 %v11310
        %v11663 = vunpack.c.l.b16 %v11311
        %v11664 = vunpack.c.l.b16 %v11312
        %v11665 = vunpack.c.l.b16 %v11313
        %v11666 = vunpack.c.l.b16 %v11314
        %v11667 = vunpack.c.l.b16 %v11315
        %v11668 = vunpack.c.l.b16 %v11316
        %v11669 = vunpack.c.l.b16 %v11317
        %v11670 = vunpack.c.l.b16 %v11318
        %v11671 = vunpack.c.l.b16 %v11319
        %v11672 = vunpack.c.l.b16 %v11320
        %v11673 = vunpack.c.l.b16 %v11321
        %v11674 = vunpack.c.l.b16 %v11322
        %v11675 = vunpack.c.l.b16 %v11323
        %v11676 = vunpack.c.l.b16 %v11324
        %v11677 = vunpack.c.l.b16 %v11325
        %v11678 = vunpack.c.l.b16 %v11326
        %v11679 = vunpack.c.l.b16 %v11327
        %v11680 = vunpack.c.l.b16 %v11328
        %v11681 = vunpack.c.l.b16 %v11329
        %v11682 = vunpack.c.l.b16 %v11330
        %v11683 = vunpack.c.l.b16 %v11331
        %v11684 = vunpack.c.l.b16 %v11332
        %v11685 = vunpack.c.l.b16 %v11333
        %v11686 = vunpack.c.l.b16 %v11334
        %v11687 = vunpack.c.l.b16 %v11335
        %v11688 = vunpack.c.l.b16 %v11336
        %v11689 = vunpack.c.l.b16 %v11337
        %v11690 = vunpack.c.l.b16 %v11338
        %v11691 = vunpack.c.l.b16 %v11339
        %v11692 = vunpack.c.l.b16 %v11340
        %v11693 = vunpack.c.l.b16 %v11341
        %v11694 = vunpack.c.l.b16 %v11342
        %v11695 = vunpack.c.l.b16 %v11343
        %v11696 = vunpack.c.l.b16 %v11344
        %v11697 = vunpack.c.l.b16 %v11345
        %v11698 = vunpack.c.l.b16 %v11346
        %v11699 = vpack.c.b16 %v11652, %v11651
        %v11700 = vpack.c.b16 %v11654, %v11653
        %v11701 = vpack.c.b16 %v11656, %v11655
        %v11702 = vpack.c.b16 %v11658, %v11657
        %v11703 = vpack.c.b16 %v11660, %v11659
        %v11704 = vpack.c.b16 %v11662, %v11661
        %v11705 = vpack.c.b16 %v11664, %v11663
        %v11706 = vpack.c.b16 %v11666, %v11665
        %v11707 = vpack.c.b16 %v11668, %v11667
        %v11708 = vpack.c.b16 %v11670, %v11669
        %v11709 = vpack.c.b16 %v11672, %v11671
        %v11710 = vpack.c.b16 %v11674, %v11673
        %v11711 = vpack.c.b16 %v11676, %v11675
        %v11712 = vpack.c.b16 %v11678, %v11677
        %v11713 = vpack.c.b16 %v11680, %v11679
        %v11714 = vpack.c.b16 %v11682, %v11681
        %v11715 = vpack.c.b16 %v11684, %v11683
        %v11716 = vpack.c.b16 %v11686, %v11685
        %v11717 = vpack.c.b16 %v11688, %v11687
        %v11718 = vpack.c.b16 %v11690, %v11689
        %v11719 = vpack.c.b16 %v11692, %v11691
        %v11720 = vpack.c.b16 %v11694, %v11693
        %v11721 = vpack.c.b16 %v11696, %v11695
        %v11722 = vpack.c.b16 %v11698, %v11697
        %11747 = vmatprep.subr.bf16.mxu0 0
        %11748 = vmatpush1.bf16.msra.mxu0 %v11706
        %11749 = vmatprep.subr.bf16.mxu0 0
        %11750 = vmatpush1.bf16.msra.mxu0 %v11705
        %11751 = vmatprep.subr.bf16.mxu0 0
        %11752 = vmatpush1.bf16.msra.mxu0 %v11704
        %11753 = vmatprep.subr.bf16.mxu0 0
        %11754 = vmatpush1.bf16.msra.mxu0 %v11703
        %11755 = vmatprep.subr.bf16.mxu0 0
        %11756 = vmatpush1.bf16.msra.mxu0 %v11702
        %11757 = vmatprep.subr.bf16.mxu0 0
        %11758 = vmatpush1.bf16.msra.mxu0 %v11701
        %11759 = vmatprep.subr.bf16.mxu0 0
        %11760 = vmatpush1.bf16.msra.mxu0 %v11700
        %11761 = vmatprep.subr.bf16.mxu0 0
        %11762 = vmatpush1.bf16.msra.mxu0 %v11699
        %11763 = vmatprep.subr.bf16.mxu0 0
        %11764 = vmatpush2.bf16.msra.mxu0 %v11714
        %11765 = vmatprep.subr.bf16.mxu0 0
        %11766 = vmatpush2.bf16.msra.mxu0 %v11713
        %11767 = vmatprep.subr.bf16.mxu0 0
        %11768 = vmatpush2.bf16.msra.mxu0 %v11712
        %11769 = vmatprep.subr.bf16.mxu0 0
        %11770 = vmatpush2.bf16.msra.mxu0 %v11711
        %11771 = vmatprep.subr.bf16.mxu0 0
        %11772 = vmatpush2.bf16.msra.mxu0 %v11710
        %11773 = vmatprep.subr.bf16.mxu0 0
        %11774 = vmatpush2.bf16.msra.mxu0 %v11709
        %11775 = vmatprep.subr.bf16.mxu0 0
        %11776 = vmatpush2.bf16.msra.mxu0 %v11708
        %11777 = vmatprep.subr.bf16.mxu0 0
        %11778 = vmatpush2.bf16.msra.mxu0 %v11707
        %11779 = vmatprep.mubr.bf16.mxu0 %v11508
        %11780 = vmatmul.mubr.bf16.gmra.mxu0 %v11507
        %v11781 = vpop.f32.mrf.mxu0
        %v11782 = vadd.f32 0.0, %v11781
        %v11783 = vpop.f32.mrf.mxu0
        %v11784 = vpop.f32.mrf.mxu0
        %v11785 = vadd.f32 0.0, %v11784
        %v11786 = vpop.f32.mrf.mxu0
        %11787 = vmatprep.mubr.bf16.mxu0 %v11511
        %11788 = vmatmul.mubr.bf16.gmra.mxu0 %v11510
        %v11789 = vpop.f32.mrf.mxu0
        %v11790 = vadd.f32 0.0, %v11789
        %v11791 = vpop.f32.mrf.mxu0
        %v11792 = vpop.f32.mrf.mxu0
        %v11793 = vadd.f32 0.0, %v11792
        %v11794 = vpop.f32.mrf.mxu0
        %11795 = vmatprep.mubr.bf16.mxu0 %v11514
        %11796 = vmatmul.mubr.bf16.gmra.mxu0 %v11513
        %v11797 = vpop.f32.mrf.mxu0
        %v11798 = vadd.f32 0.0, %v11797
        %v11799 = vpop.f32.mrf.mxu0
        %v11800 = vpop.f32.mrf.mxu0
        %v11801 = vadd.f32 0.0, %v11800
        %v11802 = vpop.f32.mrf.mxu0
        %11803 = vmatprep.mubr.bf16.mxu0 %v11517
        %11804 = vmatmul.mubr.bf16.gmra.mxu0 %v11516
        %v11805 = vpop.f32.mrf.mxu0
        %v11806 = vadd.f32 0.0, %v11805
        %v11807 = vpop.f32.mrf.mxu0
        %v11808 = vpop.f32.mrf.mxu0
        %v11809 = vadd.f32 0.0, %v11808
        %v11810 = vpop.f32.mrf.mxu0
        %11811 = vmatprep.mubr.bf16.mxu0 %v11520
        %11812 = vmatmul.mubr.bf16.gmra.mxu0 %v11519
        %v11813 = vpop.f32.mrf.mxu0
        %v11814 = vadd.f32 0.0, %v11813
        %v11815 = vpop.f32.mrf.mxu0
        %v11816 = vpop.f32.mrf.mxu0
        %v11817 = vadd.f32 0.0, %v11816
        %v11818 = vpop.f32.mrf.mxu0
        %11819 = vmatprep.mubr.bf16.mxu0 %v11523
        %11820 = vmatmul.mubr.bf16.gmra.mxu0 %v11522
        %v11821 = vpop.f32.mrf.mxu0
        %v11822 = vadd.f32 0.0, %v11821
        %v11823 = vpop.f32.mrf.mxu0
        %v11824 = vpop.f32.mrf.mxu0
        %v11825 = vadd.f32 0.0, %v11824
        %v11826 = vpop.f32.mrf.mxu0
        %11827 = vmatprep.mubr.bf16.mxu0 %v11526
        %11828 = vmatmul.mubr.bf16.gmra.mxu0 %v11525
        %v11829 = vpop.f32.mrf.mxu0
        %v11830 = vadd.f32 0.0, %v11829
        %v11831 = vpop.f32.mrf.mxu0
        %v11832 = vpop.f32.mrf.mxu0
        %v11833 = vadd.f32 0.0, %v11832
        %v11834 = vpop.f32.mrf.mxu0
        %11835 = vmatprep.mubr.bf16.mxu0 %v11529
        %11836 = vmatmul.mubr.bf16.gmra.mxu0 %v11528
        %v11837 = vpop.f32.mrf.mxu0
        %v11838 = vadd.f32 0.0, %v11837
        %v11839 = vpop.f32.mrf.mxu0
        %v11840 = vpop.f32.mrf.mxu0
        %v11841 = vadd.f32 0.0, %v11840
        %v11842 = vpop.f32.mrf.mxu0
        %11843 = vmatprep.mubr.bf16.mxu0 %v11532
        %11844 = vmatmul.mubr.bf16.gmra.mxu0 %v11531
        %v11845 = vpop.f32.mrf.mxu0
        %v11846 = vadd.f32 0.0, %v11845
        %v11847 = vpop.f32.mrf.mxu0
        %v11848 = vpop.f32.mrf.mxu0
        %v11849 = vadd.f32 0.0, %v11848
        %v11850 = vpop.f32.mrf.mxu0
        %11851 = vmatprep.mubr.bf16.mxu0 %v11535
        %11852 = vmatmul.mubr.bf16.gmra.mxu0 %v11534
        %v11853 = vpop.f32.mrf.mxu0
        %v11854 = vadd.f32 0.0, %v11853
        %v11855 = vpop.f32.mrf.mxu0
        %v11856 = vpop.f32.mrf.mxu0
        %v11857 = vadd.f32 0.0, %v11856
        %v11858 = vpop.f32.mrf.mxu0
        %11859 = vmatprep.mubr.bf16.mxu0 %v11538
        %11860 = vmatmul.mubr.bf16.gmra.mxu0 %v11537
        %v11861 = vpop.f32.mrf.mxu0
        %v11862 = vadd.f32 0.0, %v11861
        %v11863 = vpop.f32.mrf.mxu0
        %v11864 = vpop.f32.mrf.mxu0
        %v11865 = vadd.f32 0.0, %v11864
        %v11866 = vpop.f32.mrf.mxu0
        %11867 = vmatprep.mubr.bf16.mxu0 %v11541
        %11868 = vmatmul.mubr.bf16.gmra.mxu0 %v11540
        %v11869 = vpop.f32.mrf.mxu0
        %v11870 = vadd.f32 0.0, %v11869
        %v11871 = vpop.f32.mrf.mxu0
        %v11872 = vpop.f32.mrf.mxu0
        %v11873 = vadd.f32 0.0, %v11872
        %v11874 = vpop.f32.mrf.mxu0
        %11875 = vmatprep.mubr.bf16.mxu0 %v11544
        %11876 = vmatmul.mubr.bf16.gmra.mxu0 %v11543
        %v11877 = vpop.f32.mrf.mxu0
        %v11878 = vadd.f32 0.0, %v11877
        %v11879 = vpop.f32.mrf.mxu0
        %v11880 = vpop.f32.mrf.mxu0
        %v11881 = vadd.f32 0.0, %v11880
        %v11882 = vpop.f32.mrf.mxu0
        %11883 = vmatprep.mubr.bf16.mxu0 %v11547
        %11884 = vmatmul.mubr.bf16.gmra.mxu0 %v11546
        %v11885 = vpop.f32.mrf.mxu0
        %v11886 = vadd.f32 0.0, %v11885
        %v11887 = vpop.f32.mrf.mxu0
        %v11888 = vpop.f32.mrf.mxu0
        %v11889 = vadd.f32 0.0, %v11888
        %v11890 = vpop.f32.mrf.mxu0
        %11891 = vmatprep.mubr.bf16.mxu0 %v11550
        %11892 = vmatmul.mubr.bf16.gmra.mxu0 %v11549
        %v11893 = vpop.f32.mrf.mxu0
        %v11894 = vadd.f32 0.0, %v11893
        %v11895 = vpop.f32.mrf.mxu0
        %v11896 = vpop.f32.mrf.mxu0
        %v11897 = vadd.f32 0.0, %v11896
        %v11898 = vpop.f32.mrf.mxu0
        %11899 = vmatprep.mubr.bf16.mxu0 %v11553
        %11900 = vmatmul.mubr.bf16.gmra.mxu0 %v11552
        %v11901 = vpop.f32.mrf.mxu0
        %v11902 = vadd.f32 0.0, %v11901
        %v11903 = vpop.f32.mrf.mxu0
        %v11904 = vpop.f32.mrf.mxu0
        %v11905 = vadd.f32 0.0, %v11904
        %v11906 = vpop.f32.mrf.mxu0
        %11907 = vdwg.mxu0
        %11908 = vmatprep.subr.bf16.mxu0 0
        %11909 = vmatpush1.bf16.msra.mxu0 %v11722
        %11910 = vmatprep.subr.bf16.mxu0 0
        %11911 = vmatpush1.bf16.msra.mxu0 %v11721
        %11912 = vmatprep.subr.bf16.mxu0 0
        %11913 = vmatpush1.bf16.msra.mxu0 %v11720
        %11914 = vmatprep.subr.bf16.mxu0 0
        %11915 = vmatpush1.bf16.msra.mxu0 %v11719
        %11916 = vmatprep.subr.bf16.mxu0 0
        %11917 = vmatpush1.bf16.msra.mxu0 %v11718
        %11918 = vmatprep.subr.bf16.mxu0 0
        %11919 = vmatpush1.bf16.msra.mxu0 %v11717
        %11920 = vmatprep.subr.bf16.mxu0 0
        %11921 = vmatpush1.bf16.msra.mxu0 %v11716
        %11922 = vmatprep.subr.bf16.mxu0 0
        %11923 = vmatpush1.bf16.msra.mxu0 %v11715
        %11924 = vmatprep.subr.bf16.mxu0 0
        %11925 = vmatpush2.bf16.msra.mxu0 0
        %11926 = vmatprep.subr.bf16.mxu0 0
        %11927 = vmatpush2.bf16.msra.mxu0 0
        %11928 = vmatprep.subr.bf16.mxu0 0
        %11929 = vmatpush2.bf16.msra.mxu0 0
        %11930 = vmatprep.subr.bf16.mxu0 0
        %11931 = vmatpush2.bf16.msra.mxu0 0
        %11932 = vmatprep.subr.bf16.mxu0 0
        %11933 = vmatpush2.bf16.msra.mxu0 0
        %11934 = vmatprep.subr.bf16.mxu0 0
        %11935 = vmatpush2.bf16.msra.mxu0 0
        %11936 = vmatprep.subr.bf16.mxu0 0
        %11937 = vmatpush2.bf16.msra.mxu0 0
        %11938 = vmatprep.subr.bf16.mxu0 0
        %11939 = vmatpush2.bf16.msra.mxu0 0
        %11940 = vmatprep.mubr.bf16.mxu0 0
        %11941 = vmatmul.mubr.bf16.gmra.mxu0 %v11509
        %v11942 = vpop.f32.mrf.mxu0
        %v11943 = vadd.f32 %v11782, %v11942
        %v11944 = vpop.f32.mrf.mxu0
        %v11945 = vpop.f32.mrf.mxu0
        %v11946 = vadd.f32 %v11785, %v11945
        %v11947 = vpop.f32.mrf.mxu0
        %11948 = vmatprep.mubr.bf16.mxu0 0
        %11949 = vmatmul.mubr.bf16.gmra.mxu0 %v11512
        %v11950 = vpop.f32.mrf.mxu0
        %v11951 = vadd.f32 %v11790, %v11950
        %v11952 = vpop.f32.mrf.mxu0
        %v11953 = vpop.f32.mrf.mxu0
        %v11954 = vadd.f32 %v11793, %v11953
        %v11955 = vpop.f32.mrf.mxu0
        %11956 = vmatprep.mubr.bf16.mxu0 0
        %11957 = vmatmul.mubr.bf16.gmra.mxu0 %v11515
        %v11958 = vpop.f32.mrf.mxu0
        %v11959 = vadd.f32 %v11798, %v11958
        %v11960 = vpop.f32.mrf.mxu0
        %v11961 = vpop.f32.mrf.mxu0
        %v11962 = vadd.f32 %v11801, %v11961
        %v11963 = vpop.f32.mrf.mxu0
        %11964 = vmatprep.mubr.bf16.mxu0 0
        %11965 = vmatmul.mubr.bf16.gmra.mxu0 %v11518
        %v11966 = vpop.f32.mrf.mxu0
        %v11967 = vadd.f32 %v11806, %v11966
        %v11968 = vpop.f32.mrf.mxu0
        %v11969 = vpop.f32.mrf.mxu0
        %v11970 = vadd.f32 %v11809, %v11969
        %v11971 = vpop.f32.mrf.mxu0
        %11972 = vmatprep.mubr.bf16.mxu0 0
        %11973 = vmatmul.mubr.bf16.gmra.mxu0 %v11521
        %v11974 = vpop.f32.mrf.mxu0
        %v11975 = vadd.f32 %v11814, %v11974
        %v11976 = vpop.f32.mrf.mxu0
        %v11977 = vpop.f32.mrf.mxu0
        %v11978 = vadd.f32 %v11817, %v11977
        %v11979 = vpop.f32.mrf.mxu0
        %11980 = vmatprep.mubr.bf16.mxu0 0
        %11981 = vmatmul.mubr.bf16.gmra.mxu0 %v11524
        %v11982 = vpop.f32.mrf.mxu0
        %v11983 = vadd.f32 %v11822, %v11982
        %v11984 = vpop.f32.mrf.mxu0
        %v11985 = vpop.f32.mrf.mxu0
        %v11986 = vadd.f32 %v11825, %v11985
        %v11987 = vpop.f32.mrf.mxu0
        %11988 = vmatprep.mubr.bf16.mxu0 0
        %11989 = vmatmul.mubr.bf16.gmra.mxu0 %v11527
        %v11990 = vpop.f32.mrf.mxu0
        %v11991 = vadd.f32 %v11830, %v11990
        %v11992 = vpop.f32.mrf.mxu0
        %v11993 = vpop.f32.mrf.mxu0
        %v11994 = vadd.f32 %v11833, %v11993
        %v11995 = vpop.f32.mrf.mxu0
        %11996 = vmatprep.mubr.bf16.mxu0 0
        %11997 = vmatmul.mubr.bf16.gmra.mxu0 %v11530
        %v11998 = vpop.f32.mrf.mxu0
        %v11999 = vadd.f32 %v11838, %v11998
        %v12000 = vpop.f32.mrf.mxu0
        %v12001 = vpop.f32.mrf.mxu0
        %v12002 = vadd.f32 %v11841, %v12001
        %v12003 = vpop.f32.mrf.mxu0
        %12004 = vmatprep.mubr.bf16.mxu0 0
        %12005 = vmatmul.mubr.bf16.gmra.mxu0 %v11533
        %v12006 = vpop.f32.mrf.mxu0
        %v12007 = vadd.f32 %v11846, %v12006
        %v12008 = vpop.f32.mrf.mxu0
        %v12009 = vpop.f32.mrf.mxu0
        %v12010 = vadd.f32 %v11849, %v12009
        %v12011 = vpop.f32.mrf.mxu0
        %12012 = vmatprep.mubr.bf16.mxu0 0
        %12013 = vmatmul.mubr.bf16.gmra.mxu0 %v11536
        %v12014 = vpop.f32.mrf.mxu0
        %v12015 = vadd.f32 %v11854, %v12014
        %v12016 = vpop.f32.mrf.mxu0
        %v12017 = vpop.f32.mrf.mxu0
        %v12018 = vadd.f32 %v11857, %v12017
        %v12019 = vpop.f32.mrf.mxu0
        %12020 = vmatprep.mubr.bf16.mxu0 0
        %12021 = vmatmul.mubr.bf16.gmra.mxu0 %v11539
        %v12022 = vpop.f32.mrf.mxu0
        %v12023 = vadd.f32 %v11862, %v12022
        %v12024 = vpop.f32.mrf.mxu0
        %v12025 = vpop.f32.mrf.mxu0
        %v12026 = vadd.f32 %v11865, %v12025
        %v12027 = vpop.f32.mrf.mxu0
        %12028 = vmatprep.mubr.bf16.mxu0 0
        %12029 = vmatmul.mubr.bf16.gmra.mxu0 %v11542
        %v12030 = vpop.f32.mrf.mxu0
        %v12031 = vadd.f32 %v11870, %v12030
        %v12032 = vpop.f32.mrf.mxu0
        %v12033 = vpop.f32.mrf.mxu0
        %v12034 = vadd.f32 %v11873, %v12033
        %v12035 = vpop.f32.mrf.mxu0
        %12036 = vmatprep.mubr.bf16.mxu0 0
        %12037 = vmatmul.mubr.bf16.gmra.mxu0 %v11545
        %v12038 = vpop.f32.mrf.mxu0
        %v12039 = vadd.f32 %v11878, %v12038
        %v12040 = vpop.f32.mrf.mxu0
        %v12041 = vpop.f32.mrf.mxu0
        %v12042 = vadd.f32 %v11881, %v12041
        %v12043 = vpop.f32.mrf.mxu0
        %12044 = vmatprep.mubr.bf16.mxu0 0
        %12045 = vmatmul.mubr.bf16.gmra.mxu0 %v11548
        %v12046 = vpop.f32.mrf.mxu0
        %v12047 = vadd.f32 %v11886, %v12046
        %v12048 = vpop.f32.mrf.mxu0
        %v12049 = vpop.f32.mrf.mxu0
        %v12050 = vadd.f32 %v11889, %v12049
        %v12051 = vpop.f32.mrf.mxu0
        %12052 = vmatprep.mubr.bf16.mxu0 0
        %12053 = vmatmul.mubr.bf16.gmra.mxu0 %v11551
        %v12054 = vpop.f32.mrf.mxu0
        %v12055 = vadd.f32 %v11894, %v12054
        %v12056 = vpop.f32.mrf.mxu0
        %v12057 = vpop.f32.mrf.mxu0
        %v12058 = vadd.f32 %v11897, %v12057
        %v12059 = vpop.f32.mrf.mxu0
        %12060 = vmatprep.mubr.bf16.mxu0 0
        %12061 = vmatmul.mubr.bf16.gmra.mxu0 %v11554
        %v12062 = vpop.f32.mrf.mxu0
        %v12063 = vadd.f32 %v11902, %v12062
        %v12064 = vpop.f32.mrf.mxu0
        %v12065 = vpop.f32.mrf.mxu0
        %v12066 = vadd.f32 %v11905, %v12065
        %v12067 = vpop.f32.mrf.mxu0
        %12068 = vdwg.mxu0
        %v12069 = vadd.f32 %v10277, %v11943
        %v12070 = vadd.f32 %v10280, %v11946
        %v12071 = vadd.f32 %v10285, %v11951
        %v12072 = vadd.f32 %v10288, %v11954
        %v12073 = vadd.f32 %v10293, %v11959
        %v12074 = vadd.f32 %v10296, %v11962
        %v12075 = vadd.f32 %v10301, %v11967
        %v12076 = vadd.f32 %v10304, %v11970
        %v12077 = vadd.f32 %v10309, %v11975
        %v12078 = vadd.f32 %v10312, %v11978
        %v12079 = vadd.f32 %v10317, %v11983
        %v12080 = vadd.f32 %v10320, %v11986
        %v12081 = vadd.f32 %v10325, %v11991
        %v12082 = vadd.f32 %v10328, %v11994
        %v12083 = vadd.f32 %v10333, %v11999
        %v12084 = vadd.f32 %v10336, %v12002
        %v12085 = vadd.f32 %v10341, %v12007
        %v12086 = vadd.f32 %v10344, %v12010
        %v12087 = vadd.f32 %v10349, %v12015
        %v12088 = vadd.f32 %v10352, %v12018
        %v12089 = vadd.f32 %v10357, %v12023
        %v12090 = vadd.f32 %v10360, %v12026
        %v12091 = vadd.f32 %v10365, %v12031
        %v12092 = vadd.f32 %v10368, %v12034
        %v12093 = vadd.f32 %v10373, %v12039
        %v12094 = vadd.f32 %v10376, %v12042
        %v12095 = vadd.f32 %v10381, %v12047
        %v12096 = vadd.f32 %v10384, %v12050
        %v12097 = vadd.f32 %v10389, %v12055
        %v12098 = vadd.f32 %v10392, %v12058
        %v12099 = vadd.f32 %v10397, %v12063
        %v12100 = vadd.f32 %v10400, %v12066
        %v12101 = vadd.f32 %v12069, %v12070
        %v12102 = vadd.f32 %v12101, %v12071
        %v12103 = vadd.f32 %v12102, %v12072
        %v12104 = vadd.f32 %v12103, %v12073
        %v12105 = vadd.f32 %v12104, %v12074
        %v12106 = vadd.f32 %v12105, %v12075
        %v12107 = vadd.f32 %v12106, %v12076
        %v12108 = vadd.f32 %v12107, %v12077
        %v12109 = vadd.f32 %v12108, %v12078
        %v12110 = vadd.f32 %v12109, %v12079
        %v12111 = vadd.f32 %v12110, %v12080
        %v12112 = vadd.f32 %v12111, %v12081
        %v12113 = vadd.f32 %v12112, %v12082
        %v12114 = vadd.f32 %v12113, %v12083
        %v12115 = vadd.f32 %v12114, %v12084
        %v12116 = vadd.f32 %v12115, %v12085
        %v12117 = vadd.f32 %v12116, %v12086
        %v12118 = vadd.f32 %v12117, %v12087
        %v12119 = vadd.f32 %v12118, %v12088
        %v12120 = vadd.f32 %v12119, %v12089
        %v12121 = vadd.f32 %v12120, %v12090
        %v12122 = vadd.f32 %v12121, %v12091
        %v12123 = vadd.f32 %v12122, %v12092
        %v12124 = vadd.f32 %v12123, %v12093
        %v12125 = vadd.f32 %v12124, %v12094
        %v12126 = vadd.f32 %v12125, %v12095
        %v12127 = vadd.f32 %v12126, %v12096
        %v12128 = vadd.f32 %v12127, %v12097
        %v12129 = vadd.f32 %v12128, %v12098
        %v12130 = vadd.f32 %v12129, %v12099
        %v12131 = vadd.f32 %v12130, %v12100
        %v12132 = vrot.slane %v12131, 4
        %v12133 = vadd.f32 %v12131, %v12132
        %v12134 = vrot.slane %v12133, 2
        %v12135 = vadd.f32 %v12133, %v12134
        %v12136 = vrot.slane %v12135, 1
        %v12137 = vadd.f32 %v12135, %v12136
        %v12138 = vmul.f32 %v12137, %v412
        %v12139 = vpack.c.bf16 %v12138, %v12138
        %v12140 = vld [vmem:[#allocation12] sm:$0xf]
        %v12141 = vld [vmem:[#allocation12 + $0x4] sm:$0xf]
        %v12142 = vld [vmem:[#allocation12 + $0x8] sm:$0xf]
        %v12143 = vld [vmem:[#allocation12 + $0xc] sm:$0xf]
        %v12144 = vld [vmem:[#allocation12 + $0x10] sm:$0xf]
        %v12145 = vld [vmem:[#allocation12 + $0x14] sm:$0xf]
        %v12146 = vld [vmem:[#allocation12 + $0x18] sm:$0xf]
        %v12147 = vld [vmem:[#allocation12 + $0x1c] sm:$0xf]
        %v12148 = vld [vmem:[#allocation12 + $0x20] sm:$0xf]
        %v12149 = vld [vmem:[#allocation12 + $0x24] sm:$0xf]
        %v12150 = vld [vmem:[#allocation12 + $0x28] sm:$0xf]
        %v12151 = vld [vmem:[#allocation12 + $0x2c] sm:$0xf]
        %v12152 = vld [vmem:[#allocation12 + $0x30] sm:$0xf]
        %v12153 = vld [vmem:[#allocation12 + $0x34] sm:$0xf]
        %v12154 = vld [vmem:[#allocation12 + $0x38] sm:$0xf]
        %v12155 = vld [vmem:[#allocation12 + $0x3c] sm:$0xf]
        %v12172 = vunpack.c.l.b16 %v12140
        %v12173 = vunpack.c.l.b16 %v12141
        %v12174 = vunpack.c.l.b16 %v12142
        %v12175 = vunpack.c.l.b16 %v12143
        %v12176 = vunpack.c.l.b16 %v12144
        %v12177 = vunpack.c.l.b16 %v12145
        %v12178 = vunpack.c.l.b16 %v12146
        %v12179 = vunpack.c.l.b16 %v12147
        %v12180 = vunpack.c.l.b16 %v12148
        %v12181 = vunpack.c.l.b16 %v12149
        %v12182 = vunpack.c.l.b16 %v12150
        %v12183 = vunpack.c.l.b16 %v12151
        %v12184 = vunpack.c.l.b16 %v12152
        %v12185 = vunpack.c.l.b16 %v12153
        %v12186 = vunpack.c.l.b16 %v12154
        %v12187 = vunpack.c.l.b16 %v12155
        %v12188 = vpack.c.b16 %v12173, %v12172
        %v12189 = vpack.c.b16 %v12175, %v12174
        %v12190 = vpack.c.b16 %v12177, %v12176
        %v12191 = vpack.c.b16 %v12179, %v12178
        %v12192 = vpack.c.b16 %v12181, %v12180
        %v12193 = vpack.c.b16 %v12183, %v12182
        %v12194 = vpack.c.b16 %v12185, %v12184
        %v12195 = vpack.c.b16 %v12187, %v12186
        %12204 = vmatprep.subr.bf16.mxu0 0
        %12205 = vmatpush1.bf16.msra.mxu0 %v12195
        %12206 = vmatprep.subr.bf16.mxu0 0
        %12207 = vmatpush1.bf16.msra.mxu0 %v12194
        %12208 = vmatprep.subr.bf16.mxu0 0
        %12209 = vmatpush1.bf16.msra.mxu0 %v12193
        %12210 = vmatprep.subr.bf16.mxu0 0
        %12211 = vmatpush1.bf16.msra.mxu0 %v12192
        %12212 = vmatprep.subr.bf16.mxu0 0
        %12213 = vmatpush1.bf16.msra.mxu0 %v12191
        %12214 = vmatprep.subr.bf16.mxu0 0
        %12215 = vmatpush1.bf16.msra.mxu0 %v12190
        %12216 = vmatprep.subr.bf16.mxu0 0
        %12217 = vmatpush1.bf16.msra.mxu0 %v12189
        %12218 = vmatprep.subr.bf16.mxu0 0
        %12219 = vmatpush1.bf16.msra.mxu0 %v12188
        %12220 = vmatprep.subr.bf16.mxu0 0
        %12221 = vmatpush2.bf16.msra.mxu0 0
        %12222 = vmatprep.subr.bf16.mxu0 0
        %12223 = vmatpush2.bf16.msra.mxu0 0
        %12224 = vmatprep.subr.bf16.mxu0 0
        %12225 = vmatpush2.bf16.msra.mxu0 0
        %12226 = vmatprep.subr.bf16.mxu0 0
        %12227 = vmatpush2.bf16.msra.mxu0 0
        %12228 = vmatprep.subr.bf16.mxu0 0
        %12229 = vmatpush2.bf16.msra.mxu0 0
        %12230 = vmatprep.subr.bf16.mxu0 0
        %12231 = vmatpush2.bf16.msra.mxu0 0
        %12232 = vmatprep.subr.bf16.mxu0 0
        %12233 = vmatpush2.bf16.msra.mxu0 0
        %12234 = vmatprep.subr.bf16.mxu0 0
        %12235 = vmatpush2.bf16.msra.mxu0 0
        %12236 = vmatprep.mubr.bf16.mxu0 0
        %12237 = vmatmul.mubr.bf16.gmra.mxu0 %v12139
        %v12238 = vpop.f32.mrf.mxu0
        %v12239 = vadd.f32 0.0, %v12238
        %v12240 = vpop.f32.mrf.mxu0
        %v12241 = vpop.f32.mrf.mxu0
        %v12242 = vpop.f32.mrf.mxu0
        %12243 = vdwg.mxu0
        %v12244 = vmax.f32 %v12239, 0.0
        %v12245 = vpack.c.bf16 %v12244, %v12244
        %v12246 = vld [vmem:[#allocation13] sm:$0xf]
        %v12247 = vld [vmem:[#allocation13 + $0x4] sm:$0xf]
        %v12248 = vld [vmem:[#allocation13 + $0x8] sm:$0xf]
        %v12249 = vld [vmem:[#allocation13 + $0xc] sm:$0xf]
        %v12250 = vld [vmem:[#allocation13 + $0x10] sm:$0xf]
        %v12251 = vld [vmem:[#allocation13 + $0x14] sm:$0xf]
        %v12252 = vld [vmem:[#allocation13 + $0x18] sm:$0xf]
        %v12253 = vld [vmem:[#allocation13 + $0x1c] sm:$0xf]
        %v12254 = vld [vmem:[#allocation13 + $0x20] sm:$0xf]
        %v12255 = vld [vmem:[#allocation13 + $0x24] sm:$0xf]
        %v12256 = vld [vmem:[#allocation13 + $0x28] sm:$0xf]
        %v12257 = vld [vmem:[#allocation13 + $0x2c] sm:$0xf]
        %v12258 = vld [vmem:[#allocation13 + $0x30] sm:$0xf]
        %v12259 = vld [vmem:[#allocation13 + $0x34] sm:$0xf]
        %v12260 = vld [vmem:[#allocation13 + $0x38] sm:$0xf]
        %v12261 = vld [vmem:[#allocation13 + $0x3c] sm:$0xf]
        %v12278 = vunpack.c.l.b16 %v12246
        %v12279 = vunpack.c.l.b16 %v12247
        %v12280 = vunpack.c.l.b16 %v12248
        %v12281 = vunpack.c.l.b16 %v12249
        %v12282 = vunpack.c.l.b16 %v12250
        %v12283 = vunpack.c.l.b16 %v12251
        %v12284 = vunpack.c.l.b16 %v12252
        %v12285 = vunpack.c.l.b16 %v12253
        %v12286 = vunpack.c.l.b16 %v12254
        %v12287 = vunpack.c.l.b16 %v12255
        %v12288 = vunpack.c.l.b16 %v12256
        %v12289 = vunpack.c.l.b16 %v12257
        %v12290 = vunpack.c.l.b16 %v12258
        %v12291 = vunpack.c.l.b16 %v12259
        %v12292 = vunpack.c.l.b16 %v12260
        %v12293 = vunpack.c.l.b16 %v12261
        %v12294 = vpack.c.b16 %v12279, %v12278
        %v12295 = vpack.c.b16 %v12281, %v12280
        %v12296 = vpack.c.b16 %v12283, %v12282
        %v12297 = vpack.c.b16 %v12285, %v12284
        %v12298 = vpack.c.b16 %v12287, %v12286
        %v12299 = vpack.c.b16 %v12289, %v12288
        %v12300 = vpack.c.b16 %v12291, %v12290
        %v12301 = vpack.c.b16 %v12293, %v12292
        %12310 = vmatprep.subr.bf16.mxu0 0
        %12311 = vmatpush1.bf16.msra.mxu0 %v12301
        %12312 = vmatprep.subr.bf16.mxu0 0
        %12313 = vmatpush1.bf16.msra.mxu0 %v12300
        %12314 = vmatprep.subr.bf16.mxu0 0
        %12315 = vmatpush1.bf16.msra.mxu0 %v12299
        %12316 = vmatprep.subr.bf16.mxu0 0
        %12317 = vmatpush1.bf16.msra.mxu0 %v12298
        %12318 = vmatprep.subr.bf16.mxu0 0
        %12319 = vmatpush1.bf16.msra.mxu0 %v12297
        %12320 = vmatprep.subr.bf16.mxu0 0
        %12321 = vmatpush1.bf16.msra.mxu0 %v12296
        %12322 = vmatprep.subr.bf16.mxu0 0
        %12323 = vmatpush1.bf16.msra.mxu0 %v12295
        %12324 = vmatprep.subr.bf16.mxu0 0
        %12325 = vmatpush1.bf16.msra.mxu0 %v12294
        %12326 = vmatprep.subr.bf16.mxu0 0
        %12327 = vmatpush2.bf16.msra.mxu0 0
        %12328 = vmatprep.subr.bf16.mxu0 0
        %12329 = vmatpush2.bf16.msra.mxu0 0
        %12330 = vmatprep.subr.bf16.mxu0 0
        %12331 = vmatpush2.bf16.msra.mxu0 0
        %12332 = vmatprep.subr.bf16.mxu0 0
        %12333 = vmatpush2.bf16.msra.mxu0 0
        %12334 = vmatprep.subr.bf16.mxu0 0
        %12335 = vmatpush2.bf16.msra.mxu0 0
        %12336 = vmatprep.subr.bf16.mxu0 0
        %12337 = vmatpush2.bf16.msra.mxu0 0
        %12338 = vmatprep.subr.bf16.mxu0 0
        %12339 = vmatpush2.bf16.msra.mxu0 0
        %12340 = vmatprep.subr.bf16.mxu0 0
        %12341 = vmatpush2.bf16.msra.mxu0 0
        %12342 = vmatprep.mubr.bf16.mxu0 0
        %12343 = vmatmul.mubr.bf16.gmra.mxu0 %v12245
        %v12344 = vpop.f32.mrf.mxu0
        %v12345 = vadd.f32 0.0, %v12344
        %v12346 = vpop.f32.mrf.mxu0
        %v12347 = vpop.f32.mrf.mxu0
        %v12348 = vpop.f32.mrf.mxu0
        %12349 = vdwg.mxu0
        %v12350 = vsub.f32 0.0, %v12345
        %v12351 = vmul.f32 %v12350, 1.442695
        %v12352 = vpow.pop %v12351
        %v12353 = vadd.f32 %v12352, 1.0
        %v12354 = vrcp.pop %v12353
        %v12355 = vmul.f32 1.0, %v12354
        %v12356 = vlaneseq
        %v12357 = vshrl.u32 %v12356, 7
        %v12358 = vsub.s32 0, %v12357
        %v12359 = vrot.slane %v12355, %v12358
        %v12360 = vmul.f32 %v12359, %v12069
        %v12361 = vmul.f32 %v12359, %v12070
        %v12362 = vmul.f32 %v12359, %v12071
        %v12363 = vmul.f32 %v12359, %v12072
        %v12364 = vmul.f32 %v12359, %v12073
        %v12365 = vmul.f32 %v12359, %v12074
        %v12366 = vmul.f32 %v12359, %v12075
        %v12367 = vmul.f32 %v12359, %v12076
        %v12368 = vmul.f32 %v12359, %v12077
        %v12369 = vmul.f32 %v12359, %v12078
        %v12370 = vmul.f32 %v12359, %v12079
        %v12371 = vmul.f32 %v12359, %v12080
        %v12372 = vmul.f32 %v12359, %v12081
        %v12373 = vmul.f32 %v12359, %v12082
        %v12374 = vmul.f32 %v12359, %v12083
        %v12375 = vmul.f32 %v12359, %v12084
        %v12376 = vmul.f32 %v12359, %v12085
        %v12377 = vmul.f32 %v12359, %v12086
        %v12378 = vmul.f32 %v12359, %v12087
        %v12379 = vmul.f32 %v12359, %v12088
        %v12380 = vmul.f32 %v12359, %v12089
        %v12381 = vmul.f32 %v12359, %v12090
        %v12382 = vmul.f32 %v12359, %v12091
        %v12383 = vmul.f32 %v12359, %v12092
        %v12384 = vmul.f32 %v12359, %v12093
        %v12385 = vmul.f32 %v12359, %v12094
        %v12386 = vmul.f32 %v12359, %v12095
        %v12387 = vmul.f32 %v12359, %v12096
        %v12388 = vmul.f32 %v12359, %v12097
        %v12389 = vmul.f32 %v12359, %v12098
        %v12390 = vmul.f32 %v12359, %v12099
        %v12391 = vmul.f32 %v12359, %v12100
        %v12392 = vadd.f32 %v12360, %v342
        %v12393 = vadd.f32 %v12361, %v343
        %v12394 = vadd.f32 %v12362, %v344
        %v12395 = vadd.f32 %v12363, %v345
        %v12396 = vadd.f32 %v12364, %v346
        %v12397 = vadd.f32 %v12365, %v347
        %v12398 = vadd.f32 %v12366, %v348
        %v12399 = vadd.f32 %v12367, %v349
        %v12400 = vadd.f32 %v12368, %v350
        %v12401 = vadd.f32 %v12369, %v351
        %v12402 = vadd.f32 %v12370, %v352
        %v12403 = vadd.f32 %v12371, %v353
        %v12404 = vadd.f32 %v12372, %v354
        %v12405 = vadd.f32 %v12373, %v355
        %v12406 = vadd.f32 %v12374, %v356
        %v12407 = vadd.f32 %v12375, %v357
        %v12408 = vadd.f32 %v12376, %v358
        %v12409 = vadd.f32 %v12377, %v359
        %v12410 = vadd.f32 %v12378, %v360
        %v12411 = vadd.f32 %v12379, %v361
        %v12412 = vadd.f32 %v12380, %v362
        %v12413 = vadd.f32 %v12381, %v363
        %v12414 = vadd.f32 %v12382, %v364
        %v12415 = vadd.f32 %v12383, %v365
        %v12416 = vadd.f32 %v12384, %v366
        %v12417 = vadd.f32 %v12385, %v367
        %v12418 = vadd.f32 %v12386, %v368
        %v12419 = vadd.f32 %v12387, %v369
        %v12420 = vadd.f32 %v12388, %v370
        %v12421 = vadd.f32 %v12389, %v371
        %v12422 = vadd.f32 %v12390, %v372
        %v12423 = vadd.f32 %v12391, %v373
        %v12424 = vmax.f32 %v12392, 0.0
        %v12425 = vmax.f32 %v12393, 0.0
        %v12426 = vmax.f32 %v12394, 0.0
        %v12427 = vmax.f32 %v12395, 0.0
        %v12428 = vmax.f32 %v12396, 0.0
        %v12429 = vmax.f32 %v12397, 0.0
        %v12430 = vmax.f32 %v12398, 0.0
        %v12431 = vmax.f32 %v12399, 0.0
        %v12432 = vmax.f32 %v12400, 0.0
        %v12433 = vmax.f32 %v12401, 0.0
        %v12434 = vmax.f32 %v12402, 0.0
        %v12435 = vmax.f32 %v12403, 0.0
        %v12436 = vmax.f32 %v12404, 0.0
        %v12437 = vmax.f32 %v12405, 0.0
        %v12438 = vmax.f32 %v12406, 0.0
        %v12439 = vmax.f32 %v12407, 0.0
        %v12440 = vmax.f32 %v12408, 0.0
        %v12441 = vmax.f32 %v12409, 0.0
        %v12442 = vmax.f32 %v12410, 0.0
        %v12443 = vmax.f32 %v12411, 0.0
        %v12444 = vmax.f32 %v12412, 0.0
        %v12445 = vmax.f32 %v12413, 0.0
        %v12446 = vmax.f32 %v12414, 0.0
        %v12447 = vmax.f32 %v12415, 0.0
        %v12448 = vmax.f32 %v12416, 0.0
        %v12449 = vmax.f32 %v12417, 0.0
        %v12450 = vmax.f32 %v12418, 0.0
        %v12451 = vmax.f32 %v12419, 0.0
        %v12452 = vmax.f32 %v12420, 0.0
        %v12453 = vmax.f32 %v12421, 0.0
        %v12454 = vmax.f32 %v12422, 0.0
        %v12455 = vmax.f32 %v12423, 0.0
        %12456 = vst [vmem:[%s340] sm:$0xff] %v12424
        %12457 = vst [vmem:[%s340 + $0x8] sm:$0xff] %v12425
        %12458 = vst [vmem:[%s340 + $0x10] sm:$0xff] %v12426
        %12459 = vst [vmem:[%s340 + $0x18] sm:$0xff] %v12427
        %12460 = vst [vmem:[%s340 + $0x20] sm:$0xff] %v12428
        %12461 = vst [vmem:[%s340 + $0x28] sm:$0xff] %v12429
        %12462 = vst [vmem:[%s340 + $0x30] sm:$0xff] %v12430
        %12463 = vst [vmem:[%s340 + $0x38] sm:$0xff] %v12431
        %12464 = vst [vmem:[%s340 + $0x40] sm:$0xff] %v12432
        %12465 = vst [vmem:[%s340 + $0x48] sm:$0xff] %v12433
        %12466 = vst [vmem:[%s340 + $0x50] sm:$0xff] %v12434
        %12467 = vst [vmem:[%s340 + $0x58] sm:$0xff] %v12435
        %12468 = vst [vmem:[%s340 + $0x60] sm:$0xff] %v12436
        %12469 = vst [vmem:[%s340 + $0x68] sm:$0xff] %v12437
        %12470 = vst [vmem:[%s340 + $0x70] sm:$0xff] %v12438
        %12471 = vst [vmem:[%s340 + $0x78] sm:$0xff] %v12439
        %12472 = vst [vmem:[%s340 + $0x80] sm:$0xff] %v12440
        %12473 = vst [vmem:[%s340 + $0x88] sm:$0xff] %v12441
        %12474 = vst [vmem:[%s340 + $0x90] sm:$0xff] %v12442
        %12475 = vst [vmem:[%s340 + $0x98] sm:$0xff] %v12443
        %12476 = vst [vmem:[%s340 + $0xa0] sm:$0xff] %v12444
        %12477 = vst [vmem:[%s340 + $0xa8] sm:$0xff] %v12445
        %12478 = vst [vmem:[%s340 + $0xb0] sm:$0xff] %v12446
        %12479 = vst [vmem:[%s340 + $0xb8] sm:$0xff] %v12447
        %12480 = vst [vmem:[%s340 + $0xc0] sm:$0xff] %v12448
        %12481 = vst [vmem:[%s340 + $0xc8] sm:$0xff] %v12449
        %12482 = vst [vmem:[%s340 + $0xd0] sm:$0xff] %v12450
        %12483 = vst [vmem:[%s340 + $0xd8] sm:$0xff] %v12451
        %12484 = vst [vmem:[%s340 + $0xe0] sm:$0xff] %v12452
        %12485 = vst [vmem:[%s340 + $0xe8] sm:$0xff] %v12453
        %12486 = vst [vmem:[%s340 + $0xf0] sm:$0xff] %v12454
        %12487 = vst [vmem:[%s340 + $0xf8] sm:$0xff] %v12455
        %s12488 = sand.u32 %s165, 1
        %s12489 = scalar_lea.sflag [#allocation6], %s12488
        %s12490 = sand.u32 %s165, 1
        %s12491 = smul.addr %s12490, 256
        %s12492 = scalar_lea.vmem [#allocation15], %s12491
        // Predicated region
        $region69: #{tpu_custom_call.1} parent=43 // pred_check
          %p12493 = pneg %p175
        $region70: #{tpu_custom_call.1} parent=43 // pred_check_branch
          %12495 = sbr.rel (%p12493) target = $region72
        $region71: #{tpu_custom_call.1} parent=43 // pred_region
          %s12497 = ssub.s32 4096, 4096
          %12498 = vsyncadd %s12489, %s12497
          %s12499 = smul.addr %s26, 32
          %s12500 = smul.addr %s12499, 128
          %s12501 = scalar_lea.hbm %s6, %s12500
          %s12502 = sshll.u32 %s12492, 4
          %s12503 = int_to_ptr.vmem [resolvable:$true] %s12502
          %12508 = dma.vmem_to_hbm [thread:$0]  %s12503, 4096, %s12501, %s12489, 128, 128, 8
        $region72: #{tpu_custom_call.1} parent=43 // pred_fallthru
          _
      $region44: #{tpu_custom_call.1} parent=5 // pred_fallthru
        _
      %p12509 = scmp.le.s32.totalorder 2, %s21
      // Predicated region
      $region73: #{tpu_custom_call.1} parent=5 // pred_check
        %p12510 = pneg %p12509
      $region74: #{tpu_custom_call.1} parent=5 // pred_check_branch
        %12512 = sbr.rel (%p12510) target = $region76
      $region75: #{tpu_custom_call.1} parent=5 // pred_region
        %s12513 = ssub.s32 %s21, 2
        // Predicated region
        $region77: #{tpu_custom_call.1} parent=75 // pred_check
          %p12514 = pneg %p181
        $region78: #{tpu_custom_call.1} parent=75 // pred_check_branch
          %12516 = sbr.rel (%p12514) target = $region80
        $region79: #{tpu_custom_call.1} parent=75 // pred_region
          %s12517 = sand.u32 %s166, 1
          %s12518 = scalar_lea.sflag [#allocation6], %s12517
          %s12519 = sand.u32 %s166, 1
          %s12520 = smul.addr %s12519, 256
          %s12521 = scalar_lea.vmem [#allocation15], %s12520
          %12522 = dma.done %s12518, 4096
        $region80: #{tpu_custom_call.1} parent=75 // pred_fallthru
          _
      $region76: #{tpu_custom_call.1} parent=5 // pred_fallthru
        _
    $region6: #{tpu_custom_call.1} parent=1 // loop_footer
      %s25 = sadd.s32 1, %s21
    $region7: #{tpu_custom_call.1} parent=1 // loop_footer_branch
      %20 = sbr.rel target = $region3
    $region8: #{tpu_custom_call.1} parent=1 // loop_exit
      _
    %12523 = vsyncpa [#allocation5], 1
    %s12524 = scalar_lea.sflag [#allocation5], 1
    %12525 = vsyncpa %s12524, 1
    %12526 = vsyncpa [#allocation8], 1
    %12527 = vsyncpa [#allocation11], 1
    %12528 = vsyncpa [#allocation14], 1
    %12529 = vsyncpa [#allocation6], 1
    %s12530 = scalar_lea.sflag [#allocation6], 1
    %12531 = vsyncpa %s12530, 1

</llo_original>
